<compile_context>
chip_gen: v6e
topology: v6e:2x2x1
jax: 0.10.0
libtpu: 0.0.40
codegen_flags: <defaults>
</compile_context>

<pallas_src>
import math
import functools

import jax
import jax.numpy as jnp
from jax import lax
from jax.experimental import pallas as pl
from jax.experimental.pallas import tpu as pltpu


# ---------------------------------------------------------------------------
# Kernel
# ---------------------------------------------------------------------------
def _layernorm(v, g, b, eps=1e-5):
    mu = jnp.mean(v, axis=-1, keepdims=True)
    var = jnp.mean((v - mu) ** 2, axis=-1, keepdims=True)
    return (v - mu) * lax.rsqrt(var + eps) * g + b


def _block_kernel(x_ref,
                  ln1g_ref, ln1b_ref,
                  wq_ref, bq_ref, wk_ref, bk_ref, wv_ref, bv_ref,
                  wpr_ref, bpr_ref,
                  ln2g_ref, ln2b_ref,
                  wfc_ref, bfc_ref,
                  wp2_ref, bp2_ref,
                  o_ref,
                  k_s, v_s,
                  *, n_head):
    qt = pl.program_id(1)                      # query-tile index (sequential)
    TQ = o_ref.shape[1]
    C = o_ref.shape[2]
    H = n_head
    hd = C // H
    scale = 1.0 / math.sqrt(hd)

    # ----- LN1 + Q/K/V for THIS tile's rows only --------------------------
    x_t = x_ref[0]                                           # (TQ, C) f32
    xl_t = _layernorm(x_t, ln1g_ref[0], ln1b_ref[0]).astype(jnp.bfloat16)

    q0 = pl.multiple_of(qt * TQ, TQ)
    q_heads = []
    for h in range(H):                     # weights pre-split per head: no
        qh = (jnp.dot(xl_t, wq_ref[h],     # cross-lane slicing of a fused QKV
                      preferred_element_type=jnp.float32) + bq_ref[h]) * scale
        q_heads.append(qh.astype(jnp.bfloat16))
        kh = jnp.dot(xl_t, wk_ref[h],
                     preferred_element_type=jnp.float32) + bk_ref[h]
        vh = jnp.dot(xl_t, wv_ref[h],
                     preferred_element_type=jnp.float32) + bv_ref[h]
        # append this tile's keys/values into the per-batch scratch
        # (K stored transposed -> lane dim T, no per-tile transpose later)
        k_s[h, :, pl.ds(q0, TQ)] = kh.T.astype(jnp.bfloat16)
        v_s[h, pl.ds(q0, TQ), :] = vh.astype(jnp.bfloat16)
    q_t = jnp.stack(q_heads, axis=0)                         # (H, TQ, hd) bf16

    # ----- causal flash attention over key tiles 0..qt ---------------------
    def kv_step(kt, carry, *, masked):
        m, l, acc = carry
        k0 = pl.multiple_of(kt * TQ, TQ)
        k_blk = k_s[:, :, pl.ds(k0, TQ)]                     # (H, hd, TK) bf16
        v_blk = v_s[:, pl.ds(k0, TQ), :]                     # (H, TK, hd) bf16
        s = jnp.einsum('htd,hds->hts', q_t, k_blk,
                       preferred_element_type=jnp.float32)   # (H, TQ, TK) f32
        if masked:   # only the diagonal tile needs the causal compare
            rows = lax.broadcasted_iota(jnp.int32, (TQ, TQ), 0)
            cols = lax.broadcasted_iota(jnp.int32, (TQ, TQ), 1)
            s = jnp.where((rows >= cols)[None, :, :], s, -jnp.inf)
        m_new = jnp.maximum(m, jnp.max(s, axis=-1, keepdims=True))
        alpha = jnp.exp(m - m_new)          # safe: diagonal is never all-masked
        p = jnp.exp(s - m_new)
        l_new = alpha * l + jnp.sum(p, axis=-1, keepdims=True)
        acc_new = alpha * acc + jnp.einsum('hts,hsd->htd',
                                           p.astype(jnp.bfloat16), v_blk,
                                           preferred_element_type=jnp.float32)
        return m_new, l_new, acc_new

    m0 = jnp.full((H, TQ, 1), -jnp.inf, dtype=jnp.float32)
    l0 = jnp.zeros((H, TQ, 1), dtype=jnp.float32)
    acc0 = jnp.zeros((H, TQ, hd), dtype=jnp.float32)
    # interior (fully unmasked) key tiles: kt < qt
    m, l, acc = lax.fori_loop(0, qt,
                              functools.partial(kv_step, masked=False),
                              (m0, l0, acc0))
    # diagonal key tile (the only one requiring the mask)
    m, l, acc = kv_step(qt, (m, l, acc), masked=True)

    y_h = (acc * pl.reciprocal(l, approx=True)).astype(jnp.bfloat16)  # (H,TQ,hd)

    # ----- head merge folded into the output projection --------------------
    proj = jnp.dot(y_h[0], wpr_ref[0], preferred_element_type=jnp.float32)
    for h in range(1, H):
        proj = proj + jnp.dot(y_h[h], wpr_ref[h],
                              preferred_element_type=jnp.float32)
    x1 = x_t + proj + bpr_ref[0]                                   # (TQ, C) f32

    # ----- MLP --------------------------------------------------------------
    xl2 = _layernorm(x1, ln2g_ref[0], ln2b_ref[0]).astype(jnp.bfloat16)
    h1 = jnp.dot(xl2, wfc_ref[...],
                 preferred_element_type=jnp.float32) + bfc_ref[0]  # (TQ, 4C)
    # NewGELU (exact tanh form); h*h*h avoids a pow lowering
    h1 = 0.5 * h1 * (1.0 + jnp.tanh(math.sqrt(2.0 / math.pi) *
                                    (h1 + 0.044715 * h1 * h1 * h1)))
    h2 = jnp.dot(h1.astype(jnp.bfloat16), wp2_ref[...],
                 preferred_element_type=jnp.float32) + bp2_ref[0]  # (TQ, C)

    o_ref[0] = (x1 + h2).astype(o_ref.dtype)


# ---------------------------------------------------------------------------
# Wrapper
# ---------------------------------------------------------------------------
def gpt2_block(x, params, n_head):
    B, T, C = x.shape
    assert C % n_head == 0
    hd = C // n_head
    (ln1g, ln1b, wqkv, bqkv, wpr, bpr,
     ln2g, ln2b, wfc, bfc, wp2, bp2) = params

    # Pre-split the fused QKV projection per head so the kernel never does
    # cross-lane head slicing; cast matmul operands to bf16 once here.
    def per_head_w(w):                         # (C, C) -> (H, C, hd)
        return w.reshape(C, n_head, hd).transpose(1, 0, 2).astype(jnp.bfloat16)

    wq_r = per_head_w(wqkv[:, :C])
    wk_r = per_head_w(wqkv[:, C:2 * C])
    wv_r = per_head_w(wqkv[:, 2 * C:])
    bq_r = bqkv[0, :C].reshape(n_head, hd)
    bk_r = bqkv[0, C:2 * C].reshape(n_head, hd)
    bv_r = bqkv[0, 2 * C:].reshape(n_head, hd)
    wpr_r = wpr.reshape(n_head, hd, C).astype(jnp.bfloat16)   # head-merge fold
    wfc_b = wfc.astype(jnp.bfloat16)
    wp2_b = wp2.astype(jnp.bfloat16)

    kparams = (ln1g, ln1b,
               wq_r, bq_r, wk_r, bk_r, wv_r, bv_r,
               wpr_r, bpr,
               ln2g, ln2b,
               wfc_b, bfc, wp2_b, bp2)

    TQ = min(T, 128)
    assert T % TQ == 0, "sequence length must be a multiple of the query tile"
    n_qt = T // TQ

    # constant operands: full block, constant index map, single-buffered
    def const_spec(arr):
        zeros = (0,) * arr.ndim
        return pl.BlockSpec(arr.shape, lambda b, q: zeros,
                            pipeline_mode=pl.Buffered(1))

    in_specs = ([pl.BlockSpec((1, TQ, C), lambda b, q: (b, q, 0))] +
                [const_spec(p) for p in kparams])
    out_spec = pl.BlockSpec((1, TQ, C), lambda b, q: (b, q, 0))

    kernel = functools.partial(_block_kernel, n_head=n_head)
    return pl.pallas_call(
        kernel,
        out_shape=jax.ShapeDtypeStruct((B, T, C), x.dtype),
        grid_spec=pltpu.PrefetchScalarGridSpec(
            num_scalar_prefetch=0,
            grid=(B, n_qt),
            in_specs=in_specs,
            out_specs=out_spec,
            scratch_shapes=[
                pltpu.VMEM((n_head, hd, T), jnp.bfloat16),   # K^T (lane dim T)
                pltpu.VMEM((n_head, T, hd), jnp.bfloat16),   # V
            ]),
        compiler_params=pltpu.CompilerParams(
            # q-tile axis MUST stay "arbitrary": K/V scratch is filled
            # incrementally and reused across q-tiles of one batch element.
            dimension_semantics=("parallel", "arbitrary"),
            vmem_limit_bytes=48 * 1024 * 1024),
    )(x, *kparams)


# ---------------------------------------------------------------------------
# Pure-JAX reference (mirrors the PyTorch forward) for validation
# ---------------------------------------------------------------------------
def gpt2_block_ref(x, params, n_head):
    (ln1g, ln1b, wqkv, bqkv, wpr, bpr,
     ln2g, ln2b, wfc, bfc, wp2, bp2) = params
    B, T, C = x.shape
    hd = C // n_head

    def ln(v, g, b):
        mu = v.mean(-1, keepdims=True)
        var = ((v - mu) ** 2).mean(-1, keepdims=True)
        return (v - mu) / jnp.sqrt(var + 1e-5) * g[0] + b[0]

    xl = ln(x, ln1g, ln1b)
    qkv = xl @ wqkv + bqkv[0]
    q, k, v = jnp.split(qkv, 3, axis=-1)
    q = q.reshape(B, T, n_head, hd).transpose(0, 2, 1, 3)
    k = k.reshape(B, T, n_head, hd).transpose(0, 2, 1, 3)
    v = v.reshape(B, T, n_head, hd).transpose(0, 2, 1, 3)
    att = (q @ jnp.swapaxes(k, -2, -1)) / math.sqrt(hd)
    mask = jnp.tril(jnp.ones((T, T), bool))
    att = jnp.where(mask, att, -jnp.inf)
    att = jax.nn.softmax(att, axis=-1)
    y = (att @ v).transpose(0, 2, 1, 3).reshape(B, T, C)
    y = y @ wpr + bpr[0]
    x1 = x + y

    xl2 = ln(x1, ln2g, ln2b)
    h = xl2 @ wfc + bfc[0]
    h = 0.5 * h * (1.0 + jnp.tanh(math.sqrt(2.0 / math.pi) * (h + 0.044715 * h ** 3)))
    h = h @ wp2 + bp2[0]
    return x1 + h


# ---------------------------------------------------------------------------
# Main
# ---------------------------------------------------------------------------
if __name__ == "__main__":
    # Lane-dense small test: C = 256, head_dim = 128, T = 256 (two query tiles)
    B, T, C, n_head = 2, 256, 256, 2

    key = jax.random.PRNGKey(0)
    keys = jax.random.split(key, 16)

    def nrm(k, shape, s=0.02):
        return (s * jax.random.normal(k, shape)).astype(jnp.float32)

    x = jax.random.normal(keys[0], (B, T, C), dtype=jnp.float32)

    # parameters (deterministic synthetic init; 1-D params stored as (1, n))
    ln1g = 1.0 + nrm(keys[1], (1, C));       ln1b = nrm(keys[2], (1, C))
    wqkv = nrm(keys[3], (C, 3 * C));         bqkv = nrm(keys[4], (1, 3 * C))
    wpr  = nrm(keys[5], (C, C));             bpr  = nrm(keys[6], (1, C))
    ln2g = 1.0 + nrm(keys[7], (1, C));       ln2b = nrm(keys[8], (1, C))
    wfc  = nrm(keys[9], (C, 4 * C));         bfc  = nrm(keys[10], (1, 4 * C))
    wp2  = nrm(keys[11], (4 * C, C));        bp2  = nrm(keys[12], (1, C))

    params = (ln1g, ln1b, wqkv, bqkv, wpr, bpr,
              ln2g, ln2b, wfc, bfc, wp2, bp2)

    out = jax.block_until_ready(gpt2_block(x, params, n_head))
    ref = gpt2_block_ref(x, params, n_head)

    assert out.shape == (B, T, C)
    max_err = float(jnp.max(jnp.abs(out - ref)))
    # bf16 matmul operands with f32 accumulation -> tolerance loosened accordingly
    assert jnp.allclose(out, ref, rtol=1e-2, atol=1e-2), \
        f"mismatch vs JAX reference (max abs err {max_err})"

    print("KERNEL_OK")
</pallas_src>

<mosaic_0001>
module attributes {stable_mosaic.version = 11 : i64} {
  func.func @_block_kernel(%arg0: i32, %arg1: i32, %arg2: memref<1x128x256xf32, #tpu.memory_space<vmem>>, %arg3: memref<1x256xf32, #tpu.memory_space<vmem>>, %arg4: memref<1x256xf32, #tpu.memory_space<vmem>>, %arg5: memref<2x256x128xbf16, #tpu.memory_space<vmem>>, %arg6: memref<2x128xf32, #tpu.memory_space<vmem>>, %arg7: memref<2x256x128xbf16, #tpu.memory_space<vmem>>, %arg8: memref<2x128xf32, #tpu.memory_space<vmem>>, %arg9: memref<2x256x128xbf16, #tpu.memory_space<vmem>>, %arg10: memref<2x128xf32, #tpu.memory_space<vmem>>, %arg11: memref<2x128x256xbf16, #tpu.memory_space<vmem>>, %arg12: memref<1x256xf32, #tpu.memory_space<vmem>>, %arg13: memref<1x256xf32, #tpu.memory_space<vmem>>, %arg14: memref<1x256xf32, #tpu.memory_space<vmem>>, %arg15: memref<256x1024xbf16, #tpu.memory_space<vmem>>, %arg16: memref<1x1024xf32, #tpu.memory_space<vmem>>, %arg17: memref<1024x256xbf16, #tpu.memory_space<vmem>>, %arg18: memref<1x256xf32, #tpu.memory_space<vmem>>, %arg19: memref<1x128x256xf32, #tpu.memory_space<vmem>>, %arg20: memref<2x128x256xbf16, #tpu.memory_space<vmem>>, %arg21: memref<2x256x128xbf16, #tpu.memory_space<vmem>>) attributes {dimension_semantics = [#tpu.dimension_semantics<parallel>, #tpu.dimension_semantics<arbitrary>], iteration_bounds = array<i64: 2, 2>, scalar_prefetch = 0 : i64, scratch_operands = 2 : i64, tpu.core_type = #tpu.core_type<tc>, window_params = [{transform_indices = @transform_0, window_bounds = array<i64: 1, 128, 256>}, {pipeline_mode = #tpu.pipeline_mode<synchronous>, transform_indices = @transform_1, window_bounds = array<i64: 1, 256>}, {pipeline_mode = #tpu.pipeline_mode<synchronous>, transform_indices = @transform_2, window_bounds = array<i64: 1, 256>}, {pipeline_mode = #tpu.pipeline_mode<synchronous>, transform_indices = @transform_3, window_bounds = array<i64: 2, 256, 128>}, {pipeline_mode = #tpu.pipeline_mode<synchronous>, transform_indices = @transform_4, window_bounds = array<i64: 2, 128>}, {pipeline_mode = #tpu.pipeline_mode<synchronous>, transform_indices = @transform_5, window_bounds = array<i64: 2, 256, 128>}, {pipeline_mode = #tpu.pipeline_mode<synchronous>, transform_indices = @transform_6, window_bounds = array<i64: 2, 128>}, {pipeline_mode = #tpu.pipeline_mode<synchronous>, transform_indices = @transform_7, window_bounds = array<i64: 2, 256, 128>}, {pipeline_mode = #tpu.pipeline_mode<synchronous>, transform_indices = @transform_8, window_bounds = array<i64: 2, 128>}, {pipeline_mode = #tpu.pipeline_mode<synchronous>, transform_indices = @transform_9, window_bounds = array<i64: 2, 128, 256>}, {pipeline_mode = #tpu.pipeline_mode<synchronous>, transform_indices = @transform_10, window_bounds = array<i64: 1, 256>}, {pipeline_mode = #tpu.pipeline_mode<synchronous>, transform_indices = @transform_11, window_bounds = array<i64: 1, 256>}, {pipeline_mode = #tpu.pipeline_mode<synchronous>, transform_indices = @transform_12, window_bounds = array<i64: 1, 256>}, {pipeline_mode = #tpu.pipeline_mode<synchronous>, transform_indices = @transform_13, window_bounds = array<i64: 256, 1024>}, {pipeline_mode = #tpu.pipeline_mode<synchronous>, transform_indices = @transform_14, window_bounds = array<i64: 1, 1024>}, {pipeline_mode = #tpu.pipeline_mode<synchronous>, transform_indices = @transform_15, window_bounds = array<i64: 1024, 256>}, {pipeline_mode = #tpu.pipeline_mode<synchronous>, transform_indices = @transform_16, window_bounds = array<i64: 1, 256>}, {transform_indices = @transform_17, window_bounds = array<i64: 1, 128, 256>}]} {
    %c0 = arith.constant 0 : index
    %c0_0 = arith.constant 0 : index
    %c0_1 = arith.constant 0 : index
    %0 = vector.load %arg2[%c0, %c0_0, %c0_1] : memref<1x128x256xf32, #tpu.memory_space<vmem>>, vector<1x128x256xf32>
    %1 = vector.shape_cast %0 : vector<1x128x256xf32> to vector<128x256xf32>
    %c0_2 = arith.constant 0 : index
    %c0_3 = arith.constant 0 : index
    %2 = vector.load %arg3[%c0_2, %c0_3] : memref<1x256xf32, #tpu.memory_space<vmem>>, vector<1x256xf32>
    %3 = vector.shape_cast %2 : vector<1x256xf32> to vector<256xf32>
    %c0_4 = arith.constant 0 : index
    %c0_5 = arith.constant 0 : index
    %4 = vector.load %arg4[%c0_4, %c0_5] : memref<1x256xf32, #tpu.memory_space<vmem>>, vector<1x256xf32>
    %5 = vector.shape_cast %4 : vector<1x256xf32> to vector<256xf32>
    %cst = arith.constant dense<0.000000e+00> : vector<128xf32>
    %6 = vector.multi_reduction <add>, %1, %cst [1] : vector<128x256xf32> to vector<128xf32>
    %7 = vector.shape_cast %6 : vector<128xf32> to vector<128x1xf32>
    %cst_6 = arith.constant 2.560000e+02 : f32
    %8 = vector.broadcast %cst_6 : f32 to vector<128x1xf32>
    %9 = arith.divf %7, %8 : vector<128x1xf32>
    %10 = vector.broadcast %9 : vector<128x1xf32> to vector<128x256xf32>
    %11 = arith.subf %1, %10 : vector<128x256xf32>
    %12 = arith.mulf %11, %11 : vector<128x256xf32>
    %cst_7 = arith.constant dense<0.000000e+00> : vector<128xf32>
    %13 = vector.multi_reduction <add>, %12, %cst_7 [1] : vector<128x256xf32> to vector<128xf32>
    %14 = vector.shape_cast %13 : vector<128xf32> to vector<128x1xf32>
    %cst_8 = arith.constant 2.560000e+02 : f32
    %15 = vector.broadcast %cst_8 : f32 to vector<128x1xf32>
    %16 = arith.divf %14, %15 : vector<128x1xf32>
    %17 = vector.broadcast %9 : vector<128x1xf32> to vector<128x256xf32>
    %18 = arith.subf %1, %17 : vector<128x256xf32>
    %cst_9 = arith.constant 9.99999974E-6 : f32
    %19 = vector.broadcast %cst_9 : f32 to vector<128x1xf32>
    %20 = arith.addf %16, %19 : vector<128x1xf32>
    %21 = math.rsqrt %20 : vector<128x1xf32>
    %22 = vector.broadcast %21 : vector<128x1xf32> to vector<128x256xf32>
    %23 = arith.mulf %18, %22 : vector<128x256xf32>
    %24 = vector.shape_cast %3 : vector<256xf32> to vector<1x256xf32>
    %25 = vector.broadcast %24 : vector<1x256xf32> to vector<128x256xf32>
    %26 = arith.mulf %23, %25 : vector<128x256xf32>
    %27 = vector.shape_cast %5 : vector<256xf32> to vector<1x256xf32>
    %28 = vector.broadcast %27 : vector<1x256xf32> to vector<128x256xf32>
    %29 = arith.addf %26, %28 : vector<128x256xf32>
    %30 = arith.truncf %29 : vector<128x256xf32> to vector<128x256xbf16>
    %c128_i32 = arith.constant 128 : i32
    %31 = arith.muli %arg1, %c128_i32 : i32
    %32 = tpu.assume_multiple %31, 128 : i32
    %c0_10 = arith.constant 0 : index
    %c0_11 = arith.constant 0 : index
    %c0_12 = arith.constant 0 : index
    %33 = vector.load %arg5[%c0_10, %c0_11, %c0_12] : memref<2x256x128xbf16, #tpu.memory_space<vmem>>, vector<1x256x128xbf16>
    %34 = vector.shape_cast %33 : vector<1x256x128xbf16> to vector<256x128xbf16>
    %cst_13 = arith.constant dense<0.000000e+00> : vector<128x128xf32>
    %35 = tpu.matmul %30, %34, %cst_13 {dimension_numbers = #tpu.dot_dimension_numbers<[1], [0], [0], [1], [0, 0, 1, 1], [], []>} : vector<128x256xbf16>, vector<256x128xbf16>, vector<128x128xf32> -> vector<128x128xf32>
    %c0_14 = arith.constant 0 : index
    %c0_15 = arith.constant 0 : index
    %36 = vector.load %arg6[%c0_14, %c0_15] : memref<2x128xf32, #tpu.memory_space<vmem>>, vector<1x128xf32>
    %37 = vector.shape_cast %36 : vector<1x128xf32> to vector<128xf32>
    %38 = vector.shape_cast %37 : vector<128xf32> to vector<1x128xf32>
    %39 = vector.broadcast %38 : vector<1x128xf32> to vector<128x128xf32>
    %40 = arith.addf %35, %39 : vector<128x128xf32>
    %cst_16 = arith.constant 0.0883883461 : f32
    %41 = vector.broadcast %cst_16 : f32 to vector<128x128xf32>
    %42 = arith.mulf %40, %41 : vector<128x128xf32>
    %43 = arith.truncf %42 : vector<128x128xf32> to vector<128x128xbf16>
    %c0_17 = arith.constant 0 : index
    %c0_18 = arith.constant 0 : index
    %c0_19 = arith.constant 0 : index
    %44 = vector.load %arg7[%c0_17, %c0_18, %c0_19] : memref<2x256x128xbf16, #tpu.memory_space<vmem>>, vector<1x256x128xbf16>
    %45 = vector.shape_cast %44 : vector<1x256x128xbf16> to vector<256x128xbf16>
    %cst_20 = arith.constant dense<0.000000e+00> : vector<128x128xf32>
    %46 = tpu.matmul %30, %45, %cst_20 {dimension_numbers = #tpu.dot_dimension_numbers<[1], [0], [0], [1], [0, 0, 1, 1], [], []>} : vector<128x256xbf16>, vector<256x128xbf16>, vector<128x128xf32> -> vector<128x128xf32>
    %c0_21 = arith.constant 0 : index
    %c0_22 = arith.constant 0 : index
    %47 = vector.load %arg8[%c0_21, %c0_22] : memref<2x128xf32, #tpu.memory_space<vmem>>, vector<1x128xf32>
    %48 = vector.shape_cast %47 : vector<1x128xf32> to vector<128xf32>
    %49 = vector.shape_cast %48 : vector<128xf32> to vector<1x128xf32>
    %50 = vector.broadcast %49 : vector<1x128xf32> to vector<128x128xf32>
    %51 = arith.addf %46, %50 : vector<128x128xf32>
    %c0_23 = arith.constant 0 : index
    %c0_24 = arith.constant 0 : index
    %c0_25 = arith.constant 0 : index
    %52 = vector.load %arg9[%c0_23, %c0_24, %c0_25] : memref<2x256x128xbf16, #tpu.memory_space<vmem>>, vector<1x256x128xbf16>
    %53 = vector.shape_cast %52 : vector<1x256x128xbf16> to vector<256x128xbf16>
    %cst_26 = arith.constant dense<0.000000e+00> : vector<128x128xf32>
    %54 = tpu.matmul %30, %53, %cst_26 {dimension_numbers = #tpu.dot_dimension_numbers<[1], [0], [0], [1], [0, 0, 1, 1], [], []>} : vector<128x256xbf16>, vector<256x128xbf16>, vector<128x128xf32> -> vector<128x128xf32>
    %c0_27 = arith.constant 0 : index
    %c0_28 = arith.constant 0 : index
    %55 = vector.load %arg10[%c0_27, %c0_28] : memref<2x128xf32, #tpu.memory_space<vmem>>, vector<1x128xf32>
    %56 = vector.shape_cast %55 : vector<1x128xf32> to vector<128xf32>
    %57 = vector.shape_cast %56 : vector<128xf32> to vector<1x128xf32>
    %58 = vector.broadcast %57 : vector<1x128xf32> to vector<128x128xf32>
    %59 = arith.addf %54, %58 : vector<128x128xf32>
    %60 = tpu.transpose %51, [1, 0] : vector<128x128xf32> -> vector<128x128xf32>
    %61 = arith.truncf %60 : vector<128x128xf32> to vector<128x128xbf16>
    %c0_29 = arith.constant 0 : index
    %c0_30 = arith.constant 0 : index
    %62 = arith.index_cast %32 : i32 to index
    %63 = vector.load %arg20[%c0_29, %c0_30, %62] : memref<2x128x256xbf16, #tpu.memory_space<vmem>>, vector<1x128x128xbf16>
    %64 = vector.shape_cast %63 : vector<1x128x128xbf16> to vector<128x128xbf16>
    %65 = vector.shape_cast %61 : vector<128x128xbf16> to vector<1x128x128xbf16>
    tpu.vector_store %arg20[%c0_29, %c0_30, %62], %65 {strides = array<i32>} : memref<2x128x256xbf16, #tpu.memory_space<vmem>>, vector<1x128x128xbf16>,
    %66 = arith.truncf %59 : vector<128x128xf32> to vector<128x128xbf16>
    %c0_31 = arith.constant 0 : index
    %67 = arith.index_cast %32 : i32 to index
    %c0_32 = arith.constant 0 : index
    %68 = vector.load %arg21[%c0_31, %67, %c0_32] : memref<2x256x128xbf16, #tpu.memory_space<vmem>>, vector<1x128x128xbf16>
    %69 = vector.shape_cast %68 : vector<1x128x128xbf16> to vector<128x128xbf16>
    %70 = vector.shape_cast %66 : vector<128x128xbf16> to vector<1x128x128xbf16>
    tpu.vector_store %arg21[%c0_31, %67, %c0_32], %70 {strides = array<i32>} : memref<2x256x128xbf16, #tpu.memory_space<vmem>>, vector<1x128x128xbf16>,
    %c1 = arith.constant 1 : index
    %c0_33 = arith.constant 0 : index
    %c0_34 = arith.constant 0 : index
    %71 = vector.load %arg5[%c1, %c0_33, %c0_34] : memref<2x256x128xbf16, #tpu.memory_space<vmem>>, vector<1x256x128xbf16>
    %72 = vector.shape_cast %71 : vector<1x256x128xbf16> to vector<256x128xbf16>
    %cst_35 = arith.constant dense<0.000000e+00> : vector<128x128xf32>
    %73 = tpu.matmul %30, %72, %cst_35 {dimension_numbers = #tpu.dot_dimension_numbers<[1], [0], [0], [1], [0, 0, 1, 1], [], []>} : vector<128x256xbf16>, vector<256x128xbf16>, vector<128x128xf32> -> vector<128x128xf32>
    %c1_36 = arith.constant 1 : index
    %c0_37 = arith.constant 0 : index
    %74 = vector.load %arg6[%c1_36, %c0_37] : memref<2x128xf32, #tpu.memory_space<vmem>>, vector<1x128xf32>
    %75 = vector.shape_cast %74 : vector<1x128xf32> to vector<128xf32>
    %76 = vector.shape_cast %75 : vector<128xf32> to vector<1x128xf32>
    %77 = vector.broadcast %76 : vector<1x128xf32> to vector<128x128xf32>
    %78 = arith.addf %73, %77 : vector<128x128xf32>
    %cst_38 = arith.constant 0.0883883461 : f32
    %79 = vector.broadcast %cst_38 : f32 to vector<128x128xf32>
    %80 = arith.mulf %78, %79 : vector<128x128xf32>
    %81 = arith.truncf %80 : vector<128x128xf32> to vector<128x128xbf16>
    %c1_39 = arith.constant 1 : index
    %c0_40 = arith.constant 0 : index
    %c0_41 = arith.constant 0 : index
    %82 = vector.load %arg7[%c1_39, %c0_40, %c0_41] : memref<2x256x128xbf16, #tpu.memory_space<vmem>>, vector<1x256x128xbf16>
    %83 = vector.shape_cast %82 : vector<1x256x128xbf16> to vector<256x128xbf16>
    %cst_42 = arith.constant dense<0.000000e+00> : vector<128x128xf32>
    %84 = tpu.matmul %30, %83, %cst_42 {dimension_numbers = #tpu.dot_dimension_numbers<[1], [0], [0], [1], [0, 0, 1, 1], [], []>} : vector<128x256xbf16>, vector<256x128xbf16>, vector<128x128xf32> -> vector<128x128xf32>
    %c1_43 = arith.constant 1 : index
    %c0_44 = arith.constant 0 : index
    %85 = vector.load %arg8[%c1_43, %c0_44] : memref<2x128xf32, #tpu.memory_space<vmem>>, vector<1x128xf32>
    %86 = vector.shape_cast %85 : vector<1x128xf32> to vector<128xf32>
    %87 = vector.shape_cast %86 : vector<128xf32> to vector<1x128xf32>
    %88 = vector.broadcast %87 : vector<1x128xf32> to vector<128x128xf32>
    %89 = arith.addf %84, %88 : vector<128x128xf32>
    %c1_45 = arith.constant 1 : index
    %c0_46 = arith.constant 0 : index
    %c0_47 = arith.constant 0 : index
    %90 = vector.load %arg9[%c1_45, %c0_46, %c0_47] : memref<2x256x128xbf16, #tpu.memory_space<vmem>>, vector<1x256x128xbf16>
    %91 = vector.shape_cast %90 : vector<1x256x128xbf16> to vector<256x128xbf16>
    %cst_48 = arith.constant dense<0.000000e+00> : vector<128x128xf32>
    %92 = tpu.matmul %30, %91, %cst_48 {dimension_numbers = #tpu.dot_dimension_numbers<[1], [0], [0], [1], [0, 0, 1, 1], [], []>} : vector<128x256xbf16>, vector<256x128xbf16>, vector<128x128xf32> -> vector<128x128xf32>
    %c1_49 = arith.constant 1 : index
    %c0_50 = arith.constant 0 : index
    %93 = vector.load %arg10[%c1_49, %c0_50] : memref<2x128xf32, #tpu.memory_space<vmem>>, vector<1x128xf32>
    %94 = vector.shape_cast %93 : vector<1x128xf32> to vector<128xf32>
    %95 = vector.shape_cast %94 : vector<128xf32> to vector<1x128xf32>
    %96 = vector.broadcast %95 : vector<1x128xf32> to vector<128x128xf32>
    %97 = arith.addf %92, %96 : vector<128x128xf32>
    %98 = tpu.transpose %89, [1, 0] : vector<128x128xf32> -> vector<128x128xf32>
    %99 = arith.truncf %98 : vector<128x128xf32> to vector<128x128xbf16>
    %c1_51 = arith.constant 1 : index
    %c0_52 = arith.constant 0 : index
    %100 = arith.index_cast %32 : i32 to index
    %101 = vector.load %arg20[%c1_51, %c0_52, %100] : memref<2x128x256xbf16, #tpu.memory_space<vmem>>, vector<1x128x128xbf16>
    %102 = vector.shape_cast %101 : vector<1x128x128xbf16> to vector<128x128xbf16>
    %103 = vector.shape_cast %99 : vector<128x128xbf16> to vector<1x128x128xbf16>
    tpu.vector_store %arg20[%c1_51, %c0_52, %100], %103 {strides = array<i32>} : memref<2x128x256xbf16, #tpu.memory_space<vmem>>, vector<1x128x128xbf16>,
    %104 = arith.truncf %97 : vector<128x128xf32> to vector<128x128xbf16>
    %c1_53 = arith.constant 1 : index
    %105 = arith.index_cast %32 : i32 to index
    %c0_54 = arith.constant 0 : index
    %106 = vector.load %arg21[%c1_53, %105, %c0_54] : memref<2x256x128xbf16, #tpu.memory_space<vmem>>, vector<1x128x128xbf16>
    %107 = vector.shape_cast %106 : vector<1x128x128xbf16> to vector<128x128xbf16>
    %108 = vector.shape_cast %104 : vector<128x128xbf16> to vector<1x128x128xbf16>
    tpu.vector_store %arg21[%c1_53, %105, %c0_54], %108 {strides = array<i32>} : memref<2x256x128xbf16, #tpu.memory_space<vmem>>, vector<1x128x128xbf16>,
    %109 = vector.shape_cast %43 : vector<128x128xbf16> to vector<1x128x128xbf16>
    %110 = vector.shape_cast %81 : vector<128x128xbf16> to vector<1x128x128xbf16>
    %111 = tpu.concatenate %109, %110 in 0 : vector<1x128x128xbf16>, vector<1x128x128xbf16> -> vector<2x128x128xbf16>
    %cst_55 = arith.constant 0xFF800000 : f32
    %112 = vector.broadcast %cst_55 : f32 to vector<2x128x1xf32>
    %cst_56 = arith.constant 0.000000e+00 : f32
    %113 = vector.broadcast %cst_56 : f32 to vector<2x128x1xf32>
    %cst_57 = arith.constant 0.000000e+00 : f32
    %114 = vector.broadcast %cst_57 : f32 to vector<2x128x128xf32>
    %c0_i32 = arith.constant 0 : i32
    %115 = arith.subi %arg1, %c0_i32 : i32
    %116 = arith.addi %c0_i32, %115 : i32
    %c1_i32 = arith.constant 1 : i32
    %117:3 = scf.for %arg22 = %c0_i32 to %116 step %c1_i32 iter_args(%arg23 = %112, %arg24 = %113, %arg25 = %114) -> (vector<2x128x1xf32>, vector<2x128x1xf32>, vector<2x128x128xf32>)  : i32 {
      %c128_i32_104 = arith.constant 128 : i32
      %232 = arith.muli %arg22, %c128_i32_104 : i32
      %233 = tpu.assume_multiple %232, 128 : i32
      %c0_105 = arith.constant 0 : index
      %c0_106 = arith.constant 0 : index
      %234 = arith.index_cast %233 : i32 to index
      %235 = vector.load %arg20[%c0_105, %c0_106, %234] : memref<2x128x256xbf16, #tpu.memory_space<vmem>>, vector<2x128x128xbf16>
      %c0_107 = arith.constant 0 : index
      %236 = arith.index_cast %233 : i32 to index
      %c0_108 = arith.constant 0 : index
      %237 = vector.load %arg21[%c0_107, %236, %c0_108] : memref<2x256x128xbf16, #tpu.memory_space<vmem>>, vector<2x128x128xbf16>
      "tpu.trace_start"() <{level = 10 : i32, message = "htd,hds->hts"}> : () -> ()
      %cst_109 = arith.constant dense<0.000000e+00> : vector<2x128x128xf32>
      %238 = tpu.matmul %111, %235, %cst_109 {dimension_numbers = #tpu.dot_dimension_numbers<[2], [1], [1], [2], [0, 0, 0, 1, 1, 2], [0], [0]>} : vector<2x128x128xbf16>, vector<2x128x128xbf16>, vector<2x128x128xf32> -> vector<2x128x128xf32>
      "tpu.trace_stop"() : () -> ()
      %cst_110 = arith.constant dense<0xFF800000> : vector<2x128xf32>
      %239 = vector.multi_reduction <maximumf>, %238, %cst_110 [2] : vector<2x128x128xf32> to vector<2x128xf32>
      %240 = vector.shape_cast %239 : vector<2x128xf32> to vector<2x128x1xf32>
      %241 = arith.maximumf %arg23, %240 : vector<2x128x1xf32>
      %242 = arith.subf %arg23, %241 : vector<2x128x1xf32>
      %243 = math.exp %242 : vector<2x128x1xf32>
      %244 = vector.broadcast %241 : vector<2x128x1xf32> to vector<2x128x128xf32>
      %245 = arith.subf %238, %244 : vector<2x128x128xf32>
      %246 = math.exp %245 : vector<2x128x128xf32>
      %247 = arith.mulf %243, %arg24 : vector<2x128x1xf32>
      %cst_111 = arith.constant dense<0.000000e+00> : vector<2x128xf32>
      %248 = vector.multi_reduction <add>, %246, %cst_111 [2] : vector<2x128x128xf32> to vector<2x128xf32>
      %249 = vector.shape_cast %248 : vector<2x128xf32> to vector<2x128x1xf32>
      %250 = arith.addf %247, %249 : vector<2x128x1xf32>
      %251 = vector.broadcast %243 : vector<2x128x1xf32> to vector<2x128x128xf32>
      %252 = arith.mulf %251, %arg25 : vector<2x128x128xf32>
      %253 = arith.truncf %246 : vector<2x128x128xf32> to vector<2x128x128xbf16>
      "tpu.trace_start"() <{level = 10 : i32, message = "hts,hsd->htd"}> : () -> ()
      %cst_112 = arith.constant dense<0.000000e+00> : vector<2x128x128xf32>
      %254 = tpu.matmul %253, %237, %cst_112 {dimension_numbers = #tpu.dot_dimension_numbers<[2], [1], [1], [2], [0, 0, 0, 1, 1, 2], [0], [0]>} : vector<2x128x128xbf16>, vector<2x128x128xbf16>, vector<2x128x128xf32> -> vector<2x128x128xf32>
      "tpu.trace_stop"() : () -> ()
      %255 = arith.addf %252, %254 : vector<2x128x128xf32>
      scf.yield %241, %250, %255 : vector<2x128x1xf32>, vector<2x128x1xf32>, vector<2x128x128xf32>
    }
    %c128_i32_58 = arith.constant 128 : i32
    %118 = arith.muli %arg1, %c128_i32_58 : i32
    %119 = tpu.assume_multiple %118, 128 : i32
    %c0_59 = arith.constant 0 : index
    %c0_60 = arith.constant 0 : index
    %120 = arith.index_cast %119 : i32 to index
    %121 = vector.load %arg20[%c0_59, %c0_60, %120] : memref<2x128x256xbf16, #tpu.memory_space<vmem>>, vector<2x128x128xbf16>
    %c0_61 = arith.constant 0 : index
    %122 = arith.index_cast %119 : i32 to index
    %c0_62 = arith.constant 0 : index
    %123 = vector.load %arg21[%c0_61, %122, %c0_62] : memref<2x256x128xbf16, #tpu.memory_space<vmem>>, vector<2x128x128xbf16>
    "tpu.trace_start"() <{level = 10 : i32, message = "htd,hds->hts"}> : () -> ()
    %cst_63 = arith.constant dense<0.000000e+00> : vector<2x128x128xf32>
    %124 = tpu.matmul %111, %121, %cst_63 {dimension_numbers = #tpu.dot_dimension_numbers<[2], [1], [1], [2], [0, 0, 0, 1, 1, 2], [0], [0]>} : vector<2x128x128xbf16>, vector<2x128x128xbf16>, vector<2x128x128xf32> -> vector<2x128x128xf32>
    "tpu.trace_stop"() : () -> ()
    %125 = tpu.iota {dimensions = array<i32: 0>} : vector<128x128xi32>
    %126 = tpu.iota {dimensions = array<i32: 1>} : vector<128x128xi32>
    %127 = arith.cmpi sge, %125, %126 : vector<128x128xi32>
    %128 = vector.shape_cast %127 : vector<128x128xi1> to vector<1x128x128xi1>
    %cst_64 = arith.constant 0xFF800000 : f32
    %129 = vector.shape_cast %128 : vector<1x128x128xi1> to vector<1x128x128xi1>
    %130 = vector.broadcast %129 : vector<1x128x128xi1> to vector<2x128x128xi1>
    %131 = vector.broadcast %cst_64 : f32 to vector<2x128x128xf32>
    %132 = arith.select %130, %124, %131 : vector<2x128x128xi1>, vector<2x128x128xf32>
    %cst_65 = arith.constant dense<0xFF800000> : vector<2x128xf32>
    %133 = vector.multi_reduction <maximumf>, %132, %cst_65 [2] : vector<2x128x128xf32> to vector<2x128xf32>
    %134 = vector.shape_cast %133 : vector<2x128xf32> to vector<2x128x1xf32>
    %135 = arith.maximumf %117#0, %134 : vector<2x128x1xf32>
    %136 = arith.subf %117#0, %135 : vector<2x128x1xf32>
    %137 = math.exp %136 : vector<2x128x1xf32>
    %138 = vector.broadcast %135 : vector<2x128x1xf32> to vector<2x128x128xf32>
    %139 = arith.subf %132, %138 : vector<2x128x128xf32>
    %140 = math.exp %139 : vector<2x128x128xf32>
    %141 = arith.mulf %137, %117#1 : vector<2x128x1xf32>
    %cst_66 = arith.constant dense<0.000000e+00> : vector<2x128xf32>
    %142 = vector.multi_reduction <add>, %140, %cst_66 [2] : vector<2x128x128xf32> to vector<2x128xf32>
    %143 = vector.shape_cast %142 : vector<2x128xf32> to vector<2x128x1xf32>
    %144 = arith.addf %141, %143 : vector<2x128x1xf32>
    %145 = vector.broadcast %137 : vector<2x128x1xf32> to vector<2x128x128xf32>
    %146 = arith.mulf %145, %117#2 : vector<2x128x128xf32>
    %147 = arith.truncf %140 : vector<2x128x128xf32> to vector<2x128x128xbf16>
    "tpu.trace_start"() <{level = 10 : i32, message = "hts,hsd->htd"}> : () -> ()
    %cst_67 = arith.constant dense<0.000000e+00> : vector<2x128x128xf32>
    %148 = tpu.matmul %147, %123, %cst_67 {dimension_numbers = #tpu.dot_dimension_numbers<[2], [1], [1], [2], [0, 0, 0, 1, 1, 2], [0], [0]>} : vector<2x128x128xbf16>, vector<2x128x128xbf16>, vector<2x128x128xf32> -> vector<2x128x128xf32>
    "tpu.trace_stop"() : () -> ()
    %149 = arith.addf %146, %148 : vector<2x128x128xf32>
    %150 = tpu.reciprocal %144 {approx = true} : vector<2x128x1xf32> -> vector<2x128x1xf32>
    %151 = vector.broadcast %150 : vector<2x128x1xf32> to vector<2x128x128xf32>
    %152 = arith.mulf %149, %151 : vector<2x128x128xf32>
    %153 = arith.truncf %152 : vector<2x128x128xf32> to vector<2x128x128xbf16>
    %154 = vector.extract_strided_slice %153 {offsets = [0, 0, 0], sizes = [1, 128, 128], strides = [1, 1, 1]} : vector<2x128x128xbf16> to vector<1x128x128xbf16>
    %155 = vector.shape_cast %154 : vector<1x128x128xbf16> to vector<128x128xbf16>
    %c0_68 = arith.constant 0 : index
    %c0_69 = arith.constant 0 : index
    %c0_70 = arith.constant 0 : index
    %156 = vector.load %arg11[%c0_68, %c0_69, %c0_70] : memref<2x128x256xbf16, #tpu.memory_space<vmem>>, vector<1x128x256xbf16>
    %157 = vector.shape_cast %156 : vector<1x128x256xbf16> to vector<128x256xbf16>
    %cst_71 = arith.constant dense<0.000000e+00> : vector<128x256xf32>
    %158 = tpu.matmul %155, %157, %cst_71 {dimension_numbers = #tpu.dot_dimension_numbers<[1], [0], [0], [1], [0, 0, 1, 1], [], []>} : vector<128x128xbf16>, vector<128x256xbf16>, vector<128x256xf32> -> vector<128x256xf32>
    %159 = vector.extract_strided_slice %153 {offsets = [1, 0, 0], sizes = [1, 128, 128], strides = [1, 1, 1]} : vector<2x128x128xbf16> to vector<1x128x128xbf16>
    %160 = vector.shape_cast %159 : vector<1x128x128xbf16> to vector<128x128xbf16>
    %c1_72 = arith.constant 1 : index
    %c0_73 = arith.constant 0 : index
    %c0_74 = arith.constant 0 : index
    %161 = vector.load %arg11[%c1_72, %c0_73, %c0_74] : memref<2x128x256xbf16, #tpu.memory_space<vmem>>, vector<1x128x256xbf16>
    %162 = vector.shape_cast %161 : vector<1x128x256xbf16> to vector<128x256xbf16>
    %cst_75 = arith.constant dense<0.000000e+00> : vector<128x256xf32>
    %163 = tpu.matmul %160, %162, %cst_75 {dimension_numbers = #tpu.dot_dimension_numbers<[1], [0], [0], [1], [0, 0, 1, 1], [], []>} : vector<128x128xbf16>, vector<128x256xbf16>, vector<128x256xf32> -> vector<128x256xf32>
    %164 = arith.addf %158, %163 : vector<128x256xf32>
    %165 = arith.addf %1, %164 : vector<128x256xf32>
    %c0_76 = arith.constant 0 : index
    %c0_77 = arith.constant 0 : index
    %166 = vector.load %arg12[%c0_76, %c0_77] : memref<1x256xf32, #tpu.memory_space<vmem>>, vector<1x256xf32>
    %167 = vector.shape_cast %166 : vector<1x256xf32> to vector<256xf32>
    %168 = vector.shape_cast %167 : vector<256xf32> to vector<1x256xf32>
    %169 = vector.broadcast %168 : vector<1x256xf32> to vector<128x256xf32>
    %170 = arith.addf %165, %169 : vector<128x256xf32>
    %c0_78 = arith.constant 0 : index
    %c0_79 = arith.constant 0 : index
    %171 = vector.load %arg13[%c0_78, %c0_79] : memref<1x256xf32, #tpu.memory_space<vmem>>, vector<1x256xf32>
    %172 = vector.shape_cast %171 : vector<1x256xf32> to vector<256xf32>
    %c0_80 = arith.constant 0 : index
    %c0_81 = arith.constant 0 : index
    %173 = vector.load %arg14[%c0_80, %c0_81] : memref<1x256xf32, #tpu.memory_space<vmem>>, vector<1x256xf32>
    %174 = vector.shape_cast %173 : vector<1x256xf32> to vector<256xf32>
    %cst_82 = arith.constant dense<0.000000e+00> : vector<128xf32>
    %175 = vector.multi_reduction <add>, %170, %cst_82 [1] : vector<128x256xf32> to vector<128xf32>
    %176 = vector.shape_cast %175 : vector<128xf32> to vector<128x1xf32>
    %cst_83 = arith.constant 2.560000e+02 : f32
    %177 = vector.broadcast %cst_83 : f32 to vector<128x1xf32>
    %178 = arith.divf %176, %177 : vector<128x1xf32>
    %179 = vector.broadcast %178 : vector<128x1xf32> to vector<128x256xf32>
    %180 = arith.subf %170, %179 : vector<128x256xf32>
    %181 = arith.mulf %180, %180 : vector<128x256xf32>
    %cst_84 = arith.constant dense<0.000000e+00> : vector<128xf32>
    %182 = vector.multi_reduction <add>, %181, %cst_84 [1] : vector<128x256xf32> to vector<128xf32>
    %183 = vector.shape_cast %182 : vector<128xf32> to vector<128x1xf32>
    %cst_85 = arith.constant 2.560000e+02 : f32
    %184 = vector.broadcast %cst_85 : f32 to vector<128x1xf32>
    %185 = arith.divf %183, %184 : vector<128x1xf32>
    %186 = vector.broadcast %178 : vector<128x1xf32> to vector<128x256xf32>
    %187 = arith.subf %170, %186 : vector<128x256xf32>
    %cst_86 = arith.constant 9.99999974E-6 : f32
    %188 = vector.broadcast %cst_86 : f32 to vector<128x1xf32>
    %189 = arith.addf %185, %188 : vector<128x1xf32>
    %190 = math.rsqrt %189 : vector<128x1xf32>
    %191 = vector.broadcast %190 : vector<128x1xf32> to vector<128x256xf32>
    %192 = arith.mulf %187, %191 : vector<128x256xf32>
    %193 = vector.shape_cast %172 : vector<256xf32> to vector<1x256xf32>
    %194 = vector.broadcast %193 : vector<1x256xf32> to vector<128x256xf32>
    %195 = arith.mulf %192, %194 : vector<128x256xf32>
    %196 = vector.shape_cast %174 : vector<256xf32> to vector<1x256xf32>
    %197 = vector.broadcast %196 : vector<1x256xf32> to vector<128x256xf32>
    %198 = arith.addf %195, %197 : vector<128x256xf32>
    %199 = arith.truncf %198 : vector<128x256xf32> to vector<128x256xbf16>
    %c0_87 = arith.constant 0 : index
    %c0_88 = arith.constant 0 : index
    %200 = vector.load %arg15[%c0_87, %c0_88] : memref<256x1024xbf16, #tpu.memory_space<vmem>>, vector<256x1024xbf16>
    %cst_89 = arith.constant dense<0.000000e+00> : vector<128x1024xf32>
    %201 = tpu.matmul %199, %200, %cst_89 {dimension_numbers = #tpu.dot_dimension_numbers<[1], [0], [0], [1], [0, 0, 1, 1], [], []>} : vector<128x256xbf16>, vector<256x1024xbf16>, vector<128x1024xf32> -> vector<128x1024xf32>
    %c0_90 = arith.constant 0 : index
    %c0_91 = arith.constant 0 : index
    %202 = vector.load %arg16[%c0_90, %c0_91] : memref<1x1024xf32, #tpu.memory_space<vmem>>, vector<1x1024xf32>
    %203 = vector.shape_cast %202 : vector<1x1024xf32> to vector<1024xf32>
    %204 = vector.shape_cast %203 : vector<1024xf32> to vector<1x1024xf32>
    %205 = vector.broadcast %204 : vector<1x1024xf32> to vector<128x1024xf32>
    %206 = arith.addf %201, %205 : vector<128x1024xf32>
    %cst_92 = arith.constant 5.000000e-01 : f32
    %207 = vector.broadcast %cst_92 : f32 to vector<128x1024xf32>
    %208 = arith.mulf %207, %206 : vector<128x1024xf32>
    %cst_93 = arith.constant 4.471500e-02 : f32
    %209 = vector.broadcast %cst_93 : f32 to vector<128x1024xf32>
    %210 = arith.mulf %209, %206 : vector<128x1024xf32>
    %211 = arith.mulf %210, %206 : vector<128x1024xf32>
    %212 = arith.mulf %211, %206 : vector<128x1024xf32>
    %213 = arith.addf %206, %212 : vector<128x1024xf32>
    %cst_94 = arith.constant 0.797884583 : f32
    %214 = vector.broadcast %cst_94 : f32 to vector<128x1024xf32>
    %215 = arith.mulf %214, %213 : vector<128x1024xf32>
    %216 = math.tanh %215 : vector<128x1024xf32>
    %cst_95 = arith.constant 1.000000e+00 : f32
    %217 = vector.broadcast %cst_95 : f32 to vector<128x1024xf32>
    %218 = arith.addf %217, %216 : vector<128x1024xf32>
    %219 = arith.mulf %208, %218 : vector<128x1024xf32>
    %220 = arith.truncf %219 : vector<128x1024xf32> to vector<128x1024xbf16>
    %c0_96 = arith.constant 0 : index
    %c0_97 = arith.constant 0 : index
    %221 = vector.load %arg17[%c0_96, %c0_97] : memref<1024x256xbf16, #tpu.memory_space<vmem>>, vector<1024x256xbf16>
    %cst_98 = arith.constant dense<0.000000e+00> : vector<128x256xf32>
    %222 = tpu.matmul %220, %221, %cst_98 {dimension_numbers = #tpu.dot_dimension_numbers<[1], [0], [0], [1], [0, 0, 1, 1], [], []>} : vector<128x1024xbf16>, vector<1024x256xbf16>, vector<128x256xf32> -> vector<128x256xf32>
    %c0_99 = arith.constant 0 : index
    %c0_100 = arith.constant 0 : index
    %223 = vector.load %arg18[%c0_99, %c0_100] : memref<1x256xf32, #tpu.memory_space<vmem>>, vector<1x256xf32>
    %224 = vector.shape_cast %223 : vector<1x256xf32> to vector<256xf32>
    %225 = vector.shape_cast %224 : vector<256xf32> to vector<1x256xf32>
    %226 = vector.broadcast %225 : vector<1x256xf32> to vector<128x256xf32>
    %227 = arith.addf %222, %226 : vector<128x256xf32>
    %228 = arith.addf %170, %227 : vector<128x256xf32>
    %c0_101 = arith.constant 0 : index
    %c0_102 = arith.constant 0 : index
    %c0_103 = arith.constant 0 : index
    %229 = vector.load %arg19[%c0_101, %c0_102, %c0_103] : memref<1x128x256xf32, #tpu.memory_space<vmem>>, vector<1x128x256xf32>
    %230 = vector.shape_cast %229 : vector<1x128x256xf32> to vector<128x256xf32>
    %231 = vector.shape_cast %228 : vector<128x256xf32> to vector<1x128x256xf32>
    tpu.vector_store %arg19[%c0_101, %c0_102, %c0_103], %231 {strides = array<i32>} : memref<1x128x256xf32, #tpu.memory_space<vmem>>, vector<1x128x256xf32>,
    return
  }
  func.func @transform_0(%arg0: i32, %arg1: i32) -> (i32, i32, i32) {
    %c0_i32 = arith.constant 0 : i32
    %c0_i32_0 = arith.constant 0 : i32
    return %arg0, %arg1, %c0_i32 : i32, i32, i32
  }
  func.func @transform_1(%arg0: i32, %arg1: i32) -> (i32, i32) {
    %c0_i32 = arith.constant 0 : i32
    %c0_i32_0 = arith.constant 0 : i32
    %c0_i32_1 = arith.constant 0 : i32
    return %c0_i32, %c0_i32_0 : i32, i32
  }
  func.func @transform_2(%arg0: i32, %arg1: i32) -> (i32, i32) {
    %c0_i32 = arith.constant 0 : i32
    %c0_i32_0 = arith.constant 0 : i32
    %c0_i32_1 = arith.constant 0 : i32
    return %c0_i32, %c0_i32_0 : i32, i32
  }
  func.func @transform_3(%arg0: i32, %arg1: i32) -> (i32, i32, i32) {
    %c0_i32 = arith.constant 0 : i32
    %c0_i32_0 = arith.constant 0 : i32
    %c0_i32_1 = arith.constant 0 : i32
    %c0_i32_2 = arith.constant 0 : i32
    return %c0_i32, %c0_i32_0, %c0_i32_1 : i32, i32, i32
  }
  func.func @transform_4(%arg0: i32, %arg1: i32) -> (i32, i32) {
    %c0_i32 = arith.constant 0 : i32
    %c0_i32_0 = arith.constant 0 : i32
    %c0_i32_1 = arith.constant 0 : i32
    return %c0_i32, %c0_i32_0 : i32, i32
  }
  func.func @transform_5(%arg0: i32, %arg1: i32) -> (i32, i32, i32) {
    %c0_i32 = arith.constant 0 : i32
    %c0_i32_0 = arith.constant 0 : i32
    %c0_i32_1 = arith.constant 0 : i32
    %c0_i32_2 = arith.constant 0 : i32
    return %c0_i32, %c0_i32_0, %c0_i32_1 : i32, i32, i32
  }
  func.func @transform_6(%arg0: i32, %arg1: i32) -> (i32, i32) {
    %c0_i32 = arith.constant 0 : i32
    %c0_i32_0 = arith.constant 0 : i32
    %c0_i32_1 = arith.constant 0 : i32
    return %c0_i32, %c0_i32_0 : i32, i32
  }
  func.func @transform_7(%arg0: i32, %arg1: i32) -> (i32, i32, i32) {
    %c0_i32 = arith.constant 0 : i32
    %c0_i32_0 = arith.constant 0 : i32
    %c0_i32_1 = arith.constant 0 : i32
    %c0_i32_2 = arith.constant 0 : i32
    return %c0_i32, %c0_i32_0, %c0_i32_1 : i32, i32, i32
  }
  func.func @transform_8(%arg0: i32, %arg1: i32) -> (i32, i32) {
    %c0_i32 = arith.constant 0 : i32
    %c0_i32_0 = arith.constant 0 : i32
    %c0_i32_1 = arith.constant 0 : i32
    return %c0_i32, %c0_i32_0 : i32, i32
  }
  func.func @transform_9(%arg0: i32, %arg1: i32) -> (i32, i32, i32) {
    %c0_i32 = arith.constant 0 : i32
    %c0_i32_0 = arith.constant 0 : i32
    %c0_i32_1 = arith.constant 0 : i32
    %c0_i32_2 = arith.constant 0 : i32
    return %c0_i32, %c0_i32_0, %c0_i32_1 : i32, i32, i32
  }
  func.func @transform_10(%arg0: i32, %arg1: i32) -> (i32, i32) {
    %c0_i32 = arith.constant 0 : i32
    %c0_i32_0 = arith.constant 0 : i32
    %c0_i32_1 = arith.constant 0 : i32
    return %c0_i32, %c0_i32_0 : i32, i32
  }
  func.func @transform_11(%arg0: i32, %arg1: i32) -> (i32, i32) {
    %c0_i32 = arith.constant 0 : i32
    %c0_i32_0 = arith.constant 0 : i32
    %c0_i32_1 = arith.constant 0 : i32
    return %c0_i32, %c0_i32_0 : i32, i32
  }
  func.func @transform_12(%arg0: i32, %arg1: i32) -> (i32, i32) {
    %c0_i32 = arith.constant 0 : i32
    %c0_i32_0 = arith.constant 0 : i32
    %c0_i32_1 = arith.constant 0 : i32
    return %c0_i32, %c0_i32_0 : i32, i32
  }
  func.func @transform_13(%arg0: i32, %arg1: i32) -> (i32, i32) {
    %c0_i32 = arith.constant 0 : i32
    %c0_i32_0 = arith.constant 0 : i32
    %c0_i32_1 = arith.constant 0 : i32
    return %c0_i32, %c0_i32_0 : i32, i32
  }
  func.func @transform_14(%arg0: i32, %arg1: i32) -> (i32, i32) {
    %c0_i32 = arith.constant 0 : i32
    %c0_i32_0 = arith.constant 0 : i32
    %c0_i32_1 = arith.constant 0 : i32
    return %c0_i32, %c0_i32_0 : i32, i32
  }
  func.func @transform_15(%arg0: i32, %arg1: i32) -> (i32, i32) {
    %c0_i32 = arith.constant 0 : i32
    %c0_i32_0 = arith.constant 0 : i32
    %c0_i32_1 = arith.constant 0 : i32
    return %c0_i32, %c0_i32_0 : i32, i32
  }
  func.func @transform_16(%arg0: i32, %arg1: i32) -> (i32, i32) {
    %c0_i32 = arith.constant 0 : i32
    %c0_i32_0 = arith.constant 0 : i32
    %c0_i32_1 = arith.constant 0 : i32
    return %c0_i32, %c0_i32_0 : i32, i32
  }
  func.func @transform_17(%arg0: i32, %arg1: i32) -> (i32, i32, i32) {
    %c0_i32 = arith.constant 0 : i32
    %c0_i32_0 = arith.constant 0 : i32
    return %arg0, %arg1, %c0_i32 : i32, i32, i32
  }
}

</mosaic_0001>

<llo_original>
// kernel: tpu_custom_call.1
$region0: #{tpu_custom_call.1}
  #allocation0 [shape = 'u32[]', space=smem, size = 0x4, offset = 0x4, fixed_abs, tag = 'smem constant byte address 0x4 - core index']
  #allocation1 [shape = 'u32[144,128]{1,0:T(1,128)}', space=vmem, size = 0x12000, scoped, tag = 'internal scratch']
  #allocation2 [shape = 'bf16[2,128,256]{2,1,0:T(8,128)(2,1)}', space=vmem, size = 0x20000, scoped, tag = 'scratch operand']
  #allocation3 [shape = 'bf16[2,256,128]{2,1,0:T(8,128)(2,1)}', space=vmem, size = 0x20000, scoped, tag = 'scratch operand']
  %s0 = inlined_call_operand.hbm [shape: f32[2,256,256], index: 0, kind: input, shape index: {}]
  %s1 = inlined_call_operand.hbm [shape: f32[1,256], index: 1, kind: input, shape index: {}]
  %s2 = inlined_call_operand.vmem [shape: f32[1,256], index: 2, kind: input, shape index: {}]
  %s3 = inlined_call_operand.hbm [shape: bf16[2,256,128], index: 3, kind: input, shape index: {}]
  %s4 = inlined_call_operand.vmem [shape: f32[2,128], index: 4, kind: input, shape index: {}]
  %s5 = inlined_call_operand.hbm [shape: bf16[2,256,128], index: 5, kind: input, shape index: {}]
  %s6 = inlined_call_operand.vmem [shape: f32[2,128], index: 6, kind: input, shape index: {}]
  %s7 = inlined_call_operand.hbm [shape: bf16[2,256,128], index: 7, kind: input, shape index: {}]
  %s8 = inlined_call_operand.vmem [shape: f32[2,128], index: 8, kind: input, shape index: {}]
  %s9 = inlined_call_operand.hbm [shape: bf16[2,128,256], index: 9, kind: input, shape index: {}]
  %s10 = inlined_call_operand.vmem [shape: f32[1,256], index: 10, kind: input, shape index: {}]
  %s11 = inlined_call_operand.vmem [shape: f32[1,256], index: 11, kind: input, shape index: {}]
  %s12 = inlined_call_operand.hbm [shape: f32[1,256], index: 12, kind: input, shape index: {}]
  %s13 = inlined_call_operand.hbm [shape: bf16[256,1024], index: 13, kind: input, shape index: {}]
  %s14 = inlined_call_operand.vmem [shape: f32[1,1024], index: 14, kind: input, shape index: {}]
  %s15 = inlined_call_operand.hbm [shape: bf16[1024,256], index: 15, kind: input, shape index: {}]
  %s16 = inlined_call_operand.vmem [shape: f32[1,256], index: 16, kind: input, shape index: {}]
  %s17 = inlined_call_operand.hbm [shape: f32[2,256,256], index: 17, kind: output, shape index: {}]
  %s18 = sld [smem:[#allocation0]]
  $region144: #{tpu_custom_call.1} parent=0
    _
  %s20 = ssub.s32 1, %s18
  %s21 = scalar_select 0, %s20, %s18
  $region1: #{tpu_custom_call.1} parent=0
    #allocation4 [shape = 'u8[262144]{0}', space=vmem, size = 0x40000, scoped, tag = 'input window, operand 0']
    #allocation5 [shape = 's32[2]{0}', space=sflag, size = 0x8, scoped, tag = 'scoped memory for tpu_custom_call.1']
    #allocation6 [shape = 's32[2]{0}', space=sflag, size = 0x8, scoped, tag = 'scoped memory for tpu_custom_call.1']
    #allocation7 [shape = 'u8[1024]{0}', space=vmem, size = 0x400, scoped, tag = 'input window, operand 1, single buffered']
    #allocation8 [shape = 's32[1]{0}', space=sflag, size = 0x4, scoped, tag = 'scoped memory for tpu_custom_call.1']
    #allocation9 [shape = 'u8[131072]{0}', space=vmem, size = 0x20000, scoped, tag = 'input window, operand 3, single buffered']
    #allocation10 [shape = 'u8[131072]{0}', space=vmem, size = 0x20000, scoped, tag = 'input window, operand 5, single buffered']
    #allocation11 [shape = 's32[1]{0}', space=sflag, size = 0x4, scoped, tag = 'scoped memory for tpu_custom_call.1']
    #allocation12 [shape = 'u8[131072]{0}', space=vmem, size = 0x20000, scoped, tag = 'input window, operand 7, single buffered']
    #allocation13 [shape = 'u8[131072]{0}', space=vmem, size = 0x20000, scoped, tag = 'input window, operand 9, single buffered']
    #allocation14 [shape = 's32[1]{0}', space=sflag, size = 0x4, scoped, tag = 'scoped memory for tpu_custom_call.1']
    #allocation15 [shape = 'u8[1024]{0}', space=vmem, size = 0x400, scoped, tag = 'input window, operand 12, single buffered']
    #allocation16 [shape = 'u8[524288]{0}', space=vmem, size = 0x80000, scoped, tag = 'input window, operand 13, single buffered']
    #allocation17 [shape = 's32[1]{0}', space=sflag, size = 0x4, scoped, tag = 'scoped memory for tpu_custom_call.1']
    #allocation18 [shape = 'u8[524288]{0}', space=vmem, size = 0x80000, scoped, tag = 'input window, operand 15, single buffered']
    #allocation19 [shape = 'u8[262144]{0}', space=vmem, size = 0x40000, scoped, tag = 'output window, operand 0']
    %22 = vsyncpa [#allocation5], 0
    %s23 = scalar_lea.sflag [#allocation5], 1
    %24 = vsyncpa %s23, 0
    %25 = vsyncpa [#allocation8], 0
    %26 = vsyncpa [#allocation11], 0
    %27 = vsyncpa [#allocation14], 0
    %28 = vsyncpa [#allocation17], 0
    %29 = vsyncpa [#allocation6], 0
    %s30 = scalar_lea.sflag [#allocation6], 1
    %31 = vsyncpa %s30, 0
    loop: start=0, step=1, limit=6
    $region2: #{tpu_custom_call.1} parent=1 // loop_pre_header
      _
    $region3: #{tpu_custom_call.1} parent=1 // loop_header
      %s33 = sphi 0, %s37
      %p34 = scmp.ge.s32.totalorder %s33, 6
      %s40 = sphi 0, %s52
      %s41 = sphi 0, %s48
      %s42 = sphi 0, %s40
      %s43 = sphi 0, %s41
      %s44 = sphi 0, %s42
      %s45 = sphi 0, %s43
      %s57 = sphi 0, %s59
      %s60 = sphi 0, %s57
      %s61 = sphi 0, %s60
      %s77 = sphi 0, %s61
      %s81 = sphi 0, %s81
      %s83 = sphi 0, %s81
      %s84 = sphi 0, %s83
      %s98 = sphi 0, %s84
      %s102 = sphi 0, %s102
      %s104 = sphi 0, %s102
      %s105 = sphi 0, %s104
      %s119 = sphi 0, %s105
      %s123 = sphi 0, %s123
      %s125 = sphi 0, %s123
      %s126 = sphi 0, %s125
      %s140 = sphi 0, %s126
      %s144 = sphi 0, %s144
      %s146 = sphi 0, %s144
      %s147 = sphi 0, %s146
      %s161 = sphi 0, %s147
      %s165 = sphi 0, %s165
      %s167 = sphi 0, %s165
      %s168 = sphi 0, %s167
      %s182 = sphi 0, %s168
      %s186 = sphi 0, %s186
      %s188 = sphi 0, %s186
      %s189 = sphi 0, %s188
      %s203 = sphi 0, %s189
      %s207 = sphi 0, %s207
      %s209 = sphi 0, %s207
      %s210 = sphi 0, %s209
      %s224 = sphi 0, %s210
      %s228 = sphi 0, %s228
      %s230 = sphi 0, %s228
      %s231 = sphi 0, %s230
      %s245 = sphi 0, %s231
      %s249 = sphi 0, %s249
      %s251 = sphi 0, %s249
      %s252 = sphi 0, %s251
      %s266 = sphi 0, %s252
      %s270 = sphi 0, %s270
      %s272 = sphi 0, %s270
      %s273 = sphi 0, %s272
      %s287 = sphi 0, %s273
      %s291 = sphi 0, %s291
      %s293 = sphi 0, %s291
      %s294 = sphi 0, %s293
      %s308 = sphi 0, %s294
      %s312 = sphi 0, %s312
      %s314 = sphi 0, %s312
      %s315 = sphi 0, %s314
      %s329 = sphi 0, %s315
      %s333 = sphi 0, %s333
      %s335 = sphi 0, %s333
      %s336 = sphi 0, %s335
      %s350 = sphi 0, %s336
      %s354 = sphi 0, %s354
      %s356 = sphi 0, %s354
      %s357 = sphi 0, %s356
      %s371 = sphi 0, %s357
      %s375 = sphi 0, %s375
      %s377 = sphi 0, %s375
      %s378 = sphi 0, %s377
      %s392 = sphi 0, %s378
      %s396 = sphi 0, %s396
      %s398 = sphi 0, %s396
      %s399 = sphi 0, %s398
      %s413 = sphi 0, %s399
      %s421 = sphi 0, %s423
      %s424 = sphi 0, %s421
      %s425 = sphi 0, %s424
      %s441 = sphi 0, %s425
    $region4: #{tpu_custom_call.1} parent=1 // loop_header_branch
      %36 = sbr.rel (%p34) target = $region8
    $region5: #{tpu_custom_call.1} parent=1 // loop_body
      %s38 = ssub.s32 %s33, 1
      %s39 = ssub.s32 %s33, 2
      %s46 = sadd.s32 1, %s41
      %p47 = scmp.ge.s32.totalorder %s46, 2
      %s48 = scalar_select %p47, 0, %s46
      %s49 = sadd.s32 1, %s40
      %s50 = scalar_select %p47, %s49, %s40
      %p51 = scmp.ge.s32.totalorder %s50, 2
      %s52 = scalar_select %p51, 0, %s50
      %s53 = ssub.s32 %s40, %s52
      %s54 = ssub.s32 %s41, %s48
      %s55 = sor.u32 %s53, %s54
      %p56 = scmp.eq.s32.totalorder %s55, 0
      %s58 = sadd.s32 %s57, 1
      %s59 = scalar_select %p56, %s57, %s58
      %p62 = pneg %p56
      %p63 = scmp.eq.s32.totalorder %s33, 3
      %p64 = por %p62, %p63
      %p65 = scmp.ne.s32.totalorder %s57, %s60
      %p66 = scmp.eq.s32.totalorder %s33, 0
      %p67 = por %p65, %p66
      %p68 = scmp.ne.s32.totalorder %s57, %s60
      %p69 = scmp.eq.s32.totalorder %s38, 3
      %p70 = por %p68, %p69
      %p71 = scmp.ne.s32.totalorder %s60, %s61
      %p72 = scmp.eq.s32.totalorder %s38, 0
      %p73 = por %p71, %p72
      %p74 = scmp.ne.s32.totalorder %s60, %s61
      %p75 = scmp.eq.s32.totalorder %s39, 3
      %p76 = por %p74, %p75
      %p78 = scmp.ne.s32.totalorder %s61, %s77
      %p79 = scmp.eq.s32.totalorder %s39, 0
      %p80 = por %p78, %p79
      %s82 = sadd.s32 %s81, 1
      %p85 = scmp.eq.s32.totalorder %s33, 3
      %p86 = scmp.ne.s32.totalorder %s81, %s83
      %p87 = scmp.eq.s32.totalorder %s33, 0
      %p88 = por %p86, %p87
      %p89 = scmp.ne.s32.totalorder %s81, %s83
      %p90 = scmp.eq.s32.totalorder %s38, 3
      %p91 = por %p89, %p90
      %p92 = scmp.ne.s32.totalorder %s83, %s84
      %p93 = scmp.eq.s32.totalorder %s38, 0
      %p94 = por %p92, %p93
      %p95 = scmp.ne.s32.totalorder %s83, %s84
      %p96 = scmp.eq.s32.totalorder %s39, 3
      %p97 = por %p95, %p96
      %p99 = scmp.ne.s32.totalorder %s84, %s98
      %p100 = scmp.eq.s32.totalorder %s39, 0
      %p101 = por %p99, %p100
      %s103 = sadd.s32 %s102, 1
      %p106 = scmp.eq.s32.totalorder %s33, 3
      %p107 = scmp.ne.s32.totalorder %s102, %s104
      %p108 = scmp.eq.s32.totalorder %s33, 0
      %p109 = por %p107, %p108
      %p110 = scmp.ne.s32.totalorder %s102, %s104
      %p111 = scmp.eq.s32.totalorder %s38, 3
      %p112 = por %p110, %p111
      %p113 = scmp.ne.s32.totalorder %s104, %s105
      %p114 = scmp.eq.s32.totalorder %s38, 0
      %p115 = por %p113, %p114
      %p116 = scmp.ne.s32.totalorder %s104, %s105
      %p117 = scmp.eq.s32.totalorder %s39, 3
      %p118 = por %p116, %p117
      %p120 = scmp.ne.s32.totalorder %s105, %s119
      %p121 = scmp.eq.s32.totalorder %s39, 0
      %p122 = por %p120, %p121
      %s124 = sadd.s32 %s123, 1
      %p127 = scmp.eq.s32.totalorder %s33, 3
      %p128 = scmp.ne.s32.totalorder %s123, %s125
      %p129 = scmp.eq.s32.totalorder %s33, 0
      %p130 = por %p128, %p129
      %p131 = scmp.ne.s32.totalorder %s123, %s125
      %p132 = scmp.eq.s32.totalorder %s38, 3
      %p133 = por %p131, %p132
      %p134 = scmp.ne.s32.totalorder %s125, %s126
      %p135 = scmp.eq.s32.totalorder %s38, 0
      %p136 = por %p134, %p135
      %p137 = scmp.ne.s32.totalorder %s125, %s126
      %p138 = scmp.eq.s32.totalorder %s39, 3
      %p139 = por %p137, %p138
      %p141 = scmp.ne.s32.totalorder %s126, %s140
      %p142 = scmp.eq.s32.totalorder %s39, 0
      %p143 = por %p141, %p142
      %s145 = sadd.s32 %s144, 1
      %p148 = scmp.eq.s32.totalorder %s33, 3
      %p149 = scmp.ne.s32.totalorder %s144, %s146
      %p150 = scmp.eq.s32.totalorder %s33, 0
      %p151 = por %p149, %p150
      %p152 = scmp.ne.s32.totalorder %s144, %s146
      %p153 = scmp.eq.s32.totalorder %s38, 3
      %p154 = por %p152, %p153
      %p155 = scmp.ne.s32.totalorder %s146, %s147
      %p156 = scmp.eq.s32.totalorder %s38, 0
      %p157 = por %p155, %p156
      %p158 = scmp.ne.s32.totalorder %s146, %s147
      %p159 = scmp.eq.s32.totalorder %s39, 3
      %p160 = por %p158, %p159
      %p162 = scmp.ne.s32.totalorder %s147, %s161
      %p163 = scmp.eq.s32.totalorder %s39, 0
      %p164 = por %p162, %p163
      %s166 = sadd.s32 %s165, 1
      %p169 = scmp.eq.s32.totalorder %s33, 3
      %p170 = scmp.ne.s32.totalorder %s165, %s167
      %p171 = scmp.eq.s32.totalorder %s33, 0
      %p172 = por %p170, %p171
      %p173 = scmp.ne.s32.totalorder %s165, %s167
      %p174 = scmp.eq.s32.totalorder %s38, 3
      %p175 = por %p173, %p174
      %p176 = scmp.ne.s32.totalorder %s167, %s168
      %p177 = scmp.eq.s32.totalorder %s38, 0
      %p178 = por %p176, %p177
      %p179 = scmp.ne.s32.totalorder %s167, %s168
      %p180 = scmp.eq.s32.totalorder %s39, 3
      %p181 = por %p179, %p180
      %p183 = scmp.ne.s32.totalorder %s168, %s182
      %p184 = scmp.eq.s32.totalorder %s39, 0
      %p185 = por %p183, %p184
      %s187 = sadd.s32 %s186, 1
      %p190 = scmp.eq.s32.totalorder %s33, 3
      %p191 = scmp.ne.s32.totalorder %s186, %s188
      %p192 = scmp.eq.s32.totalorder %s33, 0
      %p193 = por %p191, %p192
      %p194 = scmp.ne.s32.totalorder %s186, %s188
      %p195 = scmp.eq.s32.totalorder %s38, 3
      %p196 = por %p194, %p195
      %p197 = scmp.ne.s32.totalorder %s188, %s189
      %p198 = scmp.eq.s32.totalorder %s38, 0
      %p199 = por %p197, %p198
      %p200 = scmp.ne.s32.totalorder %s188, %s189
      %p201 = scmp.eq.s32.totalorder %s39, 3
      %p202 = por %p200, %p201
      %p204 = scmp.ne.s32.totalorder %s189, %s203
      %p205 = scmp.eq.s32.totalorder %s39, 0
      %p206 = por %p204, %p205
      %s208 = sadd.s32 %s207, 1
      %p211 = scmp.eq.s32.totalorder %s33, 3
      %p212 = scmp.ne.s32.totalorder %s207, %s209
      %p213 = scmp.eq.s32.totalorder %s33, 0
      %p214 = por %p212, %p213
      %p215 = scmp.ne.s32.totalorder %s207, %s209
      %p216 = scmp.eq.s32.totalorder %s38, 3
      %p217 = por %p215, %p216
      %p218 = scmp.ne.s32.totalorder %s209, %s210
      %p219 = scmp.eq.s32.totalorder %s38, 0
      %p220 = por %p218, %p219
      %p221 = scmp.ne.s32.totalorder %s209, %s210
      %p222 = scmp.eq.s32.totalorder %s39, 3
      %p223 = por %p221, %p222
      %p225 = scmp.ne.s32.totalorder %s210, %s224
      %p226 = scmp.eq.s32.totalorder %s39, 0
      %p227 = por %p225, %p226
      %s229 = sadd.s32 %s228, 1
      %p232 = scmp.eq.s32.totalorder %s33, 3
      %p233 = scmp.ne.s32.totalorder %s228, %s230
      %p234 = scmp.eq.s32.totalorder %s33, 0
      %p235 = por %p233, %p234
      %p236 = scmp.ne.s32.totalorder %s228, %s230
      %p237 = scmp.eq.s32.totalorder %s38, 3
      %p238 = por %p236, %p237
      %p239 = scmp.ne.s32.totalorder %s230, %s231
      %p240 = scmp.eq.s32.totalorder %s38, 0
      %p241 = por %p239, %p240
      %p242 = scmp.ne.s32.totalorder %s230, %s231
      %p243 = scmp.eq.s32.totalorder %s39, 3
      %p244 = por %p242, %p243
      %p246 = scmp.ne.s32.totalorder %s231, %s245
      %p247 = scmp.eq.s32.totalorder %s39, 0
      %p248 = por %p246, %p247
      %s250 = sadd.s32 %s249, 1
      %p253 = scmp.eq.s32.totalorder %s33, 3
      %p254 = scmp.ne.s32.totalorder %s249, %s251
      %p255 = scmp.eq.s32.totalorder %s33, 0
      %p256 = por %p254, %p255
      %p257 = scmp.ne.s32.totalorder %s249, %s251
      %p258 = scmp.eq.s32.totalorder %s38, 3
      %p259 = por %p257, %p258
      %p260 = scmp.ne.s32.totalorder %s251, %s252
      %p261 = scmp.eq.s32.totalorder %s38, 0
      %p262 = por %p260, %p261
      %p263 = scmp.ne.s32.totalorder %s251, %s252
      %p264 = scmp.eq.s32.totalorder %s39, 3
      %p265 = por %p263, %p264
      %p267 = scmp.ne.s32.totalorder %s252, %s266
      %p268 = scmp.eq.s32.totalorder %s39, 0
      %p269 = por %p267, %p268
      %s271 = sadd.s32 %s270, 1
      %p274 = scmp.eq.s32.totalorder %s33, 3
      %p275 = scmp.ne.s32.totalorder %s270, %s272
      %p276 = scmp.eq.s32.totalorder %s33, 0
      %p277 = por %p275, %p276
      %p278 = scmp.ne.s32.totalorder %s270, %s272
      %p279 = scmp.eq.s32.totalorder %s38, 3
      %p280 = por %p278, %p279
      %p281 = scmp.ne.s32.totalorder %s272, %s273
      %p282 = scmp.eq.s32.totalorder %s38, 0
      %p283 = por %p281, %p282
      %p284 = scmp.ne.s32.totalorder %s272, %s273
      %p285 = scmp.eq.s32.totalorder %s39, 3
      %p286 = por %p284, %p285
      %p288 = scmp.ne.s32.totalorder %s273, %s287
      %p289 = scmp.eq.s32.totalorder %s39, 0
      %p290 = por %p288, %p289
      %s292 = sadd.s32 %s291, 1
      %p295 = scmp.eq.s32.totalorder %s33, 3
      %p296 = scmp.ne.s32.totalorder %s291, %s293
      %p297 = scmp.eq.s32.totalorder %s33, 0
      %p298 = por %p296, %p297
      %p299 = scmp.ne.s32.totalorder %s291, %s293
      %p300 = scmp.eq.s32.totalorder %s38, 3
      %p301 = por %p299, %p300
      %p302 = scmp.ne.s32.totalorder %s293, %s294
      %p303 = scmp.eq.s32.totalorder %s38, 0
      %p304 = por %p302, %p303
      %p305 = scmp.ne.s32.totalorder %s293, %s294
      %p306 = scmp.eq.s32.totalorder %s39, 3
      %p307 = por %p305, %p306
      %p309 = scmp.ne.s32.totalorder %s294, %s308
      %p310 = scmp.eq.s32.totalorder %s39, 0
      %p311 = por %p309, %p310
      %s313 = sadd.s32 %s312, 1
      %p316 = scmp.eq.s32.totalorder %s33, 3
      %p317 = scmp.ne.s32.totalorder %s312, %s314
      %p318 = scmp.eq.s32.totalorder %s33, 0
      %p319 = por %p317, %p318
      %p320 = scmp.ne.s32.totalorder %s312, %s314
      %p321 = scmp.eq.s32.totalorder %s38, 3
      %p322 = por %p320, %p321
      %p323 = scmp.ne.s32.totalorder %s314, %s315
      %p324 = scmp.eq.s32.totalorder %s38, 0
      %p325 = por %p323, %p324
      %p326 = scmp.ne.s32.totalorder %s314, %s315
      %p327 = scmp.eq.s32.totalorder %s39, 3
      %p328 = por %p326, %p327
      %p330 = scmp.ne.s32.totalorder %s315, %s329
      %p331 = scmp.eq.s32.totalorder %s39, 0
      %p332 = por %p330, %p331
      %s334 = sadd.s32 %s333, 1
      %p337 = scmp.eq.s32.totalorder %s33, 3
      %p338 = scmp.ne.s32.totalorder %s333, %s335
      %p339 = scmp.eq.s32.totalorder %s33, 0
      %p340 = por %p338, %p339
      %p341 = scmp.ne.s32.totalorder %s333, %s335
      %p342 = scmp.eq.s32.totalorder %s38, 3
      %p343 = por %p341, %p342
      %p344 = scmp.ne.s32.totalorder %s335, %s336
      %p345 = scmp.eq.s32.totalorder %s38, 0
      %p346 = por %p344, %p345
      %p347 = scmp.ne.s32.totalorder %s335, %s336
      %p348 = scmp.eq.s32.totalorder %s39, 3
      %p349 = por %p347, %p348
      %p351 = scmp.ne.s32.totalorder %s336, %s350
      %p352 = scmp.eq.s32.totalorder %s39, 0
      %p353 = por %p351, %p352
      %s355 = sadd.s32 %s354, 1
      %p358 = scmp.eq.s32.totalorder %s33, 3
      %p359 = scmp.ne.s32.totalorder %s354, %s356
      %p360 = scmp.eq.s32.totalorder %s33, 0
      %p361 = por %p359, %p360
      %p362 = scmp.ne.s32.totalorder %s354, %s356
      %p363 = scmp.eq.s32.totalorder %s38, 3
      %p364 = por %p362, %p363
      %p365 = scmp.ne.s32.totalorder %s356, %s357
      %p366 = scmp.eq.s32.totalorder %s38, 0
      %p367 = por %p365, %p366
      %p368 = scmp.ne.s32.totalorder %s356, %s357
      %p369 = scmp.eq.s32.totalorder %s39, 3
      %p370 = por %p368, %p369
      %p372 = scmp.ne.s32.totalorder %s357, %s371
      %p373 = scmp.eq.s32.totalorder %s39, 0
      %p374 = por %p372, %p373
      %s376 = sadd.s32 %s375, 1
      %p379 = scmp.eq.s32.totalorder %s33, 3
      %p380 = scmp.ne.s32.totalorder %s375, %s377
      %p381 = scmp.eq.s32.totalorder %s33, 0
      %p382 = por %p380, %p381
      %p383 = scmp.ne.s32.totalorder %s375, %s377
      %p384 = scmp.eq.s32.totalorder %s38, 3
      %p385 = por %p383, %p384
      %p386 = scmp.ne.s32.totalorder %s377, %s378
      %p387 = scmp.eq.s32.totalorder %s38, 0
      %p388 = por %p386, %p387
      %p389 = scmp.ne.s32.totalorder %s377, %s378
      %p390 = scmp.eq.s32.totalorder %s39, 3
      %p391 = por %p389, %p390
      %p393 = scmp.ne.s32.totalorder %s378, %s392
      %p394 = scmp.eq.s32.totalorder %s39, 0
      %p395 = por %p393, %p394
      %s397 = sadd.s32 %s396, 1
      %p400 = scmp.eq.s32.totalorder %s33, 3
      %p401 = scmp.ne.s32.totalorder %s396, %s398
      %p402 = scmp.eq.s32.totalorder %s33, 0
      %p403 = por %p401, %p402
      %p404 = scmp.ne.s32.totalorder %s396, %s398
      %p405 = scmp.eq.s32.totalorder %s38, 3
      %p406 = por %p404, %p405
      %p407 = scmp.ne.s32.totalorder %s398, %s399
      %p408 = scmp.eq.s32.totalorder %s38, 0
      %p409 = por %p407, %p408
      %p410 = scmp.ne.s32.totalorder %s398, %s399
      %p411 = scmp.eq.s32.totalorder %s39, 3
      %p412 = por %p410, %p411
      %p414 = scmp.ne.s32.totalorder %s399, %s413
      %p415 = scmp.eq.s32.totalorder %s39, 0
      %p416 = por %p414, %p415
      %s417 = ssub.s32 %s40, %s52
      %s418 = ssub.s32 %s41, %s48
      %s419 = sor.u32 %s417, %s418
      %p420 = scmp.eq.s32.totalorder %s419, 0
      %s422 = sadd.s32 %s421, 1
      %s423 = scalar_select %p420, %s421, %s422
      %p426 = pneg %p420
      %p427 = scmp.eq.s32.totalorder %s33, 3
      %p428 = por %p426, %p427
      %p429 = scmp.ne.s32.totalorder %s421, %s424
      %p430 = scmp.eq.s32.totalorder %s33, 0
      %p431 = por %p429, %p430
      %p432 = scmp.ne.s32.totalorder %s421, %s424
      %p433 = scmp.eq.s32.totalorder %s38, 3
      %p434 = por %p432, %p433
      %p435 = scmp.ne.s32.totalorder %s424, %s425
      %p436 = scmp.eq.s32.totalorder %s38, 0
      %p437 = por %p435, %p436
      %p438 = scmp.ne.s32.totalorder %s424, %s425
      %p439 = scmp.eq.s32.totalorder %s39, 3
      %p440 = por %p438, %p439
      %p442 = scmp.ne.s32.totalorder %s425, %s441
      %p443 = scmp.eq.s32.totalorder %s39, 0
      %p444 = por %p442, %p443
      %p445 = scmp.le.s32.totalorder 1, %s33
      %p446 = scmp.lt.s32.totalorder %s33, 5
      %p447 = pnand %p445, %p446
      %p448 = pneg %p447
      // Predicated region
      $region9: #{tpu_custom_call.1} parent=5 // pred_check
        _
      $region10: #{tpu_custom_call.1} parent=5 // pred_check_branch
        %450 = sbr.rel (%p447) target = $region12
      $region11: #{tpu_custom_call.1} parent=5 // pred_region
        %s451 = ssub.s32 %s33, 1
        // Predicated region
        $region13: #{tpu_custom_call.1} parent=11 // pred_check
          %p452 = pneg %p94
        $region14: #{tpu_custom_call.1} parent=11 // pred_check_branch
          %454 = sbr.rel (%p452) target = $region16
        $region15: #{tpu_custom_call.1} parent=11 // pred_region
          %s456 = ssub.s32 32, 32
          %457 = vsyncadd [#allocation8], %s456
          %s459 = sshll.u32 [#allocation7], 4
          %s460 = int_to_ptr.vmem [resolvable:$true] %s459
          %462 = dma.hbm_to_vmem [thread:$0]  %s1, 32, %s460, [#allocation8]
        $region16: #{tpu_custom_call.1} parent=11 // pred_fallthru
          _
        // Predicated region
        $region17: #{tpu_custom_call.1} parent=11 // pred_check
          %p463 = pneg %p115
        $region18: #{tpu_custom_call.1} parent=11 // pred_check_branch
          %465 = sbr.rel (%p463) target = $region20
        $region19: #{tpu_custom_call.1} parent=11 // pred_region
          _
        $region20: #{tpu_custom_call.1} parent=11 // pred_fallthru
          _
        // Predicated region
        $region21: #{tpu_custom_call.1} parent=11 // pred_check
          %p466 = pneg %p136
        $region22: #{tpu_custom_call.1} parent=11 // pred_check_branch
          %468 = sbr.rel (%p466) target = $region24
        $region23: #{tpu_custom_call.1} parent=11 // pred_region
          %s470 = ssub.s32 4096, 4096
          %471 = vsyncadd [#allocation8], %s470
          %s472 = sshll.u32 [#allocation9], 4
          %s473 = int_to_ptr.vmem [resolvable:$true] %s472
          %478 = dma.hbm_to_vmem [thread:$0]  %s3, 4096, %s473, [#allocation8], 64, 64, 4
        $region24: #{tpu_custom_call.1} parent=11 // pred_fallthru
          _
        // Predicated region
        $region25: #{tpu_custom_call.1} parent=11 // pred_check
          %p479 = pneg %p157
        $region26: #{tpu_custom_call.1} parent=11 // pred_check_branch
          %481 = sbr.rel (%p479) target = $region28
        $region27: #{tpu_custom_call.1} parent=11 // pred_region
          _
        $region28: #{tpu_custom_call.1} parent=11 // pred_fallthru
          _
        // Predicated region
        $region29: #{tpu_custom_call.1} parent=11 // pred_check
          %p482 = pneg %p178
        $region30: #{tpu_custom_call.1} parent=11 // pred_check_branch
          %484 = sbr.rel (%p482) target = $region32
        $region31: #{tpu_custom_call.1} parent=11 // pred_region
          %s486 = ssub.s32 4096, 4096
          %487 = vsyncadd [#allocation11], %s486
          %s488 = sshll.u32 [#allocation10], 4
          %s489 = int_to_ptr.vmem [resolvable:$true] %s488
          %494 = dma.hbm_to_vmem [thread:$0]  %s5, 4096, %s489, [#allocation11], 64, 64, 4
        $region32: #{tpu_custom_call.1} parent=11 // pred_fallthru
          _
        // Predicated region
        $region33: #{tpu_custom_call.1} parent=11 // pred_check
          %p495 = pneg %p199
        $region34: #{tpu_custom_call.1} parent=11 // pred_check_branch
          %497 = sbr.rel (%p495) target = $region36
        $region35: #{tpu_custom_call.1} parent=11 // pred_region
          _
        $region36: #{tpu_custom_call.1} parent=11 // pred_fallthru
          _
        // Predicated region
        $region37: #{tpu_custom_call.1} parent=11 // pred_check
          %p498 = pneg %p220
        $region38: #{tpu_custom_call.1} parent=11 // pred_check_branch
          %500 = sbr.rel (%p498) target = $region40
        $region39: #{tpu_custom_call.1} parent=11 // pred_region
          %s502 = ssub.s32 4096, 4096
          %503 = vsyncadd [#allocation11], %s502
          %s504 = sshll.u32 [#allocation12], 4
          %s505 = int_to_ptr.vmem [resolvable:$true] %s504
          %510 = dma.hbm_to_vmem [thread:$0]  %s7, 4096, %s505, [#allocation11], 64, 64, 4
        $region40: #{tpu_custom_call.1} parent=11 // pred_fallthru
          _
        // Predicated region
        $region41: #{tpu_custom_call.1} parent=11 // pred_check
          %p511 = pneg %p241
        $region42: #{tpu_custom_call.1} parent=11 // pred_check_branch
          %513 = sbr.rel (%p511) target = $region44
        $region43: #{tpu_custom_call.1} parent=11 // pred_region
          _
        $region44: #{tpu_custom_call.1} parent=11 // pred_fallthru
          _
        // Predicated region
        $region45: #{tpu_custom_call.1} parent=11 // pred_check
          %p514 = pneg %p262
        $region46: #{tpu_custom_call.1} parent=11 // pred_check_branch
          %516 = sbr.rel (%p514) target = $region48
        $region47: #{tpu_custom_call.1} parent=11 // pred_region
          %s518 = ssub.s32 4096, 4096
          %519 = vsyncadd [#allocation14], %s518
          %s520 = sshll.u32 [#allocation13], 4
          %s521 = int_to_ptr.vmem [resolvable:$true] %s520
          %526 = dma.hbm_to_vmem [thread:$0]  %s9, 4096, %s521, [#allocation14], 128, 128, 8
        $region48: #{tpu_custom_call.1} parent=11 // pred_fallthru
          _
        // Predicated region
        $region49: #{tpu_custom_call.1} parent=11 // pred_check
          %p527 = pneg %p283
        $region50: #{tpu_custom_call.1} parent=11 // pred_check_branch
          %529 = sbr.rel (%p527) target = $region52
        $region51: #{tpu_custom_call.1} parent=11 // pred_region
          _
        $region52: #{tpu_custom_call.1} parent=11 // pred_fallthru
          _
        // Predicated region
        $region53: #{tpu_custom_call.1} parent=11 // pred_check
          %p530 = pneg %p304
        $region54: #{tpu_custom_call.1} parent=11 // pred_check_branch
          %532 = sbr.rel (%p530) target = $region56
        $region55: #{tpu_custom_call.1} parent=11 // pred_region
          _
        $region56: #{tpu_custom_call.1} parent=11 // pred_fallthru
          _
        // Predicated region
        $region57: #{tpu_custom_call.1} parent=11 // pred_check
          %p533 = pneg %p325
        $region58: #{tpu_custom_call.1} parent=11 // pred_check_branch
          %535 = sbr.rel (%p533) target = $region60
        $region59: #{tpu_custom_call.1} parent=11 // pred_region
          %s537 = ssub.s32 32, 32
          %538 = vsyncadd [#allocation14], %s537
          %s540 = sshll.u32 [#allocation15], 4
          %s541 = int_to_ptr.vmem [resolvable:$true] %s540
          %543 = dma.hbm_to_vmem [thread:$0]  %s12, 32, %s541, [#allocation14]
        $region60: #{tpu_custom_call.1} parent=11 // pred_fallthru
          _
        // Predicated region
        $region61: #{tpu_custom_call.1} parent=11 // pred_check
          %p544 = pneg %p346
        $region62: #{tpu_custom_call.1} parent=11 // pred_check_branch
          %546 = sbr.rel (%p544) target = $region64
        $region63: #{tpu_custom_call.1} parent=11 // pred_region
          %s548 = ssub.s32 16384, 16384
          %549 = vsyncadd [#allocation17], %s548
          %s550 = sshll.u32 [#allocation16], 4
          %s551 = int_to_ptr.vmem [resolvable:$true] %s550
          %556 = dma.hbm_to_vmem [thread:$0]  %s13, 16384, %s551, [#allocation17], 512, 512, 32
        $region64: #{tpu_custom_call.1} parent=11 // pred_fallthru
          _
        // Predicated region
        $region65: #{tpu_custom_call.1} parent=11 // pred_check
          %p557 = pneg %p367
        $region66: #{tpu_custom_call.1} parent=11 // pred_check_branch
          %559 = sbr.rel (%p557) target = $region68
        $region67: #{tpu_custom_call.1} parent=11 // pred_region
          _
        $region68: #{tpu_custom_call.1} parent=11 // pred_fallthru
          _
        // Predicated region
        $region69: #{tpu_custom_call.1} parent=11 // pred_check
          %p560 = pneg %p388
        $region70: #{tpu_custom_call.1} parent=11 // pred_check_branch
          %562 = sbr.rel (%p560) target = $region72
        $region71: #{tpu_custom_call.1} parent=11 // pred_region
          %s564 = ssub.s32 16384, 16384
          %565 = vsyncadd [#allocation17], %s564
          %s566 = sshll.u32 [#allocation18], 4
          %s567 = int_to_ptr.vmem [resolvable:$true] %s566
          %572 = dma.hbm_to_vmem [thread:$0]  %s15, 16384, %s567, [#allocation17], 128, 128, 8
        $region72: #{tpu_custom_call.1} parent=11 // pred_fallthru
          _
        // Predicated region
        $region73: #{tpu_custom_call.1} parent=11 // pred_check
          %p573 = pneg %p409
        $region74: #{tpu_custom_call.1} parent=11 // pred_check_branch
          %575 = sbr.rel (%p573) target = $region76
        $region75: #{tpu_custom_call.1} parent=11 // pred_region
          _
        $region76: #{tpu_custom_call.1} parent=11 // pred_fallthru
          _
      $region12: #{tpu_custom_call.1} parent=5 // pred_fallthru
        _
      %p576 = scmp.lt.s32.totalorder %s33, 4
      // Predicated region
      $region77: #{tpu_custom_call.1} parent=5 // pred_check
        %p577 = pneg %p576
      $region78: #{tpu_custom_call.1} parent=5 // pred_check_branch
        %579 = sbr.rel (%p577) target = $region80
      $region79: #{tpu_custom_call.1} parent=5 // pred_region
        // Predicated region
        $region81: #{tpu_custom_call.1} parent=79 // pred_check
          %p580 = pneg %p67
        $region82: #{tpu_custom_call.1} parent=79 // pred_check_branch
          %582 = sbr.rel (%p580) target = $region84
        $region83: #{tpu_custom_call.1} parent=79 // pred_region
          %s583 = sand.u32 %s57, 1
          %s584 = scalar_lea.sflag [#allocation5], %s583
          %s585 = sand.u32 %s57, 1
          %s586 = smul.addr %s585, 256
          %s587 = scalar_lea.vmem [#allocation4], %s586
          %s588 = smul.u32 16, %s41
          %s590 = ssub.s32 4096, 4096
          %591 = vsyncadd %s584, %s590
          %s592 = smul.addr %s588, 2
          %s593 = smul.addr %s40, 64
          %s594 = sadd.s32 %s592, %s593
          %s595 = smul.addr %s594, 128
          %s596 = scalar_lea.hbm %s0, %s595
          %s597 = sshll.u32 %s587, 4
          %s598 = int_to_ptr.vmem [resolvable:$true] %s597
          %603 = dma.hbm_to_vmem [thread:$0]  %s596, 4096, %s598, %s584, 256, 256, 16
        $region84: #{tpu_custom_call.1} parent=79 // pred_fallthru
          _
      $region80: #{tpu_custom_call.1} parent=5 // pred_fallthru
        _
      %p604 = scmp.le.s32.totalorder 1, %s33
      %p605 = scmp.lt.s32.totalorder %s33, 5
      %p606 = pnand %p604, %p605
      %p607 = pneg %p606
      // Predicated region
      $region85: #{tpu_custom_call.1} parent=5 // pred_check
        _
      $region86: #{tpu_custom_call.1} parent=5 // pred_check_branch
        %609 = sbr.rel (%p606) target = $region88
      $region87: #{tpu_custom_call.1} parent=5 // pred_region
        %s610 = ssub.s32 %s33, 1
        %s611 = sand.u32 %s60, 1
        %s612 = scalar_lea.sflag [#allocation5], %s611
        %s613 = sand.u32 %s60, 1
        %s614 = smul.addr %s613, 256
        %s615 = scalar_lea.vmem [#allocation4], %s614
        // Predicated region
        $region89: #{tpu_custom_call.1} parent=87 // pred_check
          %p616 = pneg %p73
        $region90: #{tpu_custom_call.1} parent=87 // pred_check_branch
          %618 = sbr.rel (%p616) target = $region92
        $region91: #{tpu_custom_call.1} parent=87 // pred_region
          %619 = dma.done %s612, 4096
        $region92: #{tpu_custom_call.1} parent=87 // pred_fallthru
          _
        // Predicated region
        $region93: #{tpu_custom_call.1} parent=87 // pred_check
          %p620 = pneg %p94
        $region94: #{tpu_custom_call.1} parent=87 // pred_check_branch
          %622 = sbr.rel (%p620) target = $region96
        $region95: #{tpu_custom_call.1} parent=87 // pred_region
          %623 = dma.done [#allocation8], 32
        $region96: #{tpu_custom_call.1} parent=87 // pred_fallthru
          _
        // Predicated region
        $region97: #{tpu_custom_call.1} parent=87 // pred_check
          %p624 = pneg %p136
        $region98: #{tpu_custom_call.1} parent=87 // pred_check_branch
          %626 = sbr.rel (%p624) target = $region100
        $region99: #{tpu_custom_call.1} parent=87 // pred_region
          %627 = dma.done [#allocation8], 4096
        $region100: #{tpu_custom_call.1} parent=87 // pred_fallthru
          _
        // Predicated region
        $region101: #{tpu_custom_call.1} parent=87 // pred_check
          %p628 = pneg %p178
        $region102: #{tpu_custom_call.1} parent=87 // pred_check_branch
          %630 = sbr.rel (%p628) target = $region104
        $region103: #{tpu_custom_call.1} parent=87 // pred_region
          %631 = dma.done [#allocation11], 4096
        $region104: #{tpu_custom_call.1} parent=87 // pred_fallthru
          _
        // Predicated region
        $region105: #{tpu_custom_call.1} parent=87 // pred_check
          %p632 = pneg %p220
        $region106: #{tpu_custom_call.1} parent=87 // pred_check_branch
          %634 = sbr.rel (%p632) target = $region108
        $region107: #{tpu_custom_call.1} parent=87 // pred_region
          %635 = dma.done [#allocation11], 4096
        $region108: #{tpu_custom_call.1} parent=87 // pred_fallthru
          _
        // Predicated region
        $region109: #{tpu_custom_call.1} parent=87 // pred_check
          %p636 = pneg %p262
        $region110: #{tpu_custom_call.1} parent=87 // pred_check_branch
          %638 = sbr.rel (%p636) target = $region112
        $region111: #{tpu_custom_call.1} parent=87 // pred_region
          %639 = dma.done [#allocation14], 4096
        $region112: #{tpu_custom_call.1} parent=87 // pred_fallthru
          _
        // Predicated region
        $region113: #{tpu_custom_call.1} parent=87 // pred_check
          %p640 = pneg %p325
        $region114: #{tpu_custom_call.1} parent=87 // pred_check_branch
          %642 = sbr.rel (%p640) target = $region116
        $region115: #{tpu_custom_call.1} parent=87 // pred_region
          %643 = dma.done [#allocation14], 32
        $region116: #{tpu_custom_call.1} parent=87 // pred_fallthru
          _
        // Predicated region
        $region117: #{tpu_custom_call.1} parent=87 // pred_check
          %p644 = pneg %p346
        $region118: #{tpu_custom_call.1} parent=87 // pred_check_branch
          %646 = sbr.rel (%p644) target = $region120
        $region119: #{tpu_custom_call.1} parent=87 // pred_region
          %647 = dma.done [#allocation17], 16384
        $region120: #{tpu_custom_call.1} parent=87 // pred_fallthru
          _
        // Predicated region
        $region121: #{tpu_custom_call.1} parent=87 // pred_check
          %p648 = pneg %p388
        $region122: #{tpu_custom_call.1} parent=87 // pred_check_branch
          %650 = sbr.rel (%p648) target = $region124
        $region123: #{tpu_custom_call.1} parent=87 // pred_region
          %651 = dma.done [#allocation17], 16384
        $region124: #{tpu_custom_call.1} parent=87 // pred_fallthru
          _
        %s652 = sand.u32 %s60, 1
        %s653 = scalar_lea.sflag [#allocation5], %s652
        %s654 = sand.u32 %s60, 1
        %s655 = smul.addr %s654, 256
        %s656 = scalar_lea.vmem [#allocation4], %s655
        %p657 = pneg %p73
        %p658 = pneg %p70
        %p659 = pneg %p94
        %p660 = pneg %p91
        %p661 = pneg %p115
        %p662 = pneg %p112
        %p663 = pneg %p136
        %p664 = pneg %p133
        %p665 = pneg %p157
        %p666 = pneg %p154
        %p667 = pneg %p178
        %p668 = pneg %p175
        %p669 = pneg %p199
        %p670 = pneg %p196
        %p671 = pneg %p220
        %p672 = pneg %p217
        %p673 = pneg %p241
        %p674 = pneg %p238
        %p675 = pneg %p262
        %p676 = pneg %p259
        %p677 = pneg %p283
        %p678 = pneg %p280
        %p679 = pneg %p304
        %p680 = pneg %p301
        %p681 = pneg %p325
        %p682 = pneg %p322
        %p683 = pneg %p346
        %p684 = pneg %p343
        %p685 = pneg %p367
        %p686 = pneg %p364
        %p687 = pneg %p388
        %p688 = pneg %p385
        %p689 = pneg %p409
        %p690 = pneg %p406
        %p691 = pneg %p437
        %p692 = pneg %p434
        %s693 = sand.u32 %s424, 1
        %s694 = scalar_lea.sflag [#allocation6], %s693
        %s695 = sand.u32 %s424, 1
        %s696 = smul.addr %s695, 256
        %s697 = scalar_lea.vmem [#allocation19], %s696
        %s698 = smul.u32 16, %s43
        %s699 = smul.u32 16, %s43
        %v701 = vld [vmem:[%s615] sm:$0xff]
        %v702 = vld [vmem:[%s615 + $0x8] sm:$0xff]
        %v703 = vld [vmem:[%s615 + $0x10] sm:$0xff]
        %v704 = vld [vmem:[%s615 + $0x18] sm:$0xff]
        %v705 = vld [vmem:[%s615 + $0x20] sm:$0xff]
        %v706 = vld [vmem:[%s615 + $0x28] sm:$0xff]
        %v707 = vld [vmem:[%s615 + $0x30] sm:$0xff]
        %v708 = vld [vmem:[%s615 + $0x38] sm:$0xff]
        %v709 = vld [vmem:[%s615 + $0x40] sm:$0xff]
        %v710 = vld [vmem:[%s615 + $0x48] sm:$0xff]
        %v711 = vld [vmem:[%s615 + $0x50] sm:$0xff]
        %v712 = vld [vmem:[%s615 + $0x58] sm:$0xff]
        %v713 = vld [vmem:[%s615 + $0x60] sm:$0xff]
        %v714 = vld [vmem:[%s615 + $0x68] sm:$0xff]
        %v715 = vld [vmem:[%s615 + $0x70] sm:$0xff]
        %v716 = vld [vmem:[%s615 + $0x78] sm:$0xff]
        %v717 = vld [vmem:[%s615 + $0x80] sm:$0xff]
        %v718 = vld [vmem:[%s615 + $0x88] sm:$0xff]
        %v719 = vld [vmem:[%s615 + $0x90] sm:$0xff]
        %v720 = vld [vmem:[%s615 + $0x98] sm:$0xff]
        %v721 = vld [vmem:[%s615 + $0xa0] sm:$0xff]
        %v722 = vld [vmem:[%s615 + $0xa8] sm:$0xff]
        %v723 = vld [vmem:[%s615 + $0xb0] sm:$0xff]
        %v724 = vld [vmem:[%s615 + $0xb8] sm:$0xff]
        %v725 = vld [vmem:[%s615 + $0xc0] sm:$0xff]
        %v726 = vld [vmem:[%s615 + $0xc8] sm:$0xff]
        %v727 = vld [vmem:[%s615 + $0xd0] sm:$0xff]
        %v728 = vld [vmem:[%s615 + $0xd8] sm:$0xff]
        %v729 = vld [vmem:[%s615 + $0xe0] sm:$0xff]
        %v730 = vld [vmem:[%s615 + $0xe8] sm:$0xff]
        %v731 = vld [vmem:[%s615 + $0xf0] sm:$0xff]
        %v732 = vld [vmem:[%s615 + $0xf8] sm:$0xff]
        %v733 = vld [vmem:[#allocation7] sm:$0x3]
        %v734 = vld [vmem:[%s2] sm:$0x3]
        %v735 = vadd.f32 %v701, %v702
        %736 = vadd.xlane.f32.xlu0 %v735
        %v737 = vpop.xlane.xlu0 %736
        %v738 = vadd.f32 %v703, %v704
        %739 = vadd.xlane.f32.xlu0 %v738
        %v740 = vpop.xlane.xlu0 %739
        %v741 = vadd.f32 %v705, %v706
        %742 = vadd.xlane.f32.xlu0 %v741
        %v743 = vpop.xlane.xlu0 %742
        %v744 = vadd.f32 %v707, %v708
        %745 = vadd.xlane.f32.xlu0 %v744
        %v746 = vpop.xlane.xlu0 %745
        %v747 = vadd.f32 %v709, %v710
        %748 = vadd.xlane.f32.xlu0 %v747
        %v749 = vpop.xlane.xlu0 %748
        %v750 = vadd.f32 %v711, %v712
        %751 = vadd.xlane.f32.xlu0 %v750
        %v752 = vpop.xlane.xlu0 %751
        %v753 = vadd.f32 %v713, %v714
        %754 = vadd.xlane.f32.xlu0 %v753
        %v755 = vpop.xlane.xlu0 %754
        %v756 = vadd.f32 %v715, %v716
        %757 = vadd.xlane.f32.xlu0 %v756
        %v758 = vpop.xlane.xlu0 %757
        %v759 = vadd.f32 %v717, %v718
        %760 = vadd.xlane.f32.xlu0 %v759
        %v761 = vpop.xlane.xlu0 %760
        %v762 = vadd.f32 %v719, %v720
        %763 = vadd.xlane.f32.xlu0 %v762
        %v764 = vpop.xlane.xlu0 %763
        %v765 = vadd.f32 %v721, %v722
        %766 = vadd.xlane.f32.xlu0 %v765
        %v767 = vpop.xlane.xlu0 %766
        %v768 = vadd.f32 %v723, %v724
        %769 = vadd.xlane.f32.xlu0 %v768
        %v770 = vpop.xlane.xlu0 %769
        %v771 = vadd.f32 %v725, %v726
        %772 = vadd.xlane.f32.xlu0 %v771
        %v773 = vpop.xlane.xlu0 %772
        %v774 = vadd.f32 %v727, %v728
        %775 = vadd.xlane.f32.xlu0 %v774
        %v776 = vpop.xlane.xlu0 %775
        %v777 = vadd.f32 %v729, %v730
        %778 = vadd.xlane.f32.xlu0 %v777
        %v779 = vpop.xlane.xlu0 %778
        %v780 = vadd.f32 %v731, %v732
        %781 = vadd.xlane.f32.xlu0 %v780
        %v782 = vpop.xlane.xlu0 %781
        %v783 = vrcp.pop 256.0
        %v784 = vmul.f32 %v737, %v783
        %v785 = vmul.f32 %v740, %v783
        %v786 = vmul.f32 %v743, %v783
        %v787 = vmul.f32 %v746, %v783
        %v788 = vmul.f32 %v749, %v783
        %v789 = vmul.f32 %v752, %v783
        %v790 = vmul.f32 %v755, %v783
        %v791 = vmul.f32 %v758, %v783
        %v792 = vmul.f32 %v761, %v783
        %v793 = vmul.f32 %v764, %v783
        %v794 = vmul.f32 %v767, %v783
        %v795 = vmul.f32 %v770, %v783
        %v796 = vmul.f32 %v773, %v783
        %v797 = vmul.f32 %v776, %v783
        %v798 = vmul.f32 %v779, %v783
        %v799 = vmul.f32 %v782, %v783
        %v800 = vsub.f32 %v701, %v784
        %v801 = vsub.f32 %v702, %v784
        %v802 = vsub.f32 %v703, %v785
        %v803 = vsub.f32 %v704, %v785
        %v804 = vsub.f32 %v705, %v786
        %v805 = vsub.f32 %v706, %v786
        %v806 = vsub.f32 %v707, %v787
        %v807 = vsub.f32 %v708, %v787
        %v808 = vsub.f32 %v709, %v788
        %v809 = vsub.f32 %v710, %v788
        %v810 = vsub.f32 %v711, %v789
        %v811 = vsub.f32 %v712, %v789
        %v812 = vsub.f32 %v713, %v790
        %v813 = vsub.f32 %v714, %v790
        %v814 = vsub.f32 %v715, %v791
        %v815 = vsub.f32 %v716, %v791
        %v816 = vsub.f32 %v717, %v792
        %v817 = vsub.f32 %v718, %v792
        %v818 = vsub.f32 %v719, %v793
        %v819 = vsub.f32 %v720, %v793
        %v820 = vsub.f32 %v721, %v794
        %v821 = vsub.f32 %v722, %v794
        %v822 = vsub.f32 %v723, %v795
        %v823 = vsub.f32 %v724, %v795
        %v824 = vsub.f32 %v725, %v796
        %v825 = vsub.f32 %v726, %v796
        %v826 = vsub.f32 %v727, %v797
        %v827 = vsub.f32 %v728, %v797
        %v828 = vsub.f32 %v729, %v798
        %v829 = vsub.f32 %v730, %v798
        %v830 = vsub.f32 %v731, %v799
        %v831 = vsub.f32 %v732, %v799
        %v832 = vmul.f32 %v800, %v800
        %v833 = vmul.f32 %v801, %v801
        %v834 = vmul.f32 %v802, %v802
        %v835 = vmul.f32 %v803, %v803
        %v836 = vmul.f32 %v804, %v804
        %v837 = vmul.f32 %v805, %v805
        %v838 = vmul.f32 %v806, %v806
        %v839 = vmul.f32 %v807, %v807
        %v840 = vmul.f32 %v808, %v808
        %v841 = vmul.f32 %v809, %v809
        %v842 = vmul.f32 %v810, %v810
        %v843 = vmul.f32 %v811, %v811
        %v844 = vmul.f32 %v812, %v812
        %v845 = vmul.f32 %v813, %v813
        %v846 = vmul.f32 %v814, %v814
        %v847 = vmul.f32 %v815, %v815
        %v848 = vmul.f32 %v816, %v816
        %v849 = vmul.f32 %v817, %v817
        %v850 = vmul.f32 %v818, %v818
        %v851 = vmul.f32 %v819, %v819
        %v852 = vmul.f32 %v820, %v820
        %v853 = vmul.f32 %v821, %v821
        %v854 = vmul.f32 %v822, %v822
        %v855 = vmul.f32 %v823, %v823
        %v856 = vmul.f32 %v824, %v824
        %v857 = vmul.f32 %v825, %v825
        %v858 = vmul.f32 %v826, %v826
        %v859 = vmul.f32 %v827, %v827
        %v860 = vmul.f32 %v828, %v828
        %v861 = vmul.f32 %v829, %v829
        %v862 = vmul.f32 %v830, %v830
        %v863 = vmul.f32 %v831, %v831
        %v864 = vadd.f32 %v832, %v833
        %865 = vadd.xlane.f32.xlu0 %v864
        %v866 = vpop.xlane.xlu0 %865
        %v867 = vadd.f32 %v834, %v835
        %868 = vadd.xlane.f32.xlu0 %v867
        %v869 = vpop.xlane.xlu0 %868
        %v870 = vadd.f32 %v836, %v837
        %871 = vadd.xlane.f32.xlu0 %v870
        %v872 = vpop.xlane.xlu0 %871
        %v873 = vadd.f32 %v838, %v839
        %874 = vadd.xlane.f32.xlu0 %v873
        %v875 = vpop.xlane.xlu0 %874
        %v876 = vadd.f32 %v840, %v841
        %877 = vadd.xlane.f32.xlu0 %v876
        %v878 = vpop.xlane.xlu0 %877
        %v879 = vadd.f32 %v842, %v843
        %880 = vadd.xlane.f32.xlu0 %v879
        %v881 = vpop.xlane.xlu0 %880
        %v882 = vadd.f32 %v844, %v845
        %883 = vadd.xlane.f32.xlu0 %v882
        %v884 = vpop.xlane.xlu0 %883
        %v885 = vadd.f32 %v846, %v847
        %886 = vadd.xlane.f32.xlu0 %v885
        %v887 = vpop.xlane.xlu0 %886
        %v888 = vadd.f32 %v848, %v849
        %889 = vadd.xlane.f32.xlu0 %v888
        %v890 = vpop.xlane.xlu0 %889
        %v891 = vadd.f32 %v850, %v851
        %892 = vadd.xlane.f32.xlu0 %v891
        %v893 = vpop.xlane.xlu0 %892
        %v894 = vadd.f32 %v852, %v853
        %895 = vadd.xlane.f32.xlu0 %v894
        %v896 = vpop.xlane.xlu0 %895
        %v897 = vadd.f32 %v854, %v855
        %898 = vadd.xlane.f32.xlu0 %v897
        %v899 = vpop.xlane.xlu0 %898
        %v900 = vadd.f32 %v856, %v857
        %901 = vadd.xlane.f32.xlu0 %v900
        %v902 = vpop.xlane.xlu0 %901
        %v903 = vadd.f32 %v858, %v859
        %904 = vadd.xlane.f32.xlu0 %v903
        %v905 = vpop.xlane.xlu0 %904
        %v906 = vadd.f32 %v860, %v861
        %907 = vadd.xlane.f32.xlu0 %v906
        %v908 = vpop.xlane.xlu0 %907
        %v909 = vadd.f32 %v862, %v863
        %910 = vadd.xlane.f32.xlu0 %v909
        %v911 = vpop.xlane.xlu0 %910
        %v912 = vmul.f32 %v866, %v783
        %v913 = vmul.f32 %v869, %v783
        %v914 = vmul.f32 %v872, %v783
        %v915 = vmul.f32 %v875, %v783
        %v916 = vmul.f32 %v878, %v783
        %v917 = vmul.f32 %v881, %v783
        %v918 = vmul.f32 %v884, %v783
        %v919 = vmul.f32 %v887, %v783
        %v920 = vmul.f32 %v890, %v783
        %v921 = vmul.f32 %v893, %v783
        %v922 = vmul.f32 %v896, %v783
        %v923 = vmul.f32 %v899, %v783
        %v924 = vmul.f32 %v902, %v783
        %v925 = vmul.f32 %v905, %v783
        %v926 = vmul.f32 %v908, %v783
        %v927 = vmul.f32 %v911, %v783
        %v928 = vadd.f32 %v912, 1e-05
        %v929 = vadd.f32 %v913, 1e-05
        %v930 = vadd.f32 %v914, 1e-05
        %v931 = vadd.f32 %v915, 1e-05
        %v932 = vadd.f32 %v916, 1e-05
        %v933 = vadd.f32 %v917, 1e-05
        %v934 = vadd.f32 %v918, 1e-05
        %v935 = vadd.f32 %v919, 1e-05
        %v936 = vadd.f32 %v920, 1e-05
        %v937 = vadd.f32 %v921, 1e-05
        %v938 = vadd.f32 %v922, 1e-05
        %v939 = vadd.f32 %v923, 1e-05
        %v940 = vadd.f32 %v924, 1e-05
        %v941 = vadd.f32 %v925, 1e-05
        %v942 = vadd.f32 %v926, 1e-05
        %v943 = vadd.f32 %v927, 1e-05
        %v944 = vrsqrt.pop %v928
        %v945 = vrsqrt.pop %v929
        %v946 = vrsqrt.pop %v930
        %v947 = vrsqrt.pop %v931
        %v948 = vrsqrt.pop %v932
        %v949 = vrsqrt.pop %v933
        %v950 = vrsqrt.pop %v934
        %v951 = vrsqrt.pop %v935
        %v952 = vrsqrt.pop %v936
        %v953 = vrsqrt.pop %v937
        %v954 = vrsqrt.pop %v938
        %v955 = vrsqrt.pop %v939
        %v956 = vrsqrt.pop %v940
        %v957 = vrsqrt.pop %v941
        %v958 = vrsqrt.pop %v942
        %v959 = vrsqrt.pop %v943
        %v960 = vmul.f32 %v800, %v944
        %v961 = vmul.f32 %v801, %v944
        %v962 = vmul.f32 %v802, %v945
        %v963 = vmul.f32 %v803, %v945
        %v964 = vmul.f32 %v804, %v946
        %v965 = vmul.f32 %v805, %v946
        %v966 = vmul.f32 %v806, %v947
        %v967 = vmul.f32 %v807, %v947
        %v968 = vmul.f32 %v808, %v948
        %v969 = vmul.f32 %v809, %v948
        %v970 = vmul.f32 %v810, %v949
        %v971 = vmul.f32 %v811, %v949
        %v972 = vmul.f32 %v812, %v950
        %v973 = vmul.f32 %v813, %v950
        %v974 = vmul.f32 %v814, %v951
        %v975 = vmul.f32 %v815, %v951
        %v976 = vmul.f32 %v816, %v952
        %v977 = vmul.f32 %v817, %v952
        %v978 = vmul.f32 %v818, %v953
        %v979 = vmul.f32 %v819, %v953
        %v980 = vmul.f32 %v820, %v954
        %v981 = vmul.f32 %v821, %v954
        %v982 = vmul.f32 %v822, %v955
        %v983 = vmul.f32 %v823, %v955
        %v984 = vmul.f32 %v824, %v956
        %v985 = vmul.f32 %v825, %v956
        %v986 = vmul.f32 %v826, %v957
        %v987 = vmul.f32 %v827, %v957
        %v988 = vmul.f32 %v828, %v958
        %v989 = vmul.f32 %v829, %v958
        %v990 = vmul.f32 %v830, %v959
        %v991 = vmul.f32 %v831, %v959
        %v993 = vlaneseq
        %v994 = vshrl.u32 %v993, 7
        %v995 = vsub.s32 0, %v994
        %v996 = vrot.slane %v733, %v995
        %v997 = vlaneseq
        %v998 = vshrl.u32 %v997, 7
        %v999 = vsub.s32 1, %v998
        %v1000 = vrot.slane %v733, %v999
        %v1003 = vmul.f32 %v960, %v996
        %v1004 = vmul.f32 %v961, %v1000
        %v1005 = vmul.f32 %v962, %v996
        %v1006 = vmul.f32 %v963, %v1000
        %v1007 = vmul.f32 %v964, %v996
        %v1008 = vmul.f32 %v965, %v1000
        %v1009 = vmul.f32 %v966, %v996
        %v1010 = vmul.f32 %v967, %v1000
        %v1011 = vmul.f32 %v968, %v996
        %v1012 = vmul.f32 %v969, %v1000
        %v1013 = vmul.f32 %v970, %v996
        %v1014 = vmul.f32 %v971, %v1000
        %v1015 = vmul.f32 %v972, %v996
        %v1016 = vmul.f32 %v973, %v1000
        %v1017 = vmul.f32 %v974, %v996
        %v1018 = vmul.f32 %v975, %v1000
        %v1019 = vmul.f32 %v976, %v996
        %v1020 = vmul.f32 %v977, %v1000
        %v1021 = vmul.f32 %v978, %v996
        %v1022 = vmul.f32 %v979, %v1000
        %v1023 = vmul.f32 %v980, %v996
        %v1024 = vmul.f32 %v981, %v1000
        %v1025 = vmul.f32 %v982, %v996
        %v1026 = vmul.f32 %v983, %v1000
        %v1027 = vmul.f32 %v984, %v996
        %v1028 = vmul.f32 %v985, %v1000
        %v1029 = vmul.f32 %v986, %v996
        %v1030 = vmul.f32 %v987, %v1000
        %v1031 = vmul.f32 %v988, %v996
        %v1032 = vmul.f32 %v989, %v1000
        %v1033 = vmul.f32 %v990, %v996
        %v1034 = vmul.f32 %v991, %v1000
        %v1036 = vlaneseq
        %v1037 = vshrl.u32 %v1036, 7
        %v1038 = vsub.s32 0, %v1037
        %v1039 = vrot.slane %v734, %v1038
        %v1040 = vlaneseq
        %v1041 = vshrl.u32 %v1040, 7
        %v1042 = vsub.s32 1, %v1041
        %v1043 = vrot.slane %v734, %v1042
        %v1046 = vadd.f32 %v1003, %v1039
        %v1047 = vadd.f32 %v1004, %v1043
        %v1048 = vadd.f32 %v1005, %v1039
        %v1049 = vadd.f32 %v1006, %v1043
        %v1050 = vadd.f32 %v1007, %v1039
        %v1051 = vadd.f32 %v1008, %v1043
        %v1052 = vadd.f32 %v1009, %v1039
        %v1053 = vadd.f32 %v1010, %v1043
        %v1054 = vadd.f32 %v1011, %v1039
        %v1055 = vadd.f32 %v1012, %v1043
        %v1056 = vadd.f32 %v1013, %v1039
        %v1057 = vadd.f32 %v1014, %v1043
        %v1058 = vadd.f32 %v1015, %v1039
        %v1059 = vadd.f32 %v1016, %v1043
        %v1060 = vadd.f32 %v1017, %v1039
        %v1061 = vadd.f32 %v1018, %v1043
        %v1062 = vadd.f32 %v1019, %v1039
        %v1063 = vadd.f32 %v1020, %v1043
        %v1064 = vadd.f32 %v1021, %v1039
        %v1065 = vadd.f32 %v1022, %v1043
        %v1066 = vadd.f32 %v1023, %v1039
        %v1067 = vadd.f32 %v1024, %v1043
        %v1068 = vadd.f32 %v1025, %v1039
        %v1069 = vadd.f32 %v1026, %v1043
        %v1070 = vadd.f32 %v1027, %v1039
        %v1071 = vadd.f32 %v1028, %v1043
        %v1072 = vadd.f32 %v1029, %v1039
        %v1073 = vadd.f32 %v1030, %v1043
        %v1074 = vadd.f32 %v1031, %v1039
        %v1075 = vadd.f32 %v1032, %v1043
        %v1076 = vadd.f32 %v1033, %v1039
        %v1077 = vadd.f32 %v1034, %v1043
        %v1078 = vpack.c.bf16 %v1048, %v1046
        %v1079 = vpack.c.bf16 %v1049, %v1047
        %v1080 = vpack.c.bf16 %v1052, %v1050
        %v1081 = vpack.c.bf16 %v1053, %v1051
        %v1082 = vpack.c.bf16 %v1056, %v1054
        %v1083 = vpack.c.bf16 %v1057, %v1055
        %v1084 = vpack.c.bf16 %v1060, %v1058
        %v1085 = vpack.c.bf16 %v1061, %v1059
        %v1086 = vpack.c.bf16 %v1064, %v1062
        %v1087 = vpack.c.bf16 %v1065, %v1063
        %v1088 = vpack.c.bf16 %v1068, %v1066
        %v1089 = vpack.c.bf16 %v1069, %v1067
        %v1090 = vpack.c.bf16 %v1072, %v1070
        %v1091 = vpack.c.bf16 %v1073, %v1071
        %v1092 = vpack.c.bf16 %v1076, %v1074
        %v1093 = vpack.c.bf16 %v1077, %v1075
        %s1094 = smul.u32 %s43, 128
        %v1095 = vld [vmem:[#allocation9] sm:$0xf]
        %v1096 = vld [vmem:[#allocation9 + $0x4] sm:$0xf]
        %v1097 = vld [vmem:[#allocation9 + $0x8] sm:$0xf]
        %v1098 = vld [vmem:[#allocation9 + $0xc] sm:$0xf]
        %v1099 = vld [vmem:[#allocation9 + $0x10] sm:$0xf]
        %v1100 = vld [vmem:[#allocation9 + $0x14] sm:$0xf]
        %v1101 = vld [vmem:[#allocation9 + $0x18] sm:$0xf]
        %v1102 = vld [vmem:[#allocation9 + $0x1c] sm:$0xf]
        %v1103 = vld [vmem:[#allocation9 + $0x20] sm:$0xf]
        %v1104 = vld [vmem:[#allocation9 + $0x24] sm:$0xf]
        %v1105 = vld [vmem:[#allocation9 + $0x28] sm:$0xf]
        %v1106 = vld [vmem:[#allocation9 + $0x2c] sm:$0xf]
        %v1107 = vld [vmem:[#allocation9 + $0x30] sm:$0xf]
        %v1108 = vld [vmem:[#allocation9 + $0x34] sm:$0xf]
        %v1109 = vld [vmem:[#allocation9 + $0x38] sm:$0xf]
        %v1110 = vld [vmem:[#allocation9 + $0x3c] sm:$0xf]
        %v1111 = vld [vmem:[#allocation9 + $0x40] sm:$0xf]
        %v1112 = vld [vmem:[#allocation9 + $0x44] sm:$0xf]
        %v1113 = vld [vmem:[#allocation9 + $0x48] sm:$0xf]
        %v1114 = vld [vmem:[#allocation9 + $0x4c] sm:$0xf]
        %v1115 = vld [vmem:[#allocation9 + $0x50] sm:$0xf]
        %v1116 = vld [vmem:[#allocation9 + $0x54] sm:$0xf]
        %v1117 = vld [vmem:[#allocation9 + $0x58] sm:$0xf]
        %v1118 = vld [vmem:[#allocation9 + $0x5c] sm:$0xf]
        %v1119 = vld [vmem:[#allocation9 + $0x60] sm:$0xf]
        %v1120 = vld [vmem:[#allocation9 + $0x64] sm:$0xf]
        %v1121 = vld [vmem:[#allocation9 + $0x68] sm:$0xf]
        %v1122 = vld [vmem:[#allocation9 + $0x6c] sm:$0xf]
        %v1123 = vld [vmem:[#allocation9 + $0x70] sm:$0xf]
        %v1124 = vld [vmem:[#allocation9 + $0x74] sm:$0xf]
        %v1125 = vld [vmem:[#allocation9 + $0x78] sm:$0xf]
        %v1126 = vld [vmem:[#allocation9 + $0x7c] sm:$0xf]
        %v1127 = vld [vmem:[%s4] sm:$0x1]
        %v1128 = vlaneseq
        %v1129 = vshrl.u32 %v1128, 7
        %v1130 = vsub.s32 0, %v1129
        %v1131 = vrot.slane %v1127, %v1130
        %v1164 = vunpack.c.l.b16 %v1095
        %v1165 = vunpack.c.l.b16 %v1096
        %v1166 = vunpack.c.l.b16 %v1097
        %v1167 = vunpack.c.l.b16 %v1098
        %v1168 = vunpack.c.l.b16 %v1099
        %v1169 = vunpack.c.l.b16 %v1100
        %v1170 = vunpack.c.l.b16 %v1101
        %v1171 = vunpack.c.l.b16 %v1102
        %v1172 = vunpack.c.l.b16 %v1103
        %v1173 = vunpack.c.l.b16 %v1104
        %v1174 = vunpack.c.l.b16 %v1105
        %v1175 = vunpack.c.l.b16 %v1106
        %v1176 = vunpack.c.l.b16 %v1107
        %v1177 = vunpack.c.l.b16 %v1108
        %v1178 = vunpack.c.l.b16 %v1109
        %v1179 = vunpack.c.l.b16 %v1110
        %v1180 = vunpack.c.l.b16 %v1111
        %v1181 = vunpack.c.l.b16 %v1112
        %v1182 = vunpack.c.l.b16 %v1113
        %v1183 = vunpack.c.l.b16 %v1114
        %v1184 = vunpack.c.l.b16 %v1115
        %v1185 = vunpack.c.l.b16 %v1116
        %v1186 = vunpack.c.l.b16 %v1117
        %v1187 = vunpack.c.l.b16 %v1118
        %v1188 = vunpack.c.l.b16 %v1119
        %v1189 = vunpack.c.l.b16 %v1120
        %v1190 = vunpack.c.l.b16 %v1121
        %v1191 = vunpack.c.l.b16 %v1122
        %v1192 = vunpack.c.l.b16 %v1123
        %v1193 = vunpack.c.l.b16 %v1124
        %v1194 = vunpack.c.l.b16 %v1125
        %v1195 = vunpack.c.l.b16 %v1126
        %v1196 = vpack.c.b16 %v1165, %v1164
        %v1197 = vpack.c.b16 %v1167, %v1166
        %v1198 = vpack.c.b16 %v1169, %v1168
        %v1199 = vpack.c.b16 %v1171, %v1170
        %v1200 = vpack.c.b16 %v1173, %v1172
        %v1201 = vpack.c.b16 %v1175, %v1174
        %v1202 = vpack.c.b16 %v1177, %v1176
        %v1203 = vpack.c.b16 %v1179, %v1178
        %v1204 = vpack.c.b16 %v1181, %v1180
        %v1205 = vpack.c.b16 %v1183, %v1182
        %v1206 = vpack.c.b16 %v1185, %v1184
        %v1207 = vpack.c.b16 %v1187, %v1186
        %v1208 = vpack.c.b16 %v1189, %v1188
        %v1209 = vpack.c.b16 %v1191, %v1190
        %v1210 = vpack.c.b16 %v1193, %v1192
        %v1211 = vpack.c.b16 %v1195, %v1194
        %1228 = vmatprep.subr.bf16.mxu0 0
        %1229 = vmatpush1.bf16.msra.mxu0 %v1203
        %1230 = vmatprep.subr.bf16.mxu0 0
        %1231 = vmatpush1.bf16.msra.mxu0 %v1202
        %1232 = vmatprep.subr.bf16.mxu0 0
        %1233 = vmatpush1.bf16.msra.mxu0 %v1201
        %1234 = vmatprep.subr.bf16.mxu0 0
        %1235 = vmatpush1.bf16.msra.mxu0 %v1200
        %1236 = vmatprep.subr.bf16.mxu0 0
        %1237 = vmatpush1.bf16.msra.mxu0 %v1199
        %1238 = vmatprep.subr.bf16.mxu0 0
        %1239 = vmatpush1.bf16.msra.mxu0 %v1198
        %1240 = vmatprep.subr.bf16.mxu0 0
        %1241 = vmatpush1.bf16.msra.mxu0 %v1197
        %1242 = vmatprep.subr.bf16.mxu0 0
        %1243 = vmatpush1.bf16.msra.mxu0 %v1196
        %1244 = vmatprep.subr.bf16.mxu0 0
        %1245 = vmatpush2.bf16.msra.mxu0 %v1211
        %1246 = vmatprep.subr.bf16.mxu0 0
        %1247 = vmatpush2.bf16.msra.mxu0 %v1210
        %1248 = vmatprep.subr.bf16.mxu0 0
        %1249 = vmatpush2.bf16.msra.mxu0 %v1209
        %1250 = vmatprep.subr.bf16.mxu0 0
        %1251 = vmatpush2.bf16.msra.mxu0 %v1208
        %1252 = vmatprep.subr.bf16.mxu0 0
        %1253 = vmatpush2.bf16.msra.mxu0 %v1207
        %1254 = vmatprep.subr.bf16.mxu0 0
        %1255 = vmatpush2.bf16.msra.mxu0 %v1206
        %1256 = vmatprep.subr.bf16.mxu0 0
        %1257 = vmatpush2.bf16.msra.mxu0 %v1205
        %1258 = vmatprep.subr.bf16.mxu0 0
        %1259 = vmatpush2.bf16.msra.mxu0 %v1204
        %1260 = vmatprep.mubr.bf16.mxu0 %v1079
        %1261 = vmatmul.mubr.bf16.gmra.mxu0 %v1078
        %v1262 = vpop.f32.mrf.mxu0
        %v1263 = vadd.f32 %v1131, %v1262
        %v1264 = vpop.f32.mrf.mxu0
        %v1265 = vpop.f32.mrf.mxu0
        %v1266 = vadd.f32 %v1131, %v1265
        %v1267 = vpop.f32.mrf.mxu0
        %1268 = vmatprep.mubr.bf16.mxu0 %v1081
        %1269 = vmatmul.mubr.bf16.gmra.mxu0 %v1080
        %v1270 = vpop.f32.mrf.mxu0
        %v1271 = vadd.f32 %v1131, %v1270
        %v1272 = vpop.f32.mrf.mxu0
        %v1273 = vpop.f32.mrf.mxu0
        %v1274 = vadd.f32 %v1131, %v1273
        %v1275 = vpop.f32.mrf.mxu0
        %1276 = vmatprep.mubr.bf16.mxu0 %v1083
        %1277 = vmatmul.mubr.bf16.gmra.mxu0 %v1082
        %v1278 = vpop.f32.mrf.mxu0
        %v1279 = vadd.f32 %v1131, %v1278
        %v1280 = vpop.f32.mrf.mxu0
        %v1281 = vpop.f32.mrf.mxu0
        %v1282 = vadd.f32 %v1131, %v1281
        %v1283 = vpop.f32.mrf.mxu0
        %1284 = vmatprep.mubr.bf16.mxu0 %v1085
        %1285 = vmatmul.mubr.bf16.gmra.mxu0 %v1084
        %v1286 = vpop.f32.mrf.mxu0
        %v1287 = vadd.f32 %v1131, %v1286
        %v1288 = vpop.f32.mrf.mxu0
        %v1289 = vpop.f32.mrf.mxu0
        %v1290 = vadd.f32 %v1131, %v1289
        %v1291 = vpop.f32.mrf.mxu0
        %1292 = vmatprep.mubr.bf16.mxu0 %v1087
        %1293 = vmatmul.mubr.bf16.gmra.mxu0 %v1086
        %v1294 = vpop.f32.mrf.mxu0
        %v1295 = vadd.f32 %v1131, %v1294
        %v1296 = vpop.f32.mrf.mxu0
        %v1297 = vpop.f32.mrf.mxu0
        %v1298 = vadd.f32 %v1131, %v1297
        %v1299 = vpop.f32.mrf.mxu0
        %1300 = vmatprep.mubr.bf16.mxu0 %v1089
        %1301 = vmatmul.mubr.bf16.gmra.mxu0 %v1088
        %v1302 = vpop.f32.mrf.mxu0
        %v1303 = vadd.f32 %v1131, %v1302
        %v1304 = vpop.f32.mrf.mxu0
        %v1305 = vpop.f32.mrf.mxu0
        %v1306 = vadd.f32 %v1131, %v1305
        %v1307 = vpop.f32.mrf.mxu0
        %1308 = vmatprep.mubr.bf16.mxu0 %v1091
        %1309 = vmatmul.mubr.bf16.gmra.mxu0 %v1090
        %v1310 = vpop.f32.mrf.mxu0
        %v1311 = vadd.f32 %v1131, %v1310
        %v1312 = vpop.f32.mrf.mxu0
        %v1313 = vpop.f32.mrf.mxu0
        %v1314 = vadd.f32 %v1131, %v1313
        %v1315 = vpop.f32.mrf.mxu0
        %1316 = vmatprep.mubr.bf16.mxu0 %v1093
        %1317 = vmatmul.mubr.bf16.gmra.mxu0 %v1092
        %v1318 = vpop.f32.mrf.mxu0
        %v1319 = vadd.f32 %v1131, %v1318
        %v1320 = vpop.f32.mrf.mxu0
        %v1321 = vpop.f32.mrf.mxu0
        %v1322 = vadd.f32 %v1131, %v1321
        %v1323 = vpop.f32.mrf.mxu0
        %1324 = vdwg.mxu0
        %v1325 = vmul.f32 %v1263, 0.088388346
        %v1326 = vmul.f32 %v1266, 0.088388346
        %v1327 = vmul.f32 %v1271, 0.088388346
        %v1328 = vmul.f32 %v1274, 0.088388346
        %v1329 = vmul.f32 %v1279, 0.088388346
        %v1330 = vmul.f32 %v1282, 0.088388346
        %v1331 = vmul.f32 %v1287, 0.088388346
        %v1332 = vmul.f32 %v1290, 0.088388346
        %v1333 = vmul.f32 %v1295, 0.088388346
        %v1334 = vmul.f32 %v1298, 0.088388346
        %v1335 = vmul.f32 %v1303, 0.088388346
        %v1336 = vmul.f32 %v1306, 0.088388346
        %v1337 = vmul.f32 %v1311, 0.088388346
        %v1338 = vmul.f32 %v1314, 0.088388346
        %v1339 = vmul.f32 %v1319, 0.088388346
        %v1340 = vmul.f32 %v1322, 0.088388346
        %v1341 = vpack.c.bf16 %v1326, %v1325
        %v1342 = vpack.c.bf16 %v1328, %v1327
        %v1343 = vpack.c.bf16 %v1330, %v1329
        %v1344 = vpack.c.bf16 %v1332, %v1331
        %v1345 = vpack.c.bf16 %v1334, %v1333
        %v1346 = vpack.c.bf16 %v1336, %v1335
        %v1347 = vpack.c.bf16 %v1338, %v1337
        %v1348 = vpack.c.bf16 %v1340, %v1339
        %v1349 = vld [vmem:[#allocation10] sm:$0xf]
        %v1350 = vld [vmem:[#allocation10 + $0x4] sm:$0xf]
        %v1351 = vld [vmem:[#allocation10 + $0x8] sm:$0xf]
        %v1352 = vld [vmem:[#allocation10 + $0xc] sm:$0xf]
        %v1353 = vld [vmem:[#allocation10 + $0x10] sm:$0xf]
        %v1354 = vld [vmem:[#allocation10 + $0x14] sm:$0xf]
        %v1355 = vld [vmem:[#allocation10 + $0x18] sm:$0xf]
        %v1356 = vld [vmem:[#allocation10 + $0x1c] sm:$0xf]
        %v1357 = vld [vmem:[#allocation10 + $0x20] sm:$0xf]
        %v1358 = vld [vmem:[#allocation10 + $0x24] sm:$0xf]
        %v1359 = vld [vmem:[#allocation10 + $0x28] sm:$0xf]
        %v1360 = vld [vmem:[#allocation10 + $0x2c] sm:$0xf]
        %v1361 = vld [vmem:[#allocation10 + $0x30] sm:$0xf]
        %v1362 = vld [vmem:[#allocation10 + $0x34] sm:$0xf]
        %v1363 = vld [vmem:[#allocation10 + $0x38] sm:$0xf]
        %v1364 = vld [vmem:[#allocation10 + $0x3c] sm:$0xf]
        %v1365 = vld [vmem:[#allocation10 + $0x40] sm:$0xf]
        %v1366 = vld [vmem:[#allocation10 + $0x44] sm:$0xf]
        %v1367 = vld [vmem:[#allocation10 + $0x48] sm:$0xf]
        %v1368 = vld [vmem:[#allocation10 + $0x4c] sm:$0xf]
        %v1369 = vld [vmem:[#allocation10 + $0x50] sm:$0xf]
        %v1370 = vld [vmem:[#allocation10 + $0x54] sm:$0xf]
        %v1371 = vld [vmem:[#allocation10 + $0x58] sm:$0xf]
        %v1372 = vld [vmem:[#allocation10 + $0x5c] sm:$0xf]
        %v1373 = vld [vmem:[#allocation10 + $0x60] sm:$0xf]
        %v1374 = vld [vmem:[#allocation10 + $0x64] sm:$0xf]
        %v1375 = vld [vmem:[#allocation10 + $0x68] sm:$0xf]
        %v1376 = vld [vmem:[#allocation10 + $0x6c] sm:$0xf]
        %v1377 = vld [vmem:[#allocation10 + $0x70] sm:$0xf]
        %v1378 = vld [vmem:[#allocation10 + $0x74] sm:$0xf]
        %v1379 = vld [vmem:[#allocation10 + $0x78] sm:$0xf]
        %v1380 = vld [vmem:[#allocation10 + $0x7c] sm:$0xf]
        %v1381 = vld [vmem:[%s6] sm:$0x1]
        %v1382 = vlaneseq
        %v1383 = vshrl.u32 %v1382, 7
        %v1384 = vsub.s32 0, %v1383
        %v1385 = vrot.slane %v1381, %v1384
        %v1418 = vunpack.c.l.b16 %v1349
        %v1419 = vunpack.c.l.b16 %v1350
        %v1420 = vunpack.c.l.b16 %v1351
        %v1421 = vunpack.c.l.b16 %v1352
        %v1422 = vunpack.c.l.b16 %v1353
        %v1423 = vunpack.c.l.b16 %v1354
        %v1424 = vunpack.c.l.b16 %v1355
        %v1425 = vunpack.c.l.b16 %v1356
        %v1426 = vunpack.c.l.b16 %v1357
        %v1427 = vunpack.c.l.b16 %v1358
        %v1428 = vunpack.c.l.b16 %v1359
        %v1429 = vunpack.c.l.b16 %v1360
        %v1430 = vunpack.c.l.b16 %v1361
        %v1431 = vunpack.c.l.b16 %v1362
        %v1432 = vunpack.c.l.b16 %v1363
        %v1433 = vunpack.c.l.b16 %v1364
        %v1434 = vunpack.c.l.b16 %v1365
        %v1435 = vunpack.c.l.b16 %v1366
        %v1436 = vunpack.c.l.b16 %v1367
        %v1437 = vunpack.c.l.b16 %v1368
        %v1438 = vunpack.c.l.b16 %v1369
        %v1439 = vunpack.c.l.b16 %v1370
        %v1440 = vunpack.c.l.b16 %v1371
        %v1441 = vunpack.c.l.b16 %v1372
        %v1442 = vunpack.c.l.b16 %v1373
        %v1443 = vunpack.c.l.b16 %v1374
        %v1444 = vunpack.c.l.b16 %v1375
        %v1445 = vunpack.c.l.b16 %v1376
        %v1446 = vunpack.c.l.b16 %v1377
        %v1447 = vunpack.c.l.b16 %v1378
        %v1448 = vunpack.c.l.b16 %v1379
        %v1449 = vunpack.c.l.b16 %v1380
        %v1450 = vpack.c.b16 %v1419, %v1418
        %v1451 = vpack.c.b16 %v1421, %v1420
        %v1452 = vpack.c.b16 %v1423, %v1422
        %v1453 = vpack.c.b16 %v1425, %v1424
        %v1454 = vpack.c.b16 %v1427, %v1426
        %v1455 = vpack.c.b16 %v1429, %v1428
        %v1456 = vpack.c.b16 %v1431, %v1430
        %v1457 = vpack.c.b16 %v1433, %v1432
        %v1458 = vpack.c.b16 %v1435, %v1434
        %v1459 = vpack.c.b16 %v1437, %v1436
        %v1460 = vpack.c.b16 %v1439, %v1438
        %v1461 = vpack.c.b16 %v1441, %v1440
        %v1462 = vpack.c.b16 %v1443, %v1442
        %v1463 = vpack.c.b16 %v1445, %v1444
        %v1464 = vpack.c.b16 %v1447, %v1446
        %v1465 = vpack.c.b16 %v1449, %v1448
        %1482 = vmatprep.subr.bf16.mxu0 0
        %1483 = vmatpush1.bf16.msra.mxu0 %v1457
        %1484 = vmatprep.subr.bf16.mxu0 0
        %1485 = vmatpush1.bf16.msra.mxu0 %v1456
        %1486 = vmatprep.subr.bf16.mxu0 0
        %1487 = vmatpush1.bf16.msra.mxu0 %v1455
        %1488 = vmatprep.subr.bf16.mxu0 0
        %1489 = vmatpush1.bf16.msra.mxu0 %v1454
        %1490 = vmatprep.subr.bf16.mxu0 0
        %1491 = vmatpush1.bf16.msra.mxu0 %v1453
        %1492 = vmatprep.subr.bf16.mxu0 0
        %1493 = vmatpush1.bf16.msra.mxu0 %v1452
        %1494 = vmatprep.subr.bf16.mxu0 0
        %1495 = vmatpush1.bf16.msra.mxu0 %v1451
        %1496 = vmatprep.subr.bf16.mxu0 0
        %1497 = vmatpush1.bf16.msra.mxu0 %v1450
        %1498 = vmatprep.subr.bf16.mxu0 0
        %1499 = vmatpush2.bf16.msra.mxu0 %v1465
        %1500 = vmatprep.subr.bf16.mxu0 0
        %1501 = vmatpush2.bf16.msra.mxu0 %v1464
        %1502 = vmatprep.subr.bf16.mxu0 0
        %1503 = vmatpush2.bf16.msra.mxu0 %v1463
        %1504 = vmatprep.subr.bf16.mxu0 0
        %1505 = vmatpush2.bf16.msra.mxu0 %v1462
        %1506 = vmatprep.subr.bf16.mxu0 0
        %1507 = vmatpush2.bf16.msra.mxu0 %v1461
        %1508 = vmatprep.subr.bf16.mxu0 0
        %1509 = vmatpush2.bf16.msra.mxu0 %v1460
        %1510 = vmatprep.subr.bf16.mxu0 0
        %1511 = vmatpush2.bf16.msra.mxu0 %v1459
        %1512 = vmatprep.subr.bf16.mxu0 0
        %1513 = vmatpush2.bf16.msra.mxu0 %v1458
        %1514 = vmatprep.mubr.bf16.mxu0 %v1079
        %1515 = vmatmul.mubr.bf16.gmra.mxu0 %v1078
        %v1516 = vpop.f32.mrf.mxu0
        %v1517 = vadd.f32 %v1385, %v1516
        %v1518 = vpop.f32.mrf.mxu0
        %v1519 = vpop.f32.mrf.mxu0
        %v1520 = vadd.f32 %v1385, %v1519
        %v1521 = vpop.f32.mrf.mxu0
        %1522 = vmatprep.mubr.bf16.mxu0 %v1081
        %1523 = vmatmul.mubr.bf16.gmra.mxu0 %v1080
        %v1524 = vpop.f32.mrf.mxu0
        %v1525 = vadd.f32 %v1385, %v1524
        %v1526 = vpop.f32.mrf.mxu0
        %v1527 = vpop.f32.mrf.mxu0
        %v1528 = vadd.f32 %v1385, %v1527
        %v1529 = vpop.f32.mrf.mxu0
        %1530 = vmatprep.mubr.bf16.mxu0 %v1083
        %1531 = vmatmul.mubr.bf16.gmra.mxu0 %v1082
        %v1532 = vpop.f32.mrf.mxu0
        %v1533 = vadd.f32 %v1385, %v1532
        %v1534 = vpop.f32.mrf.mxu0
        %v1535 = vpop.f32.mrf.mxu0
        %v1536 = vadd.f32 %v1385, %v1535
        %v1537 = vpop.f32.mrf.mxu0
        %1538 = vmatprep.mubr.bf16.mxu0 %v1085
        %1539 = vmatmul.mubr.bf16.gmra.mxu0 %v1084
        %v1540 = vpop.f32.mrf.mxu0
        %v1541 = vadd.f32 %v1385, %v1540
        %v1542 = vpop.f32.mrf.mxu0
        %v1543 = vpop.f32.mrf.mxu0
        %v1544 = vadd.f32 %v1385, %v1543
        %v1545 = vpop.f32.mrf.mxu0
        %1546 = vmatprep.mubr.bf16.mxu0 %v1087
        %1547 = vmatmul.mubr.bf16.gmra.mxu0 %v1086
        %v1548 = vpop.f32.mrf.mxu0
        %v1549 = vadd.f32 %v1385, %v1548
        %v1550 = vpop.f32.mrf.mxu0
        %v1551 = vpop.f32.mrf.mxu0
        %v1552 = vadd.f32 %v1385, %v1551
        %v1553 = vpop.f32.mrf.mxu0
        %1554 = vmatprep.mubr.bf16.mxu0 %v1089
        %1555 = vmatmul.mubr.bf16.gmra.mxu0 %v1088
        %v1556 = vpop.f32.mrf.mxu0
        %v1557 = vadd.f32 %v1385, %v1556
        %v1558 = vpop.f32.mrf.mxu0
        %v1559 = vpop.f32.mrf.mxu0
        %v1560 = vadd.f32 %v1385, %v1559
        %v1561 = vpop.f32.mrf.mxu0
        %1562 = vmatprep.mubr.bf16.mxu0 %v1091
        %1563 = vmatmul.mubr.bf16.gmra.mxu0 %v1090
        %v1564 = vpop.f32.mrf.mxu0
        %v1565 = vadd.f32 %v1385, %v1564
        %v1566 = vpop.f32.mrf.mxu0
        %v1567 = vpop.f32.mrf.mxu0
        %v1568 = vadd.f32 %v1385, %v1567
        %v1569 = vpop.f32.mrf.mxu0
        %1570 = vmatprep.mubr.bf16.mxu0 %v1093
        %1571 = vmatmul.mubr.bf16.gmra.mxu0 %v1092
        %v1572 = vpop.f32.mrf.mxu0
        %v1573 = vadd.f32 %v1385, %v1572
        %v1574 = vpop.f32.mrf.mxu0
        %v1575 = vpop.f32.mrf.mxu0
        %v1576 = vadd.f32 %v1385, %v1575
        %v1577 = vpop.f32.mrf.mxu0
        %1578 = vdwg.mxu0
        %v1579 = vld [vmem:[#allocation12] sm:$0xf]
        %v1580 = vld [vmem:[#allocation12 + $0x4] sm:$0xf]
        %v1581 = vld [vmem:[#allocation12 + $0x8] sm:$0xf]
        %v1582 = vld [vmem:[#allocation12 + $0xc] sm:$0xf]
        %v1583 = vld [vmem:[#allocation12 + $0x10] sm:$0xf]
        %v1584 = vld [vmem:[#allocation12 + $0x14] sm:$0xf]
        %v1585 = vld [vmem:[#allocation12 + $0x18] sm:$0xf]
        %v1586 = vld [vmem:[#allocation12 + $0x1c] sm:$0xf]
        %v1587 = vld [vmem:[#allocation12 + $0x20] sm:$0xf]
        %v1588 = vld [vmem:[#allocation12 + $0x24] sm:$0xf]
        %v1589 = vld [vmem:[#allocation12 + $0x28] sm:$0xf]
        %v1590 = vld [vmem:[#allocation12 + $0x2c] sm:$0xf]
        %v1591 = vld [vmem:[#allocation12 + $0x30] sm:$0xf]
        %v1592 = vld [vmem:[#allocation12 + $0x34] sm:$0xf]
        %v1593 = vld [vmem:[#allocation12 + $0x38] sm:$0xf]
        %v1594 = vld [vmem:[#allocation12 + $0x3c] sm:$0xf]
        %v1595 = vld [vmem:[#allocation12 + $0x40] sm:$0xf]
        %v1596 = vld [vmem:[#allocation12 + $0x44] sm:$0xf]
        %v1597 = vld [vmem:[#allocation12 + $0x48] sm:$0xf]
        %v1598 = vld [vmem:[#allocation12 + $0x4c] sm:$0xf]
        %v1599 = vld [vmem:[#allocation12 + $0x50] sm:$0xf]
        %v1600 = vld [vmem:[#allocation12 + $0x54] sm:$0xf]
        %v1601 = vld [vmem:[#allocation12 + $0x58] sm:$0xf]
        %v1602 = vld [vmem:[#allocation12 + $0x5c] sm:$0xf]
        %v1603 = vld [vmem:[#allocation12 + $0x60] sm:$0xf]
        %v1604 = vld [vmem:[#allocation12 + $0x64] sm:$0xf]
        %v1605 = vld [vmem:[#allocation12 + $0x68] sm:$0xf]
        %v1606 = vld [vmem:[#allocation12 + $0x6c] sm:$0xf]
        %v1607 = vld [vmem:[#allocation12 + $0x70] sm:$0xf]
        %v1608 = vld [vmem:[#allocation12 + $0x74] sm:$0xf]
        %v1609 = vld [vmem:[#allocation12 + $0x78] sm:$0xf]
        %v1610 = vld [vmem:[#allocation12 + $0x7c] sm:$0xf]
        %v1611 = vld [vmem:[%s8] sm:$0x1]
        %v1612 = vlaneseq
        %v1613 = vshrl.u32 %v1612, 7
        %v1614 = vsub.s32 0, %v1613
        %v1615 = vrot.slane %v1611, %v1614
        %v1648 = vunpack.c.l.b16 %v1579
        %v1649 = vunpack.c.l.b16 %v1580
        %v1650 = vunpack.c.l.b16 %v1581
        %v1651 = vunpack.c.l.b16 %v1582
        %v1652 = vunpack.c.l.b16 %v1583
        %v1653 = vunpack.c.l.b16 %v1584
        %v1654 = vunpack.c.l.b16 %v1585
        %v1655 = vunpack.c.l.b16 %v1586
        %v1656 = vunpack.c.l.b16 %v1587
        %v1657 = vunpack.c.l.b16 %v1588
        %v1658 = vunpack.c.l.b16 %v1589
        %v1659 = vunpack.c.l.b16 %v1590
        %v1660 = vunpack.c.l.b16 %v1591
        %v1661 = vunpack.c.l.b16 %v1592
        %v1662 = vunpack.c.l.b16 %v1593
        %v1663 = vunpack.c.l.b16 %v1594
        %v1664 = vunpack.c.l.b16 %v1595
        %v1665 = vunpack.c.l.b16 %v1596
        %v1666 = vunpack.c.l.b16 %v1597
        %v1667 = vunpack.c.l.b16 %v1598
        %v1668 = vunpack.c.l.b16 %v1599
        %v1669 = vunpack.c.l.b16 %v1600
        %v1670 = vunpack.c.l.b16 %v1601
        %v1671 = vunpack.c.l.b16 %v1602
        %v1672 = vunpack.c.l.b16 %v1603
        %v1673 = vunpack.c.l.b16 %v1604
        %v1674 = vunpack.c.l.b16 %v1605
        %v1675 = vunpack.c.l.b16 %v1606
        %v1676 = vunpack.c.l.b16 %v1607
        %v1677 = vunpack.c.l.b16 %v1608
        %v1678 = vunpack.c.l.b16 %v1609
        %v1679 = vunpack.c.l.b16 %v1610
        %v1680 = vpack.c.b16 %v1649, %v1648
        %v1681 = vpack.c.b16 %v1651, %v1650
        %v1682 = vpack.c.b16 %v1653, %v1652
        %v1683 = vpack.c.b16 %v1655, %v1654
        %v1684 = vpack.c.b16 %v1657, %v1656
        %v1685 = vpack.c.b16 %v1659, %v1658
        %v1686 = vpack.c.b16 %v1661, %v1660
        %v1687 = vpack.c.b16 %v1663, %v1662
        %v1688 = vpack.c.b16 %v1665, %v1664
        %v1689 = vpack.c.b16 %v1667, %v1666
        %v1690 = vpack.c.b16 %v1669, %v1668
        %v1691 = vpack.c.b16 %v1671, %v1670
        %v1692 = vpack.c.b16 %v1673, %v1672
        %v1693 = vpack.c.b16 %v1675, %v1674
        %v1694 = vpack.c.b16 %v1677, %v1676
        %v1695 = vpack.c.b16 %v1679, %v1678
        %1712 = vmatprep.subr.bf16.mxu0 0
        %1713 = vmatpush1.bf16.msra.mxu0 %v1687
        %1714 = vmatprep.subr.bf16.mxu0 0
        %1715 = vmatpush1.bf16.msra.mxu0 %v1686
        %1716 = vmatprep.subr.bf16.mxu0 0
        %1717 = vmatpush1.bf16.msra.mxu0 %v1685
        %1718 = vmatprep.subr.bf16.mxu0 0
        %1719 = vmatpush1.bf16.msra.mxu0 %v1684
        %1720 = vmatprep.subr.bf16.mxu0 0
        %1721 = vmatpush1.bf16.msra.mxu0 %v1683
        %1722 = vmatprep.subr.bf16.mxu0 0
        %1723 = vmatpush1.bf16.msra.mxu0 %v1682
        %1724 = vmatprep.subr.bf16.mxu0 0
        %1725 = vmatpush1.bf16.msra.mxu0 %v1681
        %1726 = vmatprep.subr.bf16.mxu0 0
        %1727 = vmatpush1.bf16.msra.mxu0 %v1680
        %1728 = vmatprep.subr.bf16.mxu0 0
        %1729 = vmatpush2.bf16.msra.mxu0 %v1695
        %1730 = vmatprep.subr.bf16.mxu0 0
        %1731 = vmatpush2.bf16.msra.mxu0 %v1694
        %1732 = vmatprep.subr.bf16.mxu0 0
        %1733 = vmatpush2.bf16.msra.mxu0 %v1693
        %1734 = vmatprep.subr.bf16.mxu0 0
        %1735 = vmatpush2.bf16.msra.mxu0 %v1692
        %1736 = vmatprep.subr.bf16.mxu0 0
        %1737 = vmatpush2.bf16.msra.mxu0 %v1691
        %1738 = vmatprep.subr.bf16.mxu0 0
        %1739 = vmatpush2.bf16.msra.mxu0 %v1690
        %1740 = vmatprep.subr.bf16.mxu0 0
        %1741 = vmatpush2.bf16.msra.mxu0 %v1689
        %1742 = vmatprep.subr.bf16.mxu0 0
        %1743 = vmatpush2.bf16.msra.mxu0 %v1688
        %1744 = vmatprep.mubr.bf16.mxu0 %v1079
        %1745 = vmatmul.mubr.bf16.gmra.mxu0 %v1078
        %v1746 = vpop.f32.mrf.mxu0
        %v1747 = vadd.f32 %v1615, %v1746
        %v1748 = vpop.f32.mrf.mxu0
        %v1749 = vpop.f32.mrf.mxu0
        %v1750 = vadd.f32 %v1615, %v1749
        %v1751 = vpop.f32.mrf.mxu0
        %1752 = vmatprep.mubr.bf16.mxu0 %v1081
        %1753 = vmatmul.mubr.bf16.gmra.mxu0 %v1080
        %v1754 = vpop.f32.mrf.mxu0
        %v1755 = vadd.f32 %v1615, %v1754
        %v1756 = vpop.f32.mrf.mxu0
        %v1757 = vpop.f32.mrf.mxu0
        %v1758 = vadd.f32 %v1615, %v1757
        %v1759 = vpop.f32.mrf.mxu0
        %1760 = vmatprep.mubr.bf16.mxu0 %v1083
        %1761 = vmatmul.mubr.bf16.gmra.mxu0 %v1082
        %v1762 = vpop.f32.mrf.mxu0
        %v1763 = vadd.f32 %v1615, %v1762
        %v1764 = vpop.f32.mrf.mxu0
        %v1765 = vpop.f32.mrf.mxu0
        %v1766 = vadd.f32 %v1615, %v1765
        %v1767 = vpop.f32.mrf.mxu0
        %1768 = vmatprep.mubr.bf16.mxu0 %v1085
        %1769 = vmatmul.mubr.bf16.gmra.mxu0 %v1084
        %v1770 = vpop.f32.mrf.mxu0
        %v1771 = vadd.f32 %v1615, %v1770
        %v1772 = vpop.f32.mrf.mxu0
        %v1773 = vpop.f32.mrf.mxu0
        %v1774 = vadd.f32 %v1615, %v1773
        %v1775 = vpop.f32.mrf.mxu0
        %1776 = vmatprep.mubr.bf16.mxu0 %v1087
        %1777 = vmatmul.mubr.bf16.gmra.mxu0 %v1086
        %v1778 = vpop.f32.mrf.mxu0
        %v1779 = vadd.f32 %v1615, %v1778
        %v1780 = vpop.f32.mrf.mxu0
        %v1781 = vpop.f32.mrf.mxu0
        %v1782 = vadd.f32 %v1615, %v1781
        %v1783 = vpop.f32.mrf.mxu0
        %1784 = vmatprep.mubr.bf16.mxu0 %v1089
        %1785 = vmatmul.mubr.bf16.gmra.mxu0 %v1088
        %v1786 = vpop.f32.mrf.mxu0
        %v1787 = vadd.f32 %v1615, %v1786
        %v1788 = vpop.f32.mrf.mxu0
        %v1789 = vpop.f32.mrf.mxu0
        %v1790 = vadd.f32 %v1615, %v1789
        %v1791 = vpop.f32.mrf.mxu0
        %1792 = vmatprep.mubr.bf16.mxu0 %v1091
        %1793 = vmatmul.mubr.bf16.gmra.mxu0 %v1090
        %v1794 = vpop.f32.mrf.mxu0
        %v1795 = vadd.f32 %v1615, %v1794
        %v1796 = vpop.f32.mrf.mxu0
        %v1797 = vpop.f32.mrf.mxu0
        %v1798 = vadd.f32 %v1615, %v1797
        %v1799 = vpop.f32.mrf.mxu0
        %1800 = vmatprep.mubr.bf16.mxu0 %v1093
        %1801 = vmatmul.mubr.bf16.gmra.mxu0 %v1092
        %v1802 = vpop.f32.mrf.mxu0
        %v1803 = vadd.f32 %v1615, %v1802
        %v1804 = vpop.f32.mrf.mxu0
        %v1805 = vpop.f32.mrf.mxu0
        %v1806 = vadd.f32 %v1615, %v1805
        %v1807 = vpop.f32.mrf.mxu0
        %1808 = vdwg.mxu0
        %1809 = vxpose.xlu0.b32.start [1/16] %v1517, 128
        %1810 = vxpose.xlu0.b32.cont [2/16] %v1520, 128
        %1811 = vxpose.xlu0.b32.cont [3/16] %v1525, 128
        %1812 = vxpose.xlu0.b32.cont [4/16] %v1528, 128
        %1813 = vxpose.xlu0.b32.cont [5/16] %v1533, 128
        %1814 = vxpose.xlu0.b32.cont [6/16] %v1536, 128
        %1815 = vxpose.xlu0.b32.cont [7/16] %v1541, 128
        %1816 = vxpose.xlu0.b32.cont [8/16] %v1544, 128
        %1817 = vxpose.xlu0.b32.cont [9/16] %v1549, 128
        %1818 = vxpose.xlu0.b32.cont [10/16] %v1552, 128
        %1819 = vxpose.xlu0.b32.cont [11/16] %v1557, 128
        %1820 = vxpose.xlu0.b32.cont [12/16] %v1560, 128
        %1821 = vxpose.xlu0.b32.cont [13/16] %v1565, 128
        %1822 = vxpose.xlu0.b32.cont [14/16] %v1568, 128
        %1823 = vxpose.xlu0.b32.cont [15/16] %v1573, 128
        %1824 = vxpose.xlu0.b32.end [16/16] %v1576, 128
        %v1825 = vpop.trf.xlu0
        %v1826 = vpop.trf.xlu0
        %v1827 = vpop.trf.xlu0
        %v1828 = vpop.trf.xlu0
        %v1829 = vpop.trf.xlu0
        %v1830 = vpop.trf.xlu0
        %v1831 = vpop.trf.xlu0
        %v1832 = vpop.trf.xlu0
        %v1833 = vpop.trf.xlu0
        %v1834 = vpop.trf.xlu0
        %v1835 = vpop.trf.xlu0
        %v1836 = vpop.trf.xlu0
        %v1837 = vpop.trf.xlu0
        %v1838 = vpop.trf.xlu0
        %v1839 = vpop.trf.xlu0
        %v1840 = vpop.trf.xlu0
        %v1841 = vpack.c.bf16 %v1826, %v1825
        %v1842 = vpack.c.bf16 %v1828, %v1827
        %v1843 = vpack.c.bf16 %v1830, %v1829
        %v1844 = vpack.c.bf16 %v1832, %v1831
        %v1845 = vpack.c.bf16 %v1834, %v1833
        %v1846 = vpack.c.bf16 %v1836, %v1835
        %v1847 = vpack.c.bf16 %v1838, %v1837
        %v1848 = vpack.c.bf16 %v1840, %v1839
        %v1857 = vunpack.c.l.b16 %v1841
        %v1858 = vunpack.c.h.b16 %v1841
        %v1859 = vunpack.c.l.b16 %v1842
        %v1860 = vunpack.c.h.b16 %v1842
        %v1861 = vunpack.c.l.b16 %v1843
        %v1862 = vunpack.c.h.b16 %v1843
        %v1863 = vunpack.c.l.b16 %v1844
        %v1864 = vunpack.c.h.b16 %v1844
        %v1865 = vunpack.c.l.b16 %v1845
        %v1866 = vunpack.c.h.b16 %v1845
        %v1867 = vunpack.c.l.b16 %v1846
        %v1868 = vunpack.c.h.b16 %v1846
        %v1869 = vunpack.c.l.b16 %v1847
        %v1870 = vunpack.c.h.b16 %v1847
        %v1871 = vunpack.c.l.b16 %v1848
        %v1872 = vunpack.c.h.b16 %v1848
        %v1873 = vpack.c.b16 %v1857, %v1857
        %v1874 = vpack.c.b16 %v1858, %v1858
        %v1875 = vpack.c.b16 %v1859, %v1859
        %v1876 = vpack.c.b16 %v1860, %v1860
        %v1877 = vpack.c.b16 %v1861, %v1861
        %v1878 = vpack.c.b16 %v1862, %v1862
        %v1879 = vpack.c.b16 %v1863, %v1863
        %v1880 = vpack.c.b16 %v1864, %v1864
        %v1881 = vpack.c.b16 %v1865, %v1865
        %v1882 = vpack.c.b16 %v1866, %v1866
        %v1883 = vpack.c.b16 %v1867, %v1867
        %v1884 = vpack.c.b16 %v1868, %v1868
        %v1885 = vpack.c.b16 %v1869, %v1869
        %v1886 = vpack.c.b16 %v1870, %v1870
        %v1887 = vpack.c.b16 %v1871, %v1871
        %v1888 = vpack.c.b16 %v1872, %v1872
        %s1905 = sshra.s32 %s1094, 7
        %s1906 = sand.u32 %s1094, 127
        %s1907 = smul.addr %s1905, 4
        %s1908 = scalar_lea.vmem [#allocation2], %s1907
        %1909 = vst [vmem:[%s1908] sm:$0xf] %v1873
        %1910 = vst [vmem:[%s1908 + $0x8] sm:$0xf] %v1874
        %1911 = vst [vmem:[%s1908 + $0x10] sm:$0xf] %v1875
        %1912 = vst [vmem:[%s1908 + $0x18] sm:$0xf] %v1876
        %1913 = vst [vmem:[%s1908 + $0x20] sm:$0xf] %v1877
        %1914 = vst [vmem:[%s1908 + $0x28] sm:$0xf] %v1878
        %1915 = vst [vmem:[%s1908 + $0x30] sm:$0xf] %v1879
        %1916 = vst [vmem:[%s1908 + $0x38] sm:$0xf] %v1880
        %1917 = vst [vmem:[%s1908 + $0x40] sm:$0xf] %v1881
        %1918 = vst [vmem:[%s1908 + $0x48] sm:$0xf] %v1882
        %1919 = vst [vmem:[%s1908 + $0x50] sm:$0xf] %v1883
        %1920 = vst [vmem:[%s1908 + $0x58] sm:$0xf] %v1884
        %1921 = vst [vmem:[%s1908 + $0x60] sm:$0xf] %v1885
        %1922 = vst [vmem:[%s1908 + $0x68] sm:$0xf] %v1886
        %1923 = vst [vmem:[%s1908 + $0x70] sm:$0xf] %v1887
        %1924 = vst [vmem:[%s1908 + $0x78] sm:$0xf] %v1888
        %v1925 = vpack.c.bf16 %v1750, %v1747
        %v1926 = vpack.c.bf16 %v1758, %v1755
        %v1927 = vpack.c.bf16 %v1766, %v1763
        %v1928 = vpack.c.bf16 %v1774, %v1771
        %v1929 = vpack.c.bf16 %v1782, %v1779
        %v1930 = vpack.c.bf16 %v1790, %v1787
        %v1931 = vpack.c.bf16 %v1798, %v1795
        %v1932 = vpack.c.bf16 %v1806, %v1803
        %v1941 = vunpack.c.l.b16 %v1925
        %v1942 = vunpack.c.h.b16 %v1925
        %v1943 = vunpack.c.l.b16 %v1926
        %v1944 = vunpack.c.h.b16 %v1926
        %v1945 = vunpack.c.l.b16 %v1927
        %v1946 = vunpack.c.h.b16 %v1927
        %v1947 = vunpack.c.l.b16 %v1928
        %v1948 = vunpack.c.h.b16 %v1928
        %v1949 = vunpack.c.l.b16 %v1929
        %v1950 = vunpack.c.h.b16 %v1929
        %v1951 = vunpack.c.l.b16 %v1930
        %v1952 = vunpack.c.h.b16 %v1930
        %v1953 = vunpack.c.l.b16 %v1931
        %v1954 = vunpack.c.h.b16 %v1931
        %v1955 = vunpack.c.l.b16 %v1932
        %v1956 = vunpack.c.h.b16 %v1932
        %v1957 = vpack.c.b16 %v1941, %v1941
        %v1958 = vpack.c.b16 %v1942, %v1942
        %v1959 = vpack.c.b16 %v1943, %v1943
        %v1960 = vpack.c.b16 %v1944, %v1944
        %v1961 = vpack.c.b16 %v1945, %v1945
        %v1962 = vpack.c.b16 %v1946, %v1946
        %v1963 = vpack.c.b16 %v1947, %v1947
        %v1964 = vpack.c.b16 %v1948, %v1948
        %v1965 = vpack.c.b16 %v1949, %v1949
        %v1966 = vpack.c.b16 %v1950, %v1950
        %v1967 = vpack.c.b16 %v1951, %v1951
        %v1968 = vpack.c.b16 %v1952, %v1952
        %v1969 = vpack.c.b16 %v1953, %v1953
        %v1970 = vpack.c.b16 %v1954, %v1954
        %v1971 = vpack.c.b16 %v1955, %v1955
        %v1972 = vpack.c.b16 %v1956, %v1956
        %s1989 = sshra.s32 %s1094, 3
        %s1990 = sand.u32 %s1094, 7
        %s1991 = smul.addr %s1989, 4
        %s1992 = scalar_lea.vmem [#allocation3], %s1991
        %1993 = vst [vmem:[%s1992] sm:$0xf] %v1957
        %1994 = vst [vmem:[%s1992 + $0x4] sm:$0xf] %v1958
        %1995 = vst [vmem:[%s1992 + $0x8] sm:$0xf] %v1959
        %1996 = vst [vmem:[%s1992 + $0xc] sm:$0xf] %v1960
        %1997 = vst [vmem:[%s1992 + $0x10] sm:$0xf] %v1961
        %1998 = vst [vmem:[%s1992 + $0x14] sm:$0xf] %v1962
        %1999 = vst [vmem:[%s1992 + $0x18] sm:$0xf] %v1963
        %2000 = vst [vmem:[%s1992 + $0x1c] sm:$0xf] %v1964
        %2001 = vst [vmem:[%s1992 + $0x20] sm:$0xf] %v1965
        %2002 = vst [vmem:[%s1992 + $0x24] sm:$0xf] %v1966
        %2003 = vst [vmem:[%s1992 + $0x28] sm:$0xf] %v1967
        %2004 = vst [vmem:[%s1992 + $0x2c] sm:$0xf] %v1968
        %2005 = vst [vmem:[%s1992 + $0x30] sm:$0xf] %v1969
        %2006 = vst [vmem:[%s1992 + $0x34] sm:$0xf] %v1970
        %2007 = vst [vmem:[%s1992 + $0x38] sm:$0xf] %v1971
        %2008 = vst [vmem:[%s1992 + $0x3c] sm:$0xf] %v1972
        %s2009 = scalar_lea.vmem [#allocation9], 128
        %v2010 = vld [vmem:[%s2009] sm:$0xf]
        %v2011 = vld [vmem:[%s2009 + $0x4] sm:$0xf]
        %v2012 = vld [vmem:[%s2009 + $0x8] sm:$0xf]
        %v2013 = vld [vmem:[%s2009 + $0xc] sm:$0xf]
        %v2014 = vld [vmem:[%s2009 + $0x10] sm:$0xf]
        %v2015 = vld [vmem:[%s2009 + $0x14] sm:$0xf]
        %v2016 = vld [vmem:[%s2009 + $0x18] sm:$0xf]
        %v2017 = vld [vmem:[%s2009 + $0x1c] sm:$0xf]
        %v2018 = vld [vmem:[%s2009 + $0x20] sm:$0xf]
        %v2019 = vld [vmem:[%s2009 + $0x24] sm:$0xf]
        %v2020 = vld [vmem:[%s2009 + $0x28] sm:$0xf]
        %v2021 = vld [vmem:[%s2009 + $0x2c] sm:$0xf]
        %v2022 = vld [vmem:[%s2009 + $0x30] sm:$0xf]
        %v2023 = vld [vmem:[%s2009 + $0x34] sm:$0xf]
        %v2024 = vld [vmem:[%s2009 + $0x38] sm:$0xf]
        %v2025 = vld [vmem:[%s2009 + $0x3c] sm:$0xf]
        %v2026 = vld [vmem:[%s2009 + $0x40] sm:$0xf]
        %v2027 = vld [vmem:[%s2009 + $0x44] sm:$0xf]
        %v2028 = vld [vmem:[%s2009 + $0x48] sm:$0xf]
        %v2029 = vld [vmem:[%s2009 + $0x4c] sm:$0xf]
        %v2030 = vld [vmem:[%s2009 + $0x50] sm:$0xf]
        %v2031 = vld [vmem:[%s2009 + $0x54] sm:$0xf]
        %v2032 = vld [vmem:[%s2009 + $0x58] sm:$0xf]
        %v2033 = vld [vmem:[%s2009 + $0x5c] sm:$0xf]
        %v2034 = vld [vmem:[%s2009 + $0x60] sm:$0xf]
        %v2035 = vld [vmem:[%s2009 + $0x64] sm:$0xf]
        %v2036 = vld [vmem:[%s2009 + $0x68] sm:$0xf]
        %v2037 = vld [vmem:[%s2009 + $0x6c] sm:$0xf]
        %v2038 = vld [vmem:[%s2009 + $0x70] sm:$0xf]
        %v2039 = vld [vmem:[%s2009 + $0x74] sm:$0xf]
        %v2040 = vld [vmem:[%s2009 + $0x78] sm:$0xf]
        %v2041 = vld [vmem:[%s2009 + $0x7c] sm:$0xf]
        %v2042 = vld [vmem:[%s4 + $0x1] sm:$0x1]
        %v2043 = vlaneseq
        %v2044 = vshrl.u32 %v2043, 7
        %v2045 = vsub.s32 0, %v2044
        %v2046 = vrot.slane %v2042, %v2045
        %v2079 = vunpack.c.l.b16 %v2010
        %v2080 = vunpack.c.l.b16 %v2011
        %v2081 = vunpack.c.l.b16 %v2012
        %v2082 = vunpack.c.l.b16 %v2013
        %v2083 = vunpack.c.l.b16 %v2014
        %v2084 = vunpack.c.l.b16 %v2015
        %v2085 = vunpack.c.l.b16 %v2016
        %v2086 = vunpack.c.l.b16 %v2017
        %v2087 = vunpack.c.l.b16 %v2018
        %v2088 = vunpack.c.l.b16 %v2019
        %v2089 = vunpack.c.l.b16 %v2020
        %v2090 = vunpack.c.l.b16 %v2021
        %v2091 = vunpack.c.l.b16 %v2022
        %v2092 = vunpack.c.l.b16 %v2023
        %v2093 = vunpack.c.l.b16 %v2024
        %v2094 = vunpack.c.l.b16 %v2025
        %v2095 = vunpack.c.l.b16 %v2026
        %v2096 = vunpack.c.l.b16 %v2027
        %v2097 = vunpack.c.l.b16 %v2028
        %v2098 = vunpack.c.l.b16 %v2029
        %v2099 = vunpack.c.l.b16 %v2030
        %v2100 = vunpack.c.l.b16 %v2031
        %v2101 = vunpack.c.l.b16 %v2032
        %v2102 = vunpack.c.l.b16 %v2033
        %v2103 = vunpack.c.l.b16 %v2034
        %v2104 = vunpack.c.l.b16 %v2035
        %v2105 = vunpack.c.l.b16 %v2036
        %v2106 = vunpack.c.l.b16 %v2037
        %v2107 = vunpack.c.l.b16 %v2038
        %v2108 = vunpack.c.l.b16 %v2039
        %v2109 = vunpack.c.l.b16 %v2040
        %v2110 = vunpack.c.l.b16 %v2041
        %v2111 = vpack.c.b16 %v2080, %v2079
        %v2112 = vpack.c.b16 %v2082, %v2081
        %v2113 = vpack.c.b16 %v2084, %v2083
        %v2114 = vpack.c.b16 %v2086, %v2085
        %v2115 = vpack.c.b16 %v2088, %v2087
        %v2116 = vpack.c.b16 %v2090, %v2089
        %v2117 = vpack.c.b16 %v2092, %v2091
        %v2118 = vpack.c.b16 %v2094, %v2093
        %v2119 = vpack.c.b16 %v2096, %v2095
        %v2120 = vpack.c.b16 %v2098, %v2097
        %v2121 = vpack.c.b16 %v2100, %v2099
        %v2122 = vpack.c.b16 %v2102, %v2101
        %v2123 = vpack.c.b16 %v2104, %v2103
        %v2124 = vpack.c.b16 %v2106, %v2105
        %v2125 = vpack.c.b16 %v2108, %v2107
        %v2126 = vpack.c.b16 %v2110, %v2109
        %2143 = vmatprep.subr.bf16.mxu0 0
        %2144 = vmatpush1.bf16.msra.mxu0 %v2118
        %2145 = vmatprep.subr.bf16.mxu0 0
        %2146 = vmatpush1.bf16.msra.mxu0 %v2117
        %2147 = vmatprep.subr.bf16.mxu0 0
        %2148 = vmatpush1.bf16.msra.mxu0 %v2116
        %2149 = vmatprep.subr.bf16.mxu0 0
        %2150 = vmatpush1.bf16.msra.mxu0 %v2115
        %2151 = vmatprep.subr.bf16.mxu0 0
        %2152 = vmatpush1.bf16.msra.mxu0 %v2114
        %2153 = vmatprep.subr.bf16.mxu0 0
        %2154 = vmatpush1.bf16.msra.mxu0 %v2113
        %2155 = vmatprep.subr.bf16.mxu0 0
        %2156 = vmatpush1.bf16.msra.mxu0 %v2112
        %2157 = vmatprep.subr.bf16.mxu0 0
        %2158 = vmatpush1.bf16.msra.mxu0 %v2111
        %2159 = vmatprep.subr.bf16.mxu0 0
        %2160 = vmatpush2.bf16.msra.mxu0 %v2126
        %2161 = vmatprep.subr.bf16.mxu0 0
        %2162 = vmatpush2.bf16.msra.mxu0 %v2125
        %2163 = vmatprep.subr.bf16.mxu0 0
        %2164 = vmatpush2.bf16.msra.mxu0 %v2124
        %2165 = vmatprep.subr.bf16.mxu0 0
        %2166 = vmatpush2.bf16.msra.mxu0 %v2123
        %2167 = vmatprep.subr.bf16.mxu0 0
        %2168 = vmatpush2.bf16.msra.mxu0 %v2122
        %2169 = vmatprep.subr.bf16.mxu0 0
        %2170 = vmatpush2.bf16.msra.mxu0 %v2121
        %2171 = vmatprep.subr.bf16.mxu0 0
        %2172 = vmatpush2.bf16.msra.mxu0 %v2120
        %2173 = vmatprep.subr.bf16.mxu0 0
        %2174 = vmatpush2.bf16.msra.mxu0 %v2119
        %2175 = vmatprep.mubr.bf16.mxu0 %v1079
        %2176 = vmatmul.mubr.bf16.gmra.mxu0 %v1078
        %v2177 = vpop.f32.mrf.mxu0
        %v2178 = vadd.f32 %v2046, %v2177
        %v2179 = vpop.f32.mrf.mxu0
        %v2180 = vpop.f32.mrf.mxu0
        %v2181 = vadd.f32 %v2046, %v2180
        %v2182 = vpop.f32.mrf.mxu0
        %2183 = vmatprep.mubr.bf16.mxu0 %v1081
        %2184 = vmatmul.mubr.bf16.gmra.mxu0 %v1080
        %v2185 = vpop.f32.mrf.mxu0
        %v2186 = vadd.f32 %v2046, %v2185
        %v2187 = vpop.f32.mrf.mxu0
        %v2188 = vpop.f32.mrf.mxu0
        %v2189 = vadd.f32 %v2046, %v2188
        %v2190 = vpop.f32.mrf.mxu0
        %2191 = vmatprep.mubr.bf16.mxu0 %v1083
        %2192 = vmatmul.mubr.bf16.gmra.mxu0 %v1082
        %v2193 = vpop.f32.mrf.mxu0
        %v2194 = vadd.f32 %v2046, %v2193
        %v2195 = vpop.f32.mrf.mxu0
        %v2196 = vpop.f32.mrf.mxu0
        %v2197 = vadd.f32 %v2046, %v2196
        %v2198 = vpop.f32.mrf.mxu0
        %2199 = vmatprep.mubr.bf16.mxu0 %v1085
        %2200 = vmatmul.mubr.bf16.gmra.mxu0 %v1084
        %v2201 = vpop.f32.mrf.mxu0
        %v2202 = vadd.f32 %v2046, %v2201
        %v2203 = vpop.f32.mrf.mxu0
        %v2204 = vpop.f32.mrf.mxu0
        %v2205 = vadd.f32 %v2046, %v2204
        %v2206 = vpop.f32.mrf.mxu0
        %2207 = vmatprep.mubr.bf16.mxu0 %v1087
        %2208 = vmatmul.mubr.bf16.gmra.mxu0 %v1086
        %v2209 = vpop.f32.mrf.mxu0
        %v2210 = vadd.f32 %v2046, %v2209
        %v2211 = vpop.f32.mrf.mxu0
        %v2212 = vpop.f32.mrf.mxu0
        %v2213 = vadd.f32 %v2046, %v2212
        %v2214 = vpop.f32.mrf.mxu0
        %2215 = vmatprep.mubr.bf16.mxu0 %v1089
        %2216 = vmatmul.mubr.bf16.gmra.mxu0 %v1088
        %v2217 = vpop.f32.mrf.mxu0
        %v2218 = vadd.f32 %v2046, %v2217
        %v2219 = vpop.f32.mrf.mxu0
        %v2220 = vpop.f32.mrf.mxu0
        %v2221 = vadd.f32 %v2046, %v2220
        %v2222 = vpop.f32.mrf.mxu0
        %2223 = vmatprep.mubr.bf16.mxu0 %v1091
        %2224 = vmatmul.mubr.bf16.gmra.mxu0 %v1090
        %v2225 = vpop.f32.mrf.mxu0
        %v2226 = vadd.f32 %v2046, %v2225
        %v2227 = vpop.f32.mrf.mxu0
        %v2228 = vpop.f32.mrf.mxu0
        %v2229 = vadd.f32 %v2046, %v2228
        %v2230 = vpop.f32.mrf.mxu0
        %2231 = vmatprep.mubr.bf16.mxu0 %v1093
        %2232 = vmatmul.mubr.bf16.gmra.mxu0 %v1092
        %v2233 = vpop.f32.mrf.mxu0
        %v2234 = vadd.f32 %v2046, %v2233
        %v2235 = vpop.f32.mrf.mxu0
        %v2236 = vpop.f32.mrf.mxu0
        %v2237 = vadd.f32 %v2046, %v2236
        %v2238 = vpop.f32.mrf.mxu0
        %2239 = vdwg.mxu0
        %v2240 = vmul.f32 %v2178, 0.088388346
        %v2241 = vmul.f32 %v2181, 0.088388346
        %v2242 = vmul.f32 %v2186, 0.088388346
        %v2243 = vmul.f32 %v2189, 0.088388346
        %v2244 = vmul.f32 %v2194, 0.088388346
        %v2245 = vmul.f32 %v2197, 0.088388346
        %v2246 = vmul.f32 %v2202, 0.088388346
        %v2247 = vmul.f32 %v2205, 0.088388346
        %v2248 = vmul.f32 %v2210, 0.088388346
        %v2249 = vmul.f32 %v2213, 0.088388346
        %v2250 = vmul.f32 %v2218, 0.088388346
        %v2251 = vmul.f32 %v2221, 0.088388346
        %v2252 = vmul.f32 %v2226, 0.088388346
        %v2253 = vmul.f32 %v2229, 0.088388346
        %v2254 = vmul.f32 %v2234, 0.088388346
        %v2255 = vmul.f32 %v2237, 0.088388346
        %v2256 = vpack.c.bf16 %v2241, %v2240
        %v2257 = vpack.c.bf16 %v2243, %v2242
        %v2258 = vpack.c.bf16 %v2245, %v2244
        %v2259 = vpack.c.bf16 %v2247, %v2246
        %v2260 = vpack.c.bf16 %v2249, %v2248
        %v2261 = vpack.c.bf16 %v2251, %v2250
        %v2262 = vpack.c.bf16 %v2253, %v2252
        %v2263 = vpack.c.bf16 %v2255, %v2254
        %s2264 = scalar_lea.vmem [#allocation10], 128
        %v2265 = vld [vmem:[%s2264] sm:$0xf]
        %v2266 = vld [vmem:[%s2264 + $0x4] sm:$0xf]
        %v2267 = vld [vmem:[%s2264 + $0x8] sm:$0xf]
        %v2268 = vld [vmem:[%s2264 + $0xc] sm:$0xf]
        %v2269 = vld [vmem:[%s2264 + $0x10] sm:$0xf]
        %v2270 = vld [vmem:[%s2264 + $0x14] sm:$0xf]
        %v2271 = vld [vmem:[%s2264 + $0x18] sm:$0xf]
        %v2272 = vld [vmem:[%s2264 + $0x1c] sm:$0xf]
        %v2273 = vld [vmem:[%s2264 + $0x20] sm:$0xf]
        %v2274 = vld [vmem:[%s2264 + $0x24] sm:$0xf]
        %v2275 = vld [vmem:[%s2264 + $0x28] sm:$0xf]
        %v2276 = vld [vmem:[%s2264 + $0x2c] sm:$0xf]
        %v2277 = vld [vmem:[%s2264 + $0x30] sm:$0xf]
        %v2278 = vld [vmem:[%s2264 + $0x34] sm:$0xf]
        %v2279 = vld [vmem:[%s2264 + $0x38] sm:$0xf]
        %v2280 = vld [vmem:[%s2264 + $0x3c] sm:$0xf]
        %v2281 = vld [vmem:[%s2264 + $0x40] sm:$0xf]
        %v2282 = vld [vmem:[%s2264 + $0x44] sm:$0xf]
        %v2283 = vld [vmem:[%s2264 + $0x48] sm:$0xf]
        %v2284 = vld [vmem:[%s2264 + $0x4c] sm:$0xf]
        %v2285 = vld [vmem:[%s2264 + $0x50] sm:$0xf]
        %v2286 = vld [vmem:[%s2264 + $0x54] sm:$0xf]
        %v2287 = vld [vmem:[%s2264 + $0x58] sm:$0xf]
        %v2288 = vld [vmem:[%s2264 + $0x5c] sm:$0xf]
        %v2289 = vld [vmem:[%s2264 + $0x60] sm:$0xf]
        %v2290 = vld [vmem:[%s2264 + $0x64] sm:$0xf]
        %v2291 = vld [vmem:[%s2264 + $0x68] sm:$0xf]
        %v2292 = vld [vmem:[%s2264 + $0x6c] sm:$0xf]
        %v2293 = vld [vmem:[%s2264 + $0x70] sm:$0xf]
        %v2294 = vld [vmem:[%s2264 + $0x74] sm:$0xf]
        %v2295 = vld [vmem:[%s2264 + $0x78] sm:$0xf]
        %v2296 = vld [vmem:[%s2264 + $0x7c] sm:$0xf]
        %v2297 = vld [vmem:[%s6 + $0x1] sm:$0x1]
        %v2298 = vlaneseq
        %v2299 = vshrl.u32 %v2298, 7
        %v2300 = vsub.s32 0, %v2299
        %v2301 = vrot.slane %v2297, %v2300
        %v2334 = vunpack.c.l.b16 %v2265
        %v2335 = vunpack.c.l.b16 %v2266
        %v2336 = vunpack.c.l.b16 %v2267
        %v2337 = vunpack.c.l.b16 %v2268
        %v2338 = vunpack.c.l.b16 %v2269
        %v2339 = vunpack.c.l.b16 %v2270
        %v2340 = vunpack.c.l.b16 %v2271
        %v2341 = vunpack.c.l.b16 %v2272
        %v2342 = vunpack.c.l.b16 %v2273
        %v2343 = vunpack.c.l.b16 %v2274
        %v2344 = vunpack.c.l.b16 %v2275
        %v2345 = vunpack.c.l.b16 %v2276
        %v2346 = vunpack.c.l.b16 %v2277
        %v2347 = vunpack.c.l.b16 %v2278
        %v2348 = vunpack.c.l.b16 %v2279
        %v2349 = vunpack.c.l.b16 %v2280
        %v2350 = vunpack.c.l.b16 %v2281
        %v2351 = vunpack.c.l.b16 %v2282
        %v2352 = vunpack.c.l.b16 %v2283
        %v2353 = vunpack.c.l.b16 %v2284
        %v2354 = vunpack.c.l.b16 %v2285
        %v2355 = vunpack.c.l.b16 %v2286
        %v2356 = vunpack.c.l.b16 %v2287
        %v2357 = vunpack.c.l.b16 %v2288
        %v2358 = vunpack.c.l.b16 %v2289
        %v2359 = vunpack.c.l.b16 %v2290
        %v2360 = vunpack.c.l.b16 %v2291
        %v2361 = vunpack.c.l.b16 %v2292
        %v2362 = vunpack.c.l.b16 %v2293
        %v2363 = vunpack.c.l.b16 %v2294
        %v2364 = vunpack.c.l.b16 %v2295
        %v2365 = vunpack.c.l.b16 %v2296
        %v2366 = vpack.c.b16 %v2335, %v2334
        %v2367 = vpack.c.b16 %v2337, %v2336
        %v2368 = vpack.c.b16 %v2339, %v2338
        %v2369 = vpack.c.b16 %v2341, %v2340
        %v2370 = vpack.c.b16 %v2343, %v2342
        %v2371 = vpack.c.b16 %v2345, %v2344
        %v2372 = vpack.c.b16 %v2347, %v2346
        %v2373 = vpack.c.b16 %v2349, %v2348
        %v2374 = vpack.c.b16 %v2351, %v2350
        %v2375 = vpack.c.b16 %v2353, %v2352
        %v2376 = vpack.c.b16 %v2355, %v2354
        %v2377 = vpack.c.b16 %v2357, %v2356
        %v2378 = vpack.c.b16 %v2359, %v2358
        %v2379 = vpack.c.b16 %v2361, %v2360
        %v2380 = vpack.c.b16 %v2363, %v2362
        %v2381 = vpack.c.b16 %v2365, %v2364
        %2398 = vmatprep.subr.bf16.mxu0 0
        %2399 = vmatpush1.bf16.msra.mxu0 %v2373
        %2400 = vmatprep.subr.bf16.mxu0 0
        %2401 = vmatpush1.bf16.msra.mxu0 %v2372
        %2402 = vmatprep.subr.bf16.mxu0 0
        %2403 = vmatpush1.bf16.msra.mxu0 %v2371
        %2404 = vmatprep.subr.bf16.mxu0 0
        %2405 = vmatpush1.bf16.msra.mxu0 %v2370
        %2406 = vmatprep.subr.bf16.mxu0 0
        %2407 = vmatpush1.bf16.msra.mxu0 %v2369
        %2408 = vmatprep.subr.bf16.mxu0 0
        %2409 = vmatpush1.bf16.msra.mxu0 %v2368
        %2410 = vmatprep.subr.bf16.mxu0 0
        %2411 = vmatpush1.bf16.msra.mxu0 %v2367
        %2412 = vmatprep.subr.bf16.mxu0 0
        %2413 = vmatpush1.bf16.msra.mxu0 %v2366
        %2414 = vmatprep.subr.bf16.mxu0 0
        %2415 = vmatpush2.bf16.msra.mxu0 %v2381
        %2416 = vmatprep.subr.bf16.mxu0 0
        %2417 = vmatpush2.bf16.msra.mxu0 %v2380
        %2418 = vmatprep.subr.bf16.mxu0 0
        %2419 = vmatpush2.bf16.msra.mxu0 %v2379
        %2420 = vmatprep.subr.bf16.mxu0 0
        %2421 = vmatpush2.bf16.msra.mxu0 %v2378
        %2422 = vmatprep.subr.bf16.mxu0 0
        %2423 = vmatpush2.bf16.msra.mxu0 %v2377
        %2424 = vmatprep.subr.bf16.mxu0 0
        %2425 = vmatpush2.bf16.msra.mxu0 %v2376
        %2426 = vmatprep.subr.bf16.mxu0 0
        %2427 = vmatpush2.bf16.msra.mxu0 %v2375
        %2428 = vmatprep.subr.bf16.mxu0 0
        %2429 = vmatpush2.bf16.msra.mxu0 %v2374
        %2430 = vmatprep.mubr.bf16.mxu0 %v1079
        %2431 = vmatmul.mubr.bf16.gmra.mxu0 %v1078
        %v2432 = vpop.f32.mrf.mxu0
        %v2433 = vadd.f32 %v2301, %v2432
        %v2434 = vpop.f32.mrf.mxu0
        %v2435 = vpop.f32.mrf.mxu0
        %v2436 = vadd.f32 %v2301, %v2435
        %v2437 = vpop.f32.mrf.mxu0
        %2438 = vmatprep.mubr.bf16.mxu0 %v1081
        %2439 = vmatmul.mubr.bf16.gmra.mxu0 %v1080
        %v2440 = vpop.f32.mrf.mxu0
        %v2441 = vadd.f32 %v2301, %v2440
        %v2442 = vpop.f32.mrf.mxu0
        %v2443 = vpop.f32.mrf.mxu0
        %v2444 = vadd.f32 %v2301, %v2443
        %v2445 = vpop.f32.mrf.mxu0
        %2446 = vmatprep.mubr.bf16.mxu0 %v1083
        %2447 = vmatmul.mubr.bf16.gmra.mxu0 %v1082
        %v2448 = vpop.f32.mrf.mxu0
        %v2449 = vadd.f32 %v2301, %v2448
        %v2450 = vpop.f32.mrf.mxu0
        %v2451 = vpop.f32.mrf.mxu0
        %v2452 = vadd.f32 %v2301, %v2451
        %v2453 = vpop.f32.mrf.mxu0
        %2454 = vmatprep.mubr.bf16.mxu0 %v1085
        %2455 = vmatmul.mubr.bf16.gmra.mxu0 %v1084
        %v2456 = vpop.f32.mrf.mxu0
        %v2457 = vadd.f32 %v2301, %v2456
        %v2458 = vpop.f32.mrf.mxu0
        %v2459 = vpop.f32.mrf.mxu0
        %v2460 = vadd.f32 %v2301, %v2459
        %v2461 = vpop.f32.mrf.mxu0
        %2462 = vmatprep.mubr.bf16.mxu0 %v1087
        %2463 = vmatmul.mubr.bf16.gmra.mxu0 %v1086
        %v2464 = vpop.f32.mrf.mxu0
        %v2465 = vadd.f32 %v2301, %v2464
        %v2466 = vpop.f32.mrf.mxu0
        %v2467 = vpop.f32.mrf.mxu0
        %v2468 = vadd.f32 %v2301, %v2467
        %v2469 = vpop.f32.mrf.mxu0
        %2470 = vmatprep.mubr.bf16.mxu0 %v1089
        %2471 = vmatmul.mubr.bf16.gmra.mxu0 %v1088
        %v2472 = vpop.f32.mrf.mxu0
        %v2473 = vadd.f32 %v2301, %v2472
        %v2474 = vpop.f32.mrf.mxu0
        %v2475 = vpop.f32.mrf.mxu0
        %v2476 = vadd.f32 %v2301, %v2475
        %v2477 = vpop.f32.mrf.mxu0
        %2478 = vmatprep.mubr.bf16.mxu0 %v1091
        %2479 = vmatmul.mubr.bf16.gmra.mxu0 %v1090
        %v2480 = vpop.f32.mrf.mxu0
        %v2481 = vadd.f32 %v2301, %v2480
        %v2482 = vpop.f32.mrf.mxu0
        %v2483 = vpop.f32.mrf.mxu0
        %v2484 = vadd.f32 %v2301, %v2483
        %v2485 = vpop.f32.mrf.mxu0
        %2486 = vmatprep.mubr.bf16.mxu0 %v1093
        %2487 = vmatmul.mubr.bf16.gmra.mxu0 %v1092
        %v2488 = vpop.f32.mrf.mxu0
        %v2489 = vadd.f32 %v2301, %v2488
        %v2490 = vpop.f32.mrf.mxu0
        %v2491 = vpop.f32.mrf.mxu0
        %v2492 = vadd.f32 %v2301, %v2491
        %v2493 = vpop.f32.mrf.mxu0
        %2494 = vdwg.mxu0
        %s2495 = scalar_lea.vmem [#allocation12], 128
        %v2496 = vld [vmem:[%s2495] sm:$0xf]
        %v2497 = vld [vmem:[%s2495 + $0x4] sm:$0xf]
        %v2498 = vld [vmem:[%s2495 + $0x8] sm:$0xf]
        %v2499 = vld [vmem:[%s2495 + $0xc] sm:$0xf]
        %v2500 = vld [vmem:[%s2495 + $0x10] sm:$0xf]
        %v2501 = vld [vmem:[%s2495 + $0x14] sm:$0xf]
        %v2502 = vld [vmem:[%s2495 + $0x18] sm:$0xf]
        %v2503 = vld [vmem:[%s2495 + $0x1c] sm:$0xf]
        %v2504 = vld [vmem:[%s2495 + $0x20] sm:$0xf]
        %v2505 = vld [vmem:[%s2495 + $0x24] sm:$0xf]
        %v2506 = vld [vmem:[%s2495 + $0x28] sm:$0xf]
        %v2507 = vld [vmem:[%s2495 + $0x2c] sm:$0xf]
        %v2508 = vld [vmem:[%s2495 + $0x30] sm:$0xf]
        %v2509 = vld [vmem:[%s2495 + $0x34] sm:$0xf]
        %v2510 = vld [vmem:[%s2495 + $0x38] sm:$0xf]
        %v2511 = vld [vmem:[%s2495 + $0x3c] sm:$0xf]
        %v2512 = vld [vmem:[%s2495 + $0x40] sm:$0xf]
        %v2513 = vld [vmem:[%s2495 + $0x44] sm:$0xf]
        %v2514 = vld [vmem:[%s2495 + $0x48] sm:$0xf]
        %v2515 = vld [vmem:[%s2495 + $0x4c] sm:$0xf]
        %v2516 = vld [vmem:[%s2495 + $0x50] sm:$0xf]
        %v2517 = vld [vmem:[%s2495 + $0x54] sm:$0xf]
        %v2518 = vld [vmem:[%s2495 + $0x58] sm:$0xf]
        %v2519 = vld [vmem:[%s2495 + $0x5c] sm:$0xf]
        %v2520 = vld [vmem:[%s2495 + $0x60] sm:$0xf]
        %v2521 = vld [vmem:[%s2495 + $0x64] sm:$0xf]
        %v2522 = vld [vmem:[%s2495 + $0x68] sm:$0xf]
        %v2523 = vld [vmem:[%s2495 + $0x6c] sm:$0xf]
        %v2524 = vld [vmem:[%s2495 + $0x70] sm:$0xf]
        %v2525 = vld [vmem:[%s2495 + $0x74] sm:$0xf]
        %v2526 = vld [vmem:[%s2495 + $0x78] sm:$0xf]
        %v2527 = vld [vmem:[%s2495 + $0x7c] sm:$0xf]
        %v2528 = vld [vmem:[%s8 + $0x1] sm:$0x1]
        %v2529 = vlaneseq
        %v2530 = vshrl.u32 %v2529, 7
        %v2531 = vsub.s32 0, %v2530
        %v2532 = vrot.slane %v2528, %v2531
        %v2565 = vunpack.c.l.b16 %v2496
        %v2566 = vunpack.c.l.b16 %v2497
        %v2567 = vunpack.c.l.b16 %v2498
        %v2568 = vunpack.c.l.b16 %v2499
        %v2569 = vunpack.c.l.b16 %v2500
        %v2570 = vunpack.c.l.b16 %v2501
        %v2571 = vunpack.c.l.b16 %v2502
        %v2572 = vunpack.c.l.b16 %v2503
        %v2573 = vunpack.c.l.b16 %v2504
        %v2574 = vunpack.c.l.b16 %v2505
        %v2575 = vunpack.c.l.b16 %v2506
        %v2576 = vunpack.c.l.b16 %v2507
        %v2577 = vunpack.c.l.b16 %v2508
        %v2578 = vunpack.c.l.b16 %v2509
        %v2579 = vunpack.c.l.b16 %v2510
        %v2580 = vunpack.c.l.b16 %v2511
        %v2581 = vunpack.c.l.b16 %v2512
        %v2582 = vunpack.c.l.b16 %v2513
        %v2583 = vunpack.c.l.b16 %v2514
        %v2584 = vunpack.c.l.b16 %v2515
        %v2585 = vunpack.c.l.b16 %v2516
        %v2586 = vunpack.c.l.b16 %v2517
        %v2587 = vunpack.c.l.b16 %v2518
        %v2588 = vunpack.c.l.b16 %v2519
        %v2589 = vunpack.c.l.b16 %v2520
        %v2590 = vunpack.c.l.b16 %v2521
        %v2591 = vunpack.c.l.b16 %v2522
        %v2592 = vunpack.c.l.b16 %v2523
        %v2593 = vunpack.c.l.b16 %v2524
        %v2594 = vunpack.c.l.b16 %v2525
        %v2595 = vunpack.c.l.b16 %v2526
        %v2596 = vunpack.c.l.b16 %v2527
        %v2597 = vpack.c.b16 %v2566, %v2565
        %v2598 = vpack.c.b16 %v2568, %v2567
        %v2599 = vpack.c.b16 %v2570, %v2569
        %v2600 = vpack.c.b16 %v2572, %v2571
        %v2601 = vpack.c.b16 %v2574, %v2573
        %v2602 = vpack.c.b16 %v2576, %v2575
        %v2603 = vpack.c.b16 %v2578, %v2577
        %v2604 = vpack.c.b16 %v2580, %v2579
        %v2605 = vpack.c.b16 %v2582, %v2581
        %v2606 = vpack.c.b16 %v2584, %v2583
        %v2607 = vpack.c.b16 %v2586, %v2585
        %v2608 = vpack.c.b16 %v2588, %v2587
        %v2609 = vpack.c.b16 %v2590, %v2589
        %v2610 = vpack.c.b16 %v2592, %v2591
        %v2611 = vpack.c.b16 %v2594, %v2593
        %v2612 = vpack.c.b16 %v2596, %v2595
        %2629 = vmatprep.subr.bf16.mxu0 0
        %2630 = vmatpush1.bf16.msra.mxu0 %v2604
        %2631 = vmatprep.subr.bf16.mxu0 0
        %2632 = vmatpush1.bf16.msra.mxu0 %v2603
        %2633 = vmatprep.subr.bf16.mxu0 0
        %2634 = vmatpush1.bf16.msra.mxu0 %v2602
        %2635 = vmatprep.subr.bf16.mxu0 0
        %2636 = vmatpush1.bf16.msra.mxu0 %v2601
        %2637 = vmatprep.subr.bf16.mxu0 0
        %2638 = vmatpush1.bf16.msra.mxu0 %v2600
        %2639 = vmatprep.subr.bf16.mxu0 0
        %2640 = vmatpush1.bf16.msra.mxu0 %v2599
        %2641 = vmatprep.subr.bf16.mxu0 0
        %2642 = vmatpush1.bf16.msra.mxu0 %v2598
        %2643 = vmatprep.subr.bf16.mxu0 0
        %2644 = vmatpush1.bf16.msra.mxu0 %v2597
        %2645 = vmatprep.subr.bf16.mxu0 0
        %2646 = vmatpush2.bf16.msra.mxu0 %v2612
        %2647 = vmatprep.subr.bf16.mxu0 0
        %2648 = vmatpush2.bf16.msra.mxu0 %v2611
        %2649 = vmatprep.subr.bf16.mxu0 0
        %2650 = vmatpush2.bf16.msra.mxu0 %v2610
        %2651 = vmatprep.subr.bf16.mxu0 0
        %2652 = vmatpush2.bf16.msra.mxu0 %v2609
        %2653 = vmatprep.subr.bf16.mxu0 0
        %2654 = vmatpush2.bf16.msra.mxu0 %v2608
        %2655 = vmatprep.subr.bf16.mxu0 0
        %2656 = vmatpush2.bf16.msra.mxu0 %v2607
        %2657 = vmatprep.subr.bf16.mxu0 0
        %2658 = vmatpush2.bf16.msra.mxu0 %v2606
        %2659 = vmatprep.subr.bf16.mxu0 0
        %2660 = vmatpush2.bf16.msra.mxu0 %v2605
        %2661 = vmatprep.mubr.bf16.mxu0 %v1079
        %2662 = vmatmul.mubr.bf16.gmra.mxu0 %v1078
        %v2663 = vpop.f32.mrf.mxu0
        %v2664 = vadd.f32 %v2532, %v2663
        %v2665 = vpop.f32.mrf.mxu0
        %v2666 = vpop.f32.mrf.mxu0
        %v2667 = vadd.f32 %v2532, %v2666
        %v2668 = vpop.f32.mrf.mxu0
        %2669 = vmatprep.mubr.bf16.mxu0 %v1081
        %2670 = vmatmul.mubr.bf16.gmra.mxu0 %v1080
        %v2671 = vpop.f32.mrf.mxu0
        %v2672 = vadd.f32 %v2532, %v2671
        %v2673 = vpop.f32.mrf.mxu0
        %v2674 = vpop.f32.mrf.mxu0
        %v2675 = vadd.f32 %v2532, %v2674
        %v2676 = vpop.f32.mrf.mxu0
        %2677 = vmatprep.mubr.bf16.mxu0 %v1083
        %2678 = vmatmul.mubr.bf16.gmra.mxu0 %v1082
        %v2679 = vpop.f32.mrf.mxu0
        %v2680 = vadd.f32 %v2532, %v2679
        %v2681 = vpop.f32.mrf.mxu0
        %v2682 = vpop.f32.mrf.mxu0
        %v2683 = vadd.f32 %v2532, %v2682
        %v2684 = vpop.f32.mrf.mxu0
        %2685 = vmatprep.mubr.bf16.mxu0 %v1085
        %2686 = vmatmul.mubr.bf16.gmra.mxu0 %v1084
        %v2687 = vpop.f32.mrf.mxu0
        %v2688 = vadd.f32 %v2532, %v2687
        %v2689 = vpop.f32.mrf.mxu0
        %v2690 = vpop.f32.mrf.mxu0
        %v2691 = vadd.f32 %v2532, %v2690
        %v2692 = vpop.f32.mrf.mxu0
        %2693 = vmatprep.mubr.bf16.mxu0 %v1087
        %2694 = vmatmul.mubr.bf16.gmra.mxu0 %v1086
        %v2695 = vpop.f32.mrf.mxu0
        %v2696 = vadd.f32 %v2532, %v2695
        %v2697 = vpop.f32.mrf.mxu0
        %v2698 = vpop.f32.mrf.mxu0
        %v2699 = vadd.f32 %v2532, %v2698
        %v2700 = vpop.f32.mrf.mxu0
        %2701 = vmatprep.mubr.bf16.mxu0 %v1089
        %2702 = vmatmul.mubr.bf16.gmra.mxu0 %v1088
        %v2703 = vpop.f32.mrf.mxu0
        %v2704 = vadd.f32 %v2532, %v2703
        %v2705 = vpop.f32.mrf.mxu0
        %v2706 = vpop.f32.mrf.mxu0
        %v2707 = vadd.f32 %v2532, %v2706
        %v2708 = vpop.f32.mrf.mxu0
        %2709 = vmatprep.mubr.bf16.mxu0 %v1091
        %2710 = vmatmul.mubr.bf16.gmra.mxu0 %v1090
        %v2711 = vpop.f32.mrf.mxu0
        %v2712 = vadd.f32 %v2532, %v2711
        %v2713 = vpop.f32.mrf.mxu0
        %v2714 = vpop.f32.mrf.mxu0
        %v2715 = vadd.f32 %v2532, %v2714
        %v2716 = vpop.f32.mrf.mxu0
        %2717 = vmatprep.mubr.bf16.mxu0 %v1093
        %2718 = vmatmul.mubr.bf16.gmra.mxu0 %v1092
        %v2719 = vpop.f32.mrf.mxu0
        %v2720 = vadd.f32 %v2532, %v2719
        %v2721 = vpop.f32.mrf.mxu0
        %v2722 = vpop.f32.mrf.mxu0
        %v2723 = vadd.f32 %v2532, %v2722
        %v2724 = vpop.f32.mrf.mxu0
        %2725 = vdwg.mxu0
        %2726 = vxpose.xlu0.b32.start [1/16] %v2433, 128
        %2727 = vxpose.xlu0.b32.cont [2/16] %v2436, 128
        %2728 = vxpose.xlu0.b32.cont [3/16] %v2441, 128
        %2729 = vxpose.xlu0.b32.cont [4/16] %v2444, 128
        %2730 = vxpose.xlu0.b32.cont [5/16] %v2449, 128
        %2731 = vxpose.xlu0.b32.cont [6/16] %v2452, 128
        %2732 = vxpose.xlu0.b32.cont [7/16] %v2457, 128
        %2733 = vxpose.xlu0.b32.cont [8/16] %v2460, 128
        %2734 = vxpose.xlu0.b32.cont [9/16] %v2465, 128
        %2735 = vxpose.xlu0.b32.cont [10/16] %v2468, 128
        %2736 = vxpose.xlu0.b32.cont [11/16] %v2473, 128
        %2737 = vxpose.xlu0.b32.cont [12/16] %v2476, 128
        %2738 = vxpose.xlu0.b32.cont [13/16] %v2481, 128
        %2739 = vxpose.xlu0.b32.cont [14/16] %v2484, 128
        %2740 = vxpose.xlu0.b32.cont [15/16] %v2489, 128
        %2741 = vxpose.xlu0.b32.end [16/16] %v2492, 128
        %v2742 = vpop.trf.xlu0
        %v2743 = vpop.trf.xlu0
        %v2744 = vpop.trf.xlu0
        %v2745 = vpop.trf.xlu0
        %v2746 = vpop.trf.xlu0
        %v2747 = vpop.trf.xlu0
        %v2748 = vpop.trf.xlu0
        %v2749 = vpop.trf.xlu0
        %v2750 = vpop.trf.xlu0
        %v2751 = vpop.trf.xlu0
        %v2752 = vpop.trf.xlu0
        %v2753 = vpop.trf.xlu0
        %v2754 = vpop.trf.xlu0
        %v2755 = vpop.trf.xlu0
        %v2756 = vpop.trf.xlu0
        %v2757 = vpop.trf.xlu0
        %v2758 = vpack.c.bf16 %v2743, %v2742
        %v2759 = vpack.c.bf16 %v2745, %v2744
        %v2760 = vpack.c.bf16 %v2747, %v2746
        %v2761 = vpack.c.bf16 %v2749, %v2748
        %v2762 = vpack.c.bf16 %v2751, %v2750
        %v2763 = vpack.c.bf16 %v2753, %v2752
        %v2764 = vpack.c.bf16 %v2755, %v2754
        %v2765 = vpack.c.bf16 %v2757, %v2756
        %v2774 = vunpack.c.l.b16 %v2758
        %v2775 = vunpack.c.h.b16 %v2758
        %v2776 = vunpack.c.l.b16 %v2759
        %v2777 = vunpack.c.h.b16 %v2759
        %v2778 = vunpack.c.l.b16 %v2760
        %v2779 = vunpack.c.h.b16 %v2760
        %v2780 = vunpack.c.l.b16 %v2761
        %v2781 = vunpack.c.h.b16 %v2761
        %v2782 = vunpack.c.l.b16 %v2762
        %v2783 = vunpack.c.h.b16 %v2762
        %v2784 = vunpack.c.l.b16 %v2763
        %v2785 = vunpack.c.h.b16 %v2763
        %v2786 = vunpack.c.l.b16 %v2764
        %v2787 = vunpack.c.h.b16 %v2764
        %v2788 = vunpack.c.l.b16 %v2765
        %v2789 = vunpack.c.h.b16 %v2765
        %v2790 = vpack.c.b16 %v2774, %v2774
        %v2791 = vpack.c.b16 %v2775, %v2775
        %v2792 = vpack.c.b16 %v2776, %v2776
        %v2793 = vpack.c.b16 %v2777, %v2777
        %v2794 = vpack.c.b16 %v2778, %v2778
        %v2795 = vpack.c.b16 %v2779, %v2779
        %v2796 = vpack.c.b16 %v2780, %v2780
        %v2797 = vpack.c.b16 %v2781, %v2781
        %v2798 = vpack.c.b16 %v2782, %v2782
        %v2799 = vpack.c.b16 %v2783, %v2783
        %v2800 = vpack.c.b16 %v2784, %v2784
        %v2801 = vpack.c.b16 %v2785, %v2785
        %v2802 = vpack.c.b16 %v2786, %v2786
        %v2803 = vpack.c.b16 %v2787, %v2787
        %v2804 = vpack.c.b16 %v2788, %v2788
        %v2805 = vpack.c.b16 %v2789, %v2789
        %s2822 = sadd.s32 %s1905, 32
        %s2823 = smul.addr %s2822, 4
        %s2824 = scalar_lea.vmem [#allocation2], %s2823
        %2825 = vst [vmem:[%s2824] sm:$0xf] %v2790
        %2826 = vst [vmem:[%s2824 + $0x8] sm:$0xf] %v2791
        %2827 = vst [vmem:[%s2824 + $0x10] sm:$0xf] %v2792
        %2828 = vst [vmem:[%s2824 + $0x18] sm:$0xf] %v2793
        %2829 = vst [vmem:[%s2824 + $0x20] sm:$0xf] %v2794
        %2830 = vst [vmem:[%s2824 + $0x28] sm:$0xf] %v2795
        %2831 = vst [vmem:[%s2824 + $0x30] sm:$0xf] %v2796
        %2832 = vst [vmem:[%s2824 + $0x38] sm:$0xf] %v2797
        %2833 = vst [vmem:[%s2824 + $0x40] sm:$0xf] %v2798
        %2834 = vst [vmem:[%s2824 + $0x48] sm:$0xf] %v2799
        %2835 = vst [vmem:[%s2824 + $0x50] sm:$0xf] %v2800
        %2836 = vst [vmem:[%s2824 + $0x58] sm:$0xf] %v2801
        %2837 = vst [vmem:[%s2824 + $0x60] sm:$0xf] %v2802
        %2838 = vst [vmem:[%s2824 + $0x68] sm:$0xf] %v2803
        %2839 = vst [vmem:[%s2824 + $0x70] sm:$0xf] %v2804
        %2840 = vst [vmem:[%s2824 + $0x78] sm:$0xf] %v2805
        %v2841 = vpack.c.bf16 %v2667, %v2664
        %v2842 = vpack.c.bf16 %v2675, %v2672
        %v2843 = vpack.c.bf16 %v2683, %v2680
        %v2844 = vpack.c.bf16 %v2691, %v2688
        %v2845 = vpack.c.bf16 %v2699, %v2696
        %v2846 = vpack.c.bf16 %v2707, %v2704
        %v2847 = vpack.c.bf16 %v2715, %v2712
        %v2848 = vpack.c.bf16 %v2723, %v2720
        %v2857 = vunpack.c.l.b16 %v2841
        %v2858 = vunpack.c.h.b16 %v2841
        %v2859 = vunpack.c.l.b16 %v2842
        %v2860 = vunpack.c.h.b16 %v2842
        %v2861 = vunpack.c.l.b16 %v2843
        %v2862 = vunpack.c.h.b16 %v2843
        %v2863 = vunpack.c.l.b16 %v2844
        %v2864 = vunpack.c.h.b16 %v2844
        %v2865 = vunpack.c.l.b16 %v2845
        %v2866 = vunpack.c.h.b16 %v2845
        %v2867 = vunpack.c.l.b16 %v2846
        %v2868 = vunpack.c.h.b16 %v2846
        %v2869 = vunpack.c.l.b16 %v2847
        %v2870 = vunpack.c.h.b16 %v2847
        %v2871 = vunpack.c.l.b16 %v2848
        %v2872 = vunpack.c.h.b16 %v2848
        %v2873 = vpack.c.b16 %v2857, %v2857
        %v2874 = vpack.c.b16 %v2858, %v2858
        %v2875 = vpack.c.b16 %v2859, %v2859
        %v2876 = vpack.c.b16 %v2860, %v2860
        %v2877 = vpack.c.b16 %v2861, %v2861
        %v2878 = vpack.c.b16 %v2862, %v2862
        %v2879 = vpack.c.b16 %v2863, %v2863
        %v2880 = vpack.c.b16 %v2864, %v2864
        %v2881 = vpack.c.b16 %v2865, %v2865
        %v2882 = vpack.c.b16 %v2866, %v2866
        %v2883 = vpack.c.b16 %v2867, %v2867
        %v2884 = vpack.c.b16 %v2868, %v2868
        %v2885 = vpack.c.b16 %v2869, %v2869
        %v2886 = vpack.c.b16 %v2870, %v2870
        %v2887 = vpack.c.b16 %v2871, %v2871
        %v2888 = vpack.c.b16 %v2872, %v2872
        %s2905 = sadd.s32 %s1989, 32
        %s2906 = smul.addr %s2905, 4
        %s2907 = scalar_lea.vmem [#allocation3], %s2906
        %2908 = vst [vmem:[%s2907] sm:$0xf] %v2873
        %2909 = vst [vmem:[%s2907 + $0x4] sm:$0xf] %v2874
        %2910 = vst [vmem:[%s2907 + $0x8] sm:$0xf] %v2875
        %2911 = vst [vmem:[%s2907 + $0xc] sm:$0xf] %v2876
        %2912 = vst [vmem:[%s2907 + $0x10] sm:$0xf] %v2877
        %2913 = vst [vmem:[%s2907 + $0x14] sm:$0xf] %v2878
        %2914 = vst [vmem:[%s2907 + $0x18] sm:$0xf] %v2879
        %2915 = vst [vmem:[%s2907 + $0x1c] sm:$0xf] %v2880
        %2916 = vst [vmem:[%s2907 + $0x20] sm:$0xf] %v2881
        %2917 = vst [vmem:[%s2907 + $0x24] sm:$0xf] %v2882
        %2918 = vst [vmem:[%s2907 + $0x28] sm:$0xf] %v2883
        %2919 = vst [vmem:[%s2907 + $0x2c] sm:$0xf] %v2884
        %2920 = vst [vmem:[%s2907 + $0x30] sm:$0xf] %v2885
        %2921 = vst [vmem:[%s2907 + $0x34] sm:$0xf] %v2886
        %2922 = vst [vmem:[%s2907 + $0x38] sm:$0xf] %v2887
        %2923 = vst [vmem:[%s2907 + $0x3c] sm:$0xf] %v2888
        // While loop
        $region125: #{tpu_custom_call.1} parent=87 // loop_pre_header
          _
        $region126: #{tpu_custom_call.1} parent=87 // loop_header
          %s2925 = sphi 0, %s2927
          %p2926 = scmp.ge.s32.totalorder %s2925, %s43
          %v2930 = vphi -inf, %v3453
          %v2931 = vphi -inf, %v3454
          %v2932 = vphi -inf, %v3455
          %v2933 = vphi -inf, %v3456
          %v2934 = vphi -inf, %v3457
          %v2935 = vphi -inf, %v3458
          %v2936 = vphi -inf, %v3459
          %v2937 = vphi -inf, %v3460
          %v2938 = vphi -inf, %v3461
          %v2939 = vphi -inf, %v3462
          %v2940 = vphi -inf, %v3463
          %v2941 = vphi -inf, %v3464
          %v2942 = vphi -inf, %v3465
          %v2943 = vphi -inf, %v3466
          %v2944 = vphi -inf, %v3467
          %v2945 = vphi -inf, %v3468
          %v2946 = vphi -inf, %v3469
          %v2947 = vphi -inf, %v3470
          %v2948 = vphi -inf, %v3471
          %v2949 = vphi -inf, %v3472
          %v2950 = vphi -inf, %v3473
          %v2951 = vphi -inf, %v3474
          %v2952 = vphi -inf, %v3475
          %v2953 = vphi -inf, %v3476
          %v2954 = vphi -inf, %v3477
          %v2955 = vphi -inf, %v3478
          %v2956 = vphi -inf, %v3479
          %v2957 = vphi -inf, %v3480
          %v2958 = vphi -inf, %v3481
          %v2959 = vphi -inf, %v3482
          %v2960 = vphi -inf, %v3483
          %v2961 = vphi -inf, %v3484
          %v2962 = vphi 0.0, %v3773
          %v2963 = vphi 0.0, %v3774
          %v2964 = vphi 0.0, %v3775
          %v2965 = vphi 0.0, %v3776
          %v2966 = vphi 0.0, %v3777
          %v2967 = vphi 0.0, %v3778
          %v2968 = vphi 0.0, %v3779
          %v2969 = vphi 0.0, %v3780
          %v2970 = vphi 0.0, %v3781
          %v2971 = vphi 0.0, %v3782
          %v2972 = vphi 0.0, %v3783
          %v2973 = vphi 0.0, %v3784
          %v2974 = vphi 0.0, %v3785
          %v2975 = vphi 0.0, %v3786
          %v2976 = vphi 0.0, %v3787
          %v2977 = vphi 0.0, %v3788
          %v2978 = vphi 0.0, %v3789
          %v2979 = vphi 0.0, %v3790
          %v2980 = vphi 0.0, %v3791
          %v2981 = vphi 0.0, %v3792
          %v2982 = vphi 0.0, %v3793
          %v2983 = vphi 0.0, %v3794
          %v2984 = vphi 0.0, %v3795
          %v2985 = vphi 0.0, %v3796
          %v2986 = vphi 0.0, %v3797
          %v2987 = vphi 0.0, %v3798
          %v2988 = vphi 0.0, %v3799
          %v2989 = vphi 0.0, %v3800
          %v2990 = vphi 0.0, %v3801
          %v2991 = vphi 0.0, %v3802
          %v2992 = vphi 0.0, %v3803
          %v2993 = vphi 0.0, %v3804
          %v2994 = vphi 0.0, %v4143
          %v2995 = vphi 0.0, %v4144
          %v2996 = vphi 0.0, %v4145
          %v2997 = vphi 0.0, %v4146
          %v2998 = vphi 0.0, %v4147
          %v2999 = vphi 0.0, %v4148
          %v3000 = vphi 0.0, %v4149
          %v3001 = vphi 0.0, %v4150
          %v3002 = vphi 0.0, %v4151
          %v3003 = vphi 0.0, %v4152
          %v3004 = vphi 0.0, %v4153
          %v3005 = vphi 0.0, %v4154
          %v3006 = vphi 0.0, %v4155
          %v3007 = vphi 0.0, %v4156
          %v3008 = vphi 0.0, %v4157
          %v3009 = vphi 0.0, %v4158
          %v3010 = vphi 0.0, %v4159
          %v3011 = vphi 0.0, %v4160
          %v3012 = vphi 0.0, %v4161
          %v3013 = vphi 0.0, %v4162
          %v3014 = vphi 0.0, %v4163
          %v3015 = vphi 0.0, %v4164
          %v3016 = vphi 0.0, %v4165
          %v3017 = vphi 0.0, %v4166
          %v3018 = vphi 0.0, %v4167
          %v3019 = vphi 0.0, %v4168
          %v3020 = vphi 0.0, %v4169
          %v3021 = vphi 0.0, %v4170
          %v3022 = vphi 0.0, %v4171
          %v3023 = vphi 0.0, %v4172
          %v3024 = vphi 0.0, %v4173
          %v3025 = vphi 0.0, %v4174
        $region127: #{tpu_custom_call.1} parent=87 // loop_header_branch
          %2929 = sbr.rel (%p2926) target = $region131
        $region128: #{tpu_custom_call.1} parent=87 // loop_body
          %s3026 = smul.u32 %s2925, 128
          %s3027 = sshra.s32 %s3026, 7
          %s3028 = sand.u32 %s3026, 127
          %s3029 = smul.addr %s3027, 4
          %s3030 = scalar_lea.vmem [#allocation2], %s3029
          %v3031 = vld [vmem:[%s3030] sm:$0xf]
          %v3032 = vld [vmem:[%s3030 + $0x8] sm:$0xf]
          %v3033 = vld [vmem:[%s3030 + $0x10] sm:$0xf]
          %v3034 = vld [vmem:[%s3030 + $0x18] sm:$0xf]
          %v3035 = vld [vmem:[%s3030 + $0x20] sm:$0xf]
          %v3036 = vld [vmem:[%s3030 + $0x28] sm:$0xf]
          %v3037 = vld [vmem:[%s3030 + $0x30] sm:$0xf]
          %v3038 = vld [vmem:[%s3030 + $0x38] sm:$0xf]
          %v3039 = vld [vmem:[%s3030 + $0x40] sm:$0xf]
          %v3040 = vld [vmem:[%s3030 + $0x48] sm:$0xf]
          %v3041 = vld [vmem:[%s3030 + $0x50] sm:$0xf]
          %v3042 = vld [vmem:[%s3030 + $0x58] sm:$0xf]
          %v3043 = vld [vmem:[%s3030 + $0x60] sm:$0xf]
          %v3044 = vld [vmem:[%s3030 + $0x68] sm:$0xf]
          %v3045 = vld [vmem:[%s3030 + $0x70] sm:$0xf]
          %v3046 = vld [vmem:[%s3030 + $0x78] sm:$0xf]
          %v3047 = vld [vmem:[%s3030 + $0x80] sm:$0xf]
          %v3048 = vld [vmem:[%s3030 + $0x88] sm:$0xf]
          %v3049 = vld [vmem:[%s3030 + $0x90] sm:$0xf]
          %v3050 = vld [vmem:[%s3030 + $0x98] sm:$0xf]
          %v3051 = vld [vmem:[%s3030 + $0xa0] sm:$0xf]
          %v3052 = vld [vmem:[%s3030 + $0xa8] sm:$0xf]
          %v3053 = vld [vmem:[%s3030 + $0xb0] sm:$0xf]
          %v3054 = vld [vmem:[%s3030 + $0xb8] sm:$0xf]
          %v3055 = vld [vmem:[%s3030 + $0xc0] sm:$0xf]
          %v3056 = vld [vmem:[%s3030 + $0xc8] sm:$0xf]
          %v3057 = vld [vmem:[%s3030 + $0xd0] sm:$0xf]
          %v3058 = vld [vmem:[%s3030 + $0xd8] sm:$0xf]
          %v3059 = vld [vmem:[%s3030 + $0xe0] sm:$0xf]
          %v3060 = vld [vmem:[%s3030 + $0xe8] sm:$0xf]
          %v3061 = vld [vmem:[%s3030 + $0xf0] sm:$0xf]
          %v3062 = vld [vmem:[%s3030 + $0xf8] sm:$0xf]
          %s3063 = sshra.s32 %s3026, 3
          %s3064 = sand.u32 %s3026, 7
          %s3065 = smul.addr %s3063, 4
          %s3066 = scalar_lea.vmem [#allocation3], %s3065
          %v3067 = vld [vmem:[%s3066] sm:$0xf]
          %v3068 = vld [vmem:[%s3066 + $0x4] sm:$0xf]
          %v3069 = vld [vmem:[%s3066 + $0x8] sm:$0xf]
          %v3070 = vld [vmem:[%s3066 + $0xc] sm:$0xf]
          %v3071 = vld [vmem:[%s3066 + $0x10] sm:$0xf]
          %v3072 = vld [vmem:[%s3066 + $0x14] sm:$0xf]
          %v3073 = vld [vmem:[%s3066 + $0x18] sm:$0xf]
          %v3074 = vld [vmem:[%s3066 + $0x1c] sm:$0xf]
          %v3075 = vld [vmem:[%s3066 + $0x20] sm:$0xf]
          %v3076 = vld [vmem:[%s3066 + $0x24] sm:$0xf]
          %v3077 = vld [vmem:[%s3066 + $0x28] sm:$0xf]
          %v3078 = vld [vmem:[%s3066 + $0x2c] sm:$0xf]
          %v3079 = vld [vmem:[%s3066 + $0x30] sm:$0xf]
          %v3080 = vld [vmem:[%s3066 + $0x34] sm:$0xf]
          %v3081 = vld [vmem:[%s3066 + $0x38] sm:$0xf]
          %v3082 = vld [vmem:[%s3066 + $0x3c] sm:$0xf]
          %v3083 = vld [vmem:[%s3066 + $0x80] sm:$0xf]
          %v3084 = vld [vmem:[%s3066 + $0x84] sm:$0xf]
          %v3085 = vld [vmem:[%s3066 + $0x88] sm:$0xf]
          %v3086 = vld [vmem:[%s3066 + $0x8c] sm:$0xf]
          %v3087 = vld [vmem:[%s3066 + $0x90] sm:$0xf]
          %v3088 = vld [vmem:[%s3066 + $0x94] sm:$0xf]
          %v3089 = vld [vmem:[%s3066 + $0x98] sm:$0xf]
          %v3090 = vld [vmem:[%s3066 + $0x9c] sm:$0xf]
          %v3091 = vld [vmem:[%s3066 + $0xa0] sm:$0xf]
          %v3092 = vld [vmem:[%s3066 + $0xa4] sm:$0xf]
          %v3093 = vld [vmem:[%s3066 + $0xa8] sm:$0xf]
          %v3094 = vld [vmem:[%s3066 + $0xac] sm:$0xf]
          %v3095 = vld [vmem:[%s3066 + $0xb0] sm:$0xf]
          %v3096 = vld [vmem:[%s3066 + $0xb4] sm:$0xf]
          %v3097 = vld [vmem:[%s3066 + $0xb8] sm:$0xf]
          %v3098 = vld [vmem:[%s3066 + $0xbc] sm:$0xf]
          %v3115 = vunpack.c.l.b16 %v3031
          %v3116 = vunpack.c.l.b16 %v3032
          %v3117 = vunpack.c.l.b16 %v3033
          %v3118 = vunpack.c.l.b16 %v3034
          %v3119 = vunpack.c.l.b16 %v3035
          %v3120 = vunpack.c.l.b16 %v3036
          %v3121 = vunpack.c.l.b16 %v3037
          %v3122 = vunpack.c.l.b16 %v3038
          %v3123 = vunpack.c.l.b16 %v3039
          %v3124 = vunpack.c.l.b16 %v3040
          %v3125 = vunpack.c.l.b16 %v3041
          %v3126 = vunpack.c.l.b16 %v3042
          %v3127 = vunpack.c.l.b16 %v3043
          %v3128 = vunpack.c.l.b16 %v3044
          %v3129 = vunpack.c.l.b16 %v3045
          %v3130 = vunpack.c.l.b16 %v3046
          %v3131 = vpack.c.b16 %v3116, %v3115
          %v3132 = vpack.c.b16 %v3118, %v3117
          %v3133 = vpack.c.b16 %v3120, %v3119
          %v3134 = vpack.c.b16 %v3122, %v3121
          %v3135 = vpack.c.b16 %v3124, %v3123
          %v3136 = vpack.c.b16 %v3126, %v3125
          %v3137 = vpack.c.b16 %v3128, %v3127
          %v3138 = vpack.c.b16 %v3130, %v3129
          %3147 = vmatprep.subr.bf16.mxu0 0
          %3148 = vmatpush1.bf16.msra.mxu0 %v3138
          %3149 = vmatprep.subr.bf16.mxu0 0
          %3150 = vmatpush1.bf16.msra.mxu0 %v3137
          %3151 = vmatprep.subr.bf16.mxu0 0
          %3152 = vmatpush1.bf16.msra.mxu0 %v3136
          %3153 = vmatprep.subr.bf16.mxu0 0
          %3154 = vmatpush1.bf16.msra.mxu0 %v3135
          %3155 = vmatprep.subr.bf16.mxu0 0
          %3156 = vmatpush1.bf16.msra.mxu0 %v3134
          %3157 = vmatprep.subr.bf16.mxu0 0
          %3158 = vmatpush1.bf16.msra.mxu0 %v3133
          %3159 = vmatprep.subr.bf16.mxu0 0
          %3160 = vmatpush1.bf16.msra.mxu0 %v3132
          %3161 = vmatprep.subr.bf16.mxu0 0
          %3162 = vmatpush1.bf16.msra.mxu0 %v3131
          %3163 = vmatprep.subr.bf16.mxu0 0
          %3164 = vmatpush2.bf16.msra.mxu0 0
          %3165 = vmatprep.subr.bf16.mxu0 0
          %3166 = vmatpush2.bf16.msra.mxu0 0
          %3167 = vmatprep.subr.bf16.mxu0 0
          %3168 = vmatpush2.bf16.msra.mxu0 0
          %3169 = vmatprep.subr.bf16.mxu0 0
          %3170 = vmatpush2.bf16.msra.mxu0 0
          %3171 = vmatprep.subr.bf16.mxu0 0
          %3172 = vmatpush2.bf16.msra.mxu0 0
          %3173 = vmatprep.subr.bf16.mxu0 0
          %3174 = vmatpush2.bf16.msra.mxu0 0
          %3175 = vmatprep.subr.bf16.mxu0 0
          %3176 = vmatpush2.bf16.msra.mxu0 0
          %3177 = vmatprep.subr.bf16.mxu0 0
          %3178 = vmatpush2.bf16.msra.mxu0 0
          %3179 = vmatprep.mubr.bf16.mxu0 0
          %3180 = vmatmul.mubr.bf16.gmra.mxu0 %v1341
          %v3181 = vpop.f32.mrf.mxu0
          %v3182 = vadd.f32 0.0, %v3181
          %v3183 = vpop.f32.mrf.mxu0
          %v3184 = vpop.f32.mrf.mxu0
          %v3185 = vadd.f32 0.0, %v3184
          %v3186 = vpop.f32.mrf.mxu0
          %3187 = vmatprep.mubr.bf16.mxu0 0
          %3188 = vmatmul.mubr.bf16.gmra.mxu0 %v1342
          %v3189 = vpop.f32.mrf.mxu0
          %v3190 = vadd.f32 0.0, %v3189
          %v3191 = vpop.f32.mrf.mxu0
          %v3192 = vpop.f32.mrf.mxu0
          %v3193 = vadd.f32 0.0, %v3192
          %v3194 = vpop.f32.mrf.mxu0
          %3195 = vmatprep.mubr.bf16.mxu0 0
          %3196 = vmatmul.mubr.bf16.gmra.mxu0 %v1343
          %v3197 = vpop.f32.mrf.mxu0
          %v3198 = vadd.f32 0.0, %v3197
          %v3199 = vpop.f32.mrf.mxu0
          %v3200 = vpop.f32.mrf.mxu0
          %v3201 = vadd.f32 0.0, %v3200
          %v3202 = vpop.f32.mrf.mxu0
          %3203 = vmatprep.mubr.bf16.mxu0 0
          %3204 = vmatmul.mubr.bf16.gmra.mxu0 %v1344
          %v3205 = vpop.f32.mrf.mxu0
          %v3206 = vadd.f32 0.0, %v3205
          %v3207 = vpop.f32.mrf.mxu0
          %v3208 = vpop.f32.mrf.mxu0
          %v3209 = vadd.f32 0.0, %v3208
          %v3210 = vpop.f32.mrf.mxu0
          %3211 = vmatprep.mubr.bf16.mxu0 0
          %3212 = vmatmul.mubr.bf16.gmra.mxu0 %v1345
          %v3213 = vpop.f32.mrf.mxu0
          %v3214 = vadd.f32 0.0, %v3213
          %v3215 = vpop.f32.mrf.mxu0
          %v3216 = vpop.f32.mrf.mxu0
          %v3217 = vadd.f32 0.0, %v3216
          %v3218 = vpop.f32.mrf.mxu0
          %3219 = vmatprep.mubr.bf16.mxu0 0
          %3220 = vmatmul.mubr.bf16.gmra.mxu0 %v1346
          %v3221 = vpop.f32.mrf.mxu0
          %v3222 = vadd.f32 0.0, %v3221
          %v3223 = vpop.f32.mrf.mxu0
          %v3224 = vpop.f32.mrf.mxu0
          %v3225 = vadd.f32 0.0, %v3224
          %v3226 = vpop.f32.mrf.mxu0
          %3227 = vmatprep.mubr.bf16.mxu0 0
          %3228 = vmatmul.mubr.bf16.gmra.mxu0 %v1347
          %v3229 = vpop.f32.mrf.mxu0
          %v3230 = vadd.f32 0.0, %v3229
          %v3231 = vpop.f32.mrf.mxu0
          %v3232 = vpop.f32.mrf.mxu0
          %v3233 = vadd.f32 0.0, %v3232
          %v3234 = vpop.f32.mrf.mxu0
          %3235 = vmatprep.mubr.bf16.mxu0 0
          %3236 = vmatmul.mubr.bf16.gmra.mxu0 %v1348
          %v3237 = vpop.f32.mrf.mxu0
          %v3238 = vadd.f32 0.0, %v3237
          %v3239 = vpop.f32.mrf.mxu0
          %v3240 = vpop.f32.mrf.mxu0
          %v3241 = vadd.f32 0.0, %v3240
          %v3242 = vpop.f32.mrf.mxu0
          %3243 = vdwg.mxu0
          %v3260 = vunpack.c.l.b16 %v3047
          %v3261 = vunpack.c.l.b16 %v3048
          %v3262 = vunpack.c.l.b16 %v3049
          %v3263 = vunpack.c.l.b16 %v3050
          %v3264 = vunpack.c.l.b16 %v3051
          %v3265 = vunpack.c.l.b16 %v3052
          %v3266 = vunpack.c.l.b16 %v3053
          %v3267 = vunpack.c.l.b16 %v3054
          %v3268 = vunpack.c.l.b16 %v3055
          %v3269 = vunpack.c.l.b16 %v3056
          %v3270 = vunpack.c.l.b16 %v3057
          %v3271 = vunpack.c.l.b16 %v3058
          %v3272 = vunpack.c.l.b16 %v3059
          %v3273 = vunpack.c.l.b16 %v3060
          %v3274 = vunpack.c.l.b16 %v3061
          %v3275 = vunpack.c.l.b16 %v3062
          %v3276 = vpack.c.b16 %v3261, %v3260
          %v3277 = vpack.c.b16 %v3263, %v3262
          %v3278 = vpack.c.b16 %v3265, %v3264
          %v3279 = vpack.c.b16 %v3267, %v3266
          %v3280 = vpack.c.b16 %v3269, %v3268
          %v3281 = vpack.c.b16 %v3271, %v3270
          %v3282 = vpack.c.b16 %v3273, %v3272
          %v3283 = vpack.c.b16 %v3275, %v3274
          %3292 = vmatprep.subr.bf16.mxu0 0
          %3293 = vmatpush1.bf16.msra.mxu0 %v3283
          %3294 = vmatprep.subr.bf16.mxu0 0
          %3295 = vmatpush1.bf16.msra.mxu0 %v3282
          %3296 = vmatprep.subr.bf16.mxu0 0
          %3297 = vmatpush1.bf16.msra.mxu0 %v3281
          %3298 = vmatprep.subr.bf16.mxu0 0
          %3299 = vmatpush1.bf16.msra.mxu0 %v3280
          %3300 = vmatprep.subr.bf16.mxu0 0
          %3301 = vmatpush1.bf16.msra.mxu0 %v3279
          %3302 = vmatprep.subr.bf16.mxu0 0
          %3303 = vmatpush1.bf16.msra.mxu0 %v3278
          %3304 = vmatprep.subr.bf16.mxu0 0
          %3305 = vmatpush1.bf16.msra.mxu0 %v3277
          %3306 = vmatprep.subr.bf16.mxu0 0
          %3307 = vmatpush1.bf16.msra.mxu0 %v3276
          %3308 = vmatprep.subr.bf16.mxu0 0
          %3309 = vmatpush2.bf16.msra.mxu0 0
          %3310 = vmatprep.subr.bf16.mxu0 0
          %3311 = vmatpush2.bf16.msra.mxu0 0
          %3312 = vmatprep.subr.bf16.mxu0 0
          %3313 = vmatpush2.bf16.msra.mxu0 0
          %3314 = vmatprep.subr.bf16.mxu0 0
          %3315 = vmatpush2.bf16.msra.mxu0 0
          %3316 = vmatprep.subr.bf16.mxu0 0
          %3317 = vmatpush2.bf16.msra.mxu0 0
          %3318 = vmatprep.subr.bf16.mxu0 0
          %3319 = vmatpush2.bf16.msra.mxu0 0
          %3320 = vmatprep.subr.bf16.mxu0 0
          %3321 = vmatpush2.bf16.msra.mxu0 0
          %3322 = vmatprep.subr.bf16.mxu0 0
          %3323 = vmatpush2.bf16.msra.mxu0 0
          %3324 = vmatprep.mubr.bf16.mxu0 0
          %3325 = vmatmul.mubr.bf16.gmra.mxu0 %v2256
          %v3326 = vpop.f32.mrf.mxu0
          %v3327 = vadd.f32 0.0, %v3326
          %v3328 = vpop.f32.mrf.mxu0
          %v3329 = vpop.f32.mrf.mxu0
          %v3330 = vadd.f32 0.0, %v3329
          %v3331 = vpop.f32.mrf.mxu0
          %3332 = vmatprep.mubr.bf16.mxu0 0
          %3333 = vmatmul.mubr.bf16.gmra.mxu0 %v2257
          %v3334 = vpop.f32.mrf.mxu0
          %v3335 = vadd.f32 0.0, %v3334
          %v3336 = vpop.f32.mrf.mxu0
          %v3337 = vpop.f32.mrf.mxu0
          %v3338 = vadd.f32 0.0, %v3337
          %v3339 = vpop.f32.mrf.mxu0
          %3340 = vmatprep.mubr.bf16.mxu0 0
          %3341 = vmatmul.mubr.bf16.gmra.mxu0 %v2258
          %v3342 = vpop.f32.mrf.mxu0
          %v3343 = vadd.f32 0.0, %v3342
          %v3344 = vpop.f32.mrf.mxu0
          %v3345 = vpop.f32.mrf.mxu0
          %v3346 = vadd.f32 0.0, %v3345
          %v3347 = vpop.f32.mrf.mxu0
          %3348 = vmatprep.mubr.bf16.mxu0 0
          %3349 = vmatmul.mubr.bf16.gmra.mxu0 %v2259
          %v3350 = vpop.f32.mrf.mxu0
          %v3351 = vadd.f32 0.0, %v3350
          %v3352 = vpop.f32.mrf.mxu0
          %v3353 = vpop.f32.mrf.mxu0
          %v3354 = vadd.f32 0.0, %v3353
          %v3355 = vpop.f32.mrf.mxu0
          %3356 = vmatprep.mubr.bf16.mxu0 0
          %3357 = vmatmul.mubr.bf16.gmra.mxu0 %v2260
          %v3358 = vpop.f32.mrf.mxu0
          %v3359 = vadd.f32 0.0, %v3358
          %v3360 = vpop.f32.mrf.mxu0
          %v3361 = vpop.f32.mrf.mxu0
          %v3362 = vadd.f32 0.0, %v3361
          %v3363 = vpop.f32.mrf.mxu0
          %3364 = vmatprep.mubr.bf16.mxu0 0
          %3365 = vmatmul.mubr.bf16.gmra.mxu0 %v2261
          %v3366 = vpop.f32.mrf.mxu0
          %v3367 = vadd.f32 0.0, %v3366
          %v3368 = vpop.f32.mrf.mxu0
          %v3369 = vpop.f32.mrf.mxu0
          %v3370 = vadd.f32 0.0, %v3369
          %v3371 = vpop.f32.mrf.mxu0
          %3372 = vmatprep.mubr.bf16.mxu0 0
          %3373 = vmatmul.mubr.bf16.gmra.mxu0 %v2262
          %v3374 = vpop.f32.mrf.mxu0
          %v3375 = vadd.f32 0.0, %v3374
          %v3376 = vpop.f32.mrf.mxu0
          %v3377 = vpop.f32.mrf.mxu0
          %v3378 = vadd.f32 0.0, %v3377
          %v3379 = vpop.f32.mrf.mxu0
          %3380 = vmatprep.mubr.bf16.mxu0 0
          %3381 = vmatmul.mubr.bf16.gmra.mxu0 %v2263
          %v3382 = vpop.f32.mrf.mxu0
          %v3383 = vadd.f32 0.0, %v3382
          %v3384 = vpop.f32.mrf.mxu0
          %v3385 = vpop.f32.mrf.mxu0
          %v3386 = vadd.f32 0.0, %v3385
          %v3387 = vpop.f32.mrf.mxu0
          %3388 = vdwg.mxu0
          %3389 = vmax.xlane.f32.xlu0 %v3182
          %v3390 = vpop.xlane.xlu0 %3389
          %3391 = vmax.xlane.f32.xlu0 %v3185
          %v3392 = vpop.xlane.xlu0 %3391
          %3393 = vmax.xlane.f32.xlu0 %v3190
          %v3394 = vpop.xlane.xlu0 %3393
          %3395 = vmax.xlane.f32.xlu0 %v3193
          %v3396 = vpop.xlane.xlu0 %3395
          %3397 = vmax.xlane.f32.xlu0 %v3198
          %v3398 = vpop.xlane.xlu0 %3397
          %3399 = vmax.xlane.f32.xlu0 %v3201
          %v3400 = vpop.xlane.xlu0 %3399
          %3401 = vmax.xlane.f32.xlu0 %v3206
          %v3402 = vpop.xlane.xlu0 %3401
          %3403 = vmax.xlane.f32.xlu0 %v3209
          %v3404 = vpop.xlane.xlu0 %3403
          %3405 = vmax.xlane.f32.xlu0 %v3214
          %v3406 = vpop.xlane.xlu0 %3405
          %3407 = vmax.xlane.f32.xlu0 %v3217
          %v3408 = vpop.xlane.xlu0 %3407
          %3409 = vmax.xlane.f32.xlu0 %v3222
          %v3410 = vpop.xlane.xlu0 %3409
          %3411 = vmax.xlane.f32.xlu0 %v3225
          %v3412 = vpop.xlane.xlu0 %3411
          %3413 = vmax.xlane.f32.xlu0 %v3230
          %v3414 = vpop.xlane.xlu0 %3413
          %3415 = vmax.xlane.f32.xlu0 %v3233
          %v3416 = vpop.xlane.xlu0 %3415
          %3417 = vmax.xlane.f32.xlu0 %v3238
          %v3418 = vpop.xlane.xlu0 %3417
          %3419 = vmax.xlane.f32.xlu0 %v3241
          %v3420 = vpop.xlane.xlu0 %3419
          %3421 = vmax.xlane.f32.xlu0 %v3327
          %v3422 = vpop.xlane.xlu0 %3421
          %3423 = vmax.xlane.f32.xlu0 %v3330
          %v3424 = vpop.xlane.xlu0 %3423
          %3425 = vmax.xlane.f32.xlu0 %v3335
          %v3426 = vpop.xlane.xlu0 %3425
          %3427 = vmax.xlane.f32.xlu0 %v3338
          %v3428 = vpop.xlane.xlu0 %3427
          %3429 = vmax.xlane.f32.xlu0 %v3343
          %v3430 = vpop.xlane.xlu0 %3429
          %3431 = vmax.xlane.f32.xlu0 %v3346
          %v3432 = vpop.xlane.xlu0 %3431
          %3433 = vmax.xlane.f32.xlu0 %v3351
          %v3434 = vpop.xlane.xlu0 %3433
          %3435 = vmax.xlane.f32.xlu0 %v3354
          %v3436 = vpop.xlane.xlu0 %3435
          %3437 = vmax.xlane.f32.xlu0 %v3359
          %v3438 = vpop.xlane.xlu0 %3437
          %3439 = vmax.xlane.f32.xlu0 %v3362
          %v3440 = vpop.xlane.xlu0 %3439
          %3441 = vmax.xlane.f32.xlu0 %v3367
          %v3442 = vpop.xlane.xlu0 %3441
          %3443 = vmax.xlane.f32.xlu0 %v3370
          %v3444 = vpop.xlane.xlu0 %3443
          %3445 = vmax.xlane.f32.xlu0 %v3375
          %v3446 = vpop.xlane.xlu0 %3445
          %3447 = vmax.xlane.f32.xlu0 %v3378
          %v3448 = vpop.xlane.xlu0 %3447
          %3449 = vmax.xlane.f32.xlu0 %v3383
          %v3450 = vpop.xlane.xlu0 %3449
          %3451 = vmax.xlane.f32.xlu0 %v3386
          %v3452 = vpop.xlane.xlu0 %3451
          %v3453 = vmax.f32 %v2930, %v3390
          %v3454 = vmax.f32 %v2931, %v3392
          %v3455 = vmax.f32 %v2932, %v3394
          %v3456 = vmax.f32 %v2933, %v3396
          %v3457 = vmax.f32 %v2934, %v3398
          %v3458 = vmax.f32 %v2935, %v3400
          %v3459 = vmax.f32 %v2936, %v3402
          %v3460 = vmax.f32 %v2937, %v3404
          %v3461 = vmax.f32 %v2938, %v3406
          %v3462 = vmax.f32 %v2939, %v3408
          %v3463 = vmax.f32 %v2940, %v3410
          %v3464 = vmax.f32 %v2941, %v3412
          %v3465 = vmax.f32 %v2942, %v3414
          %v3466 = vmax.f32 %v2943, %v3416
          %v3467 = vmax.f32 %v2944, %v3418
          %v3468 = vmax.f32 %v2945, %v3420
          %v3469 = vmax.f32 %v2946, %v3422
          %v3470 = vmax.f32 %v2947, %v3424
          %v3471 = vmax.f32 %v2948, %v3426
          %v3472 = vmax.f32 %v2949, %v3428
          %v3473 = vmax.f32 %v2950, %v3430
          %v3474 = vmax.f32 %v2951, %v3432
          %v3475 = vmax.f32 %v2952, %v3434
          %v3476 = vmax.f32 %v2953, %v3436
          %v3477 = vmax.f32 %v2954, %v3438
          %v3478 = vmax.f32 %v2955, %v3440
          %v3479 = vmax.f32 %v2956, %v3442
          %v3480 = vmax.f32 %v2957, %v3444
          %v3481 = vmax.f32 %v2958, %v3446
          %v3482 = vmax.f32 %v2959, %v3448
          %v3483 = vmax.f32 %v2960, %v3450
          %v3484 = vmax.f32 %v2961, %v3452
          %v3485 = vsub.f32 %v2930, %v3453
          %v3486 = vsub.f32 %v2931, %v3454
          %v3487 = vsub.f32 %v2932, %v3455
          %v3488 = vsub.f32 %v2933, %v3456
          %v3489 = vsub.f32 %v2934, %v3457
          %v3490 = vsub.f32 %v2935, %v3458
          %v3491 = vsub.f32 %v2936, %v3459
          %v3492 = vsub.f32 %v2937, %v3460
          %v3493 = vsub.f32 %v2938, %v3461
          %v3494 = vsub.f32 %v2939, %v3462
          %v3495 = vsub.f32 %v2940, %v3463
          %v3496 = vsub.f32 %v2941, %v3464
          %v3497 = vsub.f32 %v2942, %v3465
          %v3498 = vsub.f32 %v2943, %v3466
          %v3499 = vsub.f32 %v2944, %v3467
          %v3500 = vsub.f32 %v2945, %v3468
          %v3501 = vsub.f32 %v2946, %v3469
          %v3502 = vsub.f32 %v2947, %v3470
          %v3503 = vsub.f32 %v2948, %v3471
          %v3504 = vsub.f32 %v2949, %v3472
          %v3505 = vsub.f32 %v2950, %v3473
          %v3506 = vsub.f32 %v2951, %v3474
          %v3507 = vsub.f32 %v2952, %v3475
          %v3508 = vsub.f32 %v2953, %v3476
          %v3509 = vsub.f32 %v2954, %v3477
          %v3510 = vsub.f32 %v2955, %v3478
          %v3511 = vsub.f32 %v2956, %v3479
          %v3512 = vsub.f32 %v2957, %v3480
          %v3513 = vsub.f32 %v2958, %v3481
          %v3514 = vsub.f32 %v2959, %v3482
          %v3515 = vsub.f32 %v2960, %v3483
          %v3516 = vsub.f32 %v2961, %v3484
          %v3517 = vmul.f32 %v3485, 1.442695
          %v3518 = vpow.pop %v3517
          %v3519 = vmul.f32 %v3486, 1.442695
          %v3520 = vpow.pop %v3519
          %v3521 = vmul.f32 %v3487, 1.442695
          %v3522 = vpow.pop %v3521
          %v3523 = vmul.f32 %v3488, 1.442695
          %v3524 = vpow.pop %v3523
          %v3525 = vmul.f32 %v3489, 1.442695
          %v3526 = vpow.pop %v3525
          %v3527 = vmul.f32 %v3490, 1.442695
          %v3528 = vpow.pop %v3527
          %v3529 = vmul.f32 %v3491, 1.442695
          %v3530 = vpow.pop %v3529
          %v3531 = vmul.f32 %v3492, 1.442695
          %v3532 = vpow.pop %v3531
          %v3533 = vmul.f32 %v3493, 1.442695
          %v3534 = vpow.pop %v3533
          %v3535 = vmul.f32 %v3494, 1.442695
          %v3536 = vpow.pop %v3535
          %v3537 = vmul.f32 %v3495, 1.442695
          %v3538 = vpow.pop %v3537
          %v3539 = vmul.f32 %v3496, 1.442695
          %v3540 = vpow.pop %v3539
          %v3541 = vmul.f32 %v3497, 1.442695
          %v3542 = vpow.pop %v3541
          %v3543 = vmul.f32 %v3498, 1.442695
          %v3544 = vpow.pop %v3543
          %v3545 = vmul.f32 %v3499, 1.442695
          %v3546 = vpow.pop %v3545
          %v3547 = vmul.f32 %v3500, 1.442695
          %v3548 = vpow.pop %v3547
          %v3549 = vmul.f32 %v3501, 1.442695
          %v3550 = vpow.pop %v3549
          %v3551 = vmul.f32 %v3502, 1.442695
          %v3552 = vpow.pop %v3551
          %v3553 = vmul.f32 %v3503, 1.442695
          %v3554 = vpow.pop %v3553
          %v3555 = vmul.f32 %v3504, 1.442695
          %v3556 = vpow.pop %v3555
          %v3557 = vmul.f32 %v3505, 1.442695
          %v3558 = vpow.pop %v3557
          %v3559 = vmul.f32 %v3506, 1.442695
          %v3560 = vpow.pop %v3559
          %v3561 = vmul.f32 %v3507, 1.442695
          %v3562 = vpow.pop %v3561
          %v3563 = vmul.f32 %v3508, 1.442695
          %v3564 = vpow.pop %v3563
          %v3565 = vmul.f32 %v3509, 1.442695
          %v3566 = vpow.pop %v3565
          %v3567 = vmul.f32 %v3510, 1.442695
          %v3568 = vpow.pop %v3567
          %v3569 = vmul.f32 %v3511, 1.442695
          %v3570 = vpow.pop %v3569
          %v3571 = vmul.f32 %v3512, 1.442695
          %v3572 = vpow.pop %v3571
          %v3573 = vmul.f32 %v3513, 1.442695
          %v3574 = vpow.pop %v3573
          %v3575 = vmul.f32 %v3514, 1.442695
          %v3576 = vpow.pop %v3575
          %v3577 = vmul.f32 %v3515, 1.442695
          %v3578 = vpow.pop %v3577
          %v3579 = vmul.f32 %v3516, 1.442695
          %v3580 = vpow.pop %v3579
          %v3581 = vsub.f32 %v3182, %v3453
          %v3582 = vsub.f32 %v3185, %v3454
          %v3583 = vsub.f32 %v3190, %v3455
          %v3584 = vsub.f32 %v3193, %v3456
          %v3585 = vsub.f32 %v3198, %v3457
          %v3586 = vsub.f32 %v3201, %v3458
          %v3587 = vsub.f32 %v3206, %v3459
          %v3588 = vsub.f32 %v3209, %v3460
          %v3589 = vsub.f32 %v3214, %v3461
          %v3590 = vsub.f32 %v3217, %v3462
          %v3591 = vsub.f32 %v3222, %v3463
          %v3592 = vsub.f32 %v3225, %v3464
          %v3593 = vsub.f32 %v3230, %v3465
          %v3594 = vsub.f32 %v3233, %v3466
          %v3595 = vsub.f32 %v3238, %v3467
          %v3596 = vsub.f32 %v3241, %v3468
          %v3597 = vsub.f32 %v3327, %v3469
          %v3598 = vsub.f32 %v3330, %v3470
          %v3599 = vsub.f32 %v3335, %v3471
          %v3600 = vsub.f32 %v3338, %v3472
          %v3601 = vsub.f32 %v3343, %v3473
          %v3602 = vsub.f32 %v3346, %v3474
          %v3603 = vsub.f32 %v3351, %v3475
          %v3604 = vsub.f32 %v3354, %v3476
          %v3605 = vsub.f32 %v3359, %v3477
          %v3606 = vsub.f32 %v3362, %v3478
          %v3607 = vsub.f32 %v3367, %v3479
          %v3608 = vsub.f32 %v3370, %v3480
          %v3609 = vsub.f32 %v3375, %v3481
          %v3610 = vsub.f32 %v3378, %v3482
          %v3611 = vsub.f32 %v3383, %v3483
          %v3612 = vsub.f32 %v3386, %v3484
          %v3613 = vmul.f32 %v3581, 1.442695
          %v3614 = vpow.pop %v3613
          %v3615 = vmul.f32 %v3582, 1.442695
          %v3616 = vpow.pop %v3615
          %v3617 = vmul.f32 %v3583, 1.442695
          %v3618 = vpow.pop %v3617
          %v3619 = vmul.f32 %v3584, 1.442695
          %v3620 = vpow.pop %v3619
          %v3621 = vmul.f32 %v3585, 1.442695
          %v3622 = vpow.pop %v3621
          %v3623 = vmul.f32 %v3586, 1.442695
          %v3624 = vpow.pop %v3623
          %v3625 = vmul.f32 %v3587, 1.442695
          %v3626 = vpow.pop %v3625
          %v3627 = vmul.f32 %v3588, 1.442695
          %v3628 = vpow.pop %v3627
          %v3629 = vmul.f32 %v3589, 1.442695
          %v3630 = vpow.pop %v3629
          %v3631 = vmul.f32 %v3590, 1.442695
          %v3632 = vpow.pop %v3631
          %v3633 = vmul.f32 %v3591, 1.442695
          %v3634 = vpow.pop %v3633
          %v3635 = vmul.f32 %v3592, 1.442695
          %v3636 = vpow.pop %v3635
          %v3637 = vmul.f32 %v3593, 1.442695
          %v3638 = vpow.pop %v3637
          %v3639 = vmul.f32 %v3594, 1.442695
          %v3640 = vpow.pop %v3639
          %v3641 = vmul.f32 %v3595, 1.442695
          %v3642 = vpow.pop %v3641
          %v3643 = vmul.f32 %v3596, 1.442695
          %v3644 = vpow.pop %v3643
          %v3645 = vmul.f32 %v3597, 1.442695
          %v3646 = vpow.pop %v3645
          %v3647 = vmul.f32 %v3598, 1.442695
          %v3648 = vpow.pop %v3647
          %v3649 = vmul.f32 %v3599, 1.442695
          %v3650 = vpow.pop %v3649
          %v3651 = vmul.f32 %v3600, 1.442695
          %v3652 = vpow.pop %v3651
          %v3653 = vmul.f32 %v3601, 1.442695
          %v3654 = vpow.pop %v3653
          %v3655 = vmul.f32 %v3602, 1.442695
          %v3656 = vpow.pop %v3655
          %v3657 = vmul.f32 %v3603, 1.442695
          %v3658 = vpow.pop %v3657
          %v3659 = vmul.f32 %v3604, 1.442695
          %v3660 = vpow.pop %v3659
          %v3661 = vmul.f32 %v3605, 1.442695
          %v3662 = vpow.pop %v3661
          %v3663 = vmul.f32 %v3606, 1.442695
          %v3664 = vpow.pop %v3663
          %v3665 = vmul.f32 %v3607, 1.442695
          %v3666 = vpow.pop %v3665
          %v3667 = vmul.f32 %v3608, 1.442695
          %v3668 = vpow.pop %v3667
          %v3669 = vmul.f32 %v3609, 1.442695
          %v3670 = vpow.pop %v3669
          %v3671 = vmul.f32 %v3610, 1.442695
          %v3672 = vpow.pop %v3671
          %v3673 = vmul.f32 %v3611, 1.442695
          %v3674 = vpow.pop %v3673
          %v3675 = vmul.f32 %v3612, 1.442695
          %v3676 = vpow.pop %v3675
          %v3677 = vmul.f32 %v3518, %v2962
          %v3678 = vmul.f32 %v3520, %v2963
          %v3679 = vmul.f32 %v3522, %v2964
          %v3680 = vmul.f32 %v3524, %v2965
          %v3681 = vmul.f32 %v3526, %v2966
          %v3682 = vmul.f32 %v3528, %v2967
          %v3683 = vmul.f32 %v3530, %v2968
          %v3684 = vmul.f32 %v3532, %v2969
          %v3685 = vmul.f32 %v3534, %v2970
          %v3686 = vmul.f32 %v3536, %v2971
          %v3687 = vmul.f32 %v3538, %v2972
          %v3688 = vmul.f32 %v3540, %v2973
          %v3689 = vmul.f32 %v3542, %v2974
          %v3690 = vmul.f32 %v3544, %v2975
          %v3691 = vmul.f32 %v3546, %v2976
          %v3692 = vmul.f32 %v3548, %v2977
          %v3693 = vmul.f32 %v3550, %v2978
          %v3694 = vmul.f32 %v3552, %v2979
          %v3695 = vmul.f32 %v3554, %v2980
          %v3696 = vmul.f32 %v3556, %v2981
          %v3697 = vmul.f32 %v3558, %v2982
          %v3698 = vmul.f32 %v3560, %v2983
          %v3699 = vmul.f32 %v3562, %v2984
          %v3700 = vmul.f32 %v3564, %v2985
          %v3701 = vmul.f32 %v3566, %v2986
          %v3702 = vmul.f32 %v3568, %v2987
          %v3703 = vmul.f32 %v3570, %v2988
          %v3704 = vmul.f32 %v3572, %v2989
          %v3705 = vmul.f32 %v3574, %v2990
          %v3706 = vmul.f32 %v3576, %v2991
          %v3707 = vmul.f32 %v3578, %v2992
          %v3708 = vmul.f32 %v3580, %v2993
          %3709 = vadd.xlane.f32.xlu0 %v3614
          %v3710 = vpop.xlane.xlu0 %3709
          %3711 = vadd.xlane.f32.xlu0 %v3616
          %v3712 = vpop.xlane.xlu0 %3711
          %3713 = vadd.xlane.f32.xlu0 %v3618
          %v3714 = vpop.xlane.xlu0 %3713
          %3715 = vadd.xlane.f32.xlu0 %v3620
          %v3716 = vpop.xlane.xlu0 %3715
          %3717 = vadd.xlane.f32.xlu0 %v3622
          %v3718 = vpop.xlane.xlu0 %3717
          %3719 = vadd.xlane.f32.xlu0 %v3624
          %v3720 = vpop.xlane.xlu0 %3719
          %3721 = vadd.xlane.f32.xlu0 %v3626
          %v3722 = vpop.xlane.xlu0 %3721
          %3723 = vadd.xlane.f32.xlu0 %v3628
          %v3724 = vpop.xlane.xlu0 %3723
          %3725 = vadd.xlane.f32.xlu0 %v3630
          %v3726 = vpop.xlane.xlu0 %3725
          %3727 = vadd.xlane.f32.xlu0 %v3632
          %v3728 = vpop.xlane.xlu0 %3727
          %3729 = vadd.xlane.f32.xlu0 %v3634
          %v3730 = vpop.xlane.xlu0 %3729
          %3731 = vadd.xlane.f32.xlu0 %v3636
          %v3732 = vpop.xlane.xlu0 %3731
          %3733 = vadd.xlane.f32.xlu0 %v3638
          %v3734 = vpop.xlane.xlu0 %3733
          %3735 = vadd.xlane.f32.xlu0 %v3640
          %v3736 = vpop.xlane.xlu0 %3735
          %3737 = vadd.xlane.f32.xlu0 %v3642
          %v3738 = vpop.xlane.xlu0 %3737
          %3739 = vadd.xlane.f32.xlu0 %v3644
          %v3740 = vpop.xlane.xlu0 %3739
          %3741 = vadd.xlane.f32.xlu0 %v3646
          %v3742 = vpop.xlane.xlu0 %3741
          %3743 = vadd.xlane.f32.xlu0 %v3648
          %v3744 = vpop.xlane.xlu0 %3743
          %3745 = vadd.xlane.f32.xlu0 %v3650
          %v3746 = vpop.xlane.xlu0 %3745
          %3747 = vadd.xlane.f32.xlu0 %v3652
          %v3748 = vpop.xlane.xlu0 %3747
          %3749 = vadd.xlane.f32.xlu0 %v3654
          %v3750 = vpop.xlane.xlu0 %3749
          %3751 = vadd.xlane.f32.xlu0 %v3656
          %v3752 = vpop.xlane.xlu0 %3751
          %3753 = vadd.xlane.f32.xlu0 %v3658
          %v3754 = vpop.xlane.xlu0 %3753
          %3755 = vadd.xlane.f32.xlu0 %v3660
          %v3756 = vpop.xlane.xlu0 %3755
          %3757 = vadd.xlane.f32.xlu0 %v3662
          %v3758 = vpop.xlane.xlu0 %3757
          %3759 = vadd.xlane.f32.xlu0 %v3664
          %v3760 = vpop.xlane.xlu0 %3759
          %3761 = vadd.xlane.f32.xlu0 %v3666
          %v3762 = vpop.xlane.xlu0 %3761
          %3763 = vadd.xlane.f32.xlu0 %v3668
          %v3764 = vpop.xlane.xlu0 %3763
          %3765 = vadd.xlane.f32.xlu0 %v3670
          %v3766 = vpop.xlane.xlu0 %3765
          %3767 = vadd.xlane.f32.xlu0 %v3672
          %v3768 = vpop.xlane.xlu0 %3767
          %3769 = vadd.xlane.f32.xlu0 %v3674
          %v3770 = vpop.xlane.xlu0 %3769
          %3771 = vadd.xlane.f32.xlu0 %v3676
          %v3772 = vpop.xlane.xlu0 %3771
          %v3773 = vadd.f32 %v3677, %v3710
          %v3774 = vadd.f32 %v3678, %v3712
          %v3775 = vadd.f32 %v3679, %v3714
          %v3776 = vadd.f32 %v3680, %v3716
          %v3777 = vadd.f32 %v3681, %v3718
          %v3778 = vadd.f32 %v3682, %v3720
          %v3779 = vadd.f32 %v3683, %v3722
          %v3780 = vadd.f32 %v3684, %v3724
          %v3781 = vadd.f32 %v3685, %v3726
          %v3782 = vadd.f32 %v3686, %v3728
          %v3783 = vadd.f32 %v3687, %v3730
          %v3784 = vadd.f32 %v3688, %v3732
          %v3785 = vadd.f32 %v3689, %v3734
          %v3786 = vadd.f32 %v3690, %v3736
          %v3787 = vadd.f32 %v3691, %v3738
          %v3788 = vadd.f32 %v3692, %v3740
          %v3789 = vadd.f32 %v3693, %v3742
          %v3790 = vadd.f32 %v3694, %v3744
          %v3791 = vadd.f32 %v3695, %v3746
          %v3792 = vadd.f32 %v3696, %v3748
          %v3793 = vadd.f32 %v3697, %v3750
          %v3794 = vadd.f32 %v3698, %v3752
          %v3795 = vadd.f32 %v3699, %v3754
          %v3796 = vadd.f32 %v3700, %v3756
          %v3797 = vadd.f32 %v3701, %v3758
          %v3798 = vadd.f32 %v3702, %v3760
          %v3799 = vadd.f32 %v3703, %v3762
          %v3800 = vadd.f32 %v3704, %v3764
          %v3801 = vadd.f32 %v3705, %v3766
          %v3802 = vadd.f32 %v3706, %v3768
          %v3803 = vadd.f32 %v3707, %v3770
          %v3804 = vadd.f32 %v3708, %v3772
          %v3805 = vmul.f32 %v3518, %v2994
          %v3806 = vmul.f32 %v3520, %v2995
          %v3807 = vmul.f32 %v3522, %v2996
          %v3808 = vmul.f32 %v3524, %v2997
          %v3809 = vmul.f32 %v3526, %v2998
          %v3810 = vmul.f32 %v3528, %v2999
          %v3811 = vmul.f32 %v3530, %v3000
          %v3812 = vmul.f32 %v3532, %v3001
          %v3813 = vmul.f32 %v3534, %v3002
          %v3814 = vmul.f32 %v3536, %v3003
          %v3815 = vmul.f32 %v3538, %v3004
          %v3816 = vmul.f32 %v3540, %v3005
          %v3817 = vmul.f32 %v3542, %v3006
          %v3818 = vmul.f32 %v3544, %v3007
          %v3819 = vmul.f32 %v3546, %v3008
          %v3820 = vmul.f32 %v3548, %v3009
          %v3821 = vmul.f32 %v3550, %v3010
          %v3822 = vmul.f32 %v3552, %v3011
          %v3823 = vmul.f32 %v3554, %v3012
          %v3824 = vmul.f32 %v3556, %v3013
          %v3825 = vmul.f32 %v3558, %v3014
          %v3826 = vmul.f32 %v3560, %v3015
          %v3827 = vmul.f32 %v3562, %v3016
          %v3828 = vmul.f32 %v3564, %v3017
          %v3829 = vmul.f32 %v3566, %v3018
          %v3830 = vmul.f32 %v3568, %v3019
          %v3831 = vmul.f32 %v3570, %v3020
          %v3832 = vmul.f32 %v3572, %v3021
          %v3833 = vmul.f32 %v3574, %v3022
          %v3834 = vmul.f32 %v3576, %v3023
          %v3835 = vmul.f32 %v3578, %v3024
          %v3836 = vmul.f32 %v3580, %v3025
          %v3837 = vpack.c.bf16 %v3616, %v3614
          %v3838 = vpack.c.bf16 %v3620, %v3618
          %v3839 = vpack.c.bf16 %v3624, %v3622
          %v3840 = vpack.c.bf16 %v3628, %v3626
          %v3841 = vpack.c.bf16 %v3632, %v3630
          %v3842 = vpack.c.bf16 %v3636, %v3634
          %v3843 = vpack.c.bf16 %v3640, %v3638
          %v3844 = vpack.c.bf16 %v3644, %v3642
          %v3845 = vpack.c.bf16 %v3648, %v3646
          %v3846 = vpack.c.bf16 %v3652, %v3650
          %v3847 = vpack.c.bf16 %v3656, %v3654
          %v3848 = vpack.c.bf16 %v3660, %v3658
          %v3849 = vpack.c.bf16 %v3664, %v3662
          %v3850 = vpack.c.bf16 %v3668, %v3666
          %v3851 = vpack.c.bf16 %v3672, %v3670
          %v3852 = vpack.c.bf16 %v3676, %v3674
          %v3869 = vunpack.c.l.b16 %v3067
          %v3870 = vunpack.c.l.b16 %v3068
          %v3871 = vunpack.c.l.b16 %v3069
          %v3872 = vunpack.c.l.b16 %v3070
          %v3873 = vunpack.c.l.b16 %v3071
          %v3874 = vunpack.c.l.b16 %v3072
          %v3875 = vunpack.c.l.b16 %v3073
          %v3876 = vunpack.c.l.b16 %v3074
          %v3877 = vunpack.c.l.b16 %v3075
          %v3878 = vunpack.c.l.b16 %v3076
          %v3879 = vunpack.c.l.b16 %v3077
          %v3880 = vunpack.c.l.b16 %v3078
          %v3881 = vunpack.c.l.b16 %v3079
          %v3882 = vunpack.c.l.b16 %v3080
          %v3883 = vunpack.c.l.b16 %v3081
          %v3884 = vunpack.c.l.b16 %v3082
          %v3885 = vpack.c.b16 %v3870, %v3869
          %v3886 = vpack.c.b16 %v3872, %v3871
          %v3887 = vpack.c.b16 %v3874, %v3873
          %v3888 = vpack.c.b16 %v3876, %v3875
          %v3889 = vpack.c.b16 %v3878, %v3877
          %v3890 = vpack.c.b16 %v3880, %v3879
          %v3891 = vpack.c.b16 %v3882, %v3881
          %v3892 = vpack.c.b16 %v3884, %v3883
          %3901 = vmatprep.subr.bf16.mxu0 0
          %3902 = vmatpush1.bf16.msra.mxu0 %v3892
          %3903 = vmatprep.subr.bf16.mxu0 0
          %3904 = vmatpush1.bf16.msra.mxu0 %v3891
          %3905 = vmatprep.subr.bf16.mxu0 0
          %3906 = vmatpush1.bf16.msra.mxu0 %v3890
          %3907 = vmatprep.subr.bf16.mxu0 0
          %3908 = vmatpush1.bf16.msra.mxu0 %v3889
          %3909 = vmatprep.subr.bf16.mxu0 0
          %3910 = vmatpush1.bf16.msra.mxu0 %v3888
          %3911 = vmatprep.subr.bf16.mxu0 0
          %3912 = vmatpush1.bf16.msra.mxu0 %v3887
          %3913 = vmatprep.subr.bf16.mxu0 0
          %3914 = vmatpush1.bf16.msra.mxu0 %v3886
          %3915 = vmatprep.subr.bf16.mxu0 0
          %3916 = vmatpush1.bf16.msra.mxu0 %v3885
          %3917 = vmatprep.subr.bf16.mxu0 0
          %3918 = vmatpush2.bf16.msra.mxu0 0
          %3919 = vmatprep.subr.bf16.mxu0 0
          %3920 = vmatpush2.bf16.msra.mxu0 0
          %3921 = vmatprep.subr.bf16.mxu0 0
          %3922 = vmatpush2.bf16.msra.mxu0 0
          %3923 = vmatprep.subr.bf16.mxu0 0
          %3924 = vmatpush2.bf16.msra.mxu0 0
          %3925 = vmatprep.subr.bf16.mxu0 0
          %3926 = vmatpush2.bf16.msra.mxu0 0
          %3927 = vmatprep.subr.bf16.mxu0 0
          %3928 = vmatpush2.bf16.msra.mxu0 0
          %3929 = vmatprep.subr.bf16.mxu0 0
          %3930 = vmatpush2.bf16.msra.mxu0 0
          %3931 = vmatprep.subr.bf16.mxu0 0
          %3932 = vmatpush2.bf16.msra.mxu0 0
          %3933 = vmatprep.mubr.bf16.mxu0 0
          %3934 = vmatmul.mubr.bf16.gmra.mxu0 %v3837
          %v3935 = vpop.f32.mrf.mxu0
          %v3936 = vadd.f32 0.0, %v3935
          %v3937 = vpop.f32.mrf.mxu0
          %v3938 = vpop.f32.mrf.mxu0
          %v3939 = vadd.f32 0.0, %v3938
          %v3940 = vpop.f32.mrf.mxu0
          %3941 = vmatprep.mubr.bf16.mxu0 0
          %3942 = vmatmul.mubr.bf16.gmra.mxu0 %v3838
          %v3943 = vpop.f32.mrf.mxu0
          %v3944 = vadd.f32 0.0, %v3943
          %v3945 = vpop.f32.mrf.mxu0
          %v3946 = vpop.f32.mrf.mxu0
          %v3947 = vadd.f32 0.0, %v3946
          %v3948 = vpop.f32.mrf.mxu0
          %3949 = vmatprep.mubr.bf16.mxu0 0
          %3950 = vmatmul.mubr.bf16.gmra.mxu0 %v3839
          %v3951 = vpop.f32.mrf.mxu0
          %v3952 = vadd.f32 0.0, %v3951
          %v3953 = vpop.f32.mrf.mxu0
          %v3954 = vpop.f32.mrf.mxu0
          %v3955 = vadd.f32 0.0, %v3954
          %v3956 = vpop.f32.mrf.mxu0
          %3957 = vmatprep.mubr.bf16.mxu0 0
          %3958 = vmatmul.mubr.bf16.gmra.mxu0 %v3840
          %v3959 = vpop.f32.mrf.mxu0
          %v3960 = vadd.f32 0.0, %v3959
          %v3961 = vpop.f32.mrf.mxu0
          %v3962 = vpop.f32.mrf.mxu0
          %v3963 = vadd.f32 0.0, %v3962
          %v3964 = vpop.f32.mrf.mxu0
          %3965 = vmatprep.mubr.bf16.mxu0 0
          %3966 = vmatmul.mubr.bf16.gmra.mxu0 %v3841
          %v3967 = vpop.f32.mrf.mxu0
          %v3968 = vadd.f32 0.0, %v3967
          %v3969 = vpop.f32.mrf.mxu0
          %v3970 = vpop.f32.mrf.mxu0
          %v3971 = vadd.f32 0.0, %v3970
          %v3972 = vpop.f32.mrf.mxu0
          %3973 = vmatprep.mubr.bf16.mxu0 0
          %3974 = vmatmul.mubr.bf16.gmra.mxu0 %v3842
          %v3975 = vpop.f32.mrf.mxu0
          %v3976 = vadd.f32 0.0, %v3975
          %v3977 = vpop.f32.mrf.mxu0
          %v3978 = vpop.f32.mrf.mxu0
          %v3979 = vadd.f32 0.0, %v3978
          %v3980 = vpop.f32.mrf.mxu0
          %3981 = vmatprep.mubr.bf16.mxu0 0
          %3982 = vmatmul.mubr.bf16.gmra.mxu0 %v3843
          %v3983 = vpop.f32.mrf.mxu0
          %v3984 = vadd.f32 0.0, %v3983
          %v3985 = vpop.f32.mrf.mxu0
          %v3986 = vpop.f32.mrf.mxu0
          %v3987 = vadd.f32 0.0, %v3986
          %v3988 = vpop.f32.mrf.mxu0
          %3989 = vmatprep.mubr.bf16.mxu0 0
          %3990 = vmatmul.mubr.bf16.gmra.mxu0 %v3844
          %v3991 = vpop.f32.mrf.mxu0
          %v3992 = vadd.f32 0.0, %v3991
          %v3993 = vpop.f32.mrf.mxu0
          %v3994 = vpop.f32.mrf.mxu0
          %v3995 = vadd.f32 0.0, %v3994
          %v3996 = vpop.f32.mrf.mxu0
          %3997 = vdwg.mxu0
          %v4014 = vunpack.c.l.b16 %v3083
          %v4015 = vunpack.c.l.b16 %v3084
          %v4016 = vunpack.c.l.b16 %v3085
          %v4017 = vunpack.c.l.b16 %v3086
          %v4018 = vunpack.c.l.b16 %v3087
          %v4019 = vunpack.c.l.b16 %v3088
          %v4020 = vunpack.c.l.b16 %v3089
          %v4021 = vunpack.c.l.b16 %v3090
          %v4022 = vunpack.c.l.b16 %v3091
          %v4023 = vunpack.c.l.b16 %v3092
          %v4024 = vunpack.c.l.b16 %v3093
          %v4025 = vunpack.c.l.b16 %v3094
          %v4026 = vunpack.c.l.b16 %v3095
          %v4027 = vunpack.c.l.b16 %v3096
          %v4028 = vunpack.c.l.b16 %v3097
          %v4029 = vunpack.c.l.b16 %v3098
          %v4030 = vpack.c.b16 %v4015, %v4014
          %v4031 = vpack.c.b16 %v4017, %v4016
          %v4032 = vpack.c.b16 %v4019, %v4018
          %v4033 = vpack.c.b16 %v4021, %v4020
          %v4034 = vpack.c.b16 %v4023, %v4022
          %v4035 = vpack.c.b16 %v4025, %v4024
          %v4036 = vpack.c.b16 %v4027, %v4026
          %v4037 = vpack.c.b16 %v4029, %v4028
          %4046 = vmatprep.subr.bf16.mxu0 0
          %4047 = vmatpush1.bf16.msra.mxu0 %v4037
          %4048 = vmatprep.subr.bf16.mxu0 0
          %4049 = vmatpush1.bf16.msra.mxu0 %v4036
          %4050 = vmatprep.subr.bf16.mxu0 0
          %4051 = vmatpush1.bf16.msra.mxu0 %v4035
          %4052 = vmatprep.subr.bf16.mxu0 0
          %4053 = vmatpush1.bf16.msra.mxu0 %v4034
          %4054 = vmatprep.subr.bf16.mxu0 0
          %4055 = vmatpush1.bf16.msra.mxu0 %v4033
          %4056 = vmatprep.subr.bf16.mxu0 0
          %4057 = vmatpush1.bf16.msra.mxu0 %v4032
          %4058 = vmatprep.subr.bf16.mxu0 0
          %4059 = vmatpush1.bf16.msra.mxu0 %v4031
          %4060 = vmatprep.subr.bf16.mxu0 0
          %4061 = vmatpush1.bf16.msra.mxu0 %v4030
          %4062 = vmatprep.subr.bf16.mxu0 0
          %4063 = vmatpush2.bf16.msra.mxu0 0
          %4064 = vmatprep.subr.bf16.mxu0 0
          %4065 = vmatpush2.bf16.msra.mxu0 0
          %4066 = vmatprep.subr.bf16.mxu0 0
          %4067 = vmatpush2.bf16.msra.mxu0 0
          %4068 = vmatprep.subr.bf16.mxu0 0
          %4069 = vmatpush2.bf16.msra.mxu0 0
          %4070 = vmatprep.subr.bf16.mxu0 0
          %4071 = vmatpush2.bf16.msra.mxu0 0
          %4072 = vmatprep.subr.bf16.mxu0 0
          %4073 = vmatpush2.bf16.msra.mxu0 0
          %4074 = vmatprep.subr.bf16.mxu0 0
          %4075 = vmatpush2.bf16.msra.mxu0 0
          %4076 = vmatprep.subr.bf16.mxu0 0
          %4077 = vmatpush2.bf16.msra.mxu0 0
          %4078 = vmatprep.mubr.bf16.mxu0 0
          %4079 = vmatmul.mubr.bf16.gmra.mxu0 %v3845
          %v4080 = vpop.f32.mrf.mxu0
          %v4081 = vadd.f32 0.0, %v4080
          %v4082 = vpop.f32.mrf.mxu0
          %v4083 = vpop.f32.mrf.mxu0
          %v4084 = vadd.f32 0.0, %v4083
          %v4085 = vpop.f32.mrf.mxu0
          %4086 = vmatprep.mubr.bf16.mxu0 0
          %4087 = vmatmul.mubr.bf16.gmra.mxu0 %v3846
          %v4088 = vpop.f32.mrf.mxu0
          %v4089 = vadd.f32 0.0, %v4088
          %v4090 = vpop.f32.mrf.mxu0
          %v4091 = vpop.f32.mrf.mxu0
          %v4092 = vadd.f32 0.0, %v4091
          %v4093 = vpop.f32.mrf.mxu0
          %4094 = vmatprep.mubr.bf16.mxu0 0
          %4095 = vmatmul.mubr.bf16.gmra.mxu0 %v3847
          %v4096 = vpop.f32.mrf.mxu0
          %v4097 = vadd.f32 0.0, %v4096
          %v4098 = vpop.f32.mrf.mxu0
          %v4099 = vpop.f32.mrf.mxu0
          %v4100 = vadd.f32 0.0, %v4099
          %v4101 = vpop.f32.mrf.mxu0
          %4102 = vmatprep.mubr.bf16.mxu0 0
          %4103 = vmatmul.mubr.bf16.gmra.mxu0 %v3848
          %v4104 = vpop.f32.mrf.mxu0
          %v4105 = vadd.f32 0.0, %v4104
          %v4106 = vpop.f32.mrf.mxu0
          %v4107 = vpop.f32.mrf.mxu0
          %v4108 = vadd.f32 0.0, %v4107
          %v4109 = vpop.f32.mrf.mxu0
          %4110 = vmatprep.mubr.bf16.mxu0 0
          %4111 = vmatmul.mubr.bf16.gmra.mxu0 %v3849
          %v4112 = vpop.f32.mrf.mxu0
          %v4113 = vadd.f32 0.0, %v4112
          %v4114 = vpop.f32.mrf.mxu0
          %v4115 = vpop.f32.mrf.mxu0
          %v4116 = vadd.f32 0.0, %v4115
          %v4117 = vpop.f32.mrf.mxu0
          %4118 = vmatprep.mubr.bf16.mxu0 0
          %4119 = vmatmul.mubr.bf16.gmra.mxu0 %v3850
          %v4120 = vpop.f32.mrf.mxu0
          %v4121 = vadd.f32 0.0, %v4120
          %v4122 = vpop.f32.mrf.mxu0
          %v4123 = vpop.f32.mrf.mxu0
          %v4124 = vadd.f32 0.0, %v4123
          %v4125 = vpop.f32.mrf.mxu0
          %4126 = vmatprep.mubr.bf16.mxu0 0
          %4127 = vmatmul.mubr.bf16.gmra.mxu0 %v3851
          %v4128 = vpop.f32.mrf.mxu0
          %v4129 = vadd.f32 0.0, %v4128
          %v4130 = vpop.f32.mrf.mxu0
          %v4131 = vpop.f32.mrf.mxu0
          %v4132 = vadd.f32 0.0, %v4131
          %v4133 = vpop.f32.mrf.mxu0
          %4134 = vmatprep.mubr.bf16.mxu0 0
          %4135 = vmatmul.mubr.bf16.gmra.mxu0 %v3852
          %v4136 = vpop.f32.mrf.mxu0
          %v4137 = vadd.f32 0.0, %v4136
          %v4138 = vpop.f32.mrf.mxu0
          %v4139 = vpop.f32.mrf.mxu0
          %v4140 = vadd.f32 0.0, %v4139
          %v4141 = vpop.f32.mrf.mxu0
          %4142 = vdwg.mxu0
          %v4143 = vadd.f32 %v3805, %v3936
          %v4144 = vadd.f32 %v3806, %v3939
          %v4145 = vadd.f32 %v3807, %v3944
          %v4146 = vadd.f32 %v3808, %v3947
          %v4147 = vadd.f32 %v3809, %v3952
          %v4148 = vadd.f32 %v3810, %v3955
          %v4149 = vadd.f32 %v3811, %v3960
          %v4150 = vadd.f32 %v3812, %v3963
          %v4151 = vadd.f32 %v3813, %v3968
          %v4152 = vadd.f32 %v3814, %v3971
          %v4153 = vadd.f32 %v3815, %v3976
          %v4154 = vadd.f32 %v3816, %v3979
          %v4155 = vadd.f32 %v3817, %v3984
          %v4156 = vadd.f32 %v3818, %v3987
          %v4157 = vadd.f32 %v3819, %v3992
          %v4158 = vadd.f32 %v3820, %v3995
          %v4159 = vadd.f32 %v3821, %v4081
          %v4160 = vadd.f32 %v3822, %v4084
          %v4161 = vadd.f32 %v3823, %v4089
          %v4162 = vadd.f32 %v3824, %v4092
          %v4163 = vadd.f32 %v3825, %v4097
          %v4164 = vadd.f32 %v3826, %v4100
          %v4165 = vadd.f32 %v3827, %v4105
          %v4166 = vadd.f32 %v3828, %v4108
          %v4167 = vadd.f32 %v3829, %v4113
          %v4168 = vadd.f32 %v3830, %v4116
          %v4169 = vadd.f32 %v3831, %v4121
          %v4170 = vadd.f32 %v3832, %v4124
          %v4171 = vadd.f32 %v3833, %v4129
          %v4172 = vadd.f32 %v3834, %v4132
          %v4173 = vadd.f32 %v3835, %v4137
          %v4174 = vadd.f32 %v3836, %v4140
        $region129: #{tpu_custom_call.1} parent=87 // loop_footer
          %s2927 = sadd.s32 %s2925, 1
        $region130: #{tpu_custom_call.1} parent=87 // loop_footer_branch
          %2924 = sbr.rel target = $region126
        $region131: #{tpu_custom_call.1} parent=87 // loop_exit
          _
        %v4175 = vld [vmem:[%s1908] sm:$0xf]
        %v4176 = vld [vmem:[%s1908 + $0x8] sm:$0xf]
        %v4177 = vld [vmem:[%s1908 + $0x10] sm:$0xf]
        %v4178 = vld [vmem:[%s1908 + $0x18] sm:$0xf]
        %v4179 = vld [vmem:[%s1908 + $0x20] sm:$0xf]
        %v4180 = vld [vmem:[%s1908 + $0x28] sm:$0xf]
        %v4181 = vld [vmem:[%s1908 + $0x30] sm:$0xf]
        %v4182 = vld [vmem:[%s1908 + $0x38] sm:$0xf]
        %v4183 = vld [vmem:[%s1908 + $0x40] sm:$0xf]
        %v4184 = vld [vmem:[%s1908 + $0x48] sm:$0xf]
        %v4185 = vld [vmem:[%s1908 + $0x50] sm:$0xf]
        %v4186 = vld [vmem:[%s1908 + $0x58] sm:$0xf]
        %v4187 = vld [vmem:[%s1908 + $0x60] sm:$0xf]
        %v4188 = vld [vmem:[%s1908 + $0x68] sm:$0xf]
        %v4189 = vld [vmem:[%s1908 + $0x70] sm:$0xf]
        %v4190 = vld [vmem:[%s1908 + $0x78] sm:$0xf]
        %v4191 = vld [vmem:[%s1908 + $0x80] sm:$0xf]
        %v4192 = vld [vmem:[%s1908 + $0x88] sm:$0xf]
        %v4193 = vld [vmem:[%s1908 + $0x90] sm:$0xf]
        %v4194 = vld [vmem:[%s1908 + $0x98] sm:$0xf]
        %v4195 = vld [vmem:[%s1908 + $0xa0] sm:$0xf]
        %v4196 = vld [vmem:[%s1908 + $0xa8] sm:$0xf]
        %v4197 = vld [vmem:[%s1908 + $0xb0] sm:$0xf]
        %v4198 = vld [vmem:[%s1908 + $0xb8] sm:$0xf]
        %v4199 = vld [vmem:[%s1908 + $0xc0] sm:$0xf]
        %v4200 = vld [vmem:[%s1908 + $0xc8] sm:$0xf]
        %v4201 = vld [vmem:[%s1908 + $0xd0] sm:$0xf]
        %v4202 = vld [vmem:[%s1908 + $0xd8] sm:$0xf]
        %v4203 = vld [vmem:[%s1908 + $0xe0] sm:$0xf]
        %v4204 = vld [vmem:[%s1908 + $0xe8] sm:$0xf]
        %v4205 = vld [vmem:[%s1908 + $0xf0] sm:$0xf]
        %v4206 = vld [vmem:[%s1908 + $0xf8] sm:$0xf]
        %v4207 = vld [vmem:[%s1992] sm:$0xf]
        %v4208 = vld [vmem:[%s1992 + $0x4] sm:$0xf]
        %v4209 = vld [vmem:[%s1992 + $0x8] sm:$0xf]
        %v4210 = vld [vmem:[%s1992 + $0xc] sm:$0xf]
        %v4211 = vld [vmem:[%s1992 + $0x10] sm:$0xf]
        %v4212 = vld [vmem:[%s1992 + $0x14] sm:$0xf]
        %v4213 = vld [vmem:[%s1992 + $0x18] sm:$0xf]
        %v4214 = vld [vmem:[%s1992 + $0x1c] sm:$0xf]
        %v4215 = vld [vmem:[%s1992 + $0x20] sm:$0xf]
        %v4216 = vld [vmem:[%s1992 + $0x24] sm:$0xf]
        %v4217 = vld [vmem:[%s1992 + $0x28] sm:$0xf]
        %v4218 = vld [vmem:[%s1992 + $0x2c] sm:$0xf]
        %v4219 = vld [vmem:[%s1992 + $0x30] sm:$0xf]
        %v4220 = vld [vmem:[%s1992 + $0x34] sm:$0xf]
        %v4221 = vld [vmem:[%s1992 + $0x38] sm:$0xf]
        %v4222 = vld [vmem:[%s1992 + $0x3c] sm:$0xf]
        %v4223 = vld [vmem:[%s1992 + $0x80] sm:$0xf]
        %v4224 = vld [vmem:[%s1992 + $0x84] sm:$0xf]
        %v4225 = vld [vmem:[%s1992 + $0x88] sm:$0xf]
        %v4226 = vld [vmem:[%s1992 + $0x8c] sm:$0xf]
        %v4227 = vld [vmem:[%s1992 + $0x90] sm:$0xf]
        %v4228 = vld [vmem:[%s1992 + $0x94] sm:$0xf]
        %v4229 = vld [vmem:[%s1992 + $0x98] sm:$0xf]
        %v4230 = vld [vmem:[%s1992 + $0x9c] sm:$0xf]
        %v4231 = vld [vmem:[%s1992 + $0xa0] sm:$0xf]
        %v4232 = vld [vmem:[%s1992 + $0xa4] sm:$0xf]
        %v4233 = vld [vmem:[%s1992 + $0xa8] sm:$0xf]
        %v4234 = vld [vmem:[%s1992 + $0xac] sm:$0xf]
        %v4235 = vld [vmem:[%s1992 + $0xb0] sm:$0xf]
        %v4236 = vld [vmem:[%s1992 + $0xb4] sm:$0xf]
        %v4237 = vld [vmem:[%s1992 + $0xb8] sm:$0xf]
        %v4238 = vld [vmem:[%s1992 + $0xbc] sm:$0xf]
        %v4255 = vunpack.c.l.b16 %v4175
        %v4256 = vunpack.c.l.b16 %v4176
        %v4257 = vunpack.c.l.b16 %v4177
        %v4258 = vunpack.c.l.b16 %v4178
        %v4259 = vunpack.c.l.b16 %v4179
        %v4260 = vunpack.c.l.b16 %v4180
        %v4261 = vunpack.c.l.b16 %v4181
        %v4262 = vunpack.c.l.b16 %v4182
        %v4263 = vunpack.c.l.b16 %v4183
        %v4264 = vunpack.c.l.b16 %v4184
        %v4265 = vunpack.c.l.b16 %v4185
        %v4266 = vunpack.c.l.b16 %v4186
        %v4267 = vunpack.c.l.b16 %v4187
        %v4268 = vunpack.c.l.b16 %v4188
        %v4269 = vunpack.c.l.b16 %v4189
        %v4270 = vunpack.c.l.b16 %v4190
        %v4271 = vpack.c.b16 %v4256, %v4255
        %v4272 = vpack.c.b16 %v4258, %v4257
        %v4273 = vpack.c.b16 %v4260, %v4259
        %v4274 = vpack.c.b16 %v4262, %v4261
        %v4275 = vpack.c.b16 %v4264, %v4263
        %v4276 = vpack.c.b16 %v4266, %v4265
        %v4277 = vpack.c.b16 %v4268, %v4267
        %v4278 = vpack.c.b16 %v4270, %v4269
        %4287 = vmatprep.subr.bf16.mxu0 0
        %4288 = vmatpush1.bf16.msra.mxu0 %v4278
        %4289 = vmatprep.subr.bf16.mxu0 0
        %4290 = vmatpush1.bf16.msra.mxu0 %v4277
        %4291 = vmatprep.subr.bf16.mxu0 0
        %4292 = vmatpush1.bf16.msra.mxu0 %v4276
        %4293 = vmatprep.subr.bf16.mxu0 0
        %4294 = vmatpush1.bf16.msra.mxu0 %v4275
        %4295 = vmatprep.subr.bf16.mxu0 0
        %4296 = vmatpush1.bf16.msra.mxu0 %v4274
        %4297 = vmatprep.subr.bf16.mxu0 0
        %4298 = vmatpush1.bf16.msra.mxu0 %v4273
        %4299 = vmatprep.subr.bf16.mxu0 0
        %4300 = vmatpush1.bf16.msra.mxu0 %v4272
        %4301 = vmatprep.subr.bf16.mxu0 0
        %4302 = vmatpush1.bf16.msra.mxu0 %v4271
        %4303 = vmatprep.subr.bf16.mxu0 0
        %4304 = vmatpush2.bf16.msra.mxu0 0
        %4305 = vmatprep.subr.bf16.mxu0 0
        %4306 = vmatpush2.bf16.msra.mxu0 0
        %4307 = vmatprep.subr.bf16.mxu0 0
        %4308 = vmatpush2.bf16.msra.mxu0 0
        %4309 = vmatprep.subr.bf16.mxu0 0
        %4310 = vmatpush2.bf16.msra.mxu0 0
        %4311 = vmatprep.subr.bf16.mxu0 0
        %4312 = vmatpush2.bf16.msra.mxu0 0
        %4313 = vmatprep.subr.bf16.mxu0 0
        %4314 = vmatpush2.bf16.msra.mxu0 0
        %4315 = vmatprep.subr.bf16.mxu0 0
        %4316 = vmatpush2.bf16.msra.mxu0 0
        %4317 = vmatprep.subr.bf16.mxu0 0
        %4318 = vmatpush2.bf16.msra.mxu0 0
        %4319 = vmatprep.mubr.bf16.mxu0 0
        %4320 = vmatmul.mubr.bf16.gmra.mxu0 %v1341
        %v4321 = vpop.f32.mrf.mxu0
        %v4322 = vadd.f32 0.0, %v4321
        %v4323 = vpop.f32.mrf.mxu0
        %v4324 = vpop.f32.mrf.mxu0
        %v4325 = vadd.f32 0.0, %v4324
        %v4326 = vpop.f32.mrf.mxu0
        %4327 = vmatprep.mubr.bf16.mxu0 0
        %4328 = vmatmul.mubr.bf16.gmra.mxu0 %v1342
        %v4329 = vpop.f32.mrf.mxu0
        %v4330 = vadd.f32 0.0, %v4329
        %v4331 = vpop.f32.mrf.mxu0
        %v4332 = vpop.f32.mrf.mxu0
        %v4333 = vadd.f32 0.0, %v4332
        %v4334 = vpop.f32.mrf.mxu0
        %4335 = vmatprep.mubr.bf16.mxu0 0
        %4336 = vmatmul.mubr.bf16.gmra.mxu0 %v1343
        %v4337 = vpop.f32.mrf.mxu0
        %v4338 = vadd.f32 0.0, %v4337
        %v4339 = vpop.f32.mrf.mxu0
        %v4340 = vpop.f32.mrf.mxu0
        %v4341 = vadd.f32 0.0, %v4340
        %v4342 = vpop.f32.mrf.mxu0
        %4343 = vmatprep.mubr.bf16.mxu0 0
        %4344 = vmatmul.mubr.bf16.gmra.mxu0 %v1344
        %v4345 = vpop.f32.mrf.mxu0
        %v4346 = vadd.f32 0.0, %v4345
        %v4347 = vpop.f32.mrf.mxu0
        %v4348 = vpop.f32.mrf.mxu0
        %v4349 = vadd.f32 0.0, %v4348
        %v4350 = vpop.f32.mrf.mxu0
        %4351 = vmatprep.mubr.bf16.mxu0 0
        %4352 = vmatmul.mubr.bf16.gmra.mxu0 %v1345
        %v4353 = vpop.f32.mrf.mxu0
        %v4354 = vadd.f32 0.0, %v4353
        %v4355 = vpop.f32.mrf.mxu0
        %v4356 = vpop.f32.mrf.mxu0
        %v4357 = vadd.f32 0.0, %v4356
        %v4358 = vpop.f32.mrf.mxu0
        %4359 = vmatprep.mubr.bf16.mxu0 0
        %4360 = vmatmul.mubr.bf16.gmra.mxu0 %v1346
        %v4361 = vpop.f32.mrf.mxu0
        %v4362 = vadd.f32 0.0, %v4361
        %v4363 = vpop.f32.mrf.mxu0
        %v4364 = vpop.f32.mrf.mxu0
        %v4365 = vadd.f32 0.0, %v4364
        %v4366 = vpop.f32.mrf.mxu0
        %4367 = vmatprep.mubr.bf16.mxu0 0
        %4368 = vmatmul.mubr.bf16.gmra.mxu0 %v1347
        %v4369 = vpop.f32.mrf.mxu0
        %v4370 = vadd.f32 0.0, %v4369
        %v4371 = vpop.f32.mrf.mxu0
        %v4372 = vpop.f32.mrf.mxu0
        %v4373 = vadd.f32 0.0, %v4372
        %v4374 = vpop.f32.mrf.mxu0
        %4375 = vmatprep.mubr.bf16.mxu0 0
        %4376 = vmatmul.mubr.bf16.gmra.mxu0 %v1348
        %v4377 = vpop.f32.mrf.mxu0
        %v4378 = vadd.f32 0.0, %v4377
        %v4379 = vpop.f32.mrf.mxu0
        %v4380 = vpop.f32.mrf.mxu0
        %v4381 = vadd.f32 0.0, %v4380
        %v4382 = vpop.f32.mrf.mxu0
        %4383 = vdwg.mxu0
        %v4400 = vunpack.c.l.b16 %v4191
        %v4401 = vunpack.c.l.b16 %v4192
        %v4402 = vunpack.c.l.b16 %v4193
        %v4403 = vunpack.c.l.b16 %v4194
        %v4404 = vunpack.c.l.b16 %v4195
        %v4405 = vunpack.c.l.b16 %v4196
        %v4406 = vunpack.c.l.b16 %v4197
        %v4407 = vunpack.c.l.b16 %v4198
        %v4408 = vunpack.c.l.b16 %v4199
        %v4409 = vunpack.c.l.b16 %v4200
        %v4410 = vunpack.c.l.b16 %v4201
        %v4411 = vunpack.c.l.b16 %v4202
        %v4412 = vunpack.c.l.b16 %v4203
        %v4413 = vunpack.c.l.b16 %v4204
        %v4414 = vunpack.c.l.b16 %v4205
        %v4415 = vunpack.c.l.b16 %v4206
        %v4416 = vpack.c.b16 %v4401, %v4400
        %v4417 = vpack.c.b16 %v4403, %v4402
        %v4418 = vpack.c.b16 %v4405, %v4404
        %v4419 = vpack.c.b16 %v4407, %v4406
        %v4420 = vpack.c.b16 %v4409, %v4408
        %v4421 = vpack.c.b16 %v4411, %v4410
        %v4422 = vpack.c.b16 %v4413, %v4412
        %v4423 = vpack.c.b16 %v4415, %v4414
        %4432 = vmatprep.subr.bf16.mxu0 0
        %4433 = vmatpush1.bf16.msra.mxu0 %v4423
        %4434 = vmatprep.subr.bf16.mxu0 0
        %4435 = vmatpush1.bf16.msra.mxu0 %v4422
        %4436 = vmatprep.subr.bf16.mxu0 0
        %4437 = vmatpush1.bf16.msra.mxu0 %v4421
        %4438 = vmatprep.subr.bf16.mxu0 0
        %4439 = vmatpush1.bf16.msra.mxu0 %v4420
        %4440 = vmatprep.subr.bf16.mxu0 0
        %4441 = vmatpush1.bf16.msra.mxu0 %v4419
        %4442 = vmatprep.subr.bf16.mxu0 0
        %4443 = vmatpush1.bf16.msra.mxu0 %v4418
        %4444 = vmatprep.subr.bf16.mxu0 0
        %4445 = vmatpush1.bf16.msra.mxu0 %v4417
        %4446 = vmatprep.subr.bf16.mxu0 0
        %4447 = vmatpush1.bf16.msra.mxu0 %v4416
        %4448 = vmatprep.subr.bf16.mxu0 0
        %4449 = vmatpush2.bf16.msra.mxu0 0
        %4450 = vmatprep.subr.bf16.mxu0 0
        %4451 = vmatpush2.bf16.msra.mxu0 0
        %4452 = vmatprep.subr.bf16.mxu0 0
        %4453 = vmatpush2.bf16.msra.mxu0 0
        %4454 = vmatprep.subr.bf16.mxu0 0
        %4455 = vmatpush2.bf16.msra.mxu0 0
        %4456 = vmatprep.subr.bf16.mxu0 0
        %4457 = vmatpush2.bf16.msra.mxu0 0
        %4458 = vmatprep.subr.bf16.mxu0 0
        %4459 = vmatpush2.bf16.msra.mxu0 0
        %4460 = vmatprep.subr.bf16.mxu0 0
        %4461 = vmatpush2.bf16.msra.mxu0 0
        %4462 = vmatprep.subr.bf16.mxu0 0
        %4463 = vmatpush2.bf16.msra.mxu0 0
        %4464 = vmatprep.mubr.bf16.mxu0 0
        %4465 = vmatmul.mubr.bf16.gmra.mxu0 %v2256
        %v4466 = vpop.f32.mrf.mxu0
        %v4467 = vadd.f32 0.0, %v4466
        %v4468 = vpop.f32.mrf.mxu0
        %v4469 = vpop.f32.mrf.mxu0
        %v4470 = vadd.f32 0.0, %v4469
        %v4471 = vpop.f32.mrf.mxu0
        %4472 = vmatprep.mubr.bf16.mxu0 0
        %4473 = vmatmul.mubr.bf16.gmra.mxu0 %v2257
        %v4474 = vpop.f32.mrf.mxu0
        %v4475 = vadd.f32 0.0, %v4474
        %v4476 = vpop.f32.mrf.mxu0
        %v4477 = vpop.f32.mrf.mxu0
        %v4478 = vadd.f32 0.0, %v4477
        %v4479 = vpop.f32.mrf.mxu0
        %4480 = vmatprep.mubr.bf16.mxu0 0
        %4481 = vmatmul.mubr.bf16.gmra.mxu0 %v2258
        %v4482 = vpop.f32.mrf.mxu0
        %v4483 = vadd.f32 0.0, %v4482
        %v4484 = vpop.f32.mrf.mxu0
        %v4485 = vpop.f32.mrf.mxu0
        %v4486 = vadd.f32 0.0, %v4485
        %v4487 = vpop.f32.mrf.mxu0
        %4488 = vmatprep.mubr.bf16.mxu0 0
        %4489 = vmatmul.mubr.bf16.gmra.mxu0 %v2259
        %v4490 = vpop.f32.mrf.mxu0
        %v4491 = vadd.f32 0.0, %v4490
        %v4492 = vpop.f32.mrf.mxu0
        %v4493 = vpop.f32.mrf.mxu0
        %v4494 = vadd.f32 0.0, %v4493
        %v4495 = vpop.f32.mrf.mxu0
        %4496 = vmatprep.mubr.bf16.mxu0 0
        %4497 = vmatmul.mubr.bf16.gmra.mxu0 %v2260
        %v4498 = vpop.f32.mrf.mxu0
        %v4499 = vadd.f32 0.0, %v4498
        %v4500 = vpop.f32.mrf.mxu0
        %v4501 = vpop.f32.mrf.mxu0
        %v4502 = vadd.f32 0.0, %v4501
        %v4503 = vpop.f32.mrf.mxu0
        %4504 = vmatprep.mubr.bf16.mxu0 0
        %4505 = vmatmul.mubr.bf16.gmra.mxu0 %v2261
        %v4506 = vpop.f32.mrf.mxu0
        %v4507 = vadd.f32 0.0, %v4506
        %v4508 = vpop.f32.mrf.mxu0
        %v4509 = vpop.f32.mrf.mxu0
        %v4510 = vadd.f32 0.0, %v4509
        %v4511 = vpop.f32.mrf.mxu0
        %4512 = vmatprep.mubr.bf16.mxu0 0
        %4513 = vmatmul.mubr.bf16.gmra.mxu0 %v2262
        %v4514 = vpop.f32.mrf.mxu0
        %v4515 = vadd.f32 0.0, %v4514
        %v4516 = vpop.f32.mrf.mxu0
        %v4517 = vpop.f32.mrf.mxu0
        %v4518 = vadd.f32 0.0, %v4517
        %v4519 = vpop.f32.mrf.mxu0
        %4520 = vmatprep.mubr.bf16.mxu0 0
        %4521 = vmatmul.mubr.bf16.gmra.mxu0 %v2263
        %v4522 = vpop.f32.mrf.mxu0
        %v4523 = vadd.f32 0.0, %v4522
        %v4524 = vpop.f32.mrf.mxu0
        %v4525 = vpop.f32.mrf.mxu0
        %v4526 = vadd.f32 0.0, %v4525
        %v4527 = vpop.f32.mrf.mxu0
        %4528 = vdwg.mxu0
        %v4529 = vlaneseq
        %v4530 = vshrl.u32 %v4529, 7
        %v4531 = vadd.s32 %v4530, 8
        %v4532 = vadd.s32 %v4530, 16
        %v4533 = vadd.s32 %v4530, 24
        %v4534 = vadd.s32 %v4530, 32
        %v4535 = vadd.s32 %v4530, 40
        %v4536 = vadd.s32 %v4530, 48
        %v4537 = vadd.s32 %v4530, 56
        %v4538 = vadd.s32 %v4530, 64
        %v4539 = vadd.s32 %v4530, 72
        %v4540 = vadd.s32 %v4530, 80
        %v4541 = vadd.s32 %v4530, 88
        %v4542 = vadd.s32 %v4530, 96
        %v4543 = vadd.s32 %v4530, 104
        %v4544 = vadd.s32 %v4530, 112
        %v4545 = vadd.s32 %v4530, 120
        %v4546 = vlaneseq
        %v4547 = vand.u32 %v4546, 127
        %vm4548 = vcmp.ge.s32.totalorder %v4530, %v4547
        %vm4549 = vcmp.ge.s32.totalorder %v4531, %v4547
        %vm4550 = vcmp.ge.s32.totalorder %v4532, %v4547
        %vm4551 = vcmp.ge.s32.totalorder %v4533, %v4547
        %vm4552 = vcmp.ge.s32.totalorder %v4534, %v4547
        %vm4553 = vcmp.ge.s32.totalorder %v4535, %v4547
        %vm4554 = vcmp.ge.s32.totalorder %v4536, %v4547
        %vm4555 = vcmp.ge.s32.totalorder %v4537, %v4547
        %vm4556 = vcmp.ge.s32.totalorder %v4538, %v4547
        %vm4557 = vcmp.ge.s32.totalorder %v4539, %v4547
        %vm4558 = vcmp.ge.s32.totalorder %v4540, %v4547
        %vm4559 = vcmp.ge.s32.totalorder %v4541, %v4547
        %vm4560 = vcmp.ge.s32.totalorder %v4542, %v4547
        %vm4561 = vcmp.ge.s32.totalorder %v4543, %v4547
        %vm4562 = vcmp.ge.s32.totalorder %v4544, %v4547
        %vm4563 = vcmp.ge.s32.totalorder %v4545, %v4547
        %v4564 = vsel %vm4548, 1, 0
        %v4565 = vsel %vm4549, 1, 0
        %v4566 = vsel %vm4550, 1, 0
        %v4567 = vsel %vm4551, 1, 0
        %v4568 = vsel %vm4552, 1, 0
        %v4569 = vsel %vm4553, 1, 0
        %v4570 = vsel %vm4554, 1, 0
        %v4571 = vsel %vm4555, 1, 0
        %v4572 = vsel %vm4556, 1, 0
        %v4573 = vsel %vm4557, 1, 0
        %v4574 = vsel %vm4558, 1, 0
        %v4575 = vsel %vm4559, 1, 0
        %v4576 = vsel %vm4560, 1, 0
        %v4577 = vsel %vm4561, 1, 0
        %v4578 = vsel %vm4562, 1, 0
        %v4579 = vsel %vm4563, 1, 0
        %vm4580 = vcmp.eq.s32.totalorder %v4564, 1
        %vm4581 = vcmp.eq.s32.totalorder %v4565, 1
        %vm4582 = vcmp.eq.s32.totalorder %v4566, 1
        %vm4583 = vcmp.eq.s32.totalorder %v4567, 1
        %vm4584 = vcmp.eq.s32.totalorder %v4568, 1
        %vm4585 = vcmp.eq.s32.totalorder %v4569, 1
        %vm4586 = vcmp.eq.s32.totalorder %v4570, 1
        %vm4587 = vcmp.eq.s32.totalorder %v4571, 1
        %vm4588 = vcmp.eq.s32.totalorder %v4572, 1
        %vm4589 = vcmp.eq.s32.totalorder %v4573, 1
        %vm4590 = vcmp.eq.s32.totalorder %v4574, 1
        %vm4591 = vcmp.eq.s32.totalorder %v4575, 1
        %vm4592 = vcmp.eq.s32.totalorder %v4576, 1
        %vm4593 = vcmp.eq.s32.totalorder %v4577, 1
        %vm4594 = vcmp.eq.s32.totalorder %v4578, 1
        %vm4595 = vcmp.eq.s32.totalorder %v4579, 1
        %v4596 = vsel %vm4580, %v4322, -inf
        %v4597 = vsel %vm4581, %v4325, -inf
        %v4598 = vsel %vm4582, %v4330, -inf
        %v4599 = vsel %vm4583, %v4333, -inf
        %v4600 = vsel %vm4584, %v4338, -inf
        %v4601 = vsel %vm4585, %v4341, -inf
        %v4602 = vsel %vm4586, %v4346, -inf
        %v4603 = vsel %vm4587, %v4349, -inf
        %v4604 = vsel %vm4588, %v4354, -inf
        %v4605 = vsel %vm4589, %v4357, -inf
        %v4606 = vsel %vm4590, %v4362, -inf
        %v4607 = vsel %vm4591, %v4365, -inf
        %v4608 = vsel %vm4592, %v4370, -inf
        %v4609 = vsel %vm4593, %v4373, -inf
        %v4610 = vsel %vm4594, %v4378, -inf
        %v4611 = vsel %vm4595, %v4381, -inf
        %v4612 = vsel %vm4580, %v4467, -inf
        %v4613 = vsel %vm4581, %v4470, -inf
        %v4614 = vsel %vm4582, %v4475, -inf
        %v4615 = vsel %vm4583, %v4478, -inf
        %v4616 = vsel %vm4584, %v4483, -inf
        %v4617 = vsel %vm4585, %v4486, -inf
        %v4618 = vsel %vm4586, %v4491, -inf
        %v4619 = vsel %vm4587, %v4494, -inf
        %v4620 = vsel %vm4588, %v4499, -inf
        %v4621 = vsel %vm4589, %v4502, -inf
        %v4622 = vsel %vm4590, %v4507, -inf
        %v4623 = vsel %vm4591, %v4510, -inf
        %v4624 = vsel %vm4592, %v4515, -inf
        %v4625 = vsel %vm4593, %v4518, -inf
        %v4626 = vsel %vm4594, %v4523, -inf
        %v4627 = vsel %vm4595, %v4526, -inf
        %4628 = vmax.xlane.f32.xlu0 %v4596
        %v4629 = vpop.xlane.xlu0 %4628
        %4630 = vmax.xlane.f32.xlu0 %v4597
        %v4631 = vpop.xlane.xlu0 %4630
        %4632 = vmax.xlane.f32.xlu0 %v4598
        %v4633 = vpop.xlane.xlu0 %4632
        %4634 = vmax.xlane.f32.xlu0 %v4599
        %v4635 = vpop.xlane.xlu0 %4634
        %4636 = vmax.xlane.f32.xlu0 %v4600
        %v4637 = vpop.xlane.xlu0 %4636
        %4638 = vmax.xlane.f32.xlu0 %v4601
        %v4639 = vpop.xlane.xlu0 %4638
        %4640 = vmax.xlane.f32.xlu0 %v4602
        %v4641 = vpop.xlane.xlu0 %4640
        %4642 = vmax.xlane.f32.xlu0 %v4603
        %v4643 = vpop.xlane.xlu0 %4642
        %4644 = vmax.xlane.f32.xlu0 %v4604
        %v4645 = vpop.xlane.xlu0 %4644
        %4646 = vmax.xlane.f32.xlu0 %v4605
        %v4647 = vpop.xlane.xlu0 %4646
        %4648 = vmax.xlane.f32.xlu0 %v4606
        %v4649 = vpop.xlane.xlu0 %4648
        %4650 = vmax.xlane.f32.xlu0 %v4607
        %v4651 = vpop.xlane.xlu0 %4650
        %4652 = vmax.xlane.f32.xlu0 %v4608
        %v4653 = vpop.xlane.xlu0 %4652
        %4654 = vmax.xlane.f32.xlu0 %v4609
        %v4655 = vpop.xlane.xlu0 %4654
        %4656 = vmax.xlane.f32.xlu0 %v4610
        %v4657 = vpop.xlane.xlu0 %4656
        %4658 = vmax.xlane.f32.xlu0 %v4611
        %v4659 = vpop.xlane.xlu0 %4658
        %4660 = vmax.xlane.f32.xlu0 %v4612
        %v4661 = vpop.xlane.xlu0 %4660
        %4662 = vmax.xlane.f32.xlu0 %v4613
        %v4663 = vpop.xlane.xlu0 %4662
        %4664 = vmax.xlane.f32.xlu0 %v4614
        %v4665 = vpop.xlane.xlu0 %4664
        %4666 = vmax.xlane.f32.xlu0 %v4615
        %v4667 = vpop.xlane.xlu0 %4666
        %4668 = vmax.xlane.f32.xlu0 %v4616
        %v4669 = vpop.xlane.xlu0 %4668
        %4670 = vmax.xlane.f32.xlu0 %v4617
        %v4671 = vpop.xlane.xlu0 %4670
        %4672 = vmax.xlane.f32.xlu0 %v4618
        %v4673 = vpop.xlane.xlu0 %4672
        %4674 = vmax.xlane.f32.xlu0 %v4619
        %v4675 = vpop.xlane.xlu0 %4674
        %4676 = vmax.xlane.f32.xlu0 %v4620
        %v4677 = vpop.xlane.xlu0 %4676
        %4678 = vmax.xlane.f32.xlu0 %v4621
        %v4679 = vpop.xlane.xlu0 %4678
        %4680 = vmax.xlane.f32.xlu0 %v4622
        %v4681 = vpop.xlane.xlu0 %4680
        %4682 = vmax.xlane.f32.xlu0 %v4623
        %v4683 = vpop.xlane.xlu0 %4682
        %4684 = vmax.xlane.f32.xlu0 %v4624
        %v4685 = vpop.xlane.xlu0 %4684
        %4686 = vmax.xlane.f32.xlu0 %v4625
        %v4687 = vpop.xlane.xlu0 %4686
        %4688 = vmax.xlane.f32.xlu0 %v4626
        %v4689 = vpop.xlane.xlu0 %4688
        %4690 = vmax.xlane.f32.xlu0 %v4627
        %v4691 = vpop.xlane.xlu0 %4690
        %v4692 = vmax.f32 %v2930, %v4629
        %v4693 = vmax.f32 %v2931, %v4631
        %v4694 = vmax.f32 %v2932, %v4633
        %v4695 = vmax.f32 %v2933, %v4635
        %v4696 = vmax.f32 %v2934, %v4637
        %v4697 = vmax.f32 %v2935, %v4639
        %v4698 = vmax.f32 %v2936, %v4641
        %v4699 = vmax.f32 %v2937, %v4643
        %v4700 = vmax.f32 %v2938, %v4645
        %v4701 = vmax.f32 %v2939, %v4647
        %v4702 = vmax.f32 %v2940, %v4649
        %v4703 = vmax.f32 %v2941, %v4651
        %v4704 = vmax.f32 %v2942, %v4653
        %v4705 = vmax.f32 %v2943, %v4655
        %v4706 = vmax.f32 %v2944, %v4657
        %v4707 = vmax.f32 %v2945, %v4659
        %v4708 = vmax.f32 %v2946, %v4661
        %v4709 = vmax.f32 %v2947, %v4663
        %v4710 = vmax.f32 %v2948, %v4665
        %v4711 = vmax.f32 %v2949, %v4667
        %v4712 = vmax.f32 %v2950, %v4669
        %v4713 = vmax.f32 %v2951, %v4671
        %v4714 = vmax.f32 %v2952, %v4673
        %v4715 = vmax.f32 %v2953, %v4675
        %v4716 = vmax.f32 %v2954, %v4677
        %v4717 = vmax.f32 %v2955, %v4679
        %v4718 = vmax.f32 %v2956, %v4681
        %v4719 = vmax.f32 %v2957, %v4683
        %v4720 = vmax.f32 %v2958, %v4685
        %v4721 = vmax.f32 %v2959, %v4687
        %v4722 = vmax.f32 %v2960, %v4689
        %v4723 = vmax.f32 %v2961, %v4691
        %v4724 = vsub.f32 %v2930, %v4692
        %v4725 = vsub.f32 %v2931, %v4693
        %v4726 = vsub.f32 %v2932, %v4694
        %v4727 = vsub.f32 %v2933, %v4695
        %v4728 = vsub.f32 %v2934, %v4696
        %v4729 = vsub.f32 %v2935, %v4697
        %v4730 = vsub.f32 %v2936, %v4698
        %v4731 = vsub.f32 %v2937, %v4699
        %v4732 = vsub.f32 %v2938, %v4700
        %v4733 = vsub.f32 %v2939, %v4701
        %v4734 = vsub.f32 %v2940, %v4702
        %v4735 = vsub.f32 %v2941, %v4703
        %v4736 = vsub.f32 %v2942, %v4704
        %v4737 = vsub.f32 %v2943, %v4705
        %v4738 = vsub.f32 %v2944, %v4706
        %v4739 = vsub.f32 %v2945, %v4707
        %v4740 = vsub.f32 %v2946, %v4708
        %v4741 = vsub.f32 %v2947, %v4709
        %v4742 = vsub.f32 %v2948, %v4710
        %v4743 = vsub.f32 %v2949, %v4711
        %v4744 = vsub.f32 %v2950, %v4712
        %v4745 = vsub.f32 %v2951, %v4713
        %v4746 = vsub.f32 %v2952, %v4714
        %v4747 = vsub.f32 %v2953, %v4715
        %v4748 = vsub.f32 %v2954, %v4716
        %v4749 = vsub.f32 %v2955, %v4717
        %v4750 = vsub.f32 %v2956, %v4718
        %v4751 = vsub.f32 %v2957, %v4719
        %v4752 = vsub.f32 %v2958, %v4720
        %v4753 = vsub.f32 %v2959, %v4721
        %v4754 = vsub.f32 %v2960, %v4722
        %v4755 = vsub.f32 %v2961, %v4723
        %v4756 = vmul.f32 %v4724, 1.442695
        %v4757 = vpow.pop %v4756
        %v4758 = vmul.f32 %v4725, 1.442695
        %v4759 = vpow.pop %v4758
        %v4760 = vmul.f32 %v4726, 1.442695
        %v4761 = vpow.pop %v4760
        %v4762 = vmul.f32 %v4727, 1.442695
        %v4763 = vpow.pop %v4762
        %v4764 = vmul.f32 %v4728, 1.442695
        %v4765 = vpow.pop %v4764
        %v4766 = vmul.f32 %v4729, 1.442695
        %v4767 = vpow.pop %v4766
        %v4768 = vmul.f32 %v4730, 1.442695
        %v4769 = vpow.pop %v4768
        %v4770 = vmul.f32 %v4731, 1.442695
        %v4771 = vpow.pop %v4770
        %v4772 = vmul.f32 %v4732, 1.442695
        %v4773 = vpow.pop %v4772
        %v4774 = vmul.f32 %v4733, 1.442695
        %v4775 = vpow.pop %v4774
        %v4776 = vmul.f32 %v4734, 1.442695
        %v4777 = vpow.pop %v4776
        %v4778 = vmul.f32 %v4735, 1.442695
        %v4779 = vpow.pop %v4778
        %v4780 = vmul.f32 %v4736, 1.442695
        %v4781 = vpow.pop %v4780
        %v4782 = vmul.f32 %v4737, 1.442695
        %v4783 = vpow.pop %v4782
        %v4784 = vmul.f32 %v4738, 1.442695
        %v4785 = vpow.pop %v4784
        %v4786 = vmul.f32 %v4739, 1.442695
        %v4787 = vpow.pop %v4786
        %v4788 = vmul.f32 %v4740, 1.442695
        %v4789 = vpow.pop %v4788
        %v4790 = vmul.f32 %v4741, 1.442695
        %v4791 = vpow.pop %v4790
        %v4792 = vmul.f32 %v4742, 1.442695
        %v4793 = vpow.pop %v4792
        %v4794 = vmul.f32 %v4743, 1.442695
        %v4795 = vpow.pop %v4794
        %v4796 = vmul.f32 %v4744, 1.442695
        %v4797 = vpow.pop %v4796
        %v4798 = vmul.f32 %v4745, 1.442695
        %v4799 = vpow.pop %v4798
        %v4800 = vmul.f32 %v4746, 1.442695
        %v4801 = vpow.pop %v4800
        %v4802 = vmul.f32 %v4747, 1.442695
        %v4803 = vpow.pop %v4802
        %v4804 = vmul.f32 %v4748, 1.442695
        %v4805 = vpow.pop %v4804
        %v4806 = vmul.f32 %v4749, 1.442695
        %v4807 = vpow.pop %v4806
        %v4808 = vmul.f32 %v4750, 1.442695
        %v4809 = vpow.pop %v4808
        %v4810 = vmul.f32 %v4751, 1.442695
        %v4811 = vpow.pop %v4810
        %v4812 = vmul.f32 %v4752, 1.442695
        %v4813 = vpow.pop %v4812
        %v4814 = vmul.f32 %v4753, 1.442695
        %v4815 = vpow.pop %v4814
        %v4816 = vmul.f32 %v4754, 1.442695
        %v4817 = vpow.pop %v4816
        %v4818 = vmul.f32 %v4755, 1.442695
        %v4819 = vpow.pop %v4818
        %v4820 = vsub.f32 %v4596, %v4692
        %v4821 = vsub.f32 %v4597, %v4693
        %v4822 = vsub.f32 %v4598, %v4694
        %v4823 = vsub.f32 %v4599, %v4695
        %v4824 = vsub.f32 %v4600, %v4696
        %v4825 = vsub.f32 %v4601, %v4697
        %v4826 = vsub.f32 %v4602, %v4698
        %v4827 = vsub.f32 %v4603, %v4699
        %v4828 = vsub.f32 %v4604, %v4700
        %v4829 = vsub.f32 %v4605, %v4701
        %v4830 = vsub.f32 %v4606, %v4702
        %v4831 = vsub.f32 %v4607, %v4703
        %v4832 = vsub.f32 %v4608, %v4704
        %v4833 = vsub.f32 %v4609, %v4705
        %v4834 = vsub.f32 %v4610, %v4706
        %v4835 = vsub.f32 %v4611, %v4707
        %v4836 = vsub.f32 %v4612, %v4708
        %v4837 = vsub.f32 %v4613, %v4709
        %v4838 = vsub.f32 %v4614, %v4710
        %v4839 = vsub.f32 %v4615, %v4711
        %v4840 = vsub.f32 %v4616, %v4712
        %v4841 = vsub.f32 %v4617, %v4713
        %v4842 = vsub.f32 %v4618, %v4714
        %v4843 = vsub.f32 %v4619, %v4715
        %v4844 = vsub.f32 %v4620, %v4716
        %v4845 = vsub.f32 %v4621, %v4717
        %v4846 = vsub.f32 %v4622, %v4718
        %v4847 = vsub.f32 %v4623, %v4719
        %v4848 = vsub.f32 %v4624, %v4720
        %v4849 = vsub.f32 %v4625, %v4721
        %v4850 = vsub.f32 %v4626, %v4722
        %v4851 = vsub.f32 %v4627, %v4723
        %v4852 = vmul.f32 %v4820, 1.442695
        %v4853 = vpow.pop %v4852
        %v4854 = vmul.f32 %v4821, 1.442695
        %v4855 = vpow.pop %v4854
        %v4856 = vmul.f32 %v4822, 1.442695
        %v4857 = vpow.pop %v4856
        %v4858 = vmul.f32 %v4823, 1.442695
        %v4859 = vpow.pop %v4858
        %v4860 = vmul.f32 %v4824, 1.442695
        %v4861 = vpow.pop %v4860
        %v4862 = vmul.f32 %v4825, 1.442695
        %v4863 = vpow.pop %v4862
        %v4864 = vmul.f32 %v4826, 1.442695
        %v4865 = vpow.pop %v4864
        %v4866 = vmul.f32 %v4827, 1.442695
        %v4867 = vpow.pop %v4866
        %v4868 = vmul.f32 %v4828, 1.442695
        %v4869 = vpow.pop %v4868
        %v4870 = vmul.f32 %v4829, 1.442695
        %v4871 = vpow.pop %v4870
        %v4872 = vmul.f32 %v4830, 1.442695
        %v4873 = vpow.pop %v4872
        %v4874 = vmul.f32 %v4831, 1.442695
        %v4875 = vpow.pop %v4874
        %v4876 = vmul.f32 %v4832, 1.442695
        %v4877 = vpow.pop %v4876
        %v4878 = vmul.f32 %v4833, 1.442695
        %v4879 = vpow.pop %v4878
        %v4880 = vmul.f32 %v4834, 1.442695
        %v4881 = vpow.pop %v4880
        %v4882 = vmul.f32 %v4835, 1.442695
        %v4883 = vpow.pop %v4882
        %v4884 = vmul.f32 %v4836, 1.442695
        %v4885 = vpow.pop %v4884
        %v4886 = vmul.f32 %v4837, 1.442695
        %v4887 = vpow.pop %v4886
        %v4888 = vmul.f32 %v4838, 1.442695
        %v4889 = vpow.pop %v4888
        %v4890 = vmul.f32 %v4839, 1.442695
        %v4891 = vpow.pop %v4890
        %v4892 = vmul.f32 %v4840, 1.442695
        %v4893 = vpow.pop %v4892
        %v4894 = vmul.f32 %v4841, 1.442695
        %v4895 = vpow.pop %v4894
        %v4896 = vmul.f32 %v4842, 1.442695
        %v4897 = vpow.pop %v4896
        %v4898 = vmul.f32 %v4843, 1.442695
        %v4899 = vpow.pop %v4898
        %v4900 = vmul.f32 %v4844, 1.442695
        %v4901 = vpow.pop %v4900
        %v4902 = vmul.f32 %v4845, 1.442695
        %v4903 = vpow.pop %v4902
        %v4904 = vmul.f32 %v4846, 1.442695
        %v4905 = vpow.pop %v4904
        %v4906 = vmul.f32 %v4847, 1.442695
        %v4907 = vpow.pop %v4906
        %v4908 = vmul.f32 %v4848, 1.442695
        %v4909 = vpow.pop %v4908
        %v4910 = vmul.f32 %v4849, 1.442695
        %v4911 = vpow.pop %v4910
        %v4912 = vmul.f32 %v4850, 1.442695
        %v4913 = vpow.pop %v4912
        %v4914 = vmul.f32 %v4851, 1.442695
        %v4915 = vpow.pop %v4914
        %v4916 = vmul.f32 %v4757, %v2962
        %v4917 = vmul.f32 %v4759, %v2963
        %v4918 = vmul.f32 %v4761, %v2964
        %v4919 = vmul.f32 %v4763, %v2965
        %v4920 = vmul.f32 %v4765, %v2966
        %v4921 = vmul.f32 %v4767, %v2967
        %v4922 = vmul.f32 %v4769, %v2968
        %v4923 = vmul.f32 %v4771, %v2969
        %v4924 = vmul.f32 %v4773, %v2970
        %v4925 = vmul.f32 %v4775, %v2971
        %v4926 = vmul.f32 %v4777, %v2972
        %v4927 = vmul.f32 %v4779, %v2973
        %v4928 = vmul.f32 %v4781, %v2974
        %v4929 = vmul.f32 %v4783, %v2975
        %v4930 = vmul.f32 %v4785, %v2976
        %v4931 = vmul.f32 %v4787, %v2977
        %v4932 = vmul.f32 %v4789, %v2978
        %v4933 = vmul.f32 %v4791, %v2979
        %v4934 = vmul.f32 %v4793, %v2980
        %v4935 = vmul.f32 %v4795, %v2981
        %v4936 = vmul.f32 %v4797, %v2982
        %v4937 = vmul.f32 %v4799, %v2983
        %v4938 = vmul.f32 %v4801, %v2984
        %v4939 = vmul.f32 %v4803, %v2985
        %v4940 = vmul.f32 %v4805, %v2986
        %v4941 = vmul.f32 %v4807, %v2987
        %v4942 = vmul.f32 %v4809, %v2988
        %v4943 = vmul.f32 %v4811, %v2989
        %v4944 = vmul.f32 %v4813, %v2990
        %v4945 = vmul.f32 %v4815, %v2991
        %v4946 = vmul.f32 %v4817, %v2992
        %v4947 = vmul.f32 %v4819, %v2993
        %4948 = vadd.xlane.f32.xlu0 %v4853
        %v4949 = vpop.xlane.xlu0 %4948
        %4950 = vadd.xlane.f32.xlu0 %v4855
        %v4951 = vpop.xlane.xlu0 %4950
        %4952 = vadd.xlane.f32.xlu0 %v4857
        %v4953 = vpop.xlane.xlu0 %4952
        %4954 = vadd.xlane.f32.xlu0 %v4859
        %v4955 = vpop.xlane.xlu0 %4954
        %4956 = vadd.xlane.f32.xlu0 %v4861
        %v4957 = vpop.xlane.xlu0 %4956
        %4958 = vadd.xlane.f32.xlu0 %v4863
        %v4959 = vpop.xlane.xlu0 %4958
        %4960 = vadd.xlane.f32.xlu0 %v4865
        %v4961 = vpop.xlane.xlu0 %4960
        %4962 = vadd.xlane.f32.xlu0 %v4867
        %v4963 = vpop.xlane.xlu0 %4962
        %4964 = vadd.xlane.f32.xlu0 %v4869
        %v4965 = vpop.xlane.xlu0 %4964
        %4966 = vadd.xlane.f32.xlu0 %v4871
        %v4967 = vpop.xlane.xlu0 %4966
        %4968 = vadd.xlane.f32.xlu0 %v4873
        %v4969 = vpop.xlane.xlu0 %4968
        %4970 = vadd.xlane.f32.xlu0 %v4875
        %v4971 = vpop.xlane.xlu0 %4970
        %4972 = vadd.xlane.f32.xlu0 %v4877
        %v4973 = vpop.xlane.xlu0 %4972
        %4974 = vadd.xlane.f32.xlu0 %v4879
        %v4975 = vpop.xlane.xlu0 %4974
        %4976 = vadd.xlane.f32.xlu0 %v4881
        %v4977 = vpop.xlane.xlu0 %4976
        %4978 = vadd.xlane.f32.xlu0 %v4883
        %v4979 = vpop.xlane.xlu0 %4978
        %4980 = vadd.xlane.f32.xlu0 %v4885
        %v4981 = vpop.xlane.xlu0 %4980
        %4982 = vadd.xlane.f32.xlu0 %v4887
        %v4983 = vpop.xlane.xlu0 %4982
        %4984 = vadd.xlane.f32.xlu0 %v4889
        %v4985 = vpop.xlane.xlu0 %4984
        %4986 = vadd.xlane.f32.xlu0 %v4891
        %v4987 = vpop.xlane.xlu0 %4986
        %4988 = vadd.xlane.f32.xlu0 %v4893
        %v4989 = vpop.xlane.xlu0 %4988
        %4990 = vadd.xlane.f32.xlu0 %v4895
        %v4991 = vpop.xlane.xlu0 %4990
        %4992 = vadd.xlane.f32.xlu0 %v4897
        %v4993 = vpop.xlane.xlu0 %4992
        %4994 = vadd.xlane.f32.xlu0 %v4899
        %v4995 = vpop.xlane.xlu0 %4994
        %4996 = vadd.xlane.f32.xlu0 %v4901
        %v4997 = vpop.xlane.xlu0 %4996
        %4998 = vadd.xlane.f32.xlu0 %v4903
        %v4999 = vpop.xlane.xlu0 %4998
        %5000 = vadd.xlane.f32.xlu0 %v4905
        %v5001 = vpop.xlane.xlu0 %5000
        %5002 = vadd.xlane.f32.xlu0 %v4907
        %v5003 = vpop.xlane.xlu0 %5002
        %5004 = vadd.xlane.f32.xlu0 %v4909
        %v5005 = vpop.xlane.xlu0 %5004
        %5006 = vadd.xlane.f32.xlu0 %v4911
        %v5007 = vpop.xlane.xlu0 %5006
        %5008 = vadd.xlane.f32.xlu0 %v4913
        %v5009 = vpop.xlane.xlu0 %5008
        %5010 = vadd.xlane.f32.xlu0 %v4915
        %v5011 = vpop.xlane.xlu0 %5010
        %v5012 = vadd.f32 %v4916, %v4949
        %v5013 = vadd.f32 %v4917, %v4951
        %v5014 = vadd.f32 %v4918, %v4953
        %v5015 = vadd.f32 %v4919, %v4955
        %v5016 = vadd.f32 %v4920, %v4957
        %v5017 = vadd.f32 %v4921, %v4959
        %v5018 = vadd.f32 %v4922, %v4961
        %v5019 = vadd.f32 %v4923, %v4963
        %v5020 = vadd.f32 %v4924, %v4965
        %v5021 = vadd.f32 %v4925, %v4967
        %v5022 = vadd.f32 %v4926, %v4969
        %v5023 = vadd.f32 %v4927, %v4971
        %v5024 = vadd.f32 %v4928, %v4973
        %v5025 = vadd.f32 %v4929, %v4975
        %v5026 = vadd.f32 %v4930, %v4977
        %v5027 = vadd.f32 %v4931, %v4979
        %v5028 = vadd.f32 %v4932, %v4981
        %v5029 = vadd.f32 %v4933, %v4983
        %v5030 = vadd.f32 %v4934, %v4985
        %v5031 = vadd.f32 %v4935, %v4987
        %v5032 = vadd.f32 %v4936, %v4989
        %v5033 = vadd.f32 %v4937, %v4991
        %v5034 = vadd.f32 %v4938, %v4993
        %v5035 = vadd.f32 %v4939, %v4995
        %v5036 = vadd.f32 %v4940, %v4997
        %v5037 = vadd.f32 %v4941, %v4999
        %v5038 = vadd.f32 %v4942, %v5001
        %v5039 = vadd.f32 %v4943, %v5003
        %v5040 = vadd.f32 %v4944, %v5005
        %v5041 = vadd.f32 %v4945, %v5007
        %v5042 = vadd.f32 %v4946, %v5009
        %v5043 = vadd.f32 %v4947, %v5011
        %v5044 = vmul.f32 %v4757, %v2994
        %v5045 = vmul.f32 %v4759, %v2995
        %v5046 = vmul.f32 %v4761, %v2996
        %v5047 = vmul.f32 %v4763, %v2997
        %v5048 = vmul.f32 %v4765, %v2998
        %v5049 = vmul.f32 %v4767, %v2999
        %v5050 = vmul.f32 %v4769, %v3000
        %v5051 = vmul.f32 %v4771, %v3001
        %v5052 = vmul.f32 %v4773, %v3002
        %v5053 = vmul.f32 %v4775, %v3003
        %v5054 = vmul.f32 %v4777, %v3004
        %v5055 = vmul.f32 %v4779, %v3005
        %v5056 = vmul.f32 %v4781, %v3006
        %v5057 = vmul.f32 %v4783, %v3007
        %v5058 = vmul.f32 %v4785, %v3008
        %v5059 = vmul.f32 %v4787, %v3009
        %v5060 = vmul.f32 %v4789, %v3010
        %v5061 = vmul.f32 %v4791, %v3011
        %v5062 = vmul.f32 %v4793, %v3012
        %v5063 = vmul.f32 %v4795, %v3013
        %v5064 = vmul.f32 %v4797, %v3014
        %v5065 = vmul.f32 %v4799, %v3015
        %v5066 = vmul.f32 %v4801, %v3016
        %v5067 = vmul.f32 %v4803, %v3017
        %v5068 = vmul.f32 %v4805, %v3018
        %v5069 = vmul.f32 %v4807, %v3019
        %v5070 = vmul.f32 %v4809, %v3020
        %v5071 = vmul.f32 %v4811, %v3021
        %v5072 = vmul.f32 %v4813, %v3022
        %v5073 = vmul.f32 %v4815, %v3023
        %v5074 = vmul.f32 %v4817, %v3024
        %v5075 = vmul.f32 %v4819, %v3025
        %v5076 = vpack.c.bf16 %v4855, %v4853
        %v5077 = vpack.c.bf16 %v4859, %v4857
        %v5078 = vpack.c.bf16 %v4863, %v4861
        %v5079 = vpack.c.bf16 %v4867, %v4865
        %v5080 = vpack.c.bf16 %v4871, %v4869
        %v5081 = vpack.c.bf16 %v4875, %v4873
        %v5082 = vpack.c.bf16 %v4879, %v4877
        %v5083 = vpack.c.bf16 %v4883, %v4881
        %v5084 = vpack.c.bf16 %v4887, %v4885
        %v5085 = vpack.c.bf16 %v4891, %v4889
        %v5086 = vpack.c.bf16 %v4895, %v4893
        %v5087 = vpack.c.bf16 %v4899, %v4897
        %v5088 = vpack.c.bf16 %v4903, %v4901
        %v5089 = vpack.c.bf16 %v4907, %v4905
        %v5090 = vpack.c.bf16 %v4911, %v4909
        %v5091 = vpack.c.bf16 %v4915, %v4913
        %v5108 = vunpack.c.l.b16 %v4207
        %v5109 = vunpack.c.l.b16 %v4208
        %v5110 = vunpack.c.l.b16 %v4209
        %v5111 = vunpack.c.l.b16 %v4210
        %v5112 = vunpack.c.l.b16 %v4211
        %v5113 = vunpack.c.l.b16 %v4212
        %v5114 = vunpack.c.l.b16 %v4213
        %v5115 = vunpack.c.l.b16 %v4214
        %v5116 = vunpack.c.l.b16 %v4215
        %v5117 = vunpack.c.l.b16 %v4216
        %v5118 = vunpack.c.l.b16 %v4217
        %v5119 = vunpack.c.l.b16 %v4218
        %v5120 = vunpack.c.l.b16 %v4219
        %v5121 = vunpack.c.l.b16 %v4220
        %v5122 = vunpack.c.l.b16 %v4221
        %v5123 = vunpack.c.l.b16 %v4222
        %v5124 = vpack.c.b16 %v5109, %v5108
        %v5125 = vpack.c.b16 %v5111, %v5110
        %v5126 = vpack.c.b16 %v5113, %v5112
        %v5127 = vpack.c.b16 %v5115, %v5114
        %v5128 = vpack.c.b16 %v5117, %v5116
        %v5129 = vpack.c.b16 %v5119, %v5118
        %v5130 = vpack.c.b16 %v5121, %v5120
        %v5131 = vpack.c.b16 %v5123, %v5122
        %5140 = vmatprep.subr.bf16.mxu0 0
        %5141 = vmatpush1.bf16.msra.mxu0 %v5131
        %5142 = vmatprep.subr.bf16.mxu0 0
        %5143 = vmatpush1.bf16.msra.mxu0 %v5130
        %5144 = vmatprep.subr.bf16.mxu0 0
        %5145 = vmatpush1.bf16.msra.mxu0 %v5129
        %5146 = vmatprep.subr.bf16.mxu0 0
        %5147 = vmatpush1.bf16.msra.mxu0 %v5128
        %5148 = vmatprep.subr.bf16.mxu0 0
        %5149 = vmatpush1.bf16.msra.mxu0 %v5127
        %5150 = vmatprep.subr.bf16.mxu0 0
        %5151 = vmatpush1.bf16.msra.mxu0 %v5126
        %5152 = vmatprep.subr.bf16.mxu0 0
        %5153 = vmatpush1.bf16.msra.mxu0 %v5125
        %5154 = vmatprep.subr.bf16.mxu0 0
        %5155 = vmatpush1.bf16.msra.mxu0 %v5124
        %5156 = vmatprep.subr.bf16.mxu0 0
        %5157 = vmatpush2.bf16.msra.mxu0 0
        %5158 = vmatprep.subr.bf16.mxu0 0
        %5159 = vmatpush2.bf16.msra.mxu0 0
        %5160 = vmatprep.subr.bf16.mxu0 0
        %5161 = vmatpush2.bf16.msra.mxu0 0
        %5162 = vmatprep.subr.bf16.mxu0 0
        %5163 = vmatpush2.bf16.msra.mxu0 0
        %5164 = vmatprep.subr.bf16.mxu0 0
        %5165 = vmatpush2.bf16.msra.mxu0 0
        %5166 = vmatprep.subr.bf16.mxu0 0
        %5167 = vmatpush2.bf16.msra.mxu0 0
        %5168 = vmatprep.subr.bf16.mxu0 0
        %5169 = vmatpush2.bf16.msra.mxu0 0
        %5170 = vmatprep.subr.bf16.mxu0 0
        %5171 = vmatpush2.bf16.msra.mxu0 0
        %5172 = vmatprep.mubr.bf16.mxu0 0
        %5173 = vmatmul.mubr.bf16.gmra.mxu0 %v5076
        %v5174 = vpop.f32.mrf.mxu0
        %v5175 = vadd.f32 0.0, %v5174
        %v5176 = vpop.f32.mrf.mxu0
        %v5177 = vpop.f32.mrf.mxu0
        %v5178 = vadd.f32 0.0, %v5177
        %v5179 = vpop.f32.mrf.mxu0
        %5180 = vmatprep.mubr.bf16.mxu0 0
        %5181 = vmatmul.mubr.bf16.gmra.mxu0 %v5077
        %v5182 = vpop.f32.mrf.mxu0
        %v5183 = vadd.f32 0.0, %v5182
        %v5184 = vpop.f32.mrf.mxu0
        %v5185 = vpop.f32.mrf.mxu0
        %v5186 = vadd.f32 0.0, %v5185
        %v5187 = vpop.f32.mrf.mxu0
        %5188 = vmatprep.mubr.bf16.mxu0 0
        %5189 = vmatmul.mubr.bf16.gmra.mxu0 %v5078
        %v5190 = vpop.f32.mrf.mxu0
        %v5191 = vadd.f32 0.0, %v5190
        %v5192 = vpop.f32.mrf.mxu0
        %v5193 = vpop.f32.mrf.mxu0
        %v5194 = vadd.f32 0.0, %v5193
        %v5195 = vpop.f32.mrf.mxu0
        %5196 = vmatprep.mubr.bf16.mxu0 0
        %5197 = vmatmul.mubr.bf16.gmra.mxu0 %v5079
        %v5198 = vpop.f32.mrf.mxu0
        %v5199 = vadd.f32 0.0, %v5198
        %v5200 = vpop.f32.mrf.mxu0
        %v5201 = vpop.f32.mrf.mxu0
        %v5202 = vadd.f32 0.0, %v5201
        %v5203 = vpop.f32.mrf.mxu0
        %5204 = vmatprep.mubr.bf16.mxu0 0
        %5205 = vmatmul.mubr.bf16.gmra.mxu0 %v5080
        %v5206 = vpop.f32.mrf.mxu0
        %v5207 = vadd.f32 0.0, %v5206
        %v5208 = vpop.f32.mrf.mxu0
        %v5209 = vpop.f32.mrf.mxu0
        %v5210 = vadd.f32 0.0, %v5209
        %v5211 = vpop.f32.mrf.mxu0
        %5212 = vmatprep.mubr.bf16.mxu0 0
        %5213 = vmatmul.mubr.bf16.gmra.mxu0 %v5081
        %v5214 = vpop.f32.mrf.mxu0
        %v5215 = vadd.f32 0.0, %v5214
        %v5216 = vpop.f32.mrf.mxu0
        %v5217 = vpop.f32.mrf.mxu0
        %v5218 = vadd.f32 0.0, %v5217
        %v5219 = vpop.f32.mrf.mxu0
        %5220 = vmatprep.mubr.bf16.mxu0 0
        %5221 = vmatmul.mubr.bf16.gmra.mxu0 %v5082
        %v5222 = vpop.f32.mrf.mxu0
        %v5223 = vadd.f32 0.0, %v5222
        %v5224 = vpop.f32.mrf.mxu0
        %v5225 = vpop.f32.mrf.mxu0
        %v5226 = vadd.f32 0.0, %v5225
        %v5227 = vpop.f32.mrf.mxu0
        %5228 = vmatprep.mubr.bf16.mxu0 0
        %5229 = vmatmul.mubr.bf16.gmra.mxu0 %v5083
        %v5230 = vpop.f32.mrf.mxu0
        %v5231 = vadd.f32 0.0, %v5230
        %v5232 = vpop.f32.mrf.mxu0
        %v5233 = vpop.f32.mrf.mxu0
        %v5234 = vadd.f32 0.0, %v5233
        %v5235 = vpop.f32.mrf.mxu0
        %5236 = vdwg.mxu0
        %v5253 = vunpack.c.l.b16 %v4223
        %v5254 = vunpack.c.l.b16 %v4224
        %v5255 = vunpack.c.l.b16 %v4225
        %v5256 = vunpack.c.l.b16 %v4226
        %v5257 = vunpack.c.l.b16 %v4227
        %v5258 = vunpack.c.l.b16 %v4228
        %v5259 = vunpack.c.l.b16 %v4229
        %v5260 = vunpack.c.l.b16 %v4230
        %v5261 = vunpack.c.l.b16 %v4231
        %v5262 = vunpack.c.l.b16 %v4232
        %v5263 = vunpack.c.l.b16 %v4233
        %v5264 = vunpack.c.l.b16 %v4234
        %v5265 = vunpack.c.l.b16 %v4235
        %v5266 = vunpack.c.l.b16 %v4236
        %v5267 = vunpack.c.l.b16 %v4237
        %v5268 = vunpack.c.l.b16 %v4238
        %v5269 = vpack.c.b16 %v5254, %v5253
        %v5270 = vpack.c.b16 %v5256, %v5255
        %v5271 = vpack.c.b16 %v5258, %v5257
        %v5272 = vpack.c.b16 %v5260, %v5259
        %v5273 = vpack.c.b16 %v5262, %v5261
        %v5274 = vpack.c.b16 %v5264, %v5263
        %v5275 = vpack.c.b16 %v5266, %v5265
        %v5276 = vpack.c.b16 %v5268, %v5267
        %5285 = vmatprep.subr.bf16.mxu0 0
        %5286 = vmatpush1.bf16.msra.mxu0 %v5276
        %5287 = vmatprep.subr.bf16.mxu0 0
        %5288 = vmatpush1.bf16.msra.mxu0 %v5275
        %5289 = vmatprep.subr.bf16.mxu0 0
        %5290 = vmatpush1.bf16.msra.mxu0 %v5274
        %5291 = vmatprep.subr.bf16.mxu0 0
        %5292 = vmatpush1.bf16.msra.mxu0 %v5273
        %5293 = vmatprep.subr.bf16.mxu0 0
        %5294 = vmatpush1.bf16.msra.mxu0 %v5272
        %5295 = vmatprep.subr.bf16.mxu0 0
        %5296 = vmatpush1.bf16.msra.mxu0 %v5271
        %5297 = vmatprep.subr.bf16.mxu0 0
        %5298 = vmatpush1.bf16.msra.mxu0 %v5270
        %5299 = vmatprep.subr.bf16.mxu0 0
        %5300 = vmatpush1.bf16.msra.mxu0 %v5269
        %5301 = vmatprep.subr.bf16.mxu0 0
        %5302 = vmatpush2.bf16.msra.mxu0 0
        %5303 = vmatprep.subr.bf16.mxu0 0
        %5304 = vmatpush2.bf16.msra.mxu0 0
        %5305 = vmatprep.subr.bf16.mxu0 0
        %5306 = vmatpush2.bf16.msra.mxu0 0
        %5307 = vmatprep.subr.bf16.mxu0 0
        %5308 = vmatpush2.bf16.msra.mxu0 0
        %5309 = vmatprep.subr.bf16.mxu0 0
        %5310 = vmatpush2.bf16.msra.mxu0 0
        %5311 = vmatprep.subr.bf16.mxu0 0
        %5312 = vmatpush2.bf16.msra.mxu0 0
        %5313 = vmatprep.subr.bf16.mxu0 0
        %5314 = vmatpush2.bf16.msra.mxu0 0
        %5315 = vmatprep.subr.bf16.mxu0 0
        %5316 = vmatpush2.bf16.msra.mxu0 0
        %5317 = vmatprep.mubr.bf16.mxu0 0
        %5318 = vmatmul.mubr.bf16.gmra.mxu0 %v5084
        %v5319 = vpop.f32.mrf.mxu0
        %v5320 = vadd.f32 0.0, %v5319
        %v5321 = vpop.f32.mrf.mxu0
        %v5322 = vpop.f32.mrf.mxu0
        %v5323 = vadd.f32 0.0, %v5322
        %v5324 = vpop.f32.mrf.mxu0
        %5325 = vmatprep.mubr.bf16.mxu0 0
        %5326 = vmatmul.mubr.bf16.gmra.mxu0 %v5085
        %v5327 = vpop.f32.mrf.mxu0
        %v5328 = vadd.f32 0.0, %v5327
        %v5329 = vpop.f32.mrf.mxu0
        %v5330 = vpop.f32.mrf.mxu0
        %v5331 = vadd.f32 0.0, %v5330
        %v5332 = vpop.f32.mrf.mxu0
        %5333 = vmatprep.mubr.bf16.mxu0 0
        %5334 = vmatmul.mubr.bf16.gmra.mxu0 %v5086
        %v5335 = vpop.f32.mrf.mxu0
        %v5336 = vadd.f32 0.0, %v5335
        %v5337 = vpop.f32.mrf.mxu0
        %v5338 = vpop.f32.mrf.mxu0
        %v5339 = vadd.f32 0.0, %v5338
        %v5340 = vpop.f32.mrf.mxu0
        %5341 = vmatprep.mubr.bf16.mxu0 0
        %5342 = vmatmul.mubr.bf16.gmra.mxu0 %v5087
        %v5343 = vpop.f32.mrf.mxu0
        %v5344 = vadd.f32 0.0, %v5343
        %v5345 = vpop.f32.mrf.mxu0
        %v5346 = vpop.f32.mrf.mxu0
        %v5347 = vadd.f32 0.0, %v5346
        %v5348 = vpop.f32.mrf.mxu0
        %5349 = vmatprep.mubr.bf16.mxu0 0
        %5350 = vmatmul.mubr.bf16.gmra.mxu0 %v5088
        %v5351 = vpop.f32.mrf.mxu0
        %v5352 = vadd.f32 0.0, %v5351
        %v5353 = vpop.f32.mrf.mxu0
        %v5354 = vpop.f32.mrf.mxu0
        %v5355 = vadd.f32 0.0, %v5354
        %v5356 = vpop.f32.mrf.mxu0
        %5357 = vmatprep.mubr.bf16.mxu0 0
        %5358 = vmatmul.mubr.bf16.gmra.mxu0 %v5089
        %v5359 = vpop.f32.mrf.mxu0
        %v5360 = vadd.f32 0.0, %v5359
        %v5361 = vpop.f32.mrf.mxu0
        %v5362 = vpop.f32.mrf.mxu0
        %v5363 = vadd.f32 0.0, %v5362
        %v5364 = vpop.f32.mrf.mxu0
        %5365 = vmatprep.mubr.bf16.mxu0 0
        %5366 = vmatmul.mubr.bf16.gmra.mxu0 %v5090
        %v5367 = vpop.f32.mrf.mxu0
        %v5368 = vadd.f32 0.0, %v5367
        %v5369 = vpop.f32.mrf.mxu0
        %v5370 = vpop.f32.mrf.mxu0
        %v5371 = vadd.f32 0.0, %v5370
        %v5372 = vpop.f32.mrf.mxu0
        %5373 = vmatprep.mubr.bf16.mxu0 0
        %5374 = vmatmul.mubr.bf16.gmra.mxu0 %v5091
        %v5375 = vpop.f32.mrf.mxu0
        %v5376 = vadd.f32 0.0, %v5375
        %v5377 = vpop.f32.mrf.mxu0
        %v5378 = vpop.f32.mrf.mxu0
        %v5379 = vadd.f32 0.0, %v5378
        %v5380 = vpop.f32.mrf.mxu0
        %5381 = vdwg.mxu0
        %v5382 = vadd.f32 %v5044, %v5175
        %v5383 = vadd.f32 %v5045, %v5178
        %v5384 = vadd.f32 %v5046, %v5183
        %v5385 = vadd.f32 %v5047, %v5186
        %v5386 = vadd.f32 %v5048, %v5191
        %v5387 = vadd.f32 %v5049, %v5194
        %v5388 = vadd.f32 %v5050, %v5199
        %v5389 = vadd.f32 %v5051, %v5202
        %v5390 = vadd.f32 %v5052, %v5207
        %v5391 = vadd.f32 %v5053, %v5210
        %v5392 = vadd.f32 %v5054, %v5215
        %v5393 = vadd.f32 %v5055, %v5218
        %v5394 = vadd.f32 %v5056, %v5223
        %v5395 = vadd.f32 %v5057, %v5226
        %v5396 = vadd.f32 %v5058, %v5231
        %v5397 = vadd.f32 %v5059, %v5234
        %v5398 = vadd.f32 %v5060, %v5320
        %v5399 = vadd.f32 %v5061, %v5323
        %v5400 = vadd.f32 %v5062, %v5328
        %v5401 = vadd.f32 %v5063, %v5331
        %v5402 = vadd.f32 %v5064, %v5336
        %v5403 = vadd.f32 %v5065, %v5339
        %v5404 = vadd.f32 %v5066, %v5344
        %v5405 = vadd.f32 %v5067, %v5347
        %v5406 = vadd.f32 %v5068, %v5352
        %v5407 = vadd.f32 %v5069, %v5355
        %v5408 = vadd.f32 %v5070, %v5360
        %v5409 = vadd.f32 %v5071, %v5363
        %v5410 = vadd.f32 %v5072, %v5368
        %v5411 = vadd.f32 %v5073, %v5371
        %v5412 = vadd.f32 %v5074, %v5376
        %v5413 = vadd.f32 %v5075, %v5379
        %v5414 = vrcp.pop %v5012
        %v5415 = vrcp.pop %v5013
        %v5416 = vrcp.pop %v5014
        %v5417 = vrcp.pop %v5015
        %v5418 = vrcp.pop %v5016
        %v5419 = vrcp.pop %v5017
        %v5420 = vrcp.pop %v5018
        %v5421 = vrcp.pop %v5019
        %v5422 = vrcp.pop %v5020
        %v5423 = vrcp.pop %v5021
        %v5424 = vrcp.pop %v5022
        %v5425 = vrcp.pop %v5023
        %v5426 = vrcp.pop %v5024
        %v5427 = vrcp.pop %v5025
        %v5428 = vrcp.pop %v5026
        %v5429 = vrcp.pop %v5027
        %v5430 = vrcp.pop %v5028
        %v5431 = vrcp.pop %v5029
        %v5432 = vrcp.pop %v5030
        %v5433 = vrcp.pop %v5031
        %v5434 = vrcp.pop %v5032
        %v5435 = vrcp.pop %v5033
        %v5436 = vrcp.pop %v5034
        %v5437 = vrcp.pop %v5035
        %v5438 = vrcp.pop %v5036
        %v5439 = vrcp.pop %v5037
        %v5440 = vrcp.pop %v5038
        %v5441 = vrcp.pop %v5039
        %v5442 = vrcp.pop %v5040
        %v5443 = vrcp.pop %v5041
        %v5444 = vrcp.pop %v5042
        %v5445 = vrcp.pop %v5043
        %v5446 = vmul.f32 %v5382, %v5414
        %v5447 = vmul.f32 %v5383, %v5415
        %v5448 = vmul.f32 %v5384, %v5416
        %v5449 = vmul.f32 %v5385, %v5417
        %v5450 = vmul.f32 %v5386, %v5418
        %v5451 = vmul.f32 %v5387, %v5419
        %v5452 = vmul.f32 %v5388, %v5420
        %v5453 = vmul.f32 %v5389, %v5421
        %v5454 = vmul.f32 %v5390, %v5422
        %v5455 = vmul.f32 %v5391, %v5423
        %v5456 = vmul.f32 %v5392, %v5424
        %v5457 = vmul.f32 %v5393, %v5425
        %v5458 = vmul.f32 %v5394, %v5426
        %v5459 = vmul.f32 %v5395, %v5427
        %v5460 = vmul.f32 %v5396, %v5428
        %v5461 = vmul.f32 %v5397, %v5429
        %v5462 = vmul.f32 %v5398, %v5430
        %v5463 = vmul.f32 %v5399, %v5431
        %v5464 = vmul.f32 %v5400, %v5432
        %v5465 = vmul.f32 %v5401, %v5433
        %v5466 = vmul.f32 %v5402, %v5434
        %v5467 = vmul.f32 %v5403, %v5435
        %v5468 = vmul.f32 %v5404, %v5436
        %v5469 = vmul.f32 %v5405, %v5437
        %v5470 = vmul.f32 %v5406, %v5438
        %v5471 = vmul.f32 %v5407, %v5439
        %v5472 = vmul.f32 %v5408, %v5440
        %v5473 = vmul.f32 %v5409, %v5441
        %v5474 = vmul.f32 %v5410, %v5442
        %v5475 = vmul.f32 %v5411, %v5443
        %v5476 = vmul.f32 %v5412, %v5444
        %v5477 = vmul.f32 %v5413, %v5445
        %v5478 = vpack.c.bf16 %v5447, %v5446
        %v5479 = vpack.c.bf16 %v5449, %v5448
        %v5480 = vpack.c.bf16 %v5451, %v5450
        %v5481 = vpack.c.bf16 %v5453, %v5452
        %v5482 = vpack.c.bf16 %v5455, %v5454
        %v5483 = vpack.c.bf16 %v5457, %v5456
        %v5484 = vpack.c.bf16 %v5459, %v5458
        %v5485 = vpack.c.bf16 %v5461, %v5460
        %v5486 = vpack.c.bf16 %v5463, %v5462
        %v5487 = vpack.c.bf16 %v5465, %v5464
        %v5488 = vpack.c.bf16 %v5467, %v5466
        %v5489 = vpack.c.bf16 %v5469, %v5468
        %v5490 = vpack.c.bf16 %v5471, %v5470
        %v5491 = vpack.c.bf16 %v5473, %v5472
        %v5492 = vpack.c.bf16 %v5475, %v5474
        %v5493 = vpack.c.bf16 %v5477, %v5476
        %v5494 = vld [vmem:[#allocation13] sm:$0xff]
        %v5495 = vld [vmem:[#allocation13 + $0x8] sm:$0xff]
        %v5496 = vld [vmem:[#allocation13 + $0x10] sm:$0xff]
        %v5497 = vld [vmem:[#allocation13 + $0x18] sm:$0xff]
        %v5498 = vld [vmem:[#allocation13 + $0x20] sm:$0xff]
        %v5499 = vld [vmem:[#allocation13 + $0x28] sm:$0xff]
        %v5500 = vld [vmem:[#allocation13 + $0x30] sm:$0xff]
        %v5501 = vld [vmem:[#allocation13 + $0x38] sm:$0xff]
        %v5502 = vld [vmem:[#allocation13 + $0x40] sm:$0xff]
        %v5503 = vld [vmem:[#allocation13 + $0x48] sm:$0xff]
        %v5504 = vld [vmem:[#allocation13 + $0x50] sm:$0xff]
        %v5505 = vld [vmem:[#allocation13 + $0x58] sm:$0xff]
        %v5506 = vld [vmem:[#allocation13 + $0x60] sm:$0xff]
        %v5507 = vld [vmem:[#allocation13 + $0x68] sm:$0xff]
        %v5508 = vld [vmem:[#allocation13 + $0x70] sm:$0xff]
        %v5509 = vld [vmem:[#allocation13 + $0x78] sm:$0xff]
        %s5510 = scalar_lea.vmem [#allocation13], 128
        %v5511 = vld [vmem:[%s5510] sm:$0xff]
        %v5512 = vld [vmem:[%s5510 + $0x8] sm:$0xff]
        %v5513 = vld [vmem:[%s5510 + $0x10] sm:$0xff]
        %v5514 = vld [vmem:[%s5510 + $0x18] sm:$0xff]
        %v5515 = vld [vmem:[%s5510 + $0x20] sm:$0xff]
        %v5516 = vld [vmem:[%s5510 + $0x28] sm:$0xff]
        %v5517 = vld [vmem:[%s5510 + $0x30] sm:$0xff]
        %v5518 = vld [vmem:[%s5510 + $0x38] sm:$0xff]
        %v5519 = vld [vmem:[%s5510 + $0x40] sm:$0xff]
        %v5520 = vld [vmem:[%s5510 + $0x48] sm:$0xff]
        %v5521 = vld [vmem:[%s5510 + $0x50] sm:$0xff]
        %v5522 = vld [vmem:[%s5510 + $0x58] sm:$0xff]
        %v5523 = vld [vmem:[%s5510 + $0x60] sm:$0xff]
        %v5524 = vld [vmem:[%s5510 + $0x68] sm:$0xff]
        %v5525 = vld [vmem:[%s5510 + $0x70] sm:$0xff]
        %v5526 = vld [vmem:[%s5510 + $0x78] sm:$0xff]
        %v5543 = vunpack.c.l.b16 %v5511
        %v5544 = vunpack.c.h.b16 %v5511
        %v5545 = vunpack.c.l.b16 %v5512
        %v5546 = vunpack.c.h.b16 %v5512
        %v5547 = vunpack.c.l.b16 %v5513
        %v5548 = vunpack.c.h.b16 %v5513
        %v5549 = vunpack.c.l.b16 %v5514
        %v5550 = vunpack.c.h.b16 %v5514
        %v5551 = vunpack.c.l.b16 %v5515
        %v5552 = vunpack.c.h.b16 %v5515
        %v5553 = vunpack.c.l.b16 %v5516
        %v5554 = vunpack.c.h.b16 %v5516
        %v5555 = vunpack.c.l.b16 %v5517
        %v5556 = vunpack.c.h.b16 %v5517
        %v5557 = vunpack.c.l.b16 %v5518
        %v5558 = vunpack.c.h.b16 %v5518
        %v5559 = vunpack.c.l.b16 %v5519
        %v5560 = vunpack.c.h.b16 %v5519
        %v5561 = vunpack.c.l.b16 %v5520
        %v5562 = vunpack.c.h.b16 %v5520
        %v5563 = vunpack.c.l.b16 %v5521
        %v5564 = vunpack.c.h.b16 %v5521
        %v5565 = vunpack.c.l.b16 %v5522
        %v5566 = vunpack.c.h.b16 %v5522
        %v5567 = vunpack.c.l.b16 %v5523
        %v5568 = vunpack.c.h.b16 %v5523
        %v5569 = vunpack.c.l.b16 %v5524
        %v5570 = vunpack.c.h.b16 %v5524
        %v5571 = vunpack.c.l.b16 %v5525
        %v5572 = vunpack.c.h.b16 %v5525
        %v5573 = vunpack.c.l.b16 %v5526
        %v5574 = vunpack.c.h.b16 %v5526
        %v5575 = vpack.c.b16 %v5545, %v5543
        %v5576 = vpack.c.b16 %v5546, %v5544
        %v5577 = vpack.c.b16 %v5549, %v5547
        %v5578 = vpack.c.b16 %v5550, %v5548
        %v5579 = vpack.c.b16 %v5553, %v5551
        %v5580 = vpack.c.b16 %v5554, %v5552
        %v5581 = vpack.c.b16 %v5557, %v5555
        %v5582 = vpack.c.b16 %v5558, %v5556
        %v5583 = vpack.c.b16 %v5561, %v5559
        %v5584 = vpack.c.b16 %v5562, %v5560
        %v5585 = vpack.c.b16 %v5565, %v5563
        %v5586 = vpack.c.b16 %v5566, %v5564
        %v5587 = vpack.c.b16 %v5569, %v5567
        %v5588 = vpack.c.b16 %v5570, %v5568
        %v5589 = vpack.c.b16 %v5573, %v5571
        %v5590 = vpack.c.b16 %v5574, %v5572
        %5607 = vmatprep.subr.bf16.mxu0 %v5590
        %5608 = vmatpush1.bf16.msra.mxu0 %v5589
        %5609 = vmatprep.subr.bf16.mxu0 %v5588
        %5610 = vmatpush1.bf16.msra.mxu0 %v5587
        %5611 = vmatprep.subr.bf16.mxu0 %v5586
        %5612 = vmatpush1.bf16.msra.mxu0 %v5585
        %5613 = vmatprep.subr.bf16.mxu0 %v5584
        %5614 = vmatpush1.bf16.msra.mxu0 %v5583
        %5615 = vmatprep.subr.bf16.mxu0 %v5582
        %5616 = vmatpush1.bf16.msra.mxu0 %v5581
        %5617 = vmatprep.subr.bf16.mxu0 %v5580
        %5618 = vmatpush1.bf16.msra.mxu0 %v5579
        %5619 = vmatprep.subr.bf16.mxu0 %v5578
        %5620 = vmatpush1.bf16.msra.mxu0 %v5577
        %5621 = vmatprep.subr.bf16.mxu0 %v5576
        %5622 = vmatpush1.bf16.msra.mxu0 %v5575
        %5623 = vmatprep.subr.bf16.mxu0 0
        %5624 = vmatpush2.bf16.msra.mxu0 0
        %5625 = vmatprep.subr.bf16.mxu0 0
        %5626 = vmatpush2.bf16.msra.mxu0 0
        %5627 = vmatprep.subr.bf16.mxu0 0
        %5628 = vmatpush2.bf16.msra.mxu0 0
        %5629 = vmatprep.subr.bf16.mxu0 0
        %5630 = vmatpush2.bf16.msra.mxu0 0
        %5631 = vmatprep.subr.bf16.mxu0 0
        %5632 = vmatpush2.bf16.msra.mxu0 0
        %5633 = vmatprep.subr.bf16.mxu0 0
        %5634 = vmatpush2.bf16.msra.mxu0 0
        %5635 = vmatprep.subr.bf16.mxu0 0
        %5636 = vmatpush2.bf16.msra.mxu0 0
        %5637 = vmatprep.subr.bf16.mxu0 0
        %5638 = vmatpush2.bf16.msra.mxu0 0
        %5639 = vmatprep.mubr.bf16.mxu0 0
        %5640 = vmatmul.mubr.bf16.gmra.mxu0 %v5486
        %v5641 = vpop.f32.mrf.mxu0
        %v5642 = vadd.f32 0.0, %v5641
        %v5643 = vpop.f32.mrf.mxu0
        %v5644 = vadd.f32 0.0, %v5643
        %v5645 = vpop.f32.mrf.mxu0
        %v5646 = vadd.f32 0.0, %v5645
        %v5647 = vpop.f32.mrf.mxu0
        %v5648 = vadd.f32 0.0, %v5647
        %5649 = vmatprep.mubr.bf16.mxu0 0
        %5650 = vmatmul.mubr.bf16.gmra.mxu0 %v5487
        %v5651 = vpop.f32.mrf.mxu0
        %v5652 = vadd.f32 0.0, %v5651
        %v5653 = vpop.f32.mrf.mxu0
        %v5654 = vadd.f32 0.0, %v5653
        %v5655 = vpop.f32.mrf.mxu0
        %v5656 = vadd.f32 0.0, %v5655
        %v5657 = vpop.f32.mrf.mxu0
        %v5658 = vadd.f32 0.0, %v5657
        %5659 = vmatprep.mubr.bf16.mxu0 0
        %5660 = vmatmul.mubr.bf16.gmra.mxu0 %v5488
        %v5661 = vpop.f32.mrf.mxu0
        %v5662 = vadd.f32 0.0, %v5661
        %v5663 = vpop.f32.mrf.mxu0
        %v5664 = vadd.f32 0.0, %v5663
        %v5665 = vpop.f32.mrf.mxu0
        %v5666 = vadd.f32 0.0, %v5665
        %v5667 = vpop.f32.mrf.mxu0
        %v5668 = vadd.f32 0.0, %v5667
        %5669 = vmatprep.mubr.bf16.mxu0 0
        %5670 = vmatmul.mubr.bf16.gmra.mxu0 %v5489
        %v5671 = vpop.f32.mrf.mxu0
        %v5672 = vadd.f32 0.0, %v5671
        %v5673 = vpop.f32.mrf.mxu0
        %v5674 = vadd.f32 0.0, %v5673
        %v5675 = vpop.f32.mrf.mxu0
        %v5676 = vadd.f32 0.0, %v5675
        %v5677 = vpop.f32.mrf.mxu0
        %v5678 = vadd.f32 0.0, %v5677
        %5679 = vmatprep.mubr.bf16.mxu0 0
        %5680 = vmatmul.mubr.bf16.gmra.mxu0 %v5490
        %v5681 = vpop.f32.mrf.mxu0
        %v5682 = vadd.f32 0.0, %v5681
        %v5683 = vpop.f32.mrf.mxu0
        %v5684 = vadd.f32 0.0, %v5683
        %v5685 = vpop.f32.mrf.mxu0
        %v5686 = vadd.f32 0.0, %v5685
        %v5687 = vpop.f32.mrf.mxu0
        %v5688 = vadd.f32 0.0, %v5687
        %5689 = vmatprep.mubr.bf16.mxu0 0
        %5690 = vmatmul.mubr.bf16.gmra.mxu0 %v5491
        %v5691 = vpop.f32.mrf.mxu0
        %v5692 = vadd.f32 0.0, %v5691
        %v5693 = vpop.f32.mrf.mxu0
        %v5694 = vadd.f32 0.0, %v5693
        %v5695 = vpop.f32.mrf.mxu0
        %v5696 = vadd.f32 0.0, %v5695
        %v5697 = vpop.f32.mrf.mxu0
        %v5698 = vadd.f32 0.0, %v5697
        %5699 = vmatprep.mubr.bf16.mxu0 0
        %5700 = vmatmul.mubr.bf16.gmra.mxu0 %v5492
        %v5701 = vpop.f32.mrf.mxu0
        %v5702 = vadd.f32 0.0, %v5701
        %v5703 = vpop.f32.mrf.mxu0
        %v5704 = vadd.f32 0.0, %v5703
        %v5705 = vpop.f32.mrf.mxu0
        %v5706 = vadd.f32 0.0, %v5705
        %v5707 = vpop.f32.mrf.mxu0
        %v5708 = vadd.f32 0.0, %v5707
        %5709 = vmatprep.mubr.bf16.mxu0 0
        %5710 = vmatmul.mubr.bf16.gmra.mxu0 %v5493
        %v5711 = vpop.f32.mrf.mxu0
        %v5712 = vadd.f32 0.0, %v5711
        %v5713 = vpop.f32.mrf.mxu0
        %v5714 = vadd.f32 0.0, %v5713
        %v5715 = vpop.f32.mrf.mxu0
        %v5716 = vadd.f32 0.0, %v5715
        %v5717 = vpop.f32.mrf.mxu0
        %v5718 = vadd.f32 0.0, %v5717
        %5719 = vdwg.mxu0
        %v5736 = vunpack.c.l.b16 %v5494
        %v5737 = vunpack.c.h.b16 %v5494
        %v5738 = vunpack.c.l.b16 %v5495
        %v5739 = vunpack.c.h.b16 %v5495
        %v5740 = vunpack.c.l.b16 %v5496
        %v5741 = vunpack.c.h.b16 %v5496
        %v5742 = vunpack.c.l.b16 %v5497
        %v5743 = vunpack.c.h.b16 %v5497
        %v5744 = vunpack.c.l.b16 %v5498
        %v5745 = vunpack.c.h.b16 %v5498
        %v5746 = vunpack.c.l.b16 %v5499
        %v5747 = vunpack.c.h.b16 %v5499
        %v5748 = vunpack.c.l.b16 %v5500
        %v5749 = vunpack.c.h.b16 %v5500
        %v5750 = vunpack.c.l.b16 %v5501
        %v5751 = vunpack.c.h.b16 %v5501
        %v5752 = vunpack.c.l.b16 %v5502
        %v5753 = vunpack.c.h.b16 %v5502
        %v5754 = vunpack.c.l.b16 %v5503
        %v5755 = vunpack.c.h.b16 %v5503
        %v5756 = vunpack.c.l.b16 %v5504
        %v5757 = vunpack.c.h.b16 %v5504
        %v5758 = vunpack.c.l.b16 %v5505
        %v5759 = vunpack.c.h.b16 %v5505
        %v5760 = vunpack.c.l.b16 %v5506
        %v5761 = vunpack.c.h.b16 %v5506
        %v5762 = vunpack.c.l.b16 %v5507
        %v5763 = vunpack.c.h.b16 %v5507
        %v5764 = vunpack.c.l.b16 %v5508
        %v5765 = vunpack.c.h.b16 %v5508
        %v5766 = vunpack.c.l.b16 %v5509
        %v5767 = vunpack.c.h.b16 %v5509
        %v5768 = vpack.c.b16 %v5738, %v5736
        %v5769 = vpack.c.b16 %v5739, %v5737
        %v5770 = vpack.c.b16 %v5742, %v5740
        %v5771 = vpack.c.b16 %v5743, %v5741
        %v5772 = vpack.c.b16 %v5746, %v5744
        %v5773 = vpack.c.b16 %v5747, %v5745
        %v5774 = vpack.c.b16 %v5750, %v5748
        %v5775 = vpack.c.b16 %v5751, %v5749
        %v5776 = vpack.c.b16 %v5754, %v5752
        %v5777 = vpack.c.b16 %v5755, %v5753
        %v5778 = vpack.c.b16 %v5758, %v5756
        %v5779 = vpack.c.b16 %v5759, %v5757
        %v5780 = vpack.c.b16 %v5762, %v5760
        %v5781 = vpack.c.b16 %v5763, %v5761
        %v5782 = vpack.c.b16 %v5766, %v5764
        %v5783 = vpack.c.b16 %v5767, %v5765
        %5800 = vmatprep.subr.bf16.mxu0 %v5783
        %5801 = vmatpush1.bf16.msra.mxu0 %v5782
        %5802 = vmatprep.subr.bf16.mxu0 %v5781
        %5803 = vmatpush1.bf16.msra.mxu0 %v5780
        %5804 = vmatprep.subr.bf16.mxu0 %v5779
        %5805 = vmatpush1.bf16.msra.mxu0 %v5778
        %5806 = vmatprep.subr.bf16.mxu0 %v5777
        %5807 = vmatpush1.bf16.msra.mxu0 %v5776
        %5808 = vmatprep.subr.bf16.mxu0 %v5775
        %5809 = vmatpush1.bf16.msra.mxu0 %v5774
        %5810 = vmatprep.subr.bf16.mxu0 %v5773
        %5811 = vmatpush1.bf16.msra.mxu0 %v5772
        %5812 = vmatprep.subr.bf16.mxu0 %v5771
        %5813 = vmatpush1.bf16.msra.mxu0 %v5770
        %5814 = vmatprep.subr.bf16.mxu0 %v5769
        %5815 = vmatpush1.bf16.msra.mxu0 %v5768
        %5816 = vmatprep.subr.bf16.mxu0 0
        %5817 = vmatpush2.bf16.msra.mxu0 0
        %5818 = vmatprep.subr.bf16.mxu0 0
        %5819 = vmatpush2.bf16.msra.mxu0 0
        %5820 = vmatprep.subr.bf16.mxu0 0
        %5821 = vmatpush2.bf16.msra.mxu0 0
        %5822 = vmatprep.subr.bf16.mxu0 0
        %5823 = vmatpush2.bf16.msra.mxu0 0
        %5824 = vmatprep.subr.bf16.mxu0 0
        %5825 = vmatpush2.bf16.msra.mxu0 0
        %5826 = vmatprep.subr.bf16.mxu0 0
        %5827 = vmatpush2.bf16.msra.mxu0 0
        %5828 = vmatprep.subr.bf16.mxu0 0
        %5829 = vmatpush2.bf16.msra.mxu0 0
        %5830 = vmatprep.subr.bf16.mxu0 0
        %5831 = vmatpush2.bf16.msra.mxu0 0
        %5832 = vmatprep.mubr.bf16.mxu0 0
        %5833 = vmatmul.mubr.bf16.gmra.mxu0 %v5478
        %v5834 = vpop.f32.mrf.mxu0
        %v5835 = vadd.f32 %v5642, %v5834
        %v5836 = vpop.f32.mrf.mxu0
        %v5837 = vadd.f32 %v5644, %v5836
        %v5838 = vpop.f32.mrf.mxu0
        %v5839 = vadd.f32 %v5646, %v5838
        %v5840 = vpop.f32.mrf.mxu0
        %v5841 = vadd.f32 %v5648, %v5840
        %5842 = vmatprep.mubr.bf16.mxu0 0
        %5843 = vmatmul.mubr.bf16.gmra.mxu0 %v5479
        %v5844 = vpop.f32.mrf.mxu0
        %v5845 = vadd.f32 %v5652, %v5844
        %v5846 = vpop.f32.mrf.mxu0
        %v5847 = vadd.f32 %v5654, %v5846
        %v5848 = vpop.f32.mrf.mxu0
        %v5849 = vadd.f32 %v5656, %v5848
        %v5850 = vpop.f32.mrf.mxu0
        %v5851 = vadd.f32 %v5658, %v5850
        %5852 = vmatprep.mubr.bf16.mxu0 0
        %5853 = vmatmul.mubr.bf16.gmra.mxu0 %v5480
        %v5854 = vpop.f32.mrf.mxu0
        %v5855 = vadd.f32 %v5662, %v5854
        %v5856 = vpop.f32.mrf.mxu0
        %v5857 = vadd.f32 %v5664, %v5856
        %v5858 = vpop.f32.mrf.mxu0
        %v5859 = vadd.f32 %v5666, %v5858
        %v5860 = vpop.f32.mrf.mxu0
        %v5861 = vadd.f32 %v5668, %v5860
        %5862 = vmatprep.mubr.bf16.mxu0 0
        %5863 = vmatmul.mubr.bf16.gmra.mxu0 %v5481
        %v5864 = vpop.f32.mrf.mxu0
        %v5865 = vadd.f32 %v5672, %v5864
        %v5866 = vpop.f32.mrf.mxu0
        %v5867 = vadd.f32 %v5674, %v5866
        %v5868 = vpop.f32.mrf.mxu0
        %v5869 = vadd.f32 %v5676, %v5868
        %v5870 = vpop.f32.mrf.mxu0
        %v5871 = vadd.f32 %v5678, %v5870
        %5872 = vmatprep.mubr.bf16.mxu0 0
        %5873 = vmatmul.mubr.bf16.gmra.mxu0 %v5482
        %v5874 = vpop.f32.mrf.mxu0
        %v5875 = vadd.f32 %v5682, %v5874
        %v5876 = vpop.f32.mrf.mxu0
        %v5877 = vadd.f32 %v5684, %v5876
        %v5878 = vpop.f32.mrf.mxu0
        %v5879 = vadd.f32 %v5686, %v5878
        %v5880 = vpop.f32.mrf.mxu0
        %v5881 = vadd.f32 %v5688, %v5880
        %5882 = vmatprep.mubr.bf16.mxu0 0
        %5883 = vmatmul.mubr.bf16.gmra.mxu0 %v5483
        %v5884 = vpop.f32.mrf.mxu0
        %v5885 = vadd.f32 %v5692, %v5884
        %v5886 = vpop.f32.mrf.mxu0
        %v5887 = vadd.f32 %v5694, %v5886
        %v5888 = vpop.f32.mrf.mxu0
        %v5889 = vadd.f32 %v5696, %v5888
        %v5890 = vpop.f32.mrf.mxu0
        %v5891 = vadd.f32 %v5698, %v5890
        %5892 = vmatprep.mubr.bf16.mxu0 0
        %5893 = vmatmul.mubr.bf16.gmra.mxu0 %v5484
        %v5894 = vpop.f32.mrf.mxu0
        %v5895 = vadd.f32 %v5702, %v5894
        %v5896 = vpop.f32.mrf.mxu0
        %v5897 = vadd.f32 %v5704, %v5896
        %v5898 = vpop.f32.mrf.mxu0
        %v5899 = vadd.f32 %v5706, %v5898
        %v5900 = vpop.f32.mrf.mxu0
        %v5901 = vadd.f32 %v5708, %v5900
        %5902 = vmatprep.mubr.bf16.mxu0 0
        %5903 = vmatmul.mubr.bf16.gmra.mxu0 %v5485
        %v5904 = vpop.f32.mrf.mxu0
        %v5905 = vadd.f32 %v5712, %v5904
        %v5906 = vpop.f32.mrf.mxu0
        %v5907 = vadd.f32 %v5714, %v5906
        %v5908 = vpop.f32.mrf.mxu0
        %v5909 = vadd.f32 %v5716, %v5908
        %v5910 = vpop.f32.mrf.mxu0
        %v5911 = vadd.f32 %v5718, %v5910
        %5912 = vdwg.mxu0
        %v5913 = vadd.f32 %v701, %v5835
        %v5914 = vadd.f32 %v702, %v5837
        %v5915 = vadd.f32 %v703, %v5839
        %v5916 = vadd.f32 %v704, %v5841
        %v5917 = vadd.f32 %v705, %v5845
        %v5918 = vadd.f32 %v706, %v5847
        %v5919 = vadd.f32 %v707, %v5849
        %v5920 = vadd.f32 %v708, %v5851
        %v5921 = vadd.f32 %v709, %v5855
        %v5922 = vadd.f32 %v710, %v5857
        %v5923 = vadd.f32 %v711, %v5859
        %v5924 = vadd.f32 %v712, %v5861
        %v5925 = vadd.f32 %v713, %v5865
        %v5926 = vadd.f32 %v714, %v5867
        %v5927 = vadd.f32 %v715, %v5869
        %v5928 = vadd.f32 %v716, %v5871
        %v5929 = vadd.f32 %v717, %v5875
        %v5930 = vadd.f32 %v718, %v5877
        %v5931 = vadd.f32 %v719, %v5879
        %v5932 = vadd.f32 %v720, %v5881
        %v5933 = vadd.f32 %v721, %v5885
        %v5934 = vadd.f32 %v722, %v5887
        %v5935 = vadd.f32 %v723, %v5889
        %v5936 = vadd.f32 %v724, %v5891
        %v5937 = vadd.f32 %v725, %v5895
        %v5938 = vadd.f32 %v726, %v5897
        %v5939 = vadd.f32 %v727, %v5899
        %v5940 = vadd.f32 %v728, %v5901
        %v5941 = vadd.f32 %v729, %v5905
        %v5942 = vadd.f32 %v730, %v5907
        %v5943 = vadd.f32 %v731, %v5909
        %v5944 = vadd.f32 %v732, %v5911
        %v5945 = vld [vmem:[%s10] sm:$0x3]
        %v5947 = vlaneseq
        %v5948 = vshrl.u32 %v5947, 7
        %v5949 = vsub.s32 0, %v5948
        %v5950 = vrot.slane %v5945, %v5949
        %v5951 = vlaneseq
        %v5952 = vshrl.u32 %v5951, 7
        %v5953 = vsub.s32 1, %v5952
        %v5954 = vrot.slane %v5945, %v5953
        %v5957 = vadd.f32 %v5913, %v5950
        %v5958 = vadd.f32 %v5914, %v5954
        %v5959 = vadd.f32 %v5915, %v5950
        %v5960 = vadd.f32 %v5916, %v5954
        %v5961 = vadd.f32 %v5917, %v5950
        %v5962 = vadd.f32 %v5918, %v5954
        %v5963 = vadd.f32 %v5919, %v5950
        %v5964 = vadd.f32 %v5920, %v5954
        %v5965 = vadd.f32 %v5921, %v5950
        %v5966 = vadd.f32 %v5922, %v5954
        %v5967 = vadd.f32 %v5923, %v5950
        %v5968 = vadd.f32 %v5924, %v5954
        %v5969 = vadd.f32 %v5925, %v5950
        %v5970 = vadd.f32 %v5926, %v5954
        %v5971 = vadd.f32 %v5927, %v5950
        %v5972 = vadd.f32 %v5928, %v5954
        %v5973 = vadd.f32 %v5929, %v5950
        %v5974 = vadd.f32 %v5930, %v5954
        %v5975 = vadd.f32 %v5931, %v5950
        %v5976 = vadd.f32 %v5932, %v5954
        %v5977 = vadd.f32 %v5933, %v5950
        %v5978 = vadd.f32 %v5934, %v5954
        %v5979 = vadd.f32 %v5935, %v5950
        %v5980 = vadd.f32 %v5936, %v5954
        %v5981 = vadd.f32 %v5937, %v5950
        %v5982 = vadd.f32 %v5938, %v5954
        %v5983 = vadd.f32 %v5939, %v5950
        %v5984 = vadd.f32 %v5940, %v5954
        %v5985 = vadd.f32 %v5941, %v5950
        %v5986 = vadd.f32 %v5942, %v5954
        %v5987 = vadd.f32 %v5943, %v5950
        %v5988 = vadd.f32 %v5944, %v5954
        %v5989 = vld [vmem:[%s11] sm:$0x3]
        %v5990 = vld [vmem:[#allocation15] sm:$0x3]
        %v5991 = vadd.f32 %v5957, %v5958
        %5992 = vadd.xlane.f32.xlu0 %v5991
        %v5993 = vpop.xlane.xlu0 %5992
        %v5994 = vadd.f32 %v5959, %v5960
        %5995 = vadd.xlane.f32.xlu0 %v5994
        %v5996 = vpop.xlane.xlu0 %5995
        %v5997 = vadd.f32 %v5961, %v5962
        %5998 = vadd.xlane.f32.xlu0 %v5997
        %v5999 = vpop.xlane.xlu0 %5998
        %v6000 = vadd.f32 %v5963, %v5964
        %6001 = vadd.xlane.f32.xlu0 %v6000
        %v6002 = vpop.xlane.xlu0 %6001
        %v6003 = vadd.f32 %v5965, %v5966
        %6004 = vadd.xlane.f32.xlu0 %v6003
        %v6005 = vpop.xlane.xlu0 %6004
        %v6006 = vadd.f32 %v5967, %v5968
        %6007 = vadd.xlane.f32.xlu0 %v6006
        %v6008 = vpop.xlane.xlu0 %6007
        %v6009 = vadd.f32 %v5969, %v5970
        %6010 = vadd.xlane.f32.xlu0 %v6009
        %v6011 = vpop.xlane.xlu0 %6010
        %v6012 = vadd.f32 %v5971, %v5972
        %6013 = vadd.xlane.f32.xlu0 %v6012
        %v6014 = vpop.xlane.xlu0 %6013
        %v6015 = vadd.f32 %v5973, %v5974
        %6016 = vadd.xlane.f32.xlu0 %v6015
        %v6017 = vpop.xlane.xlu0 %6016
        %v6018 = vadd.f32 %v5975, %v5976
        %6019 = vadd.xlane.f32.xlu0 %v6018
        %v6020 = vpop.xlane.xlu0 %6019
        %v6021 = vadd.f32 %v5977, %v5978
        %6022 = vadd.xlane.f32.xlu0 %v6021
        %v6023 = vpop.xlane.xlu0 %6022
        %v6024 = vadd.f32 %v5979, %v5980
        %6025 = vadd.xlane.f32.xlu0 %v6024
        %v6026 = vpop.xlane.xlu0 %6025
        %v6027 = vadd.f32 %v5981, %v5982
        %6028 = vadd.xlane.f32.xlu0 %v6027
        %v6029 = vpop.xlane.xlu0 %6028
        %v6030 = vadd.f32 %v5983, %v5984
        %6031 = vadd.xlane.f32.xlu0 %v6030
        %v6032 = vpop.xlane.xlu0 %6031
        %v6033 = vadd.f32 %v5985, %v5986
        %6034 = vadd.xlane.f32.xlu0 %v6033
        %v6035 = vpop.xlane.xlu0 %6034
        %v6036 = vadd.f32 %v5987, %v5988
        %6037 = vadd.xlane.f32.xlu0 %v6036
        %v6038 = vpop.xlane.xlu0 %6037
        %v6039 = vmul.f32 %v5993, %v783
        %v6040 = vmul.f32 %v5996, %v783
        %v6041 = vmul.f32 %v5999, %v783
        %v6042 = vmul.f32 %v6002, %v783
        %v6043 = vmul.f32 %v6005, %v783
        %v6044 = vmul.f32 %v6008, %v783
        %v6045 = vmul.f32 %v6011, %v783
        %v6046 = vmul.f32 %v6014, %v783
        %v6047 = vmul.f32 %v6017, %v783
        %v6048 = vmul.f32 %v6020, %v783
        %v6049 = vmul.f32 %v6023, %v783
        %v6050 = vmul.f32 %v6026, %v783
        %v6051 = vmul.f32 %v6029, %v783
        %v6052 = vmul.f32 %v6032, %v783
        %v6053 = vmul.f32 %v6035, %v783
        %v6054 = vmul.f32 %v6038, %v783
        %v6055 = vsub.f32 %v5957, %v6039
        %v6056 = vsub.f32 %v5958, %v6039
        %v6057 = vsub.f32 %v5959, %v6040
        %v6058 = vsub.f32 %v5960, %v6040
        %v6059 = vsub.f32 %v5961, %v6041
        %v6060 = vsub.f32 %v5962, %v6041
        %v6061 = vsub.f32 %v5963, %v6042
        %v6062 = vsub.f32 %v5964, %v6042
        %v6063 = vsub.f32 %v5965, %v6043
        %v6064 = vsub.f32 %v5966, %v6043
        %v6065 = vsub.f32 %v5967, %v6044
        %v6066 = vsub.f32 %v5968, %v6044
        %v6067 = vsub.f32 %v5969, %v6045
        %v6068 = vsub.f32 %v5970, %v6045
        %v6069 = vsub.f32 %v5971, %v6046
        %v6070 = vsub.f32 %v5972, %v6046
        %v6071 = vsub.f32 %v5973, %v6047
        %v6072 = vsub.f32 %v5974, %v6047
        %v6073 = vsub.f32 %v5975, %v6048
        %v6074 = vsub.f32 %v5976, %v6048
        %v6075 = vsub.f32 %v5977, %v6049
        %v6076 = vsub.f32 %v5978, %v6049
        %v6077 = vsub.f32 %v5979, %v6050
        %v6078 = vsub.f32 %v5980, %v6050
        %v6079 = vsub.f32 %v5981, %v6051
        %v6080 = vsub.f32 %v5982, %v6051
        %v6081 = vsub.f32 %v5983, %v6052
        %v6082 = vsub.f32 %v5984, %v6052
        %v6083 = vsub.f32 %v5985, %v6053
        %v6084 = vsub.f32 %v5986, %v6053
        %v6085 = vsub.f32 %v5987, %v6054
        %v6086 = vsub.f32 %v5988, %v6054
        %v6087 = vmul.f32 %v6055, %v6055
        %v6088 = vmul.f32 %v6056, %v6056
        %v6089 = vmul.f32 %v6057, %v6057
        %v6090 = vmul.f32 %v6058, %v6058
        %v6091 = vmul.f32 %v6059, %v6059
        %v6092 = vmul.f32 %v6060, %v6060
        %v6093 = vmul.f32 %v6061, %v6061
        %v6094 = vmul.f32 %v6062, %v6062
        %v6095 = vmul.f32 %v6063, %v6063
        %v6096 = vmul.f32 %v6064, %v6064
        %v6097 = vmul.f32 %v6065, %v6065
        %v6098 = vmul.f32 %v6066, %v6066
        %v6099 = vmul.f32 %v6067, %v6067
        %v6100 = vmul.f32 %v6068, %v6068
        %v6101 = vmul.f32 %v6069, %v6069
        %v6102 = vmul.f32 %v6070, %v6070
        %v6103 = vmul.f32 %v6071, %v6071
        %v6104 = vmul.f32 %v6072, %v6072
        %v6105 = vmul.f32 %v6073, %v6073
        %v6106 = vmul.f32 %v6074, %v6074
        %v6107 = vmul.f32 %v6075, %v6075
        %v6108 = vmul.f32 %v6076, %v6076
        %v6109 = vmul.f32 %v6077, %v6077
        %v6110 = vmul.f32 %v6078, %v6078
        %v6111 = vmul.f32 %v6079, %v6079
        %v6112 = vmul.f32 %v6080, %v6080
        %v6113 = vmul.f32 %v6081, %v6081
        %v6114 = vmul.f32 %v6082, %v6082
        %v6115 = vmul.f32 %v6083, %v6083
        %v6116 = vmul.f32 %v6084, %v6084
        %v6117 = vmul.f32 %v6085, %v6085
        %v6118 = vmul.f32 %v6086, %v6086
        %v6119 = vadd.f32 %v6087, %v6088
        %6120 = vadd.xlane.f32.xlu0 %v6119
        %v6121 = vpop.xlane.xlu0 %6120
        %v6122 = vadd.f32 %v6089, %v6090
        %6123 = vadd.xlane.f32.xlu0 %v6122
        %v6124 = vpop.xlane.xlu0 %6123
        %v6125 = vadd.f32 %v6091, %v6092
        %6126 = vadd.xlane.f32.xlu0 %v6125
        %v6127 = vpop.xlane.xlu0 %6126
        %v6128 = vadd.f32 %v6093, %v6094
        %6129 = vadd.xlane.f32.xlu0 %v6128
        %v6130 = vpop.xlane.xlu0 %6129
        %v6131 = vadd.f32 %v6095, %v6096
        %6132 = vadd.xlane.f32.xlu0 %v6131
        %v6133 = vpop.xlane.xlu0 %6132
        %v6134 = vadd.f32 %v6097, %v6098
        %6135 = vadd.xlane.f32.xlu0 %v6134
        %v6136 = vpop.xlane.xlu0 %6135
        %v6137 = vadd.f32 %v6099, %v6100
        %6138 = vadd.xlane.f32.xlu0 %v6137
        %v6139 = vpop.xlane.xlu0 %6138
        %v6140 = vadd.f32 %v6101, %v6102
        %6141 = vadd.xlane.f32.xlu0 %v6140
        %v6142 = vpop.xlane.xlu0 %6141
        %v6143 = vadd.f32 %v6103, %v6104
        %6144 = vadd.xlane.f32.xlu0 %v6143
        %v6145 = vpop.xlane.xlu0 %6144
        %v6146 = vadd.f32 %v6105, %v6106
        %6147 = vadd.xlane.f32.xlu0 %v6146
        %v6148 = vpop.xlane.xlu0 %6147
        %v6149 = vadd.f32 %v6107, %v6108
        %6150 = vadd.xlane.f32.xlu0 %v6149
        %v6151 = vpop.xlane.xlu0 %6150
        %v6152 = vadd.f32 %v6109, %v6110
        %6153 = vadd.xlane.f32.xlu0 %v6152
        %v6154 = vpop.xlane.xlu0 %6153
        %v6155 = vadd.f32 %v6111, %v6112
        %6156 = vadd.xlane.f32.xlu0 %v6155
        %v6157 = vpop.xlane.xlu0 %6156
        %v6158 = vadd.f32 %v6113, %v6114
        %6159 = vadd.xlane.f32.xlu0 %v6158
        %v6160 = vpop.xlane.xlu0 %6159
        %v6161 = vadd.f32 %v6115, %v6116
        %6162 = vadd.xlane.f32.xlu0 %v6161
        %v6163 = vpop.xlane.xlu0 %6162
        %v6164 = vadd.f32 %v6117, %v6118
        %6165 = vadd.xlane.f32.xlu0 %v6164
        %v6166 = vpop.xlane.xlu0 %6165
        %v6167 = vmul.f32 %v6121, %v783
        %v6168 = vmul.f32 %v6124, %v783
        %v6169 = vmul.f32 %v6127, %v783
        %v6170 = vmul.f32 %v6130, %v783
        %v6171 = vmul.f32 %v6133, %v783
        %v6172 = vmul.f32 %v6136, %v783
        %v6173 = vmul.f32 %v6139, %v783
        %v6174 = vmul.f32 %v6142, %v783
        %v6175 = vmul.f32 %v6145, %v783
        %v6176 = vmul.f32 %v6148, %v783
        %v6177 = vmul.f32 %v6151, %v783
        %v6178 = vmul.f32 %v6154, %v783
        %v6179 = vmul.f32 %v6157, %v783
        %v6180 = vmul.f32 %v6160, %v783
        %v6181 = vmul.f32 %v6163, %v783
        %v6182 = vmul.f32 %v6166, %v783
        %v6183 = vadd.f32 %v6167, 1e-05
        %v6184 = vadd.f32 %v6168, 1e-05
        %v6185 = vadd.f32 %v6169, 1e-05
        %v6186 = vadd.f32 %v6170, 1e-05
        %v6187 = vadd.f32 %v6171, 1e-05
        %v6188 = vadd.f32 %v6172, 1e-05
        %v6189 = vadd.f32 %v6173, 1e-05
        %v6190 = vadd.f32 %v6174, 1e-05
        %v6191 = vadd.f32 %v6175, 1e-05
        %v6192 = vadd.f32 %v6176, 1e-05
        %v6193 = vadd.f32 %v6177, 1e-05
        %v6194 = vadd.f32 %v6178, 1e-05
        %v6195 = vadd.f32 %v6179, 1e-05
        %v6196 = vadd.f32 %v6180, 1e-05
        %v6197 = vadd.f32 %v6181, 1e-05
        %v6198 = vadd.f32 %v6182, 1e-05
        %v6199 = vrsqrt.pop %v6183
        %v6200 = vrsqrt.pop %v6184
        %v6201 = vrsqrt.pop %v6185
        %v6202 = vrsqrt.pop %v6186
        %v6203 = vrsqrt.pop %v6187
        %v6204 = vrsqrt.pop %v6188
        %v6205 = vrsqrt.pop %v6189
        %v6206 = vrsqrt.pop %v6190
        %v6207 = vrsqrt.pop %v6191
        %v6208 = vrsqrt.pop %v6192
        %v6209 = vrsqrt.pop %v6193
        %v6210 = vrsqrt.pop %v6194
        %v6211 = vrsqrt.pop %v6195
        %v6212 = vrsqrt.pop %v6196
        %v6213 = vrsqrt.pop %v6197
        %v6214 = vrsqrt.pop %v6198
        %v6215 = vmul.f32 %v6055, %v6199
        %v6216 = vmul.f32 %v6056, %v6199
        %v6217 = vmul.f32 %v6057, %v6200
        %v6218 = vmul.f32 %v6058, %v6200
        %v6219 = vmul.f32 %v6059, %v6201
        %v6220 = vmul.f32 %v6060, %v6201
        %v6221 = vmul.f32 %v6061, %v6202
        %v6222 = vmul.f32 %v6062, %v6202
        %v6223 = vmul.f32 %v6063, %v6203
        %v6224 = vmul.f32 %v6064, %v6203
        %v6225 = vmul.f32 %v6065, %v6204
        %v6226 = vmul.f32 %v6066, %v6204
        %v6227 = vmul.f32 %v6067, %v6205
        %v6228 = vmul.f32 %v6068, %v6205
        %v6229 = vmul.f32 %v6069, %v6206
        %v6230 = vmul.f32 %v6070, %v6206
        %v6231 = vmul.f32 %v6071, %v6207
        %v6232 = vmul.f32 %v6072, %v6207
        %v6233 = vmul.f32 %v6073, %v6208
        %v6234 = vmul.f32 %v6074, %v6208
        %v6235 = vmul.f32 %v6075, %v6209
        %v6236 = vmul.f32 %v6076, %v6209
        %v6237 = vmul.f32 %v6077, %v6210
        %v6238 = vmul.f32 %v6078, %v6210
        %v6239 = vmul.f32 %v6079, %v6211
        %v6240 = vmul.f32 %v6080, %v6211
        %v6241 = vmul.f32 %v6081, %v6212
        %v6242 = vmul.f32 %v6082, %v6212
        %v6243 = vmul.f32 %v6083, %v6213
        %v6244 = vmul.f32 %v6084, %v6213
        %v6245 = vmul.f32 %v6085, %v6214
        %v6246 = vmul.f32 %v6086, %v6214
        %v6248 = vlaneseq
        %v6249 = vshrl.u32 %v6248, 7
        %v6250 = vsub.s32 0, %v6249
        %v6251 = vrot.slane %v5989, %v6250
        %v6252 = vlaneseq
        %v6253 = vshrl.u32 %v6252, 7
        %v6254 = vsub.s32 1, %v6253
        %v6255 = vrot.slane %v5989, %v6254
        %v6258 = vmul.f32 %v6215, %v6251
        %v6259 = vmul.f32 %v6216, %v6255
        %v6260 = vmul.f32 %v6217, %v6251
        %v6261 = vmul.f32 %v6218, %v6255
        %v6262 = vmul.f32 %v6219, %v6251
        %v6263 = vmul.f32 %v6220, %v6255
        %v6264 = vmul.f32 %v6221, %v6251
        %v6265 = vmul.f32 %v6222, %v6255
        %v6266 = vmul.f32 %v6223, %v6251
        %v6267 = vmul.f32 %v6224, %v6255
        %v6268 = vmul.f32 %v6225, %v6251
        %v6269 = vmul.f32 %v6226, %v6255
        %v6270 = vmul.f32 %v6227, %v6251
        %v6271 = vmul.f32 %v6228, %v6255
        %v6272 = vmul.f32 %v6229, %v6251
        %v6273 = vmul.f32 %v6230, %v6255
        %v6274 = vmul.f32 %v6231, %v6251
        %v6275 = vmul.f32 %v6232, %v6255
        %v6276 = vmul.f32 %v6233, %v6251
        %v6277 = vmul.f32 %v6234, %v6255
        %v6278 = vmul.f32 %v6235, %v6251
        %v6279 = vmul.f32 %v6236, %v6255
        %v6280 = vmul.f32 %v6237, %v6251
        %v6281 = vmul.f32 %v6238, %v6255
        %v6282 = vmul.f32 %v6239, %v6251
        %v6283 = vmul.f32 %v6240, %v6255
        %v6284 = vmul.f32 %v6241, %v6251
        %v6285 = vmul.f32 %v6242, %v6255
        %v6286 = vmul.f32 %v6243, %v6251
        %v6287 = vmul.f32 %v6244, %v6255
        %v6288 = vmul.f32 %v6245, %v6251
        %v6289 = vmul.f32 %v6246, %v6255
        %v6291 = vlaneseq
        %v6292 = vshrl.u32 %v6291, 7
        %v6293 = vsub.s32 0, %v6292
        %v6294 = vrot.slane %v5990, %v6293
        %v6295 = vlaneseq
        %v6296 = vshrl.u32 %v6295, 7
        %v6297 = vsub.s32 1, %v6296
        %v6298 = vrot.slane %v5990, %v6297
        %v6301 = vadd.f32 %v6258, %v6294
        %v6302 = vadd.f32 %v6259, %v6298
        %v6303 = vadd.f32 %v6260, %v6294
        %v6304 = vadd.f32 %v6261, %v6298
        %v6305 = vadd.f32 %v6262, %v6294
        %v6306 = vadd.f32 %v6263, %v6298
        %v6307 = vadd.f32 %v6264, %v6294
        %v6308 = vadd.f32 %v6265, %v6298
        %v6309 = vadd.f32 %v6266, %v6294
        %v6310 = vadd.f32 %v6267, %v6298
        %v6311 = vadd.f32 %v6268, %v6294
        %v6312 = vadd.f32 %v6269, %v6298
        %v6313 = vadd.f32 %v6270, %v6294
        %v6314 = vadd.f32 %v6271, %v6298
        %v6315 = vadd.f32 %v6272, %v6294
        %v6316 = vadd.f32 %v6273, %v6298
        %v6317 = vadd.f32 %v6274, %v6294
        %v6318 = vadd.f32 %v6275, %v6298
        %v6319 = vadd.f32 %v6276, %v6294
        %v6320 = vadd.f32 %v6277, %v6298
        %v6321 = vadd.f32 %v6278, %v6294
        %v6322 = vadd.f32 %v6279, %v6298
        %v6323 = vadd.f32 %v6280, %v6294
        %v6324 = vadd.f32 %v6281, %v6298
        %v6325 = vadd.f32 %v6282, %v6294
        %v6326 = vadd.f32 %v6283, %v6298
        %v6327 = vadd.f32 %v6284, %v6294
        %v6328 = vadd.f32 %v6285, %v6298
        %v6329 = vadd.f32 %v6286, %v6294
        %v6330 = vadd.f32 %v6287, %v6298
        %v6331 = vadd.f32 %v6288, %v6294
        %v6332 = vadd.f32 %v6289, %v6298
        %v6333 = vpack.c.bf16 %v6303, %v6301
        %v6334 = vpack.c.bf16 %v6304, %v6302
        %v6335 = vpack.c.bf16 %v6307, %v6305
        %v6336 = vpack.c.bf16 %v6308, %v6306
        %v6337 = vpack.c.bf16 %v6311, %v6309
        %v6338 = vpack.c.bf16 %v6312, %v6310
        %v6339 = vpack.c.bf16 %v6315, %v6313
        %v6340 = vpack.c.bf16 %v6316, %v6314
        %v6341 = vpack.c.bf16 %v6319, %v6317
        %v6342 = vpack.c.bf16 %v6320, %v6318
        %v6343 = vpack.c.bf16 %v6323, %v6321
        %v6344 = vpack.c.bf16 %v6324, %v6322
        %v6345 = vpack.c.bf16 %v6327, %v6325
        %v6346 = vpack.c.bf16 %v6328, %v6326
        %v6347 = vpack.c.bf16 %v6331, %v6329
        %v6348 = vpack.c.bf16 %v6332, %v6330
        %v6349 = vld [vmem:[#allocation16] sm:$0xff]
        %v6350 = vld [vmem:[#allocation16 + $0x8] sm:$0xff]
        %v6351 = vld [vmem:[#allocation16 + $0x10] sm:$0xff]
        %v6352 = vld [vmem:[#allocation16 + $0x18] sm:$0xff]
        %v6353 = vld [vmem:[#allocation16 + $0x20] sm:$0xff]
        %v6354 = vld [vmem:[#allocation16 + $0x28] sm:$0xff]
        %v6355 = vld [vmem:[#allocation16 + $0x30] sm:$0xff]
        %v6356 = vld [vmem:[#allocation16 + $0x38] sm:$0xff]
        %v6357 = vld [vmem:[#allocation16 + $0x40] sm:$0xff]
        %v6358 = vld [vmem:[#allocation16 + $0x48] sm:$0xff]
        %v6359 = vld [vmem:[#allocation16 + $0x50] sm:$0xff]
        %v6360 = vld [vmem:[#allocation16 + $0x58] sm:$0xff]
        %v6361 = vld [vmem:[#allocation16 + $0x60] sm:$0xff]
        %v6362 = vld [vmem:[#allocation16 + $0x68] sm:$0xff]
        %v6363 = vld [vmem:[#allocation16 + $0x70] sm:$0xff]
        %v6364 = vld [vmem:[#allocation16 + $0x78] sm:$0xff]
        %v6365 = vld [vmem:[#allocation16 + $0x80] sm:$0xff]
        %v6366 = vld [vmem:[#allocation16 + $0x88] sm:$0xff]
        %v6367 = vld [vmem:[#allocation16 + $0x90] sm:$0xff]
        %v6368 = vld [vmem:[#allocation16 + $0x98] sm:$0xff]
        %v6369 = vld [vmem:[#allocation16 + $0xa0] sm:$0xff]
        %v6370 = vld [vmem:[#allocation16 + $0xa8] sm:$0xff]
        %v6371 = vld [vmem:[#allocation16 + $0xb0] sm:$0xff]
        %v6372 = vld [vmem:[#allocation16 + $0xb8] sm:$0xff]
        %v6373 = vld [vmem:[#allocation16 + $0xc0] sm:$0xff]
        %v6374 = vld [vmem:[#allocation16 + $0xc8] sm:$0xff]
        %v6375 = vld [vmem:[#allocation16 + $0xd0] sm:$0xff]
        %v6376 = vld [vmem:[#allocation16 + $0xd8] sm:$0xff]
        %v6377 = vld [vmem:[#allocation16 + $0xe0] sm:$0xff]
        %v6378 = vld [vmem:[#allocation16 + $0xe8] sm:$0xff]
        %v6379 = vld [vmem:[#allocation16 + $0xf0] sm:$0xff]
        %v6380 = vld [vmem:[#allocation16 + $0xf8] sm:$0xff]
        %v6381 = vld [vmem:[#allocation16 + $0x100] sm:$0xff]
        %v6382 = vld [vmem:[#allocation16 + $0x108] sm:$0xff]
        %v6383 = vld [vmem:[#allocation16 + $0x110] sm:$0xff]
        %v6384 = vld [vmem:[#allocation16 + $0x118] sm:$0xff]
        %v6385 = vld [vmem:[#allocation16 + $0x120] sm:$0xff]
        %v6386 = vld [vmem:[#allocation16 + $0x128] sm:$0xff]
        %v6387 = vld [vmem:[#allocation16 + $0x130] sm:$0xff]
        %v6388 = vld [vmem:[#allocation16 + $0x138] sm:$0xff]
        %v6389 = vld [vmem:[#allocation16 + $0x140] sm:$0xff]
        %v6390 = vld [vmem:[#allocation16 + $0x148] sm:$0xff]
        %v6391 = vld [vmem:[#allocation16 + $0x150] sm:$0xff]
        %v6392 = vld [vmem:[#allocation16 + $0x158] sm:$0xff]
        %v6393 = vld [vmem:[#allocation16 + $0x160] sm:$0xff]
        %v6394 = vld [vmem:[#allocation16 + $0x168] sm:$0xff]
        %v6395 = vld [vmem:[#allocation16 + $0x170] sm:$0xff]
        %v6396 = vld [vmem:[#allocation16 + $0x178] sm:$0xff]
        %v6397 = vld [vmem:[#allocation16 + $0x180] sm:$0xff]
        %v6398 = vld [vmem:[#allocation16 + $0x188] sm:$0xff]
        %v6399 = vld [vmem:[#allocation16 + $0x190] sm:$0xff]
        %v6400 = vld [vmem:[#allocation16 + $0x198] sm:$0xff]
        %v6401 = vld [vmem:[#allocation16 + $0x1a0] sm:$0xff]
        %v6402 = vld [vmem:[#allocation16 + $0x1a8] sm:$0xff]
        %v6403 = vld [vmem:[#allocation16 + $0x1b0] sm:$0xff]
        %v6404 = vld [vmem:[#allocation16 + $0x1b8] sm:$0xff]
        %v6405 = vld [vmem:[#allocation16 + $0x1c0] sm:$0xff]
        %v6406 = vld [vmem:[#allocation16 + $0x1c8] sm:$0xff]
        %v6407 = vld [vmem:[#allocation16 + $0x1d0] sm:$0xff]
        %v6408 = vld [vmem:[#allocation16 + $0x1d8] sm:$0xff]
        %v6409 = vld [vmem:[#allocation16 + $0x1e0] sm:$0xff]
        %v6410 = vld [vmem:[#allocation16 + $0x1e8] sm:$0xff]
        %v6411 = vld [vmem:[#allocation16 + $0x1f0] sm:$0xff]
        %v6412 = vld [vmem:[#allocation16 + $0x1f8] sm:$0xff]
        %v6413 = vld [vmem:[#allocation16 + $0x200] sm:$0xff]
        %v6414 = vld [vmem:[#allocation16 + $0x208] sm:$0xff]
        %v6415 = vld [vmem:[#allocation16 + $0x210] sm:$0xff]
        %v6416 = vld [vmem:[#allocation16 + $0x218] sm:$0xff]
        %v6417 = vld [vmem:[#allocation16 + $0x220] sm:$0xff]
        %v6418 = vld [vmem:[#allocation16 + $0x228] sm:$0xff]
        %v6419 = vld [vmem:[#allocation16 + $0x230] sm:$0xff]
        %v6420 = vld [vmem:[#allocation16 + $0x238] sm:$0xff]
        %v6421 = vld [vmem:[#allocation16 + $0x240] sm:$0xff]
        %v6422 = vld [vmem:[#allocation16 + $0x248] sm:$0xff]
        %v6423 = vld [vmem:[#allocation16 + $0x250] sm:$0xff]
        %v6424 = vld [vmem:[#allocation16 + $0x258] sm:$0xff]
        %v6425 = vld [vmem:[#allocation16 + $0x260] sm:$0xff]
        %v6426 = vld [vmem:[#allocation16 + $0x268] sm:$0xff]
        %v6427 = vld [vmem:[#allocation16 + $0x270] sm:$0xff]
        %v6428 = vld [vmem:[#allocation16 + $0x278] sm:$0xff]
        %v6429 = vld [vmem:[#allocation16 + $0x280] sm:$0xff]
        %v6430 = vld [vmem:[#allocation16 + $0x288] sm:$0xff]
        %v6431 = vld [vmem:[#allocation16 + $0x290] sm:$0xff]
        %v6432 = vld [vmem:[#allocation16 + $0x298] sm:$0xff]
        %v6433 = vld [vmem:[#allocation16 + $0x2a0] sm:$0xff]
        %v6434 = vld [vmem:[#allocation16 + $0x2a8] sm:$0xff]
        %v6435 = vld [vmem:[#allocation16 + $0x2b0] sm:$0xff]
        %v6436 = vld [vmem:[#allocation16 + $0x2b8] sm:$0xff]
        %v6437 = vld [vmem:[#allocation16 + $0x2c0] sm:$0xff]
        %v6438 = vld [vmem:[#allocation16 + $0x2c8] sm:$0xff]
        %v6439 = vld [vmem:[#allocation16 + $0x2d0] sm:$0xff]
        %v6440 = vld [vmem:[#allocation16 + $0x2d8] sm:$0xff]
        %v6441 = vld [vmem:[#allocation16 + $0x2e0] sm:$0xff]
        %v6442 = vld [vmem:[#allocation16 + $0x2e8] sm:$0xff]
        %v6443 = vld [vmem:[#allocation16 + $0x2f0] sm:$0xff]
        %v6444 = vld [vmem:[#allocation16 + $0x2f8] sm:$0xff]
        %v6445 = vld [vmem:[#allocation16 + $0x300] sm:$0xff]
        %v6446 = vld [vmem:[#allocation16 + $0x308] sm:$0xff]
        %v6447 = vld [vmem:[#allocation16 + $0x310] sm:$0xff]
        %v6448 = vld [vmem:[#allocation16 + $0x318] sm:$0xff]
        %v6449 = vld [vmem:[#allocation16 + $0x320] sm:$0xff]
        %v6450 = vld [vmem:[#allocation16 + $0x328] sm:$0xff]
        %v6451 = vld [vmem:[#allocation16 + $0x330] sm:$0xff]
        %v6452 = vld [vmem:[#allocation16 + $0x338] sm:$0xff]
        %v6453 = vld [vmem:[#allocation16 + $0x340] sm:$0xff]
        %v6454 = vld [vmem:[#allocation16 + $0x348] sm:$0xff]
        %v6455 = vld [vmem:[#allocation16 + $0x350] sm:$0xff]
        %v6456 = vld [vmem:[#allocation16 + $0x358] sm:$0xff]
        %v6457 = vld [vmem:[#allocation16 + $0x360] sm:$0xff]
        %v6458 = vld [vmem:[#allocation16 + $0x368] sm:$0xff]
        %v6459 = vld [vmem:[#allocation16 + $0x370] sm:$0xff]
        %v6460 = vld [vmem:[#allocation16 + $0x378] sm:$0xff]
        %v6461 = vld [vmem:[#allocation16 + $0x380] sm:$0xff]
        %v6462 = vld [vmem:[#allocation16 + $0x388] sm:$0xff]
        %v6463 = vld [vmem:[#allocation16 + $0x390] sm:$0xff]
        %v6464 = vld [vmem:[#allocation16 + $0x398] sm:$0xff]
        %v6465 = vld [vmem:[#allocation16 + $0x3a0] sm:$0xff]
        %v6466 = vld [vmem:[#allocation16 + $0x3a8] sm:$0xff]
        %v6467 = vld [vmem:[#allocation16 + $0x3b0] sm:$0xff]
        %v6468 = vld [vmem:[#allocation16 + $0x3b8] sm:$0xff]
        %v6469 = vld [vmem:[#allocation16 + $0x3c0] sm:$0xff]
        %v6470 = vld [vmem:[#allocation16 + $0x3c8] sm:$0xff]
        %v6471 = vld [vmem:[#allocation16 + $0x3d0] sm:$0xff]
        %v6472 = vld [vmem:[#allocation16 + $0x3d8] sm:$0xff]
        %v6473 = vld [vmem:[#allocation16 + $0x3e0] sm:$0xff]
        %v6474 = vld [vmem:[#allocation16 + $0x3e8] sm:$0xff]
        %v6475 = vld [vmem:[#allocation16 + $0x3f0] sm:$0xff]
        %v6476 = vld [vmem:[#allocation16 + $0x3f8] sm:$0xff]
        %v6477 = vld [vmem:[%s14] sm:$0xff]
        %v6479 = vlaneseq
        %v6480 = vshrl.u32 %v6479, 7
        %v6481 = vsub.s32 0, %v6480
        %v6482 = vrot.slane %v6477, %v6481
        %v6483 = vlaneseq
        %v6484 = vshrl.u32 %v6483, 7
        %v6485 = vsub.s32 1, %v6484
        %v6486 = vrot.slane %v6477, %v6485
        %v6487 = vlaneseq
        %v6488 = vshrl.u32 %v6487, 7
        %v6489 = vsub.s32 2, %v6488
        %v6490 = vrot.slane %v6477, %v6489
        %v6491 = vlaneseq
        %v6492 = vshrl.u32 %v6491, 7
        %v6493 = vsub.s32 3, %v6492
        %v6494 = vrot.slane %v6477, %v6493
        %v6495 = vlaneseq
        %v6496 = vshrl.u32 %v6495, 7
        %v6497 = vsub.s32 4, %v6496
        %v6498 = vrot.slane %v6477, %v6497
        %v6499 = vlaneseq
        %v6500 = vshrl.u32 %v6499, 7
        %v6501 = vsub.s32 5, %v6500
        %v6502 = vrot.slane %v6477, %v6501
        %v6503 = vlaneseq
        %v6504 = vshrl.u32 %v6503, 7
        %v6505 = vsub.s32 6, %v6504
        %v6506 = vrot.slane %v6477, %v6505
        %v6507 = vlaneseq
        %v6508 = vshrl.u32 %v6507, 7
        %v6509 = vsub.s32 7, %v6508
        %v6510 = vrot.slane %v6477, %v6509
        %v6647 = vunpack.c.l.b16 %v6349
        %v6648 = vunpack.c.h.b16 %v6349
        %v6649 = vunpack.c.l.b16 %v6350
        %v6650 = vunpack.c.h.b16 %v6350
        %v6651 = vunpack.c.l.b16 %v6351
        %v6652 = vunpack.c.h.b16 %v6351
        %v6653 = vunpack.c.l.b16 %v6352
        %v6654 = vunpack.c.h.b16 %v6352
        %v6655 = vunpack.c.l.b16 %v6353
        %v6656 = vunpack.c.h.b16 %v6353
        %v6657 = vunpack.c.l.b16 %v6354
        %v6658 = vunpack.c.h.b16 %v6354
        %v6659 = vunpack.c.l.b16 %v6355
        %v6660 = vunpack.c.h.b16 %v6355
        %v6661 = vunpack.c.l.b16 %v6356
        %v6662 = vunpack.c.h.b16 %v6356
        %v6663 = vunpack.c.l.b16 %v6357
        %v6664 = vunpack.c.h.b16 %v6357
        %v6665 = vunpack.c.l.b16 %v6358
        %v6666 = vunpack.c.h.b16 %v6358
        %v6667 = vunpack.c.l.b16 %v6359
        %v6668 = vunpack.c.h.b16 %v6359
        %v6669 = vunpack.c.l.b16 %v6360
        %v6670 = vunpack.c.h.b16 %v6360
        %v6671 = vunpack.c.l.b16 %v6361
        %v6672 = vunpack.c.h.b16 %v6361
        %v6673 = vunpack.c.l.b16 %v6362
        %v6674 = vunpack.c.h.b16 %v6362
        %v6675 = vunpack.c.l.b16 %v6363
        %v6676 = vunpack.c.h.b16 %v6363
        %v6677 = vunpack.c.l.b16 %v6364
        %v6678 = vunpack.c.h.b16 %v6364
        %v6679 = vunpack.c.l.b16 %v6365
        %v6680 = vunpack.c.h.b16 %v6365
        %v6681 = vunpack.c.l.b16 %v6366
        %v6682 = vunpack.c.h.b16 %v6366
        %v6683 = vunpack.c.l.b16 %v6367
        %v6684 = vunpack.c.h.b16 %v6367
        %v6685 = vunpack.c.l.b16 %v6368
        %v6686 = vunpack.c.h.b16 %v6368
        %v6687 = vunpack.c.l.b16 %v6369
        %v6688 = vunpack.c.h.b16 %v6369
        %v6689 = vunpack.c.l.b16 %v6370
        %v6690 = vunpack.c.h.b16 %v6370
        %v6691 = vunpack.c.l.b16 %v6371
        %v6692 = vunpack.c.h.b16 %v6371
        %v6693 = vunpack.c.l.b16 %v6372
        %v6694 = vunpack.c.h.b16 %v6372
        %v6695 = vunpack.c.l.b16 %v6373
        %v6696 = vunpack.c.h.b16 %v6373
        %v6697 = vunpack.c.l.b16 %v6374
        %v6698 = vunpack.c.h.b16 %v6374
        %v6699 = vunpack.c.l.b16 %v6375
        %v6700 = vunpack.c.h.b16 %v6375
        %v6701 = vunpack.c.l.b16 %v6376
        %v6702 = vunpack.c.h.b16 %v6376
        %v6703 = vunpack.c.l.b16 %v6377
        %v6704 = vunpack.c.h.b16 %v6377
        %v6705 = vunpack.c.l.b16 %v6378
        %v6706 = vunpack.c.h.b16 %v6378
        %v6707 = vunpack.c.l.b16 %v6379
        %v6708 = vunpack.c.h.b16 %v6379
        %v6709 = vunpack.c.l.b16 %v6380
        %v6710 = vunpack.c.h.b16 %v6380
        %v6711 = vunpack.c.l.b16 %v6381
        %v6712 = vunpack.c.h.b16 %v6381
        %v6713 = vunpack.c.l.b16 %v6382
        %v6714 = vunpack.c.h.b16 %v6382
        %v6715 = vunpack.c.l.b16 %v6383
        %v6716 = vunpack.c.h.b16 %v6383
        %v6717 = vunpack.c.l.b16 %v6384
        %v6718 = vunpack.c.h.b16 %v6384
        %v6719 = vunpack.c.l.b16 %v6385
        %v6720 = vunpack.c.h.b16 %v6385
        %v6721 = vunpack.c.l.b16 %v6386
        %v6722 = vunpack.c.h.b16 %v6386
        %v6723 = vunpack.c.l.b16 %v6387
        %v6724 = vunpack.c.h.b16 %v6387
        %v6725 = vunpack.c.l.b16 %v6388
        %v6726 = vunpack.c.h.b16 %v6388
        %v6727 = vunpack.c.l.b16 %v6389
        %v6728 = vunpack.c.h.b16 %v6389
        %v6729 = vunpack.c.l.b16 %v6390
        %v6730 = vunpack.c.h.b16 %v6390
        %v6731 = vunpack.c.l.b16 %v6391
        %v6732 = vunpack.c.h.b16 %v6391
        %v6733 = vunpack.c.l.b16 %v6392
        %v6734 = vunpack.c.h.b16 %v6392
        %v6735 = vunpack.c.l.b16 %v6393
        %v6736 = vunpack.c.h.b16 %v6393
        %v6737 = vunpack.c.l.b16 %v6394
        %v6738 = vunpack.c.h.b16 %v6394
        %v6739 = vunpack.c.l.b16 %v6395
        %v6740 = vunpack.c.h.b16 %v6395
        %v6741 = vunpack.c.l.b16 %v6396
        %v6742 = vunpack.c.h.b16 %v6396
        %v6743 = vunpack.c.l.b16 %v6397
        %v6744 = vunpack.c.h.b16 %v6397
        %v6745 = vunpack.c.l.b16 %v6398
        %v6746 = vunpack.c.h.b16 %v6398
        %v6747 = vunpack.c.l.b16 %v6399
        %v6748 = vunpack.c.h.b16 %v6399
        %v6749 = vunpack.c.l.b16 %v6400
        %v6750 = vunpack.c.h.b16 %v6400
        %v6751 = vunpack.c.l.b16 %v6401
        %v6752 = vunpack.c.h.b16 %v6401
        %v6753 = vunpack.c.l.b16 %v6402
        %v6754 = vunpack.c.h.b16 %v6402
        %v6755 = vunpack.c.l.b16 %v6403
        %v6756 = vunpack.c.h.b16 %v6403
        %v6757 = vunpack.c.l.b16 %v6404
        %v6758 = vunpack.c.h.b16 %v6404
        %v6759 = vunpack.c.l.b16 %v6405
        %v6760 = vunpack.c.h.b16 %v6405
        %v6761 = vunpack.c.l.b16 %v6406
        %v6762 = vunpack.c.h.b16 %v6406
        %v6763 = vunpack.c.l.b16 %v6407
        %v6764 = vunpack.c.h.b16 %v6407
        %v6765 = vunpack.c.l.b16 %v6408
        %v6766 = vunpack.c.h.b16 %v6408
        %v6767 = vunpack.c.l.b16 %v6409
        %v6768 = vunpack.c.h.b16 %v6409
        %v6769 = vunpack.c.l.b16 %v6410
        %v6770 = vunpack.c.h.b16 %v6410
        %v6771 = vunpack.c.l.b16 %v6411
        %v6772 = vunpack.c.h.b16 %v6411
        %v6773 = vunpack.c.l.b16 %v6412
        %v6774 = vunpack.c.h.b16 %v6412
        %v6775 = vunpack.c.l.b16 %v6413
        %v6776 = vunpack.c.h.b16 %v6413
        %v6777 = vunpack.c.l.b16 %v6414
        %v6778 = vunpack.c.h.b16 %v6414
        %v6779 = vunpack.c.l.b16 %v6415
        %v6780 = vunpack.c.h.b16 %v6415
        %v6781 = vunpack.c.l.b16 %v6416
        %v6782 = vunpack.c.h.b16 %v6416
        %v6783 = vunpack.c.l.b16 %v6417
        %v6784 = vunpack.c.h.b16 %v6417
        %v6785 = vunpack.c.l.b16 %v6418
        %v6786 = vunpack.c.h.b16 %v6418
        %v6787 = vunpack.c.l.b16 %v6419
        %v6788 = vunpack.c.h.b16 %v6419
        %v6789 = vunpack.c.l.b16 %v6420
        %v6790 = vunpack.c.h.b16 %v6420
        %v6791 = vunpack.c.l.b16 %v6421
        %v6792 = vunpack.c.h.b16 %v6421
        %v6793 = vunpack.c.l.b16 %v6422
        %v6794 = vunpack.c.h.b16 %v6422
        %v6795 = vunpack.c.l.b16 %v6423
        %v6796 = vunpack.c.h.b16 %v6423
        %v6797 = vunpack.c.l.b16 %v6424
        %v6798 = vunpack.c.h.b16 %v6424
        %v6799 = vunpack.c.l.b16 %v6425
        %v6800 = vunpack.c.h.b16 %v6425
        %v6801 = vunpack.c.l.b16 %v6426
        %v6802 = vunpack.c.h.b16 %v6426
        %v6803 = vunpack.c.l.b16 %v6427
        %v6804 = vunpack.c.h.b16 %v6427
        %v6805 = vunpack.c.l.b16 %v6428
        %v6806 = vunpack.c.h.b16 %v6428
        %v6807 = vunpack.c.l.b16 %v6429
        %v6808 = vunpack.c.h.b16 %v6429
        %v6809 = vunpack.c.l.b16 %v6430
        %v6810 = vunpack.c.h.b16 %v6430
        %v6811 = vunpack.c.l.b16 %v6431
        %v6812 = vunpack.c.h.b16 %v6431
        %v6813 = vunpack.c.l.b16 %v6432
        %v6814 = vunpack.c.h.b16 %v6432
        %v6815 = vunpack.c.l.b16 %v6433
        %v6816 = vunpack.c.h.b16 %v6433
        %v6817 = vunpack.c.l.b16 %v6434
        %v6818 = vunpack.c.h.b16 %v6434
        %v6819 = vunpack.c.l.b16 %v6435
        %v6820 = vunpack.c.h.b16 %v6435
        %v6821 = vunpack.c.l.b16 %v6436
        %v6822 = vunpack.c.h.b16 %v6436
        %v6823 = vunpack.c.l.b16 %v6437
        %v6824 = vunpack.c.h.b16 %v6437
        %v6825 = vunpack.c.l.b16 %v6438
        %v6826 = vunpack.c.h.b16 %v6438
        %v6827 = vunpack.c.l.b16 %v6439
        %v6828 = vunpack.c.h.b16 %v6439
        %v6829 = vunpack.c.l.b16 %v6440
        %v6830 = vunpack.c.h.b16 %v6440
        %v6831 = vunpack.c.l.b16 %v6441
        %v6832 = vunpack.c.h.b16 %v6441
        %v6833 = vunpack.c.l.b16 %v6442
        %v6834 = vunpack.c.h.b16 %v6442
        %v6835 = vunpack.c.l.b16 %v6443
        %v6836 = vunpack.c.h.b16 %v6443
        %v6837 = vunpack.c.l.b16 %v6444
        %v6838 = vunpack.c.h.b16 %v6444
        %v6839 = vunpack.c.l.b16 %v6445
        %v6840 = vunpack.c.h.b16 %v6445
        %v6841 = vunpack.c.l.b16 %v6446
        %v6842 = vunpack.c.h.b16 %v6446
        %v6843 = vunpack.c.l.b16 %v6447
        %v6844 = vunpack.c.h.b16 %v6447
        %v6845 = vunpack.c.l.b16 %v6448
        %v6846 = vunpack.c.h.b16 %v6448
        %v6847 = vunpack.c.l.b16 %v6449
        %v6848 = vunpack.c.h.b16 %v6449
        %v6849 = vunpack.c.l.b16 %v6450
        %v6850 = vunpack.c.h.b16 %v6450
        %v6851 = vunpack.c.l.b16 %v6451
        %v6852 = vunpack.c.h.b16 %v6451
        %v6853 = vunpack.c.l.b16 %v6452
        %v6854 = vunpack.c.h.b16 %v6452
        %v6855 = vunpack.c.l.b16 %v6453
        %v6856 = vunpack.c.h.b16 %v6453
        %v6857 = vunpack.c.l.b16 %v6454
        %v6858 = vunpack.c.h.b16 %v6454
        %v6859 = vunpack.c.l.b16 %v6455
        %v6860 = vunpack.c.h.b16 %v6455
        %v6861 = vunpack.c.l.b16 %v6456
        %v6862 = vunpack.c.h.b16 %v6456
        %v6863 = vunpack.c.l.b16 %v6457
        %v6864 = vunpack.c.h.b16 %v6457
        %v6865 = vunpack.c.l.b16 %v6458
        %v6866 = vunpack.c.h.b16 %v6458
        %v6867 = vunpack.c.l.b16 %v6459
        %v6868 = vunpack.c.h.b16 %v6459
        %v6869 = vunpack.c.l.b16 %v6460
        %v6870 = vunpack.c.h.b16 %v6460
        %v6871 = vunpack.c.l.b16 %v6461
        %v6872 = vunpack.c.h.b16 %v6461
        %v6873 = vunpack.c.l.b16 %v6462
        %v6874 = vunpack.c.h.b16 %v6462
        %v6875 = vunpack.c.l.b16 %v6463
        %v6876 = vunpack.c.h.b16 %v6463
        %v6877 = vunpack.c.l.b16 %v6464
        %v6878 = vunpack.c.h.b16 %v6464
        %v6879 = vunpack.c.l.b16 %v6465
        %v6880 = vunpack.c.h.b16 %v6465
        %v6881 = vunpack.c.l.b16 %v6466
        %v6882 = vunpack.c.h.b16 %v6466
        %v6883 = vunpack.c.l.b16 %v6467
        %v6884 = vunpack.c.h.b16 %v6467
        %v6885 = vunpack.c.l.b16 %v6468
        %v6886 = vunpack.c.h.b16 %v6468
        %v6887 = vunpack.c.l.b16 %v6469
        %v6888 = vunpack.c.h.b16 %v6469
        %v6889 = vunpack.c.l.b16 %v6470
        %v6890 = vunpack.c.h.b16 %v6470
        %v6891 = vunpack.c.l.b16 %v6471
        %v6892 = vunpack.c.h.b16 %v6471
        %v6893 = vunpack.c.l.b16 %v6472
        %v6894 = vunpack.c.h.b16 %v6472
        %v6895 = vunpack.c.l.b16 %v6473
        %v6896 = vunpack.c.h.b16 %v6473
        %v6897 = vunpack.c.l.b16 %v6474
        %v6898 = vunpack.c.h.b16 %v6474
        %v6899 = vunpack.c.l.b16 %v6475
        %v6900 = vunpack.c.h.b16 %v6475
        %v6901 = vunpack.c.l.b16 %v6476
        %v6902 = vunpack.c.h.b16 %v6476
        %v6903 = vpack.c.b16 %v6655, %v6647
        %v6904 = vpack.c.b16 %v6656, %v6648
        %v6905 = vpack.c.b16 %v6657, %v6649
        %v6906 = vpack.c.b16 %v6658, %v6650
        %v6907 = vpack.c.b16 %v6659, %v6651
        %v6908 = vpack.c.b16 %v6660, %v6652
        %v6909 = vpack.c.b16 %v6661, %v6653
        %v6910 = vpack.c.b16 %v6662, %v6654
        %v6911 = vpack.c.b16 %v6671, %v6663
        %v6912 = vpack.c.b16 %v6672, %v6664
        %v6913 = vpack.c.b16 %v6673, %v6665
        %v6914 = vpack.c.b16 %v6674, %v6666
        %v6915 = vpack.c.b16 %v6675, %v6667
        %v6916 = vpack.c.b16 %v6676, %v6668
        %v6917 = vpack.c.b16 %v6677, %v6669
        %v6918 = vpack.c.b16 %v6678, %v6670
        %v6919 = vpack.c.b16 %v6687, %v6679
        %v6920 = vpack.c.b16 %v6688, %v6680
        %v6921 = vpack.c.b16 %v6689, %v6681
        %v6922 = vpack.c.b16 %v6690, %v6682
        %v6923 = vpack.c.b16 %v6691, %v6683
        %v6924 = vpack.c.b16 %v6692, %v6684
        %v6925 = vpack.c.b16 %v6693, %v6685
        %v6926 = vpack.c.b16 %v6694, %v6686
        %v6927 = vpack.c.b16 %v6703, %v6695
        %v6928 = vpack.c.b16 %v6704, %v6696
        %v6929 = vpack.c.b16 %v6705, %v6697
        %v6930 = vpack.c.b16 %v6706, %v6698
        %v6931 = vpack.c.b16 %v6707, %v6699
        %v6932 = vpack.c.b16 %v6708, %v6700
        %v6933 = vpack.c.b16 %v6709, %v6701
        %v6934 = vpack.c.b16 %v6710, %v6702
        %v6935 = vpack.c.b16 %v6719, %v6711
        %v6936 = vpack.c.b16 %v6720, %v6712
        %v6937 = vpack.c.b16 %v6721, %v6713
        %v6938 = vpack.c.b16 %v6722, %v6714
        %v6939 = vpack.c.b16 %v6723, %v6715
        %v6940 = vpack.c.b16 %v6724, %v6716
        %v6941 = vpack.c.b16 %v6725, %v6717
        %v6942 = vpack.c.b16 %v6726, %v6718
        %v6943 = vpack.c.b16 %v6735, %v6727
        %v6944 = vpack.c.b16 %v6736, %v6728
        %v6945 = vpack.c.b16 %v6737, %v6729
        %v6946 = vpack.c.b16 %v6738, %v6730
        %v6947 = vpack.c.b16 %v6739, %v6731
        %v6948 = vpack.c.b16 %v6740, %v6732
        %v6949 = vpack.c.b16 %v6741, %v6733
        %v6950 = vpack.c.b16 %v6742, %v6734
        %v6951 = vpack.c.b16 %v6751, %v6743
        %v6952 = vpack.c.b16 %v6752, %v6744
        %v6953 = vpack.c.b16 %v6753, %v6745
        %v6954 = vpack.c.b16 %v6754, %v6746
        %v6955 = vpack.c.b16 %v6755, %v6747
        %v6956 = vpack.c.b16 %v6756, %v6748
        %v6957 = vpack.c.b16 %v6757, %v6749
        %v6958 = vpack.c.b16 %v6758, %v6750
        %v6959 = vpack.c.b16 %v6767, %v6759
        %v6960 = vpack.c.b16 %v6768, %v6760
        %v6961 = vpack.c.b16 %v6769, %v6761
        %v6962 = vpack.c.b16 %v6770, %v6762
        %v6963 = vpack.c.b16 %v6771, %v6763
        %v6964 = vpack.c.b16 %v6772, %v6764
        %v6965 = vpack.c.b16 %v6773, %v6765
        %v6966 = vpack.c.b16 %v6774, %v6766
        %v6967 = vpack.c.b16 %v6783, %v6775
        %v6968 = vpack.c.b16 %v6784, %v6776
        %v6969 = vpack.c.b16 %v6785, %v6777
        %v6970 = vpack.c.b16 %v6786, %v6778
        %v6971 = vpack.c.b16 %v6787, %v6779
        %v6972 = vpack.c.b16 %v6788, %v6780
        %v6973 = vpack.c.b16 %v6789, %v6781
        %v6974 = vpack.c.b16 %v6790, %v6782
        %v6975 = vpack.c.b16 %v6799, %v6791
        %v6976 = vpack.c.b16 %v6800, %v6792
        %v6977 = vpack.c.b16 %v6801, %v6793
        %v6978 = vpack.c.b16 %v6802, %v6794
        %v6979 = vpack.c.b16 %v6803, %v6795
        %v6980 = vpack.c.b16 %v6804, %v6796
        %v6981 = vpack.c.b16 %v6805, %v6797
        %v6982 = vpack.c.b16 %v6806, %v6798
        %v6983 = vpack.c.b16 %v6815, %v6807
        %v6984 = vpack.c.b16 %v6816, %v6808
        %v6985 = vpack.c.b16 %v6817, %v6809
        %v6986 = vpack.c.b16 %v6818, %v6810
        %v6987 = vpack.c.b16 %v6819, %v6811
        %v6988 = vpack.c.b16 %v6820, %v6812
        %v6989 = vpack.c.b16 %v6821, %v6813
        %v6990 = vpack.c.b16 %v6822, %v6814
        %v6991 = vpack.c.b16 %v6831, %v6823
        %v6992 = vpack.c.b16 %v6832, %v6824
        %v6993 = vpack.c.b16 %v6833, %v6825
        %v6994 = vpack.c.b16 %v6834, %v6826
        %v6995 = vpack.c.b16 %v6835, %v6827
        %v6996 = vpack.c.b16 %v6836, %v6828
        %v6997 = vpack.c.b16 %v6837, %v6829
        %v6998 = vpack.c.b16 %v6838, %v6830
        %v6999 = vpack.c.b16 %v6847, %v6839
        %v7000 = vpack.c.b16 %v6848, %v6840
        %v7001 = vpack.c.b16 %v6849, %v6841
        %v7002 = vpack.c.b16 %v6850, %v6842
        %v7003 = vpack.c.b16 %v6851, %v6843
        %v7004 = vpack.c.b16 %v6852, %v6844
        %v7005 = vpack.c.b16 %v6853, %v6845
        %v7006 = vpack.c.b16 %v6854, %v6846
        %v7007 = vpack.c.b16 %v6863, %v6855
        %v7008 = vpack.c.b16 %v6864, %v6856
        %v7009 = vpack.c.b16 %v6865, %v6857
        %v7010 = vpack.c.b16 %v6866, %v6858
        %v7011 = vpack.c.b16 %v6867, %v6859
        %v7012 = vpack.c.b16 %v6868, %v6860
        %v7013 = vpack.c.b16 %v6869, %v6861
        %v7014 = vpack.c.b16 %v6870, %v6862
        %v7015 = vpack.c.b16 %v6879, %v6871
        %v7016 = vpack.c.b16 %v6880, %v6872
        %v7017 = vpack.c.b16 %v6881, %v6873
        %v7018 = vpack.c.b16 %v6882, %v6874
        %v7019 = vpack.c.b16 %v6883, %v6875
        %v7020 = vpack.c.b16 %v6884, %v6876
        %v7021 = vpack.c.b16 %v6885, %v6877
        %v7022 = vpack.c.b16 %v6886, %v6878
        %v7023 = vpack.c.b16 %v6895, %v6887
        %v7024 = vpack.c.b16 %v6896, %v6888
        %v7025 = vpack.c.b16 %v6897, %v6889
        %v7026 = vpack.c.b16 %v6898, %v6890
        %v7027 = vpack.c.b16 %v6899, %v6891
        %v7028 = vpack.c.b16 %v6900, %v6892
        %v7029 = vpack.c.b16 %v6901, %v6893
        %v7030 = vpack.c.b16 %v6902, %v6894
        %7159 = vmatprep.subr.bf16.mxu0 %v6960
        %7160 = vmatpush1.bf16.msra.mxu0 %v6959
        %7161 = vmatprep.subr.bf16.mxu0 %v6952
        %7162 = vmatpush1.bf16.msra.mxu0 %v6951
        %7163 = vmatprep.subr.bf16.mxu0 %v6944
        %7164 = vmatpush1.bf16.msra.mxu0 %v6943
        %7165 = vmatprep.subr.bf16.mxu0 %v6936
        %7166 = vmatpush1.bf16.msra.mxu0 %v6935
        %7167 = vmatprep.subr.bf16.mxu0 %v6928
        %7168 = vmatpush1.bf16.msra.mxu0 %v6927
        %7169 = vmatprep.subr.bf16.mxu0 %v6920
        %7170 = vmatpush1.bf16.msra.mxu0 %v6919
        %7171 = vmatprep.subr.bf16.mxu0 %v6912
        %7172 = vmatpush1.bf16.msra.mxu0 %v6911
        %7173 = vmatprep.subr.bf16.mxu0 %v6904
        %7174 = vmatpush1.bf16.msra.mxu0 %v6903
        %7175 = vmatprep.subr.bf16.mxu0 %v7024
        %7176 = vmatpush2.bf16.msra.mxu0 %v7023
        %7177 = vmatprep.subr.bf16.mxu0 %v7016
        %7178 = vmatpush2.bf16.msra.mxu0 %v7015
        %7179 = vmatprep.subr.bf16.mxu0 %v7008
        %7180 = vmatpush2.bf16.msra.mxu0 %v7007
        %7181 = vmatprep.subr.bf16.mxu0 %v7000
        %7182 = vmatpush2.bf16.msra.mxu0 %v6999
        %7183 = vmatprep.subr.bf16.mxu0 %v6992
        %7184 = vmatpush2.bf16.msra.mxu0 %v6991
        %7185 = vmatprep.subr.bf16.mxu0 %v6984
        %7186 = vmatpush2.bf16.msra.mxu0 %v6983
        %7187 = vmatprep.subr.bf16.mxu0 %v6976
        %7188 = vmatpush2.bf16.msra.mxu0 %v6975
        %7189 = vmatprep.subr.bf16.mxu0 %v6968
        %7190 = vmatpush2.bf16.msra.mxu0 %v6967
        %7191 = vmatprep.mubr.bf16.mxu0 %v6334
        %7192 = vmatmul.mubr.bf16.gmra.mxu0 %v6333
        %v7193 = vpop.f32.mrf.mxu0
        %v7194 = vadd.f32 %v6482, %v7193
        %v7195 = vpop.f32.mrf.mxu0
        %v7196 = vadd.f32 %v6486, %v7195
        %v7197 = vpop.f32.mrf.mxu0
        %v7198 = vadd.f32 %v6482, %v7197
        %v7199 = vpop.f32.mrf.mxu0
        %v7200 = vadd.f32 %v6486, %v7199
        %7201 = vmatprep.mubr.bf16.mxu0 %v6336
        %7202 = vmatmul.mubr.bf16.gmra.mxu0 %v6335
        %v7203 = vpop.f32.mrf.mxu0
        %v7204 = vadd.f32 %v6482, %v7203
        %v7205 = vpop.f32.mrf.mxu0
        %v7206 = vadd.f32 %v6486, %v7205
        %v7207 = vpop.f32.mrf.mxu0
        %v7208 = vadd.f32 %v6482, %v7207
        %v7209 = vpop.f32.mrf.mxu0
        %v7210 = vadd.f32 %v6486, %v7209
        %7211 = vmatprep.mubr.bf16.mxu0 %v6338
        %7212 = vmatmul.mubr.bf16.gmra.mxu0 %v6337
        %v7213 = vpop.f32.mrf.mxu0
        %v7214 = vadd.f32 %v6482, %v7213
        %v7215 = vpop.f32.mrf.mxu0
        %v7216 = vadd.f32 %v6486, %v7215
        %v7217 = vpop.f32.mrf.mxu0
        %v7218 = vadd.f32 %v6482, %v7217
        %v7219 = vpop.f32.mrf.mxu0
        %v7220 = vadd.f32 %v6486, %v7219
        %7221 = vmatprep.mubr.bf16.mxu0 %v6340
        %7222 = vmatmul.mubr.bf16.gmra.mxu0 %v6339
        %v7223 = vpop.f32.mrf.mxu0
        %v7224 = vadd.f32 %v6482, %v7223
        %v7225 = vpop.f32.mrf.mxu0
        %v7226 = vadd.f32 %v6486, %v7225
        %v7227 = vpop.f32.mrf.mxu0
        %v7228 = vadd.f32 %v6482, %v7227
        %v7229 = vpop.f32.mrf.mxu0
        %v7230 = vadd.f32 %v6486, %v7229
        %7231 = vmatprep.mubr.bf16.mxu0 %v6342
        %7232 = vmatmul.mubr.bf16.gmra.mxu0 %v6341
        %v7233 = vpop.f32.mrf.mxu0
        %v7234 = vadd.f32 %v6482, %v7233
        %v7235 = vpop.f32.mrf.mxu0
        %v7236 = vadd.f32 %v6486, %v7235
        %v7237 = vpop.f32.mrf.mxu0
        %v7238 = vadd.f32 %v6482, %v7237
        %v7239 = vpop.f32.mrf.mxu0
        %v7240 = vadd.f32 %v6486, %v7239
        %7241 = vmatprep.mubr.bf16.mxu0 %v6344
        %7242 = vmatmul.mubr.bf16.gmra.mxu0 %v6343
        %v7243 = vpop.f32.mrf.mxu0
        %v7244 = vadd.f32 %v6482, %v7243
        %v7245 = vpop.f32.mrf.mxu0
        %v7246 = vadd.f32 %v6486, %v7245
        %v7247 = vpop.f32.mrf.mxu0
        %v7248 = vadd.f32 %v6482, %v7247
        %v7249 = vpop.f32.mrf.mxu0
        %v7250 = vadd.f32 %v6486, %v7249
        %7251 = vmatprep.mubr.bf16.mxu0 %v6346
        %7252 = vmatmul.mubr.bf16.gmra.mxu0 %v6345
        %v7253 = vpop.f32.mrf.mxu0
        %v7254 = vadd.f32 %v6482, %v7253
        %v7255 = vpop.f32.mrf.mxu0
        %v7256 = vadd.f32 %v6486, %v7255
        %v7257 = vpop.f32.mrf.mxu0
        %v7258 = vadd.f32 %v6482, %v7257
        %v7259 = vpop.f32.mrf.mxu0
        %v7260 = vadd.f32 %v6486, %v7259
        %7261 = vmatprep.mubr.bf16.mxu0 %v6348
        %7262 = vmatmul.mubr.bf16.gmra.mxu0 %v6347
        %v7263 = vpop.f32.mrf.mxu0
        %v7264 = vadd.f32 %v6482, %v7263
        %v7265 = vpop.f32.mrf.mxu0
        %v7266 = vadd.f32 %v6486, %v7265
        %v7267 = vpop.f32.mrf.mxu0
        %v7268 = vadd.f32 %v6482, %v7267
        %v7269 = vpop.f32.mrf.mxu0
        %v7270 = vadd.f32 %v6486, %v7269
        %7271 = vdwg.mxu0
        %7272 = vmatprep.subr.bf16.mxu0 %v6962
        %7273 = vmatpush1.bf16.msra.mxu0 %v6961
        %7274 = vmatprep.subr.bf16.mxu0 %v6954
        %7275 = vmatpush1.bf16.msra.mxu0 %v6953
        %7276 = vmatprep.subr.bf16.mxu0 %v6946
        %7277 = vmatpush1.bf16.msra.mxu0 %v6945
        %7278 = vmatprep.subr.bf16.mxu0 %v6938
        %7279 = vmatpush1.bf16.msra.mxu0 %v6937
        %7280 = vmatprep.subr.bf16.mxu0 %v6930
        %7281 = vmatpush1.bf16.msra.mxu0 %v6929
        %7282 = vmatprep.subr.bf16.mxu0 %v6922
        %7283 = vmatpush1.bf16.msra.mxu0 %v6921
        %7284 = vmatprep.subr.bf16.mxu0 %v6914
        %7285 = vmatpush1.bf16.msra.mxu0 %v6913
        %7286 = vmatprep.subr.bf16.mxu0 %v6906
        %7287 = vmatpush1.bf16.msra.mxu0 %v6905
        %7288 = vmatprep.subr.bf16.mxu0 %v7026
        %7289 = vmatpush2.bf16.msra.mxu0 %v7025
        %7290 = vmatprep.subr.bf16.mxu0 %v7018
        %7291 = vmatpush2.bf16.msra.mxu0 %v7017
        %7292 = vmatprep.subr.bf16.mxu0 %v7010
        %7293 = vmatpush2.bf16.msra.mxu0 %v7009
        %7294 = vmatprep.subr.bf16.mxu0 %v7002
        %7295 = vmatpush2.bf16.msra.mxu0 %v7001
        %7296 = vmatprep.subr.bf16.mxu0 %v6994
        %7297 = vmatpush2.bf16.msra.mxu0 %v6993
        %7298 = vmatprep.subr.bf16.mxu0 %v6986
        %7299 = vmatpush2.bf16.msra.mxu0 %v6985
        %7300 = vmatprep.subr.bf16.mxu0 %v6978
        %7301 = vmatpush2.bf16.msra.mxu0 %v6977
        %7302 = vmatprep.subr.bf16.mxu0 %v6970
        %7303 = vmatpush2.bf16.msra.mxu0 %v6969
        %7304 = vmatprep.mubr.bf16.mxu0 %v6334
        %7305 = vmatmul.mubr.bf16.gmra.mxu0 %v6333
        %v7306 = vpop.f32.mrf.mxu0
        %v7307 = vadd.f32 %v6490, %v7306
        %v7308 = vpop.f32.mrf.mxu0
        %v7309 = vadd.f32 %v6494, %v7308
        %v7310 = vpop.f32.mrf.mxu0
        %v7311 = vadd.f32 %v6490, %v7310
        %v7312 = vpop.f32.mrf.mxu0
        %v7313 = vadd.f32 %v6494, %v7312
        %7314 = vmatprep.mubr.bf16.mxu0 %v6336
        %7315 = vmatmul.mubr.bf16.gmra.mxu0 %v6335
        %v7316 = vpop.f32.mrf.mxu0
        %v7317 = vadd.f32 %v6490, %v7316
        %v7318 = vpop.f32.mrf.mxu0
        %v7319 = vadd.f32 %v6494, %v7318
        %v7320 = vpop.f32.mrf.mxu0
        %v7321 = vadd.f32 %v6490, %v7320
        %v7322 = vpop.f32.mrf.mxu0
        %v7323 = vadd.f32 %v6494, %v7322
        %7324 = vmatprep.mubr.bf16.mxu0 %v6338
        %7325 = vmatmul.mubr.bf16.gmra.mxu0 %v6337
        %v7326 = vpop.f32.mrf.mxu0
        %v7327 = vadd.f32 %v6490, %v7326
        %v7328 = vpop.f32.mrf.mxu0
        %v7329 = vadd.f32 %v6494, %v7328
        %v7330 = vpop.f32.mrf.mxu0
        %v7331 = vadd.f32 %v6490, %v7330
        %v7332 = vpop.f32.mrf.mxu0
        %v7333 = vadd.f32 %v6494, %v7332
        %7334 = vmatprep.mubr.bf16.mxu0 %v6340
        %7335 = vmatmul.mubr.bf16.gmra.mxu0 %v6339
        %v7336 = vpop.f32.mrf.mxu0
        %v7337 = vadd.f32 %v6490, %v7336
        %v7338 = vpop.f32.mrf.mxu0
        %v7339 = vadd.f32 %v6494, %v7338
        %v7340 = vpop.f32.mrf.mxu0
        %v7341 = vadd.f32 %v6490, %v7340
        %v7342 = vpop.f32.mrf.mxu0
        %v7343 = vadd.f32 %v6494, %v7342
        %7344 = vmatprep.mubr.bf16.mxu0 %v6342
        %7345 = vmatmul.mubr.bf16.gmra.mxu0 %v6341
        %v7346 = vpop.f32.mrf.mxu0
        %v7347 = vadd.f32 %v6490, %v7346
        %v7348 = vpop.f32.mrf.mxu0
        %v7349 = vadd.f32 %v6494, %v7348
        %v7350 = vpop.f32.mrf.mxu0
        %v7351 = vadd.f32 %v6490, %v7350
        %v7352 = vpop.f32.mrf.mxu0
        %v7353 = vadd.f32 %v6494, %v7352
        %7354 = vmatprep.mubr.bf16.mxu0 %v6344
        %7355 = vmatmul.mubr.bf16.gmra.mxu0 %v6343
        %v7356 = vpop.f32.mrf.mxu0
        %v7357 = vadd.f32 %v6490, %v7356
        %v7358 = vpop.f32.mrf.mxu0
        %v7359 = vadd.f32 %v6494, %v7358
        %v7360 = vpop.f32.mrf.mxu0
        %v7361 = vadd.f32 %v6490, %v7360
        %v7362 = vpop.f32.mrf.mxu0
        %v7363 = vadd.f32 %v6494, %v7362
        %7364 = vmatprep.mubr.bf16.mxu0 %v6346
        %7365 = vmatmul.mubr.bf16.gmra.mxu0 %v6345
        %v7366 = vpop.f32.mrf.mxu0
        %v7367 = vadd.f32 %v6490, %v7366
        %v7368 = vpop.f32.mrf.mxu0
        %v7369 = vadd.f32 %v6494, %v7368
        %v7370 = vpop.f32.mrf.mxu0
        %v7371 = vadd.f32 %v6490, %v7370
        %v7372 = vpop.f32.mrf.mxu0
        %v7373 = vadd.f32 %v6494, %v7372
        %7374 = vmatprep.mubr.bf16.mxu0 %v6348
        %7375 = vmatmul.mubr.bf16.gmra.mxu0 %v6347
        %v7376 = vpop.f32.mrf.mxu0
        %v7377 = vadd.f32 %v6490, %v7376
        %v7378 = vpop.f32.mrf.mxu0
        %v7379 = vadd.f32 %v6494, %v7378
        %v7380 = vpop.f32.mrf.mxu0
        %v7381 = vadd.f32 %v6490, %v7380
        %v7382 = vpop.f32.mrf.mxu0
        %v7383 = vadd.f32 %v6494, %v7382
        %7384 = vdwg.mxu0
        %7385 = vmatprep.subr.bf16.mxu0 %v6964
        %7386 = vmatpush1.bf16.msra.mxu0 %v6963
        %7387 = vmatprep.subr.bf16.mxu0 %v6956
        %7388 = vmatpush1.bf16.msra.mxu0 %v6955
        %7389 = vmatprep.subr.bf16.mxu0 %v6948
        %7390 = vmatpush1.bf16.msra.mxu0 %v6947
        %7391 = vmatprep.subr.bf16.mxu0 %v6940
        %7392 = vmatpush1.bf16.msra.mxu0 %v6939
        %7393 = vmatprep.subr.bf16.mxu0 %v6932
        %7394 = vmatpush1.bf16.msra.mxu0 %v6931
        %7395 = vmatprep.subr.bf16.mxu0 %v6924
        %7396 = vmatpush1.bf16.msra.mxu0 %v6923
        %7397 = vmatprep.subr.bf16.mxu0 %v6916
        %7398 = vmatpush1.bf16.msra.mxu0 %v6915
        %7399 = vmatprep.subr.bf16.mxu0 %v6908
        %7400 = vmatpush1.bf16.msra.mxu0 %v6907
        %7401 = vmatprep.subr.bf16.mxu0 %v7028
        %7402 = vmatpush2.bf16.msra.mxu0 %v7027
        %7403 = vmatprep.subr.bf16.mxu0 %v7020
        %7404 = vmatpush2.bf16.msra.mxu0 %v7019
        %7405 = vmatprep.subr.bf16.mxu0 %v7012
        %7406 = vmatpush2.bf16.msra.mxu0 %v7011
        %7407 = vmatprep.subr.bf16.mxu0 %v7004
        %7408 = vmatpush2.bf16.msra.mxu0 %v7003
        %7409 = vmatprep.subr.bf16.mxu0 %v6996
        %7410 = vmatpush2.bf16.msra.mxu0 %v6995
        %7411 = vmatprep.subr.bf16.mxu0 %v6988
        %7412 = vmatpush2.bf16.msra.mxu0 %v6987
        %7413 = vmatprep.subr.bf16.mxu0 %v6980
        %7414 = vmatpush2.bf16.msra.mxu0 %v6979
        %7415 = vmatprep.subr.bf16.mxu0 %v6972
        %7416 = vmatpush2.bf16.msra.mxu0 %v6971
        %7417 = vmatprep.mubr.bf16.mxu0 %v6334
        %7418 = vmatmul.mubr.bf16.gmra.mxu0 %v6333
        %v7419 = vpop.f32.mrf.mxu0
        %v7420 = vadd.f32 %v6498, %v7419
        %v7421 = vpop.f32.mrf.mxu0
        %v7422 = vadd.f32 %v6502, %v7421
        %v7423 = vpop.f32.mrf.mxu0
        %v7424 = vadd.f32 %v6498, %v7423
        %v7425 = vpop.f32.mrf.mxu0
        %v7426 = vadd.f32 %v6502, %v7425
        %7427 = vmatprep.mubr.bf16.mxu0 %v6336
        %7428 = vmatmul.mubr.bf16.gmra.mxu0 %v6335
        %v7429 = vpop.f32.mrf.mxu0
        %v7430 = vadd.f32 %v6498, %v7429
        %v7431 = vpop.f32.mrf.mxu0
        %v7432 = vadd.f32 %v6502, %v7431
        %v7433 = vpop.f32.mrf.mxu0
        %v7434 = vadd.f32 %v6498, %v7433
        %v7435 = vpop.f32.mrf.mxu0
        %v7436 = vadd.f32 %v6502, %v7435
        %7437 = vmatprep.mubr.bf16.mxu0 %v6338
        %7438 = vmatmul.mubr.bf16.gmra.mxu0 %v6337
        %v7439 = vpop.f32.mrf.mxu0
        %v7440 = vadd.f32 %v6498, %v7439
        %v7441 = vpop.f32.mrf.mxu0
        %v7442 = vadd.f32 %v6502, %v7441
        %v7443 = vpop.f32.mrf.mxu0
        %v7444 = vadd.f32 %v6498, %v7443
        %v7445 = vpop.f32.mrf.mxu0
        %v7446 = vadd.f32 %v6502, %v7445
        %7447 = vmatprep.mubr.bf16.mxu0 %v6340
        %7448 = vmatmul.mubr.bf16.gmra.mxu0 %v6339
        %v7449 = vpop.f32.mrf.mxu0
        %v7450 = vadd.f32 %v6498, %v7449
        %v7451 = vpop.f32.mrf.mxu0
        %v7452 = vadd.f32 %v6502, %v7451
        %v7453 = vpop.f32.mrf.mxu0
        %v7454 = vadd.f32 %v6498, %v7453
        %v7455 = vpop.f32.mrf.mxu0
        %v7456 = vadd.f32 %v6502, %v7455
        %7457 = vmatprep.mubr.bf16.mxu0 %v6342
        %7458 = vmatmul.mubr.bf16.gmra.mxu0 %v6341
        %v7459 = vpop.f32.mrf.mxu0
        %v7460 = vadd.f32 %v6498, %v7459
        %v7461 = vpop.f32.mrf.mxu0
        %v7462 = vadd.f32 %v6502, %v7461
        %v7463 = vpop.f32.mrf.mxu0
        %v7464 = vadd.f32 %v6498, %v7463
        %v7465 = vpop.f32.mrf.mxu0
        %v7466 = vadd.f32 %v6502, %v7465
        %7467 = vmatprep.mubr.bf16.mxu0 %v6344
        %7468 = vmatmul.mubr.bf16.gmra.mxu0 %v6343
        %v7469 = vpop.f32.mrf.mxu0
        %v7470 = vadd.f32 %v6498, %v7469
        %v7471 = vpop.f32.mrf.mxu0
        %v7472 = vadd.f32 %v6502, %v7471
        %v7473 = vpop.f32.mrf.mxu0
        %v7474 = vadd.f32 %v6498, %v7473
        %v7475 = vpop.f32.mrf.mxu0
        %v7476 = vadd.f32 %v6502, %v7475
        %7477 = vmatprep.mubr.bf16.mxu0 %v6346
        %7478 = vmatmul.mubr.bf16.gmra.mxu0 %v6345
        %v7479 = vpop.f32.mrf.mxu0
        %v7480 = vadd.f32 %v6498, %v7479
        %v7481 = vpop.f32.mrf.mxu0
        %v7482 = vadd.f32 %v6502, %v7481
        %v7483 = vpop.f32.mrf.mxu0
        %v7484 = vadd.f32 %v6498, %v7483
        %v7485 = vpop.f32.mrf.mxu0
        %v7486 = vadd.f32 %v6502, %v7485
        %7487 = vmatprep.mubr.bf16.mxu0 %v6348
        %7488 = vmatmul.mubr.bf16.gmra.mxu0 %v6347
        %v7489 = vpop.f32.mrf.mxu0
        %v7490 = vadd.f32 %v6498, %v7489
        %v7491 = vpop.f32.mrf.mxu0
        %v7492 = vadd.f32 %v6502, %v7491
        %v7493 = vpop.f32.mrf.mxu0
        %v7494 = vadd.f32 %v6498, %v7493
        %v7495 = vpop.f32.mrf.mxu0
        %v7496 = vadd.f32 %v6502, %v7495
        %7497 = vdwg.mxu0
        %7498 = vmatprep.subr.bf16.mxu0 %v6966
        %7499 = vmatpush1.bf16.msra.mxu0 %v6965
        %7500 = vmatprep.subr.bf16.mxu0 %v6958
        %7501 = vmatpush1.bf16.msra.mxu0 %v6957
        %7502 = vmatprep.subr.bf16.mxu0 %v6950
        %7503 = vmatpush1.bf16.msra.mxu0 %v6949
        %7504 = vmatprep.subr.bf16.mxu0 %v6942
        %7505 = vmatpush1.bf16.msra.mxu0 %v6941
        %7506 = vmatprep.subr.bf16.mxu0 %v6934
        %7507 = vmatpush1.bf16.msra.mxu0 %v6933
        %7508 = vmatprep.subr.bf16.mxu0 %v6926
        %7509 = vmatpush1.bf16.msra.mxu0 %v6925
        %7510 = vmatprep.subr.bf16.mxu0 %v6918
        %7511 = vmatpush1.bf16.msra.mxu0 %v6917
        %7512 = vmatprep.subr.bf16.mxu0 %v6910
        %7513 = vmatpush1.bf16.msra.mxu0 %v6909
        %7514 = vmatprep.subr.bf16.mxu0 %v7030
        %7515 = vmatpush2.bf16.msra.mxu0 %v7029
        %7516 = vmatprep.subr.bf16.mxu0 %v7022
        %7517 = vmatpush2.bf16.msra.mxu0 %v7021
        %7518 = vmatprep.subr.bf16.mxu0 %v7014
        %7519 = vmatpush2.bf16.msra.mxu0 %v7013
        %7520 = vmatprep.subr.bf16.mxu0 %v7006
        %7521 = vmatpush2.bf16.msra.mxu0 %v7005
        %7522 = vmatprep.subr.bf16.mxu0 %v6998
        %7523 = vmatpush2.bf16.msra.mxu0 %v6997
        %7524 = vmatprep.subr.bf16.mxu0 %v6990
        %7525 = vmatpush2.bf16.msra.mxu0 %v6989
        %7526 = vmatprep.subr.bf16.mxu0 %v6982
        %7527 = vmatpush2.bf16.msra.mxu0 %v6981
        %7528 = vmatprep.subr.bf16.mxu0 %v6974
        %7529 = vmatpush2.bf16.msra.mxu0 %v6973
        %7530 = vmatprep.mubr.bf16.mxu0 %v6334
        %7531 = vmatmul.mubr.bf16.gmra.mxu0 %v6333
        %v7532 = vpop.f32.mrf.mxu0
        %v7533 = vadd.f32 %v6506, %v7532
        %v7534 = vpop.f32.mrf.mxu0
        %v7535 = vadd.f32 %v6510, %v7534
        %v7536 = vpop.f32.mrf.mxu0
        %v7537 = vadd.f32 %v6506, %v7536
        %v7538 = vpop.f32.mrf.mxu0
        %v7539 = vadd.f32 %v6510, %v7538
        %7540 = vmatprep.mubr.bf16.mxu0 %v6336
        %7541 = vmatmul.mubr.bf16.gmra.mxu0 %v6335
        %v7542 = vpop.f32.mrf.mxu0
        %v7543 = vadd.f32 %v6506, %v7542
        %v7544 = vpop.f32.mrf.mxu0
        %v7545 = vadd.f32 %v6510, %v7544
        %v7546 = vpop.f32.mrf.mxu0
        %v7547 = vadd.f32 %v6506, %v7546
        %v7548 = vpop.f32.mrf.mxu0
        %v7549 = vadd.f32 %v6510, %v7548
        %7550 = vmatprep.mubr.bf16.mxu0 %v6338
        %7551 = vmatmul.mubr.bf16.gmra.mxu0 %v6337
        %v7552 = vpop.f32.mrf.mxu0
        %v7553 = vadd.f32 %v6506, %v7552
        %v7554 = vpop.f32.mrf.mxu0
        %v7555 = vadd.f32 %v6510, %v7554
        %v7556 = vpop.f32.mrf.mxu0
        %v7557 = vadd.f32 %v6506, %v7556
        %v7558 = vpop.f32.mrf.mxu0
        %v7559 = vadd.f32 %v6510, %v7558
        %7560 = vmatprep.mubr.bf16.mxu0 %v6340
        %7561 = vmatmul.mubr.bf16.gmra.mxu0 %v6339
        %v7562 = vpop.f32.mrf.mxu0
        %v7563 = vadd.f32 %v6506, %v7562
        %v7564 = vpop.f32.mrf.mxu0
        %v7565 = vadd.f32 %v6510, %v7564
        %v7566 = vpop.f32.mrf.mxu0
        %v7567 = vadd.f32 %v6506, %v7566
        %v7568 = vpop.f32.mrf.mxu0
        %v7569 = vadd.f32 %v6510, %v7568
        %7570 = vmatprep.mubr.bf16.mxu0 %v6342
        %7571 = vmatmul.mubr.bf16.gmra.mxu0 %v6341
        %v7572 = vpop.f32.mrf.mxu0
        %v7573 = vadd.f32 %v6506, %v7572
        %v7574 = vpop.f32.mrf.mxu0
        %v7575 = vadd.f32 %v6510, %v7574
        %v7576 = vpop.f32.mrf.mxu0
        %v7577 = vadd.f32 %v6506, %v7576
        %v7578 = vpop.f32.mrf.mxu0
        %v7579 = vadd.f32 %v6510, %v7578
        %7580 = vmatprep.mubr.bf16.mxu0 %v6344
        %7581 = vmatmul.mubr.bf16.gmra.mxu0 %v6343
        %v7582 = vpop.f32.mrf.mxu0
        %v7583 = vadd.f32 %v6506, %v7582
        %v7584 = vpop.f32.mrf.mxu0
        %v7585 = vadd.f32 %v6510, %v7584
        %v7586 = vpop.f32.mrf.mxu0
        %v7587 = vadd.f32 %v6506, %v7586
        %v7588 = vpop.f32.mrf.mxu0
        %v7589 = vadd.f32 %v6510, %v7588
        %7590 = vmatprep.mubr.bf16.mxu0 %v6346
        %7591 = vmatmul.mubr.bf16.gmra.mxu0 %v6345
        %v7592 = vpop.f32.mrf.mxu0
        %v7593 = vadd.f32 %v6506, %v7592
        %v7594 = vpop.f32.mrf.mxu0
        %v7595 = vadd.f32 %v6510, %v7594
        %v7596 = vpop.f32.mrf.mxu0
        %v7597 = vadd.f32 %v6506, %v7596
        %v7598 = vpop.f32.mrf.mxu0
        %v7599 = vadd.f32 %v6510, %v7598
        %7600 = vmatprep.mubr.bf16.mxu0 %v6348
        %7601 = vmatmul.mubr.bf16.gmra.mxu0 %v6347
        %v7602 = vpop.f32.mrf.mxu0
        %v7603 = vadd.f32 %v6506, %v7602
        %v7604 = vpop.f32.mrf.mxu0
        %v7605 = vadd.f32 %v6510, %v7604
        %v7606 = vpop.f32.mrf.mxu0
        %v7607 = vadd.f32 %v6506, %v7606
        %v7608 = vpop.f32.mrf.mxu0
        %v7609 = vadd.f32 %v6510, %v7608
        %7610 = vdwg.mxu0
        %v7611 = vmul.f32 %v7194, 0.5
        %v7612 = vmul.f32 %v7196, 0.5
        %v7613 = vmul.f32 %v7307, 0.5
        %v7614 = vmul.f32 %v7309, 0.5
        %v7615 = vmul.f32 %v7420, 0.5
        %v7616 = vmul.f32 %v7422, 0.5
        %v7617 = vmul.f32 %v7533, 0.5
        %v7618 = vmul.f32 %v7535, 0.5
        %v7619 = vmul.f32 %v7198, 0.5
        %v7620 = vmul.f32 %v7200, 0.5
        %v7621 = vmul.f32 %v7311, 0.5
        %v7622 = vmul.f32 %v7313, 0.5
        %v7623 = vmul.f32 %v7424, 0.5
        %v7624 = vmul.f32 %v7426, 0.5
        %v7625 = vmul.f32 %v7537, 0.5
        %v7626 = vmul.f32 %v7539, 0.5
        %v7627 = vmul.f32 %v7204, 0.5
        %v7628 = vmul.f32 %v7206, 0.5
        %v7629 = vmul.f32 %v7317, 0.5
        %v7630 = vmul.f32 %v7319, 0.5
        %v7631 = vmul.f32 %v7430, 0.5
        %v7632 = vmul.f32 %v7432, 0.5
        %v7633 = vmul.f32 %v7543, 0.5
        %v7634 = vmul.f32 %v7545, 0.5
        %v7635 = vmul.f32 %v7208, 0.5
        %v7636 = vmul.f32 %v7210, 0.5
        %v7637 = vmul.f32 %v7321, 0.5
        %v7638 = vmul.f32 %v7323, 0.5
        %v7639 = vmul.f32 %v7434, 0.5
        %v7640 = vmul.f32 %v7436, 0.5
        %v7641 = vmul.f32 %v7547, 0.5
        %v7642 = vmul.f32 %v7549, 0.5
        %v7643 = vmul.f32 %v7214, 0.5
        %v7644 = vmul.f32 %v7216, 0.5
        %v7645 = vmul.f32 %v7327, 0.5
        %v7646 = vmul.f32 %v7329, 0.5
        %v7647 = vmul.f32 %v7440, 0.5
        %v7648 = vmul.f32 %v7442, 0.5
        %v7649 = vmul.f32 %v7553, 0.5
        %v7650 = vmul.f32 %v7555, 0.5
        %v7651 = vmul.f32 %v7218, 0.5
        %v7652 = vmul.f32 %v7220, 0.5
        %v7653 = vmul.f32 %v7331, 0.5
        %v7654 = vmul.f32 %v7333, 0.5
        %v7655 = vmul.f32 %v7444, 0.5
        %v7656 = vmul.f32 %v7446, 0.5
        %v7657 = vmul.f32 %v7557, 0.5
        %v7658 = vmul.f32 %v7559, 0.5
        %v7659 = vmul.f32 %v7224, 0.5
        %v7660 = vmul.f32 %v7226, 0.5
        %v7661 = vmul.f32 %v7337, 0.5
        %v7662 = vmul.f32 %v7339, 0.5
        %v7663 = vmul.f32 %v7450, 0.5
        %v7664 = vmul.f32 %v7452, 0.5
        %v7665 = vmul.f32 %v7563, 0.5
        %v7666 = vmul.f32 %v7565, 0.5
        %v7667 = vmul.f32 %v7228, 0.5
        %v7668 = vmul.f32 %v7230, 0.5
        %v7669 = vmul.f32 %v7341, 0.5
        %v7670 = vmul.f32 %v7343, 0.5
        %v7671 = vmul.f32 %v7454, 0.5
        %v7672 = vmul.f32 %v7456, 0.5
        %v7673 = vmul.f32 %v7567, 0.5
        %v7674 = vmul.f32 %v7569, 0.5
        %v7675 = vmul.f32 %v7234, 0.5
        %v7676 = vmul.f32 %v7236, 0.5
        %v7677 = vmul.f32 %v7347, 0.5
        %v7678 = vmul.f32 %v7349, 0.5
        %v7679 = vmul.f32 %v7460, 0.5
        %v7680 = vmul.f32 %v7462, 0.5
        %v7681 = vmul.f32 %v7573, 0.5
        %v7682 = vmul.f32 %v7575, 0.5
        %v7683 = vmul.f32 %v7238, 0.5
        %v7684 = vmul.f32 %v7240, 0.5
        %v7685 = vmul.f32 %v7351, 0.5
        %v7686 = vmul.f32 %v7353, 0.5
        %v7687 = vmul.f32 %v7464, 0.5
        %v7688 = vmul.f32 %v7466, 0.5
        %v7689 = vmul.f32 %v7577, 0.5
        %v7690 = vmul.f32 %v7579, 0.5
        %v7691 = vmul.f32 %v7244, 0.5
        %v7692 = vmul.f32 %v7246, 0.5
        %v7693 = vmul.f32 %v7357, 0.5
        %v7694 = vmul.f32 %v7359, 0.5
        %v7695 = vmul.f32 %v7470, 0.5
        %v7696 = vmul.f32 %v7472, 0.5
        %v7697 = vmul.f32 %v7583, 0.5
        %v7698 = vmul.f32 %v7585, 0.5
        %v7699 = vmul.f32 %v7248, 0.5
        %v7700 = vmul.f32 %v7250, 0.5
        %v7701 = vmul.f32 %v7361, 0.5
        %v7702 = vmul.f32 %v7363, 0.5
        %v7703 = vmul.f32 %v7474, 0.5
        %v7704 = vmul.f32 %v7476, 0.5
        %v7705 = vmul.f32 %v7587, 0.5
        %v7706 = vmul.f32 %v7589, 0.5
        %v7707 = vmul.f32 %v7254, 0.5
        %v7708 = vmul.f32 %v7256, 0.5
        %v7709 = vmul.f32 %v7367, 0.5
        %v7710 = vmul.f32 %v7369, 0.5
        %v7711 = vmul.f32 %v7480, 0.5
        %v7712 = vmul.f32 %v7482, 0.5
        %v7713 = vmul.f32 %v7593, 0.5
        %v7714 = vmul.f32 %v7595, 0.5
        %v7715 = vmul.f32 %v7258, 0.5
        %v7716 = vmul.f32 %v7260, 0.5
        %v7717 = vmul.f32 %v7371, 0.5
        %v7718 = vmul.f32 %v7373, 0.5
        %v7719 = vmul.f32 %v7484, 0.5
        %v7720 = vmul.f32 %v7486, 0.5
        %v7721 = vmul.f32 %v7597, 0.5
        %v7722 = vmul.f32 %v7599, 0.5
        %v7723 = vmul.f32 %v7264, 0.5
        %v7724 = vmul.f32 %v7266, 0.5
        %v7725 = vmul.f32 %v7377, 0.5
        %v7726 = vmul.f32 %v7379, 0.5
        %v7727 = vmul.f32 %v7490, 0.5
        %v7728 = vmul.f32 %v7492, 0.5
        %v7729 = vmul.f32 %v7603, 0.5
        %v7730 = vmul.f32 %v7605, 0.5
        %v7731 = vmul.f32 %v7268, 0.5
        %v7732 = vmul.f32 %v7270, 0.5
        %v7733 = vmul.f32 %v7381, 0.5
        %v7734 = vmul.f32 %v7383, 0.5
        %v7735 = vmul.f32 %v7494, 0.5
        %v7736 = vmul.f32 %v7496, 0.5
        %v7737 = vmul.f32 %v7607, 0.5
        %v7738 = vmul.f32 %v7609, 0.5
        %v7739 = vmul.f32 %v7194, 0.044715
        %v7740 = vmul.f32 %v7196, 0.044715
        %v7741 = vmul.f32 %v7307, 0.044715
        %v7742 = vmul.f32 %v7309, 0.044715
        %v7743 = vmul.f32 %v7420, 0.044715
        %v7744 = vmul.f32 %v7422, 0.044715
        %v7745 = vmul.f32 %v7533, 0.044715
        %v7746 = vmul.f32 %v7535, 0.044715
        %v7747 = vmul.f32 %v7198, 0.044715
        %v7748 = vmul.f32 %v7200, 0.044715
        %v7749 = vmul.f32 %v7311, 0.044715
        %v7750 = vmul.f32 %v7313, 0.044715
        %v7751 = vmul.f32 %v7424, 0.044715
        %v7752 = vmul.f32 %v7426, 0.044715
        %v7753 = vmul.f32 %v7537, 0.044715
        %v7754 = vmul.f32 %v7539, 0.044715
        %v7755 = vmul.f32 %v7204, 0.044715
        %v7756 = vmul.f32 %v7206, 0.044715
        %v7757 = vmul.f32 %v7317, 0.044715
        %v7758 = vmul.f32 %v7319, 0.044715
        %v7759 = vmul.f32 %v7430, 0.044715
        %v7760 = vmul.f32 %v7432, 0.044715
        %v7761 = vmul.f32 %v7543, 0.044715
        %v7762 = vmul.f32 %v7545, 0.044715
        %v7763 = vmul.f32 %v7208, 0.044715
        %v7764 = vmul.f32 %v7210, 0.044715
        %v7765 = vmul.f32 %v7321, 0.044715
        %v7766 = vmul.f32 %v7323, 0.044715
        %v7767 = vmul.f32 %v7434, 0.044715
        %v7768 = vmul.f32 %v7436, 0.044715
        %v7769 = vmul.f32 %v7547, 0.044715
        %v7770 = vmul.f32 %v7549, 0.044715
        %v7771 = vmul.f32 %v7214, 0.044715
        %v7772 = vmul.f32 %v7216, 0.044715
        %v7773 = vmul.f32 %v7327, 0.044715
        %v7774 = vmul.f32 %v7329, 0.044715
        %v7775 = vmul.f32 %v7440, 0.044715
        %v7776 = vmul.f32 %v7442, 0.044715
        %v7777 = vmul.f32 %v7553, 0.044715
        %v7778 = vmul.f32 %v7555, 0.044715
        %v7779 = vmul.f32 %v7218, 0.044715
        %v7780 = vmul.f32 %v7220, 0.044715
        %v7781 = vmul.f32 %v7331, 0.044715
        %v7782 = vmul.f32 %v7333, 0.044715
        %v7783 = vmul.f32 %v7444, 0.044715
        %v7784 = vmul.f32 %v7446, 0.044715
        %v7785 = vmul.f32 %v7557, 0.044715
        %v7786 = vmul.f32 %v7559, 0.044715
        %v7787 = vmul.f32 %v7224, 0.044715
        %v7788 = vmul.f32 %v7226, 0.044715
        %v7789 = vmul.f32 %v7337, 0.044715
        %v7790 = vmul.f32 %v7339, 0.044715
        %v7791 = vmul.f32 %v7450, 0.044715
        %v7792 = vmul.f32 %v7452, 0.044715
        %v7793 = vmul.f32 %v7563, 0.044715
        %v7794 = vmul.f32 %v7565, 0.044715
        %v7795 = vmul.f32 %v7228, 0.044715
        %v7796 = vmul.f32 %v7230, 0.044715
        %v7797 = vmul.f32 %v7341, 0.044715
        %v7798 = vmul.f32 %v7343, 0.044715
        %v7799 = vmul.f32 %v7454, 0.044715
        %v7800 = vmul.f32 %v7456, 0.044715
        %v7801 = vmul.f32 %v7567, 0.044715
        %v7802 = vmul.f32 %v7569, 0.044715
        %v7803 = vmul.f32 %v7234, 0.044715
        %v7804 = vmul.f32 %v7236, 0.044715
        %v7805 = vmul.f32 %v7347, 0.044715
        %v7806 = vmul.f32 %v7349, 0.044715
        %v7807 = vmul.f32 %v7460, 0.044715
        %v7808 = vmul.f32 %v7462, 0.044715
        %v7809 = vmul.f32 %v7573, 0.044715
        %v7810 = vmul.f32 %v7575, 0.044715
        %v7811 = vmul.f32 %v7238, 0.044715
        %v7812 = vmul.f32 %v7240, 0.044715
        %v7813 = vmul.f32 %v7351, 0.044715
        %v7814 = vmul.f32 %v7353, 0.044715
        %v7815 = vmul.f32 %v7464, 0.044715
        %v7816 = vmul.f32 %v7466, 0.044715
        %v7817 = vmul.f32 %v7577, 0.044715
        %v7818 = vmul.f32 %v7579, 0.044715
        %v7819 = vmul.f32 %v7244, 0.044715
        %v7820 = vmul.f32 %v7246, 0.044715
        %v7821 = vmul.f32 %v7357, 0.044715
        %v7822 = vmul.f32 %v7359, 0.044715
        %v7823 = vmul.f32 %v7470, 0.044715
        %v7824 = vmul.f32 %v7472, 0.044715
        %v7825 = vmul.f32 %v7583, 0.044715
        %v7826 = vmul.f32 %v7585, 0.044715
        %v7827 = vmul.f32 %v7248, 0.044715
        %v7828 = vmul.f32 %v7250, 0.044715
        %v7829 = vmul.f32 %v7361, 0.044715
        %v7830 = vmul.f32 %v7363, 0.044715
        %v7831 = vmul.f32 %v7474, 0.044715
        %v7832 = vmul.f32 %v7476, 0.044715
        %v7833 = vmul.f32 %v7587, 0.044715
        %v7834 = vmul.f32 %v7589, 0.044715
        %v7835 = vmul.f32 %v7254, 0.044715
        %v7836 = vmul.f32 %v7256, 0.044715
        %v7837 = vmul.f32 %v7367, 0.044715
        %v7838 = vmul.f32 %v7369, 0.044715
        %v7839 = vmul.f32 %v7480, 0.044715
        %v7840 = vmul.f32 %v7482, 0.044715
        %v7841 = vmul.f32 %v7593, 0.044715
        %v7842 = vmul.f32 %v7595, 0.044715
        %v7843 = vmul.f32 %v7258, 0.044715
        %v7844 = vmul.f32 %v7260, 0.044715
        %v7845 = vmul.f32 %v7371, 0.044715
        %v7846 = vmul.f32 %v7373, 0.044715
        %v7847 = vmul.f32 %v7484, 0.044715
        %v7848 = vmul.f32 %v7486, 0.044715
        %v7849 = vmul.f32 %v7597, 0.044715
        %v7850 = vmul.f32 %v7599, 0.044715
        %v7851 = vmul.f32 %v7264, 0.044715
        %v7852 = vmul.f32 %v7266, 0.044715
        %v7853 = vmul.f32 %v7377, 0.044715
        %v7854 = vmul.f32 %v7379, 0.044715
        %v7855 = vmul.f32 %v7490, 0.044715
        %v7856 = vmul.f32 %v7492, 0.044715
        %v7857 = vmul.f32 %v7603, 0.044715
        %v7858 = vmul.f32 %v7605, 0.044715
        %v7859 = vmul.f32 %v7268, 0.044715
        %v7860 = vmul.f32 %v7270, 0.044715
        %v7861 = vmul.f32 %v7381, 0.044715
        %v7862 = vmul.f32 %v7383, 0.044715
        %v7863 = vmul.f32 %v7494, 0.044715
        %v7864 = vmul.f32 %v7496, 0.044715
        %v7865 = vmul.f32 %v7607, 0.044715
        %v7866 = vmul.f32 %v7609, 0.044715
        %v7867 = vmul.f32 %v7739, %v7194
        %v7868 = vmul.f32 %v7740, %v7196
        %v7869 = vmul.f32 %v7741, %v7307
        %v7870 = vmul.f32 %v7742, %v7309
        %v7871 = vmul.f32 %v7743, %v7420
        %v7872 = vmul.f32 %v7744, %v7422
        %v7873 = vmul.f32 %v7745, %v7533
        %v7874 = vmul.f32 %v7746, %v7535
        %v7875 = vmul.f32 %v7747, %v7198
        %v7876 = vmul.f32 %v7748, %v7200
        %v7877 = vmul.f32 %v7749, %v7311
        %v7878 = vmul.f32 %v7750, %v7313
        %v7879 = vmul.f32 %v7751, %v7424
        %v7880 = vmul.f32 %v7752, %v7426
        %v7881 = vmul.f32 %v7753, %v7537
        %v7882 = vmul.f32 %v7754, %v7539
        %v7883 = vmul.f32 %v7755, %v7204
        %v7884 = vmul.f32 %v7756, %v7206
        %v7885 = vmul.f32 %v7757, %v7317
        %v7886 = vmul.f32 %v7758, %v7319
        %v7887 = vmul.f32 %v7759, %v7430
        %v7888 = vmul.f32 %v7760, %v7432
        %v7889 = vmul.f32 %v7761, %v7543
        %v7890 = vmul.f32 %v7762, %v7545
        %v7891 = vmul.f32 %v7763, %v7208
        %v7892 = vmul.f32 %v7764, %v7210
        %v7893 = vmul.f32 %v7765, %v7321
        %v7894 = vmul.f32 %v7766, %v7323
        %v7895 = vmul.f32 %v7767, %v7434
        %v7896 = vmul.f32 %v7768, %v7436
        %v7897 = vmul.f32 %v7769, %v7547
        %v7898 = vmul.f32 %v7770, %v7549
        %v7899 = vmul.f32 %v7771, %v7214
        %v7900 = vmul.f32 %v7772, %v7216
        %v7901 = vmul.f32 %v7773, %v7327
        %v7902 = vmul.f32 %v7774, %v7329
        %v7903 = vmul.f32 %v7775, %v7440
        %v7904 = vmul.f32 %v7776, %v7442
        %v7905 = vmul.f32 %v7777, %v7553
        %v7906 = vmul.f32 %v7778, %v7555
        %v7907 = vmul.f32 %v7779, %v7218
        %v7908 = vmul.f32 %v7780, %v7220
        %v7909 = vmul.f32 %v7781, %v7331
        %v7910 = vmul.f32 %v7782, %v7333
        %v7911 = vmul.f32 %v7783, %v7444
        %v7912 = vmul.f32 %v7784, %v7446
        %v7913 = vmul.f32 %v7785, %v7557
        %v7914 = vmul.f32 %v7786, %v7559
        %v7915 = vmul.f32 %v7787, %v7224
        %v7916 = vmul.f32 %v7788, %v7226
        %v7917 = vmul.f32 %v7789, %v7337
        %v7918 = vmul.f32 %v7790, %v7339
        %v7919 = vmul.f32 %v7791, %v7450
        %v7920 = vmul.f32 %v7792, %v7452
        %v7921 = vmul.f32 %v7793, %v7563
        %v7922 = vmul.f32 %v7794, %v7565
        %v7923 = vmul.f32 %v7795, %v7228
        %v7924 = vmul.f32 %v7796, %v7230
        %v7925 = vmul.f32 %v7797, %v7341
        %v7926 = vmul.f32 %v7798, %v7343
        %v7927 = vmul.f32 %v7799, %v7454
        %v7928 = vmul.f32 %v7800, %v7456
        %v7929 = vmul.f32 %v7801, %v7567
        %v7930 = vmul.f32 %v7802, %v7569
        %v7931 = vmul.f32 %v7803, %v7234
        %v7932 = vmul.f32 %v7804, %v7236
        %v7933 = vmul.f32 %v7805, %v7347
        %v7934 = vmul.f32 %v7806, %v7349
        %v7935 = vmul.f32 %v7807, %v7460
        %v7936 = vmul.f32 %v7808, %v7462
        %v7937 = vmul.f32 %v7809, %v7573
        %v7938 = vmul.f32 %v7810, %v7575
        %v7939 = vmul.f32 %v7811, %v7238
        %v7940 = vmul.f32 %v7812, %v7240
        %v7941 = vmul.f32 %v7813, %v7351
        %v7942 = vmul.f32 %v7814, %v7353
        %v7943 = vmul.f32 %v7815, %v7464
        %v7944 = vmul.f32 %v7816, %v7466
        %v7945 = vmul.f32 %v7817, %v7577
        %v7946 = vmul.f32 %v7818, %v7579
        %v7947 = vmul.f32 %v7819, %v7244
        %v7948 = vmul.f32 %v7820, %v7246
        %v7949 = vmul.f32 %v7821, %v7357
        %v7950 = vmul.f32 %v7822, %v7359
        %v7951 = vmul.f32 %v7823, %v7470
        %v7952 = vmul.f32 %v7824, %v7472
        %v7953 = vmul.f32 %v7825, %v7583
        %v7954 = vmul.f32 %v7826, %v7585
        %v7955 = vmul.f32 %v7827, %v7248
        %v7956 = vmul.f32 %v7828, %v7250
        %v7957 = vmul.f32 %v7829, %v7361
        %v7958 = vmul.f32 %v7830, %v7363
        %v7959 = vmul.f32 %v7831, %v7474
        %v7960 = vmul.f32 %v7832, %v7476
        %v7961 = vmul.f32 %v7833, %v7587
        %v7962 = vmul.f32 %v7834, %v7589
        %v7963 = vmul.f32 %v7835, %v7254
        %v7964 = vmul.f32 %v7836, %v7256
        %v7965 = vmul.f32 %v7837, %v7367
        %v7966 = vmul.f32 %v7838, %v7369
        %v7967 = vmul.f32 %v7839, %v7480
        %v7968 = vmul.f32 %v7840, %v7482
        %v7969 = vmul.f32 %v7841, %v7593
        %v7970 = vmul.f32 %v7842, %v7595
        %v7971 = vmul.f32 %v7843, %v7258
        %v7972 = vmul.f32 %v7844, %v7260
        %v7973 = vmul.f32 %v7845, %v7371
        %v7974 = vmul.f32 %v7846, %v7373
        %v7975 = vmul.f32 %v7847, %v7484
        %v7976 = vmul.f32 %v7848, %v7486
        %v7977 = vmul.f32 %v7849, %v7597
        %v7978 = vmul.f32 %v7850, %v7599
        %v7979 = vmul.f32 %v7851, %v7264
        %v7980 = vmul.f32 %v7852, %v7266
        %v7981 = vmul.f32 %v7853, %v7377
        %v7982 = vmul.f32 %v7854, %v7379
        %v7983 = vmul.f32 %v7855, %v7490
        %v7984 = vmul.f32 %v7856, %v7492
        %v7985 = vmul.f32 %v7857, %v7603
        %v7986 = vmul.f32 %v7858, %v7605
        %v7987 = vmul.f32 %v7859, %v7268
        %v7988 = vmul.f32 %v7860, %v7270
        %v7989 = vmul.f32 %v7861, %v7381
        %v7990 = vmul.f32 %v7862, %v7383
        %v7991 = vmul.f32 %v7863, %v7494
        %v7992 = vmul.f32 %v7864, %v7496
        %v7993 = vmul.f32 %v7865, %v7607
        %v7994 = vmul.f32 %v7866, %v7609
        %v7995 = vmul.f32 %v7867, %v7194
        %v7996 = vmul.f32 %v7868, %v7196
        %v7997 = vmul.f32 %v7869, %v7307
        %v7998 = vmul.f32 %v7870, %v7309
        %v7999 = vmul.f32 %v7871, %v7420
        %v8000 = vmul.f32 %v7872, %v7422
        %v8001 = vmul.f32 %v7873, %v7533
        %v8002 = vmul.f32 %v7874, %v7535
        %v8003 = vmul.f32 %v7875, %v7198
        %v8004 = vmul.f32 %v7876, %v7200
        %v8005 = vmul.f32 %v7877, %v7311
        %v8006 = vmul.f32 %v7878, %v7313
        %v8007 = vmul.f32 %v7879, %v7424
        %v8008 = vmul.f32 %v7880, %v7426
        %v8009 = vmul.f32 %v7881, %v7537
        %v8010 = vmul.f32 %v7882, %v7539
        %v8011 = vmul.f32 %v7883, %v7204
        %v8012 = vmul.f32 %v7884, %v7206
        %v8013 = vmul.f32 %v7885, %v7317
        %v8014 = vmul.f32 %v7886, %v7319
        %v8015 = vmul.f32 %v7887, %v7430
        %v8016 = vmul.f32 %v7888, %v7432
        %v8017 = vmul.f32 %v7889, %v7543
        %v8018 = vmul.f32 %v7890, %v7545
        %v8019 = vmul.f32 %v7891, %v7208
        %v8020 = vmul.f32 %v7892, %v7210
        %v8021 = vmul.f32 %v7893, %v7321
        %v8022 = vmul.f32 %v7894, %v7323
        %v8023 = vmul.f32 %v7895, %v7434
        %v8024 = vmul.f32 %v7896, %v7436
        %v8025 = vmul.f32 %v7897, %v7547
        %v8026 = vmul.f32 %v7898, %v7549
        %v8027 = vmul.f32 %v7899, %v7214
        %v8028 = vmul.f32 %v7900, %v7216
        %v8029 = vmul.f32 %v7901, %v7327
        %v8030 = vmul.f32 %v7902, %v7329
        %v8031 = vmul.f32 %v7903, %v7440
        %v8032 = vmul.f32 %v7904, %v7442
        %v8033 = vmul.f32 %v7905, %v7553
        %v8034 = vmul.f32 %v7906, %v7555
        %v8035 = vmul.f32 %v7907, %v7218
        %v8036 = vmul.f32 %v7908, %v7220
        %v8037 = vmul.f32 %v7909, %v7331
        %v8038 = vmul.f32 %v7910, %v7333
        %v8039 = vmul.f32 %v7911, %v7444
        %v8040 = vmul.f32 %v7912, %v7446
        %v8041 = vmul.f32 %v7913, %v7557
        %v8042 = vmul.f32 %v7914, %v7559
        %v8043 = vmul.f32 %v7915, %v7224
        %v8044 = vmul.f32 %v7916, %v7226
        %v8045 = vmul.f32 %v7917, %v7337
        %v8046 = vmul.f32 %v7918, %v7339
        %v8047 = vmul.f32 %v7919, %v7450
        %v8048 = vmul.f32 %v7920, %v7452
        %v8049 = vmul.f32 %v7921, %v7563
        %v8050 = vmul.f32 %v7922, %v7565
        %v8051 = vmul.f32 %v7923, %v7228
        %v8052 = vmul.f32 %v7924, %v7230
        %v8053 = vmul.f32 %v7925, %v7341
        %v8054 = vmul.f32 %v7926, %v7343
        %v8055 = vmul.f32 %v7927, %v7454
        %v8056 = vmul.f32 %v7928, %v7456
        %v8057 = vmul.f32 %v7929, %v7567
        %v8058 = vmul.f32 %v7930, %v7569
        %v8059 = vmul.f32 %v7931, %v7234
        %v8060 = vmul.f32 %v7932, %v7236
        %v8061 = vmul.f32 %v7933, %v7347
        %v8062 = vmul.f32 %v7934, %v7349
        %v8063 = vmul.f32 %v7935, %v7460
        %v8064 = vmul.f32 %v7936, %v7462
        %v8065 = vmul.f32 %v7937, %v7573
        %v8066 = vmul.f32 %v7938, %v7575
        %v8067 = vmul.f32 %v7939, %v7238
        %v8068 = vmul.f32 %v7940, %v7240
        %v8069 = vmul.f32 %v7941, %v7351
        %v8070 = vmul.f32 %v7942, %v7353
        %v8071 = vmul.f32 %v7943, %v7464
        %v8072 = vmul.f32 %v7944, %v7466
        %v8073 = vmul.f32 %v7945, %v7577
        %v8074 = vmul.f32 %v7946, %v7579
        %v8075 = vmul.f32 %v7947, %v7244
        %v8076 = vmul.f32 %v7948, %v7246
        %v8077 = vmul.f32 %v7949, %v7357
        %v8078 = vmul.f32 %v7950, %v7359
        %v8079 = vmul.f32 %v7951, %v7470
        %v8080 = vmul.f32 %v7952, %v7472
        %v8081 = vmul.f32 %v7953, %v7583
        %v8082 = vmul.f32 %v7954, %v7585
        %v8083 = vmul.f32 %v7955, %v7248
        %v8084 = vmul.f32 %v7956, %v7250
        %v8085 = vmul.f32 %v7957, %v7361
        %v8086 = vmul.f32 %v7958, %v7363
        %v8087 = vmul.f32 %v7959, %v7474
        %v8088 = vmul.f32 %v7960, %v7476
        %v8089 = vmul.f32 %v7961, %v7587
        %v8090 = vmul.f32 %v7962, %v7589
        %v8091 = vmul.f32 %v7963, %v7254
        %v8092 = vmul.f32 %v7964, %v7256
        %v8093 = vmul.f32 %v7965, %v7367
        %v8094 = vmul.f32 %v7966, %v7369
        %v8095 = vmul.f32 %v7967, %v7480
        %v8096 = vmul.f32 %v7968, %v7482
        %v8097 = vmul.f32 %v7969, %v7593
        %v8098 = vmul.f32 %v7970, %v7595
        %v8099 = vmul.f32 %v7971, %v7258
        %v8100 = vmul.f32 %v7972, %v7260
        %v8101 = vmul.f32 %v7973, %v7371
        %v8102 = vmul.f32 %v7974, %v7373
        %v8103 = vmul.f32 %v7975, %v7484
        %v8104 = vmul.f32 %v7976, %v7486
        %v8105 = vmul.f32 %v7977, %v7597
        %v8106 = vmul.f32 %v7978, %v7599
        %v8107 = vmul.f32 %v7979, %v7264
        %v8108 = vmul.f32 %v7980, %v7266
        %v8109 = vmul.f32 %v7981, %v7377
        %v8110 = vmul.f32 %v7982, %v7379
        %v8111 = vmul.f32 %v7983, %v7490
        %v8112 = vmul.f32 %v7984, %v7492
        %v8113 = vmul.f32 %v7985, %v7603
        %v8114 = vmul.f32 %v7986, %v7605
        %v8115 = vmul.f32 %v7987, %v7268
        %v8116 = vmul.f32 %v7988, %v7270
        %v8117 = vmul.f32 %v7989, %v7381
        %v8118 = vmul.f32 %v7990, %v7383
        %v8119 = vmul.f32 %v7991, %v7494
        %v8120 = vmul.f32 %v7992, %v7496
        %v8121 = vmul.f32 %v7993, %v7607
        %v8122 = vmul.f32 %v7994, %v7609
        %v8123 = vadd.f32 %v7194, %v7995
        %v8124 = vadd.f32 %v7196, %v7996
        %v8125 = vadd.f32 %v7307, %v7997
        %v8126 = vadd.f32 %v7309, %v7998
        %v8127 = vadd.f32 %v7420, %v7999
        %v8128 = vadd.f32 %v7422, %v8000
        %v8129 = vadd.f32 %v7533, %v8001
        %v8130 = vadd.f32 %v7535, %v8002
        %v8131 = vadd.f32 %v7198, %v8003
        %v8132 = vadd.f32 %v7200, %v8004
        %v8133 = vadd.f32 %v7311, %v8005
        %v8134 = vadd.f32 %v7313, %v8006
        %v8135 = vadd.f32 %v7424, %v8007
        %v8136 = vadd.f32 %v7426, %v8008
        %v8137 = vadd.f32 %v7537, %v8009
        %v8138 = vadd.f32 %v7539, %v8010
        %v8139 = vadd.f32 %v7204, %v8011
        %v8140 = vadd.f32 %v7206, %v8012
        %v8141 = vadd.f32 %v7317, %v8013
        %v8142 = vadd.f32 %v7319, %v8014
        %v8143 = vadd.f32 %v7430, %v8015
        %v8144 = vadd.f32 %v7432, %v8016
        %v8145 = vadd.f32 %v7543, %v8017
        %v8146 = vadd.f32 %v7545, %v8018
        %v8147 = vadd.f32 %v7208, %v8019
        %v8148 = vadd.f32 %v7210, %v8020
        %v8149 = vadd.f32 %v7321, %v8021
        %v8150 = vadd.f32 %v7323, %v8022
        %v8151 = vadd.f32 %v7434, %v8023
        %v8152 = vadd.f32 %v7436, %v8024
        %v8153 = vadd.f32 %v7547, %v8025
        %v8154 = vadd.f32 %v7549, %v8026
        %v8155 = vadd.f32 %v7214, %v8027
        %v8156 = vadd.f32 %v7216, %v8028
        %v8157 = vadd.f32 %v7327, %v8029
        %v8158 = vadd.f32 %v7329, %v8030
        %v8159 = vadd.f32 %v7440, %v8031
        %v8160 = vadd.f32 %v7442, %v8032
        %v8161 = vadd.f32 %v7553, %v8033
        %v8162 = vadd.f32 %v7555, %v8034
        %v8163 = vadd.f32 %v7218, %v8035
        %v8164 = vadd.f32 %v7220, %v8036
        %v8165 = vadd.f32 %v7331, %v8037
        %v8166 = vadd.f32 %v7333, %v8038
        %v8167 = vadd.f32 %v7444, %v8039
        %v8168 = vadd.f32 %v7446, %v8040
        %v8169 = vadd.f32 %v7557, %v8041
        %v8170 = vadd.f32 %v7559, %v8042
        %v8171 = vadd.f32 %v7224, %v8043
        %v8172 = vadd.f32 %v7226, %v8044
        %v8173 = vadd.f32 %v7337, %v8045
        %v8174 = vadd.f32 %v7339, %v8046
        %v8175 = vadd.f32 %v7450, %v8047
        %v8176 = vadd.f32 %v7452, %v8048
        %v8177 = vadd.f32 %v7563, %v8049
        %v8178 = vadd.f32 %v7565, %v8050
        %v8179 = vadd.f32 %v7228, %v8051
        %v8180 = vadd.f32 %v7230, %v8052
        %v8181 = vadd.f32 %v7341, %v8053
        %v8182 = vadd.f32 %v7343, %v8054
        %v8183 = vadd.f32 %v7454, %v8055
        %v8184 = vadd.f32 %v7456, %v8056
        %v8185 = vadd.f32 %v7567, %v8057
        %v8186 = vadd.f32 %v7569, %v8058
        %v8187 = vadd.f32 %v7234, %v8059
        %v8188 = vadd.f32 %v7236, %v8060
        %v8189 = vadd.f32 %v7347, %v8061
        %v8190 = vadd.f32 %v7349, %v8062
        %v8191 = vadd.f32 %v7460, %v8063
        %v8192 = vadd.f32 %v7462, %v8064
        %v8193 = vadd.f32 %v7573, %v8065
        %v8194 = vadd.f32 %v7575, %v8066
        %v8195 = vadd.f32 %v7238, %v8067
        %v8196 = vadd.f32 %v7240, %v8068
        %v8197 = vadd.f32 %v7351, %v8069
        %v8198 = vadd.f32 %v7353, %v8070
        %v8199 = vadd.f32 %v7464, %v8071
        %v8200 = vadd.f32 %v7466, %v8072
        %v8201 = vadd.f32 %v7577, %v8073
        %v8202 = vadd.f32 %v7579, %v8074
        %v8203 = vadd.f32 %v7244, %v8075
        %v8204 = vadd.f32 %v7246, %v8076
        %v8205 = vadd.f32 %v7357, %v8077
        %v8206 = vadd.f32 %v7359, %v8078
        %v8207 = vadd.f32 %v7470, %v8079
        %v8208 = vadd.f32 %v7472, %v8080
        %v8209 = vadd.f32 %v7583, %v8081
        %v8210 = vadd.f32 %v7585, %v8082
        %v8211 = vadd.f32 %v7248, %v8083
        %v8212 = vadd.f32 %v7250, %v8084
        %v8213 = vadd.f32 %v7361, %v8085
        %v8214 = vadd.f32 %v7363, %v8086
        %v8215 = vadd.f32 %v7474, %v8087
        %v8216 = vadd.f32 %v7476, %v8088
        %v8217 = vadd.f32 %v7587, %v8089
        %v8218 = vadd.f32 %v7589, %v8090
        %v8219 = vadd.f32 %v7254, %v8091
        %v8220 = vadd.f32 %v7256, %v8092
        %v8221 = vadd.f32 %v7367, %v8093
        %v8222 = vadd.f32 %v7369, %v8094
        %v8223 = vadd.f32 %v7480, %v8095
        %v8224 = vadd.f32 %v7482, %v8096
        %v8225 = vadd.f32 %v7593, %v8097
        %v8226 = vadd.f32 %v7595, %v8098
        %v8227 = vadd.f32 %v7258, %v8099
        %v8228 = vadd.f32 %v7260, %v8100
        %v8229 = vadd.f32 %v7371, %v8101
        %v8230 = vadd.f32 %v7373, %v8102
        %v8231 = vadd.f32 %v7484, %v8103
        %v8232 = vadd.f32 %v7486, %v8104
        %v8233 = vadd.f32 %v7597, %v8105
        %v8234 = vadd.f32 %v7599, %v8106
        %v8235 = vadd.f32 %v7264, %v8107
        %v8236 = vadd.f32 %v7266, %v8108
        %v8237 = vadd.f32 %v7377, %v8109
        %v8238 = vadd.f32 %v7379, %v8110
        %v8239 = vadd.f32 %v7490, %v8111
        %v8240 = vadd.f32 %v7492, %v8112
        %v8241 = vadd.f32 %v7603, %v8113
        %v8242 = vadd.f32 %v7605, %v8114
        %v8243 = vadd.f32 %v7268, %v8115
        %v8244 = vadd.f32 %v7270, %v8116
        %v8245 = vadd.f32 %v7381, %v8117
        %v8246 = vadd.f32 %v7383, %v8118
        %v8247 = vadd.f32 %v7494, %v8119
        %v8248 = vadd.f32 %v7496, %v8120
        %v8249 = vadd.f32 %v7607, %v8121
        %v8250 = vadd.f32 %v7609, %v8122
        %v8251 = vmul.f32 %v8123, 0.7978846
        %v8252 = vmul.f32 %v8124, 0.7978846
        %v8253 = vmul.f32 %v8125, 0.7978846
        %v8254 = vmul.f32 %v8126, 0.7978846
        %v8255 = vmul.f32 %v8127, 0.7978846
        %v8256 = vmul.f32 %v8128, 0.7978846
        %v8257 = vmul.f32 %v8129, 0.7978846
        %v8258 = vmul.f32 %v8130, 0.7978846
        %v8259 = vmul.f32 %v8131, 0.7978846
        %v8260 = vmul.f32 %v8132, 0.7978846
        %v8261 = vmul.f32 %v8133, 0.7978846
        %v8262 = vmul.f32 %v8134, 0.7978846
        %v8263 = vmul.f32 %v8135, 0.7978846
        %v8264 = vmul.f32 %v8136, 0.7978846
        %v8265 = vmul.f32 %v8137, 0.7978846
        %v8266 = vmul.f32 %v8138, 0.7978846
        %v8267 = vmul.f32 %v8139, 0.7978846
        %v8268 = vmul.f32 %v8140, 0.7978846
        %v8269 = vmul.f32 %v8141, 0.7978846
        %v8270 = vmul.f32 %v8142, 0.7978846
        %v8271 = vmul.f32 %v8143, 0.7978846
        %v8272 = vmul.f32 %v8144, 0.7978846
        %v8273 = vmul.f32 %v8145, 0.7978846
        %v8274 = vmul.f32 %v8146, 0.7978846
        %v8275 = vmul.f32 %v8147, 0.7978846
        %v8276 = vmul.f32 %v8148, 0.7978846
        %v8277 = vmul.f32 %v8149, 0.7978846
        %v8278 = vmul.f32 %v8150, 0.7978846
        %v8279 = vmul.f32 %v8151, 0.7978846
        %v8280 = vmul.f32 %v8152, 0.7978846
        %v8281 = vmul.f32 %v8153, 0.7978846
        %v8282 = vmul.f32 %v8154, 0.7978846
        %v8283 = vmul.f32 %v8155, 0.7978846
        %v8284 = vmul.f32 %v8156, 0.7978846
        %v8285 = vmul.f32 %v8157, 0.7978846
        %v8286 = vmul.f32 %v8158, 0.7978846
        %v8287 = vmul.f32 %v8159, 0.7978846
        %v8288 = vmul.f32 %v8160, 0.7978846
        %v8289 = vmul.f32 %v8161, 0.7978846
        %v8290 = vmul.f32 %v8162, 0.7978846
        %v8291 = vmul.f32 %v8163, 0.7978846
        %v8292 = vmul.f32 %v8164, 0.7978846
        %v8293 = vmul.f32 %v8165, 0.7978846
        %v8294 = vmul.f32 %v8166, 0.7978846
        %v8295 = vmul.f32 %v8167, 0.7978846
        %v8296 = vmul.f32 %v8168, 0.7978846
        %v8297 = vmul.f32 %v8169, 0.7978846
        %v8298 = vmul.f32 %v8170, 0.7978846
        %v8299 = vmul.f32 %v8171, 0.7978846
        %v8300 = vmul.f32 %v8172, 0.7978846
        %v8301 = vmul.f32 %v8173, 0.7978846
        %v8302 = vmul.f32 %v8174, 0.7978846
        %v8303 = vmul.f32 %v8175, 0.7978846
        %v8304 = vmul.f32 %v8176, 0.7978846
        %v8305 = vmul.f32 %v8177, 0.7978846
        %v8306 = vmul.f32 %v8178, 0.7978846
        %v8307 = vmul.f32 %v8179, 0.7978846
        %v8308 = vmul.f32 %v8180, 0.7978846
        %v8309 = vmul.f32 %v8181, 0.7978846
        %v8310 = vmul.f32 %v8182, 0.7978846
        %v8311 = vmul.f32 %v8183, 0.7978846
        %v8312 = vmul.f32 %v8184, 0.7978846
        %v8313 = vmul.f32 %v8185, 0.7978846
        %v8314 = vmul.f32 %v8186, 0.7978846
        %v8315 = vmul.f32 %v8187, 0.7978846
        %v8316 = vmul.f32 %v8188, 0.7978846
        %v8317 = vmul.f32 %v8189, 0.7978846
        %v8318 = vmul.f32 %v8190, 0.7978846
        %v8319 = vmul.f32 %v8191, 0.7978846
        %v8320 = vmul.f32 %v8192, 0.7978846
        %v8321 = vmul.f32 %v8193, 0.7978846
        %v8322 = vmul.f32 %v8194, 0.7978846
        %v8323 = vmul.f32 %v8195, 0.7978846
        %v8324 = vmul.f32 %v8196, 0.7978846
        %v8325 = vmul.f32 %v8197, 0.7978846
        %v8326 = vmul.f32 %v8198, 0.7978846
        %v8327 = vmul.f32 %v8199, 0.7978846
        %v8328 = vmul.f32 %v8200, 0.7978846
        %v8329 = vmul.f32 %v8201, 0.7978846
        %v8330 = vmul.f32 %v8202, 0.7978846
        %v8331 = vmul.f32 %v8203, 0.7978846
        %v8332 = vmul.f32 %v8204, 0.7978846
        %v8333 = vmul.f32 %v8205, 0.7978846
        %v8334 = vmul.f32 %v8206, 0.7978846
        %v8335 = vmul.f32 %v8207, 0.7978846
        %v8336 = vmul.f32 %v8208, 0.7978846
        %v8337 = vmul.f32 %v8209, 0.7978846
        %v8338 = vmul.f32 %v8210, 0.7978846
        %v8339 = vmul.f32 %v8211, 0.7978846
        %v8340 = vmul.f32 %v8212, 0.7978846
        %v8341 = vmul.f32 %v8213, 0.7978846
        %v8342 = vmul.f32 %v8214, 0.7978846
        %v8343 = vmul.f32 %v8215, 0.7978846
        %v8344 = vmul.f32 %v8216, 0.7978846
        %v8345 = vmul.f32 %v8217, 0.7978846
        %v8346 = vmul.f32 %v8218, 0.7978846
        %v8347 = vmul.f32 %v8219, 0.7978846
        %v8348 = vmul.f32 %v8220, 0.7978846
        %v8349 = vmul.f32 %v8221, 0.7978846
        %v8350 = vmul.f32 %v8222, 0.7978846
        %v8351 = vmul.f32 %v8223, 0.7978846
        %v8352 = vmul.f32 %v8224, 0.7978846
        %v8353 = vmul.f32 %v8225, 0.7978846
        %v8354 = vmul.f32 %v8226, 0.7978846
        %v8355 = vmul.f32 %v8227, 0.7978846
        %v8356 = vmul.f32 %v8228, 0.7978846
        %v8357 = vmul.f32 %v8229, 0.7978846
        %v8358 = vmul.f32 %v8230, 0.7978846
        %v8359 = vmul.f32 %v8231, 0.7978846
        %v8360 = vmul.f32 %v8232, 0.7978846
        %v8361 = vmul.f32 %v8233, 0.7978846
        %v8362 = vmul.f32 %v8234, 0.7978846
        %v8363 = vmul.f32 %v8235, 0.7978846
        %v8364 = vmul.f32 %v8236, 0.7978846
        %v8365 = vmul.f32 %v8237, 0.7978846
        %v8366 = vmul.f32 %v8238, 0.7978846
        %v8367 = vmul.f32 %v8239, 0.7978846
        %v8368 = vmul.f32 %v8240, 0.7978846
        %v8369 = vmul.f32 %v8241, 0.7978846
        %v8370 = vmul.f32 %v8242, 0.7978846
        %v8371 = vmul.f32 %v8243, 0.7978846
        %v8372 = vmul.f32 %v8244, 0.7978846
        %v8373 = vmul.f32 %v8245, 0.7978846
        %v8374 = vmul.f32 %v8246, 0.7978846
        %v8375 = vmul.f32 %v8247, 0.7978846
        %v8376 = vmul.f32 %v8248, 0.7978846
        %v8377 = vmul.f32 %v8249, 0.7978846
        %v8378 = vmul.f32 %v8250, 0.7978846
        %v8379 = vtanh.pop %v8251
        %v8380 = vtanh.pop %v8252
        %v8381 = vtanh.pop %v8253
        %v8382 = vtanh.pop %v8254
        %v8383 = vtanh.pop %v8255
        %v8384 = vtanh.pop %v8256
        %v8385 = vtanh.pop %v8257
        %v8386 = vtanh.pop %v8258
        %v8387 = vtanh.pop %v8259
        %v8388 = vtanh.pop %v8260
        %v8389 = vtanh.pop %v8261
        %v8390 = vtanh.pop %v8262
        %v8391 = vtanh.pop %v8263
        %v8392 = vtanh.pop %v8264
        %v8393 = vtanh.pop %v8265
        %v8394 = vtanh.pop %v8266
        %v8395 = vtanh.pop %v8267
        %v8396 = vtanh.pop %v8268
        %v8397 = vtanh.pop %v8269
        %v8398 = vtanh.pop %v8270
        %v8399 = vtanh.pop %v8271
        %v8400 = vtanh.pop %v8272
        %v8401 = vtanh.pop %v8273
        %v8402 = vtanh.pop %v8274
        %v8403 = vtanh.pop %v8275
        %v8404 = vtanh.pop %v8276
        %v8405 = vtanh.pop %v8277
        %v8406 = vtanh.pop %v8278
        %v8407 = vtanh.pop %v8279
        %v8408 = vtanh.pop %v8280
        %v8409 = vtanh.pop %v8281
        %v8410 = vtanh.pop %v8282
        %v8411 = vtanh.pop %v8283
        %v8412 = vtanh.pop %v8284
        %v8413 = vtanh.pop %v8285
        %v8414 = vtanh.pop %v8286
        %v8415 = vtanh.pop %v8287
        %v8416 = vtanh.pop %v8288
        %v8417 = vtanh.pop %v8289
        %v8418 = vtanh.pop %v8290
        %v8419 = vtanh.pop %v8291
        %v8420 = vtanh.pop %v8292
        %v8421 = vtanh.pop %v8293
        %v8422 = vtanh.pop %v8294
        %v8423 = vtanh.pop %v8295
        %v8424 = vtanh.pop %v8296
        %v8425 = vtanh.pop %v8297
        %v8426 = vtanh.pop %v8298
        %v8427 = vtanh.pop %v8299
        %v8428 = vtanh.pop %v8300
        %v8429 = vtanh.pop %v8301
        %v8430 = vtanh.pop %v8302
        %v8431 = vtanh.pop %v8303
        %v8432 = vtanh.pop %v8304
        %v8433 = vtanh.pop %v8305
        %v8434 = vtanh.pop %v8306
        %v8435 = vtanh.pop %v8307
        %v8436 = vtanh.pop %v8308
        %v8437 = vtanh.pop %v8309
        %v8438 = vtanh.pop %v8310
        %v8439 = vtanh.pop %v8311
        %v8440 = vtanh.pop %v8312
        %v8441 = vtanh.pop %v8313
        %v8442 = vtanh.pop %v8314
        %v8443 = vtanh.pop %v8315
        %v8444 = vtanh.pop %v8316
        %v8445 = vtanh.pop %v8317
        %v8446 = vtanh.pop %v8318
        %v8447 = vtanh.pop %v8319
        %v8448 = vtanh.pop %v8320
        %v8449 = vtanh.pop %v8321
        %v8450 = vtanh.pop %v8322
        %v8451 = vtanh.pop %v8323
        %v8452 = vtanh.pop %v8324
        %v8453 = vtanh.pop %v8325
        %v8454 = vtanh.pop %v8326
        %v8455 = vtanh.pop %v8327
        %v8456 = vtanh.pop %v8328
        %v8457 = vtanh.pop %v8329
        %v8458 = vtanh.pop %v8330
        %v8459 = vtanh.pop %v8331
        %v8460 = vtanh.pop %v8332
        %v8461 = vtanh.pop %v8333
        %v8462 = vtanh.pop %v8334
        %v8463 = vtanh.pop %v8335
        %v8464 = vtanh.pop %v8336
        %v8465 = vtanh.pop %v8337
        %v8466 = vtanh.pop %v8338
        %v8467 = vtanh.pop %v8339
        %v8468 = vtanh.pop %v8340
        %v8469 = vtanh.pop %v8341
        %v8470 = vtanh.pop %v8342
        %v8471 = vtanh.pop %v8343
        %v8472 = vtanh.pop %v8344
        %v8473 = vtanh.pop %v8345
        %v8474 = vtanh.pop %v8346
        %v8475 = vtanh.pop %v8347
        %v8476 = vtanh.pop %v8348
        %v8477 = vtanh.pop %v8349
        %v8478 = vtanh.pop %v8350
        %v8479 = vtanh.pop %v8351
        %v8480 = vtanh.pop %v8352
        %v8481 = vtanh.pop %v8353
        %v8482 = vtanh.pop %v8354
        %v8483 = vtanh.pop %v8355
        %v8484 = vtanh.pop %v8356
        %v8485 = vtanh.pop %v8357
        %v8486 = vtanh.pop %v8358
        %v8487 = vtanh.pop %v8359
        %v8488 = vtanh.pop %v8360
        %v8489 = vtanh.pop %v8361
        %v8490 = vtanh.pop %v8362
        %v8491 = vtanh.pop %v8363
        %v8492 = vtanh.pop %v8364
        %v8493 = vtanh.pop %v8365
        %v8494 = vtanh.pop %v8366
        %v8495 = vtanh.pop %v8367
        %v8496 = vtanh.pop %v8368
        %v8497 = vtanh.pop %v8369
        %v8498 = vtanh.pop %v8370
        %v8499 = vtanh.pop %v8371
        %v8500 = vtanh.pop %v8372
        %v8501 = vtanh.pop %v8373
        %v8502 = vtanh.pop %v8374
        %v8503 = vtanh.pop %v8375
        %v8504 = vtanh.pop %v8376
        %v8505 = vtanh.pop %v8377
        %v8506 = vtanh.pop %v8378
        %v8507 = vadd.f32 %v8379, 1.0
        %v8508 = vadd.f32 %v8380, 1.0
        %v8509 = vadd.f32 %v8381, 1.0
        %v8510 = vadd.f32 %v8382, 1.0
        %v8511 = vadd.f32 %v8383, 1.0
        %v8512 = vadd.f32 %v8384, 1.0
        %v8513 = vadd.f32 %v8385, 1.0
        %v8514 = vadd.f32 %v8386, 1.0
        %v8515 = vadd.f32 %v8387, 1.0
        %v8516 = vadd.f32 %v8388, 1.0
        %v8517 = vadd.f32 %v8389, 1.0
        %v8518 = vadd.f32 %v8390, 1.0
        %v8519 = vadd.f32 %v8391, 1.0
        %v8520 = vadd.f32 %v8392, 1.0
        %v8521 = vadd.f32 %v8393, 1.0
        %v8522 = vadd.f32 %v8394, 1.0
        %v8523 = vadd.f32 %v8395, 1.0
        %v8524 = vadd.f32 %v8396, 1.0
        %v8525 = vadd.f32 %v8397, 1.0
        %v8526 = vadd.f32 %v8398, 1.0
        %v8527 = vadd.f32 %v8399, 1.0
        %v8528 = vadd.f32 %v8400, 1.0
        %v8529 = vadd.f32 %v8401, 1.0
        %v8530 = vadd.f32 %v8402, 1.0
        %v8531 = vadd.f32 %v8403, 1.0
        %v8532 = vadd.f32 %v8404, 1.0
        %v8533 = vadd.f32 %v8405, 1.0
        %v8534 = vadd.f32 %v8406, 1.0
        %v8535 = vadd.f32 %v8407, 1.0
        %v8536 = vadd.f32 %v8408, 1.0
        %v8537 = vadd.f32 %v8409, 1.0
        %v8538 = vadd.f32 %v8410, 1.0
        %v8539 = vadd.f32 %v8411, 1.0
        %v8540 = vadd.f32 %v8412, 1.0
        %v8541 = vadd.f32 %v8413, 1.0
        %v8542 = vadd.f32 %v8414, 1.0
        %v8543 = vadd.f32 %v8415, 1.0
        %v8544 = vadd.f32 %v8416, 1.0
        %v8545 = vadd.f32 %v8417, 1.0
        %v8546 = vadd.f32 %v8418, 1.0
        %v8547 = vadd.f32 %v8419, 1.0
        %v8548 = vadd.f32 %v8420, 1.0
        %v8549 = vadd.f32 %v8421, 1.0
        %v8550 = vadd.f32 %v8422, 1.0
        %v8551 = vadd.f32 %v8423, 1.0
        %v8552 = vadd.f32 %v8424, 1.0
        %v8553 = vadd.f32 %v8425, 1.0
        %v8554 = vadd.f32 %v8426, 1.0
        %v8555 = vadd.f32 %v8427, 1.0
        %v8556 = vadd.f32 %v8428, 1.0
        %v8557 = vadd.f32 %v8429, 1.0
        %v8558 = vadd.f32 %v8430, 1.0
        %v8559 = vadd.f32 %v8431, 1.0
        %v8560 = vadd.f32 %v8432, 1.0
        %v8561 = vadd.f32 %v8433, 1.0
        %v8562 = vadd.f32 %v8434, 1.0
        %v8563 = vadd.f32 %v8435, 1.0
        %v8564 = vadd.f32 %v8436, 1.0
        %v8565 = vadd.f32 %v8437, 1.0
        %v8566 = vadd.f32 %v8438, 1.0
        %v8567 = vadd.f32 %v8439, 1.0
        %v8568 = vadd.f32 %v8440, 1.0
        %v8569 = vadd.f32 %v8441, 1.0
        %v8570 = vadd.f32 %v8442, 1.0
        %v8571 = vadd.f32 %v8443, 1.0
        %v8572 = vadd.f32 %v8444, 1.0
        %v8573 = vadd.f32 %v8445, 1.0
        %v8574 = vadd.f32 %v8446, 1.0
        %v8575 = vadd.f32 %v8447, 1.0
        %v8576 = vadd.f32 %v8448, 1.0
        %v8577 = vadd.f32 %v8449, 1.0
        %v8578 = vadd.f32 %v8450, 1.0
        %v8579 = vadd.f32 %v8451, 1.0
        %v8580 = vadd.f32 %v8452, 1.0
        %v8581 = vadd.f32 %v8453, 1.0
        %v8582 = vadd.f32 %v8454, 1.0
        %v8583 = vadd.f32 %v8455, 1.0
        %v8584 = vadd.f32 %v8456, 1.0
        %v8585 = vadd.f32 %v8457, 1.0
        %v8586 = vadd.f32 %v8458, 1.0
        %v8587 = vadd.f32 %v8459, 1.0
        %v8588 = vadd.f32 %v8460, 1.0
        %v8589 = vadd.f32 %v8461, 1.0
        %v8590 = vadd.f32 %v8462, 1.0
        %v8591 = vadd.f32 %v8463, 1.0
        %v8592 = vadd.f32 %v8464, 1.0
        %v8593 = vadd.f32 %v8465, 1.0
        %v8594 = vadd.f32 %v8466, 1.0
        %v8595 = vadd.f32 %v8467, 1.0
        %v8596 = vadd.f32 %v8468, 1.0
        %v8597 = vadd.f32 %v8469, 1.0
        %v8598 = vadd.f32 %v8470, 1.0
        %v8599 = vadd.f32 %v8471, 1.0
        %v8600 = vadd.f32 %v8472, 1.0
        %v8601 = vadd.f32 %v8473, 1.0
        %v8602 = vadd.f32 %v8474, 1.0
        %v8603 = vadd.f32 %v8475, 1.0
        %v8604 = vadd.f32 %v8476, 1.0
        %v8605 = vadd.f32 %v8477, 1.0
        %v8606 = vadd.f32 %v8478, 1.0
        %v8607 = vadd.f32 %v8479, 1.0
        %v8608 = vadd.f32 %v8480, 1.0
        %v8609 = vadd.f32 %v8481, 1.0
        %v8610 = vadd.f32 %v8482, 1.0
        %v8611 = vadd.f32 %v8483, 1.0
        %v8612 = vadd.f32 %v8484, 1.0
        %v8613 = vadd.f32 %v8485, 1.0
        %v8614 = vadd.f32 %v8486, 1.0
        %v8615 = vadd.f32 %v8487, 1.0
        %v8616 = vadd.f32 %v8488, 1.0
        %v8617 = vadd.f32 %v8489, 1.0
        %v8618 = vadd.f32 %v8490, 1.0
        %v8619 = vadd.f32 %v8491, 1.0
        %v8620 = vadd.f32 %v8492, 1.0
        %v8621 = vadd.f32 %v8493, 1.0
        %v8622 = vadd.f32 %v8494, 1.0
        %v8623 = vadd.f32 %v8495, 1.0
        %v8624 = vadd.f32 %v8496, 1.0
        %v8625 = vadd.f32 %v8497, 1.0
        %v8626 = vadd.f32 %v8498, 1.0
        %v8627 = vadd.f32 %v8499, 1.0
        %v8628 = vadd.f32 %v8500, 1.0
        %v8629 = vadd.f32 %v8501, 1.0
        %v8630 = vadd.f32 %v8502, 1.0
        %v8631 = vadd.f32 %v8503, 1.0
        %v8632 = vadd.f32 %v8504, 1.0
        %v8633 = vadd.f32 %v8505, 1.0
        %v8634 = vadd.f32 %v8506, 1.0
        %v8635 = vmul.f32 %v7611, %v8507
        %v8636 = vmul.f32 %v7612, %v8508
        %v8637 = vmul.f32 %v7613, %v8509
        %v8638 = vmul.f32 %v7614, %v8510
        %v8639 = vmul.f32 %v7615, %v8511
        %v8640 = vmul.f32 %v7616, %v8512
        %v8641 = vmul.f32 %v7617, %v8513
        %v8642 = vmul.f32 %v7618, %v8514
        %v8643 = vmul.f32 %v7619, %v8515
        %v8644 = vmul.f32 %v7620, %v8516
        %v8645 = vmul.f32 %v7621, %v8517
        %v8646 = vmul.f32 %v7622, %v8518
        %v8647 = vmul.f32 %v7623, %v8519
        %v8648 = vmul.f32 %v7624, %v8520
        %v8649 = vmul.f32 %v7625, %v8521
        %v8650 = vmul.f32 %v7626, %v8522
        %v8651 = vmul.f32 %v7627, %v8523
        %v8652 = vmul.f32 %v7628, %v8524
        %v8653 = vmul.f32 %v7629, %v8525
        %v8654 = vmul.f32 %v7630, %v8526
        %v8655 = vmul.f32 %v7631, %v8527
        %v8656 = vmul.f32 %v7632, %v8528
        %v8657 = vmul.f32 %v7633, %v8529
        %v8658 = vmul.f32 %v7634, %v8530
        %v8659 = vmul.f32 %v7635, %v8531
        %v8660 = vmul.f32 %v7636, %v8532
        %v8661 = vmul.f32 %v7637, %v8533
        %v8662 = vmul.f32 %v7638, %v8534
        %v8663 = vmul.f32 %v7639, %v8535
        %v8664 = vmul.f32 %v7640, %v8536
        %v8665 = vmul.f32 %v7641, %v8537
        %v8666 = vmul.f32 %v7642, %v8538
        %v8667 = vmul.f32 %v7643, %v8539
        %v8668 = vmul.f32 %v7644, %v8540
        %v8669 = vmul.f32 %v7645, %v8541
        %v8670 = vmul.f32 %v7646, %v8542
        %v8671 = vmul.f32 %v7647, %v8543
        %v8672 = vmul.f32 %v7648, %v8544
        %v8673 = vmul.f32 %v7649, %v8545
        %v8674 = vmul.f32 %v7650, %v8546
        %v8675 = vmul.f32 %v7651, %v8547
        %v8676 = vmul.f32 %v7652, %v8548
        %v8677 = vmul.f32 %v7653, %v8549
        %v8678 = vmul.f32 %v7654, %v8550
        %v8679 = vmul.f32 %v7655, %v8551
        %v8680 = vmul.f32 %v7656, %v8552
        %v8681 = vmul.f32 %v7657, %v8553
        %v8682 = vmul.f32 %v7658, %v8554
        %v8683 = vmul.f32 %v7659, %v8555
        %v8684 = vmul.f32 %v7660, %v8556
        %v8685 = vmul.f32 %v7661, %v8557
        %v8686 = vmul.f32 %v7662, %v8558
        %v8687 = vmul.f32 %v7663, %v8559
        %v8688 = vmul.f32 %v7664, %v8560
        %v8689 = vmul.f32 %v7665, %v8561
        %v8690 = vmul.f32 %v7666, %v8562
        %v8691 = vmul.f32 %v7667, %v8563
        %v8692 = vmul.f32 %v7668, %v8564
        %v8693 = vmul.f32 %v7669, %v8565
        %v8694 = vmul.f32 %v7670, %v8566
        %v8695 = vmul.f32 %v7671, %v8567
        %v8696 = vmul.f32 %v7672, %v8568
        %v8697 = vmul.f32 %v7673, %v8569
        %v8698 = vmul.f32 %v7674, %v8570
        %v8699 = vmul.f32 %v7675, %v8571
        %v8700 = vmul.f32 %v7676, %v8572
        %v8701 = vmul.f32 %v7677, %v8573
        %v8702 = vmul.f32 %v7678, %v8574
        %v8703 = vmul.f32 %v7679, %v8575
        %v8704 = vmul.f32 %v7680, %v8576
        %v8705 = vmul.f32 %v7681, %v8577
        %v8706 = vmul.f32 %v7682, %v8578
        %v8707 = vmul.f32 %v7683, %v8579
        %v8708 = vmul.f32 %v7684, %v8580
        %v8709 = vmul.f32 %v7685, %v8581
        %v8710 = vmul.f32 %v7686, %v8582
        %v8711 = vmul.f32 %v7687, %v8583
        %v8712 = vmul.f32 %v7688, %v8584
        %v8713 = vmul.f32 %v7689, %v8585
        %v8714 = vmul.f32 %v7690, %v8586
        %v8715 = vmul.f32 %v7691, %v8587
        %v8716 = vmul.f32 %v7692, %v8588
        %v8717 = vmul.f32 %v7693, %v8589
        %v8718 = vmul.f32 %v7694, %v8590
        %v8719 = vmul.f32 %v7695, %v8591
        %v8720 = vmul.f32 %v7696, %v8592
        %v8721 = vmul.f32 %v7697, %v8593
        %v8722 = vmul.f32 %v7698, %v8594
        %v8723 = vmul.f32 %v7699, %v8595
        %v8724 = vmul.f32 %v7700, %v8596
        %v8725 = vmul.f32 %v7701, %v8597
        %v8726 = vmul.f32 %v7702, %v8598
        %v8727 = vmul.f32 %v7703, %v8599
        %v8728 = vmul.f32 %v7704, %v8600
        %v8729 = vmul.f32 %v7705, %v8601
        %v8730 = vmul.f32 %v7706, %v8602
        %v8731 = vmul.f32 %v7707, %v8603
        %v8732 = vmul.f32 %v7708, %v8604
        %v8733 = vmul.f32 %v7709, %v8605
        %v8734 = vmul.f32 %v7710, %v8606
        %v8735 = vmul.f32 %v7711, %v8607
        %v8736 = vmul.f32 %v7712, %v8608
        %v8737 = vmul.f32 %v7713, %v8609
        %v8738 = vmul.f32 %v7714, %v8610
        %v8739 = vmul.f32 %v7715, %v8611
        %v8740 = vmul.f32 %v7716, %v8612
        %v8741 = vmul.f32 %v7717, %v8613
        %v8742 = vmul.f32 %v7718, %v8614
        %v8743 = vmul.f32 %v7719, %v8615
        %v8744 = vmul.f32 %v7720, %v8616
        %v8745 = vmul.f32 %v7721, %v8617
        %v8746 = vmul.f32 %v7722, %v8618
        %v8747 = vmul.f32 %v7723, %v8619
        %v8748 = vmul.f32 %v7724, %v8620
        %v8749 = vmul.f32 %v7725, %v8621
        %v8750 = vmul.f32 %v7726, %v8622
        %v8751 = vmul.f32 %v7727, %v8623
        %v8752 = vmul.f32 %v7728, %v8624
        %v8753 = vmul.f32 %v7729, %v8625
        %v8754 = vmul.f32 %v7730, %v8626
        %v8755 = vmul.f32 %v7731, %v8627
        %v8756 = vmul.f32 %v7732, %v8628
        %v8757 = vmul.f32 %v7733, %v8629
        %v8758 = vmul.f32 %v7734, %v8630
        %v8759 = vmul.f32 %v7735, %v8631
        %v8760 = vmul.f32 %v7736, %v8632
        %v8761 = vmul.f32 %v7737, %v8633
        %v8762 = vmul.f32 %v7738, %v8634
        %v8763 = vpack.c.bf16 %v8643, %v8635
        %v8764 = vpack.c.bf16 %v8644, %v8636
        %v8765 = vpack.c.bf16 %v8645, %v8637
        %v8766 = vpack.c.bf16 %v8646, %v8638
        %v8767 = vpack.c.bf16 %v8647, %v8639
        %v8768 = vpack.c.bf16 %v8648, %v8640
        %v8769 = vpack.c.bf16 %v8649, %v8641
        %v8770 = vpack.c.bf16 %v8650, %v8642
        %v8771 = vpack.c.bf16 %v8659, %v8651
        %v8772 = vpack.c.bf16 %v8660, %v8652
        %v8773 = vpack.c.bf16 %v8661, %v8653
        %v8774 = vpack.c.bf16 %v8662, %v8654
        %v8775 = vpack.c.bf16 %v8663, %v8655
        %v8776 = vpack.c.bf16 %v8664, %v8656
        %v8777 = vpack.c.bf16 %v8665, %v8657
        %v8778 = vpack.c.bf16 %v8666, %v8658
        %v8779 = vpack.c.bf16 %v8675, %v8667
        %v8780 = vpack.c.bf16 %v8676, %v8668
        %v8781 = vpack.c.bf16 %v8677, %v8669
        %v8782 = vpack.c.bf16 %v8678, %v8670
        %v8783 = vpack.c.bf16 %v8679, %v8671
        %v8784 = vpack.c.bf16 %v8680, %v8672
        %v8785 = vpack.c.bf16 %v8681, %v8673
        %v8786 = vpack.c.bf16 %v8682, %v8674
        %v8787 = vpack.c.bf16 %v8691, %v8683
        %v8788 = vpack.c.bf16 %v8692, %v8684
        %v8789 = vpack.c.bf16 %v8693, %v8685
        %v8790 = vpack.c.bf16 %v8694, %v8686
        %v8791 = vpack.c.bf16 %v8695, %v8687
        %v8792 = vpack.c.bf16 %v8696, %v8688
        %v8793 = vpack.c.bf16 %v8697, %v8689
        %v8794 = vpack.c.bf16 %v8698, %v8690
        %v8795 = vpack.c.bf16 %v8707, %v8699
        %v8796 = vpack.c.bf16 %v8708, %v8700
        %v8797 = vpack.c.bf16 %v8709, %v8701
        %v8798 = vpack.c.bf16 %v8710, %v8702
        %v8799 = vpack.c.bf16 %v8711, %v8703
        %v8800 = vpack.c.bf16 %v8712, %v8704
        %v8801 = vpack.c.bf16 %v8713, %v8705
        %v8802 = vpack.c.bf16 %v8714, %v8706
        %v8803 = vpack.c.bf16 %v8723, %v8715
        %v8804 = vpack.c.bf16 %v8724, %v8716
        %v8805 = vpack.c.bf16 %v8725, %v8717
        %v8806 = vpack.c.bf16 %v8726, %v8718
        %v8807 = vpack.c.bf16 %v8727, %v8719
        %v8808 = vpack.c.bf16 %v8728, %v8720
        %v8809 = vpack.c.bf16 %v8729, %v8721
        %v8810 = vpack.c.bf16 %v8730, %v8722
        %v8811 = vpack.c.bf16 %v8739, %v8731
        %v8812 = vpack.c.bf16 %v8740, %v8732
        %v8813 = vpack.c.bf16 %v8741, %v8733
        %v8814 = vpack.c.bf16 %v8742, %v8734
        %v8815 = vpack.c.bf16 %v8743, %v8735
        %v8816 = vpack.c.bf16 %v8744, %v8736
        %v8817 = vpack.c.bf16 %v8745, %v8737
        %v8818 = vpack.c.bf16 %v8746, %v8738
        %v8819 = vpack.c.bf16 %v8755, %v8747
        %v8820 = vpack.c.bf16 %v8756, %v8748
        %v8821 = vpack.c.bf16 %v8757, %v8749
        %v8822 = vpack.c.bf16 %v8758, %v8750
        %v8823 = vpack.c.bf16 %v8759, %v8751
        %v8824 = vpack.c.bf16 %v8760, %v8752
        %v8825 = vpack.c.bf16 %v8761, %v8753
        %v8826 = vpack.c.bf16 %v8762, %v8754
        %v8827 = vld [vmem:[#allocation18] sm:$0xff]
        %v8828 = vld [vmem:[#allocation18 + $0x8] sm:$0xff]
        %v8829 = vld [vmem:[#allocation18 + $0x10] sm:$0xff]
        %v8830 = vld [vmem:[#allocation18 + $0x18] sm:$0xff]
        %v8831 = vld [vmem:[#allocation18 + $0x20] sm:$0xff]
        %v8832 = vld [vmem:[#allocation18 + $0x28] sm:$0xff]
        %v8833 = vld [vmem:[#allocation18 + $0x30] sm:$0xff]
        %v8834 = vld [vmem:[#allocation18 + $0x38] sm:$0xff]
        %v8835 = vld [vmem:[#allocation18 + $0x40] sm:$0xff]
        %v8836 = vld [vmem:[#allocation18 + $0x48] sm:$0xff]
        %v8837 = vld [vmem:[#allocation18 + $0x50] sm:$0xff]
        %v8838 = vld [vmem:[#allocation18 + $0x58] sm:$0xff]
        %v8839 = vld [vmem:[#allocation18 + $0x60] sm:$0xff]
        %v8840 = vld [vmem:[#allocation18 + $0x68] sm:$0xff]
        %v8841 = vld [vmem:[#allocation18 + $0x70] sm:$0xff]
        %v8842 = vld [vmem:[#allocation18 + $0x78] sm:$0xff]
        %v8843 = vld [vmem:[#allocation18 + $0x80] sm:$0xff]
        %v8844 = vld [vmem:[#allocation18 + $0x88] sm:$0xff]
        %v8845 = vld [vmem:[#allocation18 + $0x90] sm:$0xff]
        %v8846 = vld [vmem:[#allocation18 + $0x98] sm:$0xff]
        %v8847 = vld [vmem:[#allocation18 + $0xa0] sm:$0xff]
        %v8848 = vld [vmem:[#allocation18 + $0xa8] sm:$0xff]
        %v8849 = vld [vmem:[#allocation18 + $0xb0] sm:$0xff]
        %v8850 = vld [vmem:[#allocation18 + $0xb8] sm:$0xff]
        %v8851 = vld [vmem:[#allocation18 + $0xc0] sm:$0xff]
        %v8852 = vld [vmem:[#allocation18 + $0xc8] sm:$0xff]
        %v8853 = vld [vmem:[#allocation18 + $0xd0] sm:$0xff]
        %v8854 = vld [vmem:[#allocation18 + $0xd8] sm:$0xff]
        %v8855 = vld [vmem:[#allocation18 + $0xe0] sm:$0xff]
        %v8856 = vld [vmem:[#allocation18 + $0xe8] sm:$0xff]
        %v8857 = vld [vmem:[#allocation18 + $0xf0] sm:$0xff]
        %v8858 = vld [vmem:[#allocation18 + $0xf8] sm:$0xff]
        %v8859 = vld [vmem:[#allocation18 + $0x100] sm:$0xff]
        %v8860 = vld [vmem:[#allocation18 + $0x108] sm:$0xff]
        %v8861 = vld [vmem:[#allocation18 + $0x110] sm:$0xff]
        %v8862 = vld [vmem:[#allocation18 + $0x118] sm:$0xff]
        %v8863 = vld [vmem:[#allocation18 + $0x120] sm:$0xff]
        %v8864 = vld [vmem:[#allocation18 + $0x128] sm:$0xff]
        %v8865 = vld [vmem:[#allocation18 + $0x130] sm:$0xff]
        %v8866 = vld [vmem:[#allocation18 + $0x138] sm:$0xff]
        %v8867 = vld [vmem:[#allocation18 + $0x140] sm:$0xff]
        %v8868 = vld [vmem:[#allocation18 + $0x148] sm:$0xff]
        %v8869 = vld [vmem:[#allocation18 + $0x150] sm:$0xff]
        %v8870 = vld [vmem:[#allocation18 + $0x158] sm:$0xff]
        %v8871 = vld [vmem:[#allocation18 + $0x160] sm:$0xff]
        %v8872 = vld [vmem:[#allocation18 + $0x168] sm:$0xff]
        %v8873 = vld [vmem:[#allocation18 + $0x170] sm:$0xff]
        %v8874 = vld [vmem:[#allocation18 + $0x178] sm:$0xff]
        %v8875 = vld [vmem:[#allocation18 + $0x180] sm:$0xff]
        %v8876 = vld [vmem:[#allocation18 + $0x188] sm:$0xff]
        %v8877 = vld [vmem:[#allocation18 + $0x190] sm:$0xff]
        %v8878 = vld [vmem:[#allocation18 + $0x198] sm:$0xff]
        %v8879 = vld [vmem:[#allocation18 + $0x1a0] sm:$0xff]
        %v8880 = vld [vmem:[#allocation18 + $0x1a8] sm:$0xff]
        %v8881 = vld [vmem:[#allocation18 + $0x1b0] sm:$0xff]
        %v8882 = vld [vmem:[#allocation18 + $0x1b8] sm:$0xff]
        %v8883 = vld [vmem:[#allocation18 + $0x1c0] sm:$0xff]
        %v8884 = vld [vmem:[#allocation18 + $0x1c8] sm:$0xff]
        %v8885 = vld [vmem:[#allocation18 + $0x1d0] sm:$0xff]
        %v8886 = vld [vmem:[#allocation18 + $0x1d8] sm:$0xff]
        %v8887 = vld [vmem:[#allocation18 + $0x1e0] sm:$0xff]
        %v8888 = vld [vmem:[#allocation18 + $0x1e8] sm:$0xff]
        %v8889 = vld [vmem:[#allocation18 + $0x1f0] sm:$0xff]
        %v8890 = vld [vmem:[#allocation18 + $0x1f8] sm:$0xff]
        %v8891 = vld [vmem:[#allocation18 + $0x200] sm:$0xff]
        %v8892 = vld [vmem:[#allocation18 + $0x208] sm:$0xff]
        %v8893 = vld [vmem:[#allocation18 + $0x210] sm:$0xff]
        %v8894 = vld [vmem:[#allocation18 + $0x218] sm:$0xff]
        %v8895 = vld [vmem:[#allocation18 + $0x220] sm:$0xff]
        %v8896 = vld [vmem:[#allocation18 + $0x228] sm:$0xff]
        %v8897 = vld [vmem:[#allocation18 + $0x230] sm:$0xff]
        %v8898 = vld [vmem:[#allocation18 + $0x238] sm:$0xff]
        %v8899 = vld [vmem:[#allocation18 + $0x240] sm:$0xff]
        %v8900 = vld [vmem:[#allocation18 + $0x248] sm:$0xff]
        %v8901 = vld [vmem:[#allocation18 + $0x250] sm:$0xff]
        %v8902 = vld [vmem:[#allocation18 + $0x258] sm:$0xff]
        %v8903 = vld [vmem:[#allocation18 + $0x260] sm:$0xff]
        %v8904 = vld [vmem:[#allocation18 + $0x268] sm:$0xff]
        %v8905 = vld [vmem:[#allocation18 + $0x270] sm:$0xff]
        %v8906 = vld [vmem:[#allocation18 + $0x278] sm:$0xff]
        %v8907 = vld [vmem:[#allocation18 + $0x280] sm:$0xff]
        %v8908 = vld [vmem:[#allocation18 + $0x288] sm:$0xff]
        %v8909 = vld [vmem:[#allocation18 + $0x290] sm:$0xff]
        %v8910 = vld [vmem:[#allocation18 + $0x298] sm:$0xff]
        %v8911 = vld [vmem:[#allocation18 + $0x2a0] sm:$0xff]
        %v8912 = vld [vmem:[#allocation18 + $0x2a8] sm:$0xff]
        %v8913 = vld [vmem:[#allocation18 + $0x2b0] sm:$0xff]
        %v8914 = vld [vmem:[#allocation18 + $0x2b8] sm:$0xff]
        %v8915 = vld [vmem:[#allocation18 + $0x2c0] sm:$0xff]
        %v8916 = vld [vmem:[#allocation18 + $0x2c8] sm:$0xff]
        %v8917 = vld [vmem:[#allocation18 + $0x2d0] sm:$0xff]
        %v8918 = vld [vmem:[#allocation18 + $0x2d8] sm:$0xff]
        %v8919 = vld [vmem:[#allocation18 + $0x2e0] sm:$0xff]
        %v8920 = vld [vmem:[#allocation18 + $0x2e8] sm:$0xff]
        %v8921 = vld [vmem:[#allocation18 + $0x2f0] sm:$0xff]
        %v8922 = vld [vmem:[#allocation18 + $0x2f8] sm:$0xff]
        %v8923 = vld [vmem:[#allocation18 + $0x300] sm:$0xff]
        %v8924 = vld [vmem:[#allocation18 + $0x308] sm:$0xff]
        %v8925 = vld [vmem:[#allocation18 + $0x310] sm:$0xff]
        %v8926 = vld [vmem:[#allocation18 + $0x318] sm:$0xff]
        %v8927 = vld [vmem:[#allocation18 + $0x320] sm:$0xff]
        %v8928 = vld [vmem:[#allocation18 + $0x328] sm:$0xff]
        %v8929 = vld [vmem:[#allocation18 + $0x330] sm:$0xff]
        %v8930 = vld [vmem:[#allocation18 + $0x338] sm:$0xff]
        %v8931 = vld [vmem:[#allocation18 + $0x340] sm:$0xff]
        %v8932 = vld [vmem:[#allocation18 + $0x348] sm:$0xff]
        %v8933 = vld [vmem:[#allocation18 + $0x350] sm:$0xff]
        %v8934 = vld [vmem:[#allocation18 + $0x358] sm:$0xff]
        %v8935 = vld [vmem:[#allocation18 + $0x360] sm:$0xff]
        %v8936 = vld [vmem:[#allocation18 + $0x368] sm:$0xff]
        %v8937 = vld [vmem:[#allocation18 + $0x370] sm:$0xff]
        %v8938 = vld [vmem:[#allocation18 + $0x378] sm:$0xff]
        %v8939 = vld [vmem:[#allocation18 + $0x380] sm:$0xff]
        %v8940 = vld [vmem:[#allocation18 + $0x388] sm:$0xff]
        %v8941 = vld [vmem:[#allocation18 + $0x390] sm:$0xff]
        %v8942 = vld [vmem:[#allocation18 + $0x398] sm:$0xff]
        %v8943 = vld [vmem:[#allocation18 + $0x3a0] sm:$0xff]
        %v8944 = vld [vmem:[#allocation18 + $0x3a8] sm:$0xff]
        %v8945 = vld [vmem:[#allocation18 + $0x3b0] sm:$0xff]
        %v8946 = vld [vmem:[#allocation18 + $0x3b8] sm:$0xff]
        %v8947 = vld [vmem:[#allocation18 + $0x3c0] sm:$0xff]
        %v8948 = vld [vmem:[#allocation18 + $0x3c8] sm:$0xff]
        %v8949 = vld [vmem:[#allocation18 + $0x3d0] sm:$0xff]
        %v8950 = vld [vmem:[#allocation18 + $0x3d8] sm:$0xff]
        %v8951 = vld [vmem:[#allocation18 + $0x3e0] sm:$0xff]
        %v8952 = vld [vmem:[#allocation18 + $0x3e8] sm:$0xff]
        %v8953 = vld [vmem:[#allocation18 + $0x3f0] sm:$0xff]
        %v8954 = vld [vmem:[#allocation18 + $0x3f8] sm:$0xff]
        %v8955 = vld [vmem:[%s16] sm:$0x3]
        %v8957 = vlaneseq
        %v8958 = vshrl.u32 %v8957, 7
        %v8959 = vsub.s32 0, %v8958
        %v8960 = vrot.slane %v8955, %v8959
        %v8961 = vlaneseq
        %v8962 = vshrl.u32 %v8961, 7
        %v8963 = vsub.s32 1, %v8962
        %v8964 = vrot.slane %v8955, %v8963
        %v9095 = vunpack.c.l.b16 %v8827
        %v9096 = vunpack.c.h.b16 %v8827
        %v9097 = vunpack.c.l.b16 %v8828
        %v9098 = vunpack.c.h.b16 %v8828
        %v9099 = vunpack.c.l.b16 %v8829
        %v9100 = vunpack.c.h.b16 %v8829
        %v9101 = vunpack.c.l.b16 %v8830
        %v9102 = vunpack.c.h.b16 %v8830
        %v9103 = vunpack.c.l.b16 %v8831
        %v9104 = vunpack.c.h.b16 %v8831
        %v9105 = vunpack.c.l.b16 %v8832
        %v9106 = vunpack.c.h.b16 %v8832
        %v9107 = vunpack.c.l.b16 %v8833
        %v9108 = vunpack.c.h.b16 %v8833
        %v9109 = vunpack.c.l.b16 %v8834
        %v9110 = vunpack.c.h.b16 %v8834
        %v9111 = vunpack.c.l.b16 %v8835
        %v9112 = vunpack.c.h.b16 %v8835
        %v9113 = vunpack.c.l.b16 %v8836
        %v9114 = vunpack.c.h.b16 %v8836
        %v9115 = vunpack.c.l.b16 %v8837
        %v9116 = vunpack.c.h.b16 %v8837
        %v9117 = vunpack.c.l.b16 %v8838
        %v9118 = vunpack.c.h.b16 %v8838
        %v9119 = vunpack.c.l.b16 %v8839
        %v9120 = vunpack.c.h.b16 %v8839
        %v9121 = vunpack.c.l.b16 %v8840
        %v9122 = vunpack.c.h.b16 %v8840
        %v9123 = vunpack.c.l.b16 %v8841
        %v9124 = vunpack.c.h.b16 %v8841
        %v9125 = vunpack.c.l.b16 %v8842
        %v9126 = vunpack.c.h.b16 %v8842
        %v9127 = vunpack.c.l.b16 %v8843
        %v9128 = vunpack.c.h.b16 %v8843
        %v9129 = vunpack.c.l.b16 %v8844
        %v9130 = vunpack.c.h.b16 %v8844
        %v9131 = vunpack.c.l.b16 %v8845
        %v9132 = vunpack.c.h.b16 %v8845
        %v9133 = vunpack.c.l.b16 %v8846
        %v9134 = vunpack.c.h.b16 %v8846
        %v9135 = vunpack.c.l.b16 %v8847
        %v9136 = vunpack.c.h.b16 %v8847
        %v9137 = vunpack.c.l.b16 %v8848
        %v9138 = vunpack.c.h.b16 %v8848
        %v9139 = vunpack.c.l.b16 %v8849
        %v9140 = vunpack.c.h.b16 %v8849
        %v9141 = vunpack.c.l.b16 %v8850
        %v9142 = vunpack.c.h.b16 %v8850
        %v9143 = vunpack.c.l.b16 %v8851
        %v9144 = vunpack.c.h.b16 %v8851
        %v9145 = vunpack.c.l.b16 %v8852
        %v9146 = vunpack.c.h.b16 %v8852
        %v9147 = vunpack.c.l.b16 %v8853
        %v9148 = vunpack.c.h.b16 %v8853
        %v9149 = vunpack.c.l.b16 %v8854
        %v9150 = vunpack.c.h.b16 %v8854
        %v9151 = vunpack.c.l.b16 %v8855
        %v9152 = vunpack.c.h.b16 %v8855
        %v9153 = vunpack.c.l.b16 %v8856
        %v9154 = vunpack.c.h.b16 %v8856
        %v9155 = vunpack.c.l.b16 %v8857
        %v9156 = vunpack.c.h.b16 %v8857
        %v9157 = vunpack.c.l.b16 %v8858
        %v9158 = vunpack.c.h.b16 %v8858
        %v9159 = vunpack.c.l.b16 %v8859
        %v9160 = vunpack.c.h.b16 %v8859
        %v9161 = vunpack.c.l.b16 %v8860
        %v9162 = vunpack.c.h.b16 %v8860
        %v9163 = vunpack.c.l.b16 %v8861
        %v9164 = vunpack.c.h.b16 %v8861
        %v9165 = vunpack.c.l.b16 %v8862
        %v9166 = vunpack.c.h.b16 %v8862
        %v9167 = vunpack.c.l.b16 %v8863
        %v9168 = vunpack.c.h.b16 %v8863
        %v9169 = vunpack.c.l.b16 %v8864
        %v9170 = vunpack.c.h.b16 %v8864
        %v9171 = vunpack.c.l.b16 %v8865
        %v9172 = vunpack.c.h.b16 %v8865
        %v9173 = vunpack.c.l.b16 %v8866
        %v9174 = vunpack.c.h.b16 %v8866
        %v9175 = vunpack.c.l.b16 %v8867
        %v9176 = vunpack.c.h.b16 %v8867
        %v9177 = vunpack.c.l.b16 %v8868
        %v9178 = vunpack.c.h.b16 %v8868
        %v9179 = vunpack.c.l.b16 %v8869
        %v9180 = vunpack.c.h.b16 %v8869
        %v9181 = vunpack.c.l.b16 %v8870
        %v9182 = vunpack.c.h.b16 %v8870
        %v9183 = vunpack.c.l.b16 %v8871
        %v9184 = vunpack.c.h.b16 %v8871
        %v9185 = vunpack.c.l.b16 %v8872
        %v9186 = vunpack.c.h.b16 %v8872
        %v9187 = vunpack.c.l.b16 %v8873
        %v9188 = vunpack.c.h.b16 %v8873
        %v9189 = vunpack.c.l.b16 %v8874
        %v9190 = vunpack.c.h.b16 %v8874
        %v9191 = vunpack.c.l.b16 %v8875
        %v9192 = vunpack.c.h.b16 %v8875
        %v9193 = vunpack.c.l.b16 %v8876
        %v9194 = vunpack.c.h.b16 %v8876
        %v9195 = vunpack.c.l.b16 %v8877
        %v9196 = vunpack.c.h.b16 %v8877
        %v9197 = vunpack.c.l.b16 %v8878
        %v9198 = vunpack.c.h.b16 %v8878
        %v9199 = vunpack.c.l.b16 %v8879
        %v9200 = vunpack.c.h.b16 %v8879
        %v9201 = vunpack.c.l.b16 %v8880
        %v9202 = vunpack.c.h.b16 %v8880
        %v9203 = vunpack.c.l.b16 %v8881
        %v9204 = vunpack.c.h.b16 %v8881
        %v9205 = vunpack.c.l.b16 %v8882
        %v9206 = vunpack.c.h.b16 %v8882
        %v9207 = vunpack.c.l.b16 %v8883
        %v9208 = vunpack.c.h.b16 %v8883
        %v9209 = vunpack.c.l.b16 %v8884
        %v9210 = vunpack.c.h.b16 %v8884
        %v9211 = vunpack.c.l.b16 %v8885
        %v9212 = vunpack.c.h.b16 %v8885
        %v9213 = vunpack.c.l.b16 %v8886
        %v9214 = vunpack.c.h.b16 %v8886
        %v9215 = vunpack.c.l.b16 %v8887
        %v9216 = vunpack.c.h.b16 %v8887
        %v9217 = vunpack.c.l.b16 %v8888
        %v9218 = vunpack.c.h.b16 %v8888
        %v9219 = vunpack.c.l.b16 %v8889
        %v9220 = vunpack.c.h.b16 %v8889
        %v9221 = vunpack.c.l.b16 %v8890
        %v9222 = vunpack.c.h.b16 %v8890
        %v9223 = vunpack.c.l.b16 %v8891
        %v9224 = vunpack.c.h.b16 %v8891
        %v9225 = vunpack.c.l.b16 %v8892
        %v9226 = vunpack.c.h.b16 %v8892
        %v9227 = vunpack.c.l.b16 %v8893
        %v9228 = vunpack.c.h.b16 %v8893
        %v9229 = vunpack.c.l.b16 %v8894
        %v9230 = vunpack.c.h.b16 %v8894
        %v9231 = vunpack.c.l.b16 %v8895
        %v9232 = vunpack.c.h.b16 %v8895
        %v9233 = vunpack.c.l.b16 %v8896
        %v9234 = vunpack.c.h.b16 %v8896
        %v9235 = vunpack.c.l.b16 %v8897
        %v9236 = vunpack.c.h.b16 %v8897
        %v9237 = vunpack.c.l.b16 %v8898
        %v9238 = vunpack.c.h.b16 %v8898
        %v9239 = vunpack.c.l.b16 %v8899
        %v9240 = vunpack.c.h.b16 %v8899
        %v9241 = vunpack.c.l.b16 %v8900
        %v9242 = vunpack.c.h.b16 %v8900
        %v9243 = vunpack.c.l.b16 %v8901
        %v9244 = vunpack.c.h.b16 %v8901
        %v9245 = vunpack.c.l.b16 %v8902
        %v9246 = vunpack.c.h.b16 %v8902
        %v9247 = vunpack.c.l.b16 %v8903
        %v9248 = vunpack.c.h.b16 %v8903
        %v9249 = vunpack.c.l.b16 %v8904
        %v9250 = vunpack.c.h.b16 %v8904
        %v9251 = vunpack.c.l.b16 %v8905
        %v9252 = vunpack.c.h.b16 %v8905
        %v9253 = vunpack.c.l.b16 %v8906
        %v9254 = vunpack.c.h.b16 %v8906
        %v9255 = vunpack.c.l.b16 %v8907
        %v9256 = vunpack.c.h.b16 %v8907
        %v9257 = vunpack.c.l.b16 %v8908
        %v9258 = vunpack.c.h.b16 %v8908
        %v9259 = vunpack.c.l.b16 %v8909
        %v9260 = vunpack.c.h.b16 %v8909
        %v9261 = vunpack.c.l.b16 %v8910
        %v9262 = vunpack.c.h.b16 %v8910
        %v9263 = vunpack.c.l.b16 %v8911
        %v9264 = vunpack.c.h.b16 %v8911
        %v9265 = vunpack.c.l.b16 %v8912
        %v9266 = vunpack.c.h.b16 %v8912
        %v9267 = vunpack.c.l.b16 %v8913
        %v9268 = vunpack.c.h.b16 %v8913
        %v9269 = vunpack.c.l.b16 %v8914
        %v9270 = vunpack.c.h.b16 %v8914
        %v9271 = vunpack.c.l.b16 %v8915
        %v9272 = vunpack.c.h.b16 %v8915
        %v9273 = vunpack.c.l.b16 %v8916
        %v9274 = vunpack.c.h.b16 %v8916
        %v9275 = vunpack.c.l.b16 %v8917
        %v9276 = vunpack.c.h.b16 %v8917
        %v9277 = vunpack.c.l.b16 %v8918
        %v9278 = vunpack.c.h.b16 %v8918
        %v9279 = vunpack.c.l.b16 %v8919
        %v9280 = vunpack.c.h.b16 %v8919
        %v9281 = vunpack.c.l.b16 %v8920
        %v9282 = vunpack.c.h.b16 %v8920
        %v9283 = vunpack.c.l.b16 %v8921
        %v9284 = vunpack.c.h.b16 %v8921
        %v9285 = vunpack.c.l.b16 %v8922
        %v9286 = vunpack.c.h.b16 %v8922
        %v9287 = vunpack.c.l.b16 %v8923
        %v9288 = vunpack.c.h.b16 %v8923
        %v9289 = vunpack.c.l.b16 %v8924
        %v9290 = vunpack.c.h.b16 %v8924
        %v9291 = vunpack.c.l.b16 %v8925
        %v9292 = vunpack.c.h.b16 %v8925
        %v9293 = vunpack.c.l.b16 %v8926
        %v9294 = vunpack.c.h.b16 %v8926
        %v9295 = vunpack.c.l.b16 %v8927
        %v9296 = vunpack.c.h.b16 %v8927
        %v9297 = vunpack.c.l.b16 %v8928
        %v9298 = vunpack.c.h.b16 %v8928
        %v9299 = vunpack.c.l.b16 %v8929
        %v9300 = vunpack.c.h.b16 %v8929
        %v9301 = vunpack.c.l.b16 %v8930
        %v9302 = vunpack.c.h.b16 %v8930
        %v9303 = vunpack.c.l.b16 %v8931
        %v9304 = vunpack.c.h.b16 %v8931
        %v9305 = vunpack.c.l.b16 %v8932
        %v9306 = vunpack.c.h.b16 %v8932
        %v9307 = vunpack.c.l.b16 %v8933
        %v9308 = vunpack.c.h.b16 %v8933
        %v9309 = vunpack.c.l.b16 %v8934
        %v9310 = vunpack.c.h.b16 %v8934
        %v9311 = vunpack.c.l.b16 %v8935
        %v9312 = vunpack.c.h.b16 %v8935
        %v9313 = vunpack.c.l.b16 %v8936
        %v9314 = vunpack.c.h.b16 %v8936
        %v9315 = vunpack.c.l.b16 %v8937
        %v9316 = vunpack.c.h.b16 %v8937
        %v9317 = vunpack.c.l.b16 %v8938
        %v9318 = vunpack.c.h.b16 %v8938
        %v9319 = vunpack.c.l.b16 %v8939
        %v9320 = vunpack.c.h.b16 %v8939
        %v9321 = vunpack.c.l.b16 %v8940
        %v9322 = vunpack.c.h.b16 %v8940
        %v9323 = vunpack.c.l.b16 %v8941
        %v9324 = vunpack.c.h.b16 %v8941
        %v9325 = vunpack.c.l.b16 %v8942
        %v9326 = vunpack.c.h.b16 %v8942
        %v9327 = vunpack.c.l.b16 %v8943
        %v9328 = vunpack.c.h.b16 %v8943
        %v9329 = vunpack.c.l.b16 %v8944
        %v9330 = vunpack.c.h.b16 %v8944
        %v9331 = vunpack.c.l.b16 %v8945
        %v9332 = vunpack.c.h.b16 %v8945
        %v9333 = vunpack.c.l.b16 %v8946
        %v9334 = vunpack.c.h.b16 %v8946
        %v9335 = vunpack.c.l.b16 %v8947
        %v9336 = vunpack.c.h.b16 %v8947
        %v9337 = vunpack.c.l.b16 %v8948
        %v9338 = vunpack.c.h.b16 %v8948
        %v9339 = vunpack.c.l.b16 %v8949
        %v9340 = vunpack.c.h.b16 %v8949
        %v9341 = vunpack.c.l.b16 %v8950
        %v9342 = vunpack.c.h.b16 %v8950
        %v9343 = vunpack.c.l.b16 %v8951
        %v9344 = vunpack.c.h.b16 %v8951
        %v9345 = vunpack.c.l.b16 %v8952
        %v9346 = vunpack.c.h.b16 %v8952
        %v9347 = vunpack.c.l.b16 %v8953
        %v9348 = vunpack.c.h.b16 %v8953
        %v9349 = vunpack.c.l.b16 %v8954
        %v9350 = vunpack.c.h.b16 %v8954
        %v9351 = vpack.c.b16 %v9097, %v9095
        %v9352 = vpack.c.b16 %v9098, %v9096
        %v9353 = vpack.c.b16 %v9101, %v9099
        %v9354 = vpack.c.b16 %v9102, %v9100
        %v9355 = vpack.c.b16 %v9105, %v9103
        %v9356 = vpack.c.b16 %v9106, %v9104
        %v9357 = vpack.c.b16 %v9109, %v9107
        %v9358 = vpack.c.b16 %v9110, %v9108
        %v9359 = vpack.c.b16 %v9113, %v9111
        %v9360 = vpack.c.b16 %v9114, %v9112
        %v9361 = vpack.c.b16 %v9117, %v9115
        %v9362 = vpack.c.b16 %v9118, %v9116
        %v9363 = vpack.c.b16 %v9121, %v9119
        %v9364 = vpack.c.b16 %v9122, %v9120
        %v9365 = vpack.c.b16 %v9125, %v9123
        %v9366 = vpack.c.b16 %v9126, %v9124
        %v9367 = vpack.c.b16 %v9129, %v9127
        %v9368 = vpack.c.b16 %v9130, %v9128
        %v9369 = vpack.c.b16 %v9133, %v9131
        %v9370 = vpack.c.b16 %v9134, %v9132
        %v9371 = vpack.c.b16 %v9137, %v9135
        %v9372 = vpack.c.b16 %v9138, %v9136
        %v9373 = vpack.c.b16 %v9141, %v9139
        %v9374 = vpack.c.b16 %v9142, %v9140
        %v9375 = vpack.c.b16 %v9145, %v9143
        %v9376 = vpack.c.b16 %v9146, %v9144
        %v9377 = vpack.c.b16 %v9149, %v9147
        %v9378 = vpack.c.b16 %v9150, %v9148
        %v9379 = vpack.c.b16 %v9153, %v9151
        %v9380 = vpack.c.b16 %v9154, %v9152
        %v9381 = vpack.c.b16 %v9157, %v9155
        %v9382 = vpack.c.b16 %v9158, %v9156
        %v9383 = vpack.c.b16 %v9161, %v9159
        %v9384 = vpack.c.b16 %v9162, %v9160
        %v9385 = vpack.c.b16 %v9165, %v9163
        %v9386 = vpack.c.b16 %v9166, %v9164
        %v9387 = vpack.c.b16 %v9169, %v9167
        %v9388 = vpack.c.b16 %v9170, %v9168
        %v9389 = vpack.c.b16 %v9173, %v9171
        %v9390 = vpack.c.b16 %v9174, %v9172
        %v9391 = vpack.c.b16 %v9177, %v9175
        %v9392 = vpack.c.b16 %v9178, %v9176
        %v9393 = vpack.c.b16 %v9181, %v9179
        %v9394 = vpack.c.b16 %v9182, %v9180
        %v9395 = vpack.c.b16 %v9185, %v9183
        %v9396 = vpack.c.b16 %v9186, %v9184
        %v9397 = vpack.c.b16 %v9189, %v9187
        %v9398 = vpack.c.b16 %v9190, %v9188
        %v9399 = vpack.c.b16 %v9193, %v9191
        %v9400 = vpack.c.b16 %v9194, %v9192
        %v9401 = vpack.c.b16 %v9197, %v9195
        %v9402 = vpack.c.b16 %v9198, %v9196
        %v9403 = vpack.c.b16 %v9201, %v9199
        %v9404 = vpack.c.b16 %v9202, %v9200
        %v9405 = vpack.c.b16 %v9205, %v9203
        %v9406 = vpack.c.b16 %v9206, %v9204
        %v9407 = vpack.c.b16 %v9209, %v9207
        %v9408 = vpack.c.b16 %v9210, %v9208
        %v9409 = vpack.c.b16 %v9213, %v9211
        %v9410 = vpack.c.b16 %v9214, %v9212
        %v9411 = vpack.c.b16 %v9217, %v9215
        %v9412 = vpack.c.b16 %v9218, %v9216
        %v9413 = vpack.c.b16 %v9221, %v9219
        %v9414 = vpack.c.b16 %v9222, %v9220
        %v9415 = vpack.c.b16 %v9225, %v9223
        %v9416 = vpack.c.b16 %v9226, %v9224
        %v9417 = vpack.c.b16 %v9229, %v9227
        %v9418 = vpack.c.b16 %v9230, %v9228
        %v9419 = vpack.c.b16 %v9233, %v9231
        %v9420 = vpack.c.b16 %v9234, %v9232
        %v9421 = vpack.c.b16 %v9237, %v9235
        %v9422 = vpack.c.b16 %v9238, %v9236
        %v9423 = vpack.c.b16 %v9241, %v9239
        %v9424 = vpack.c.b16 %v9242, %v9240
        %v9425 = vpack.c.b16 %v9245, %v9243
        %v9426 = vpack.c.b16 %v9246, %v9244
        %v9427 = vpack.c.b16 %v9249, %v9247
        %v9428 = vpack.c.b16 %v9250, %v9248
        %v9429 = vpack.c.b16 %v9253, %v9251
        %v9430 = vpack.c.b16 %v9254, %v9252
        %v9431 = vpack.c.b16 %v9257, %v9255
        %v9432 = vpack.c.b16 %v9258, %v9256
        %v9433 = vpack.c.b16 %v9261, %v9259
        %v9434 = vpack.c.b16 %v9262, %v9260
        %v9435 = vpack.c.b16 %v9265, %v9263
        %v9436 = vpack.c.b16 %v9266, %v9264
        %v9437 = vpack.c.b16 %v9269, %v9267
        %v9438 = vpack.c.b16 %v9270, %v9268
        %v9439 = vpack.c.b16 %v9273, %v9271
        %v9440 = vpack.c.b16 %v9274, %v9272
        %v9441 = vpack.c.b16 %v9277, %v9275
        %v9442 = vpack.c.b16 %v9278, %v9276
        %v9443 = vpack.c.b16 %v9281, %v9279
        %v9444 = vpack.c.b16 %v9282, %v9280
        %v9445 = vpack.c.b16 %v9285, %v9283
        %v9446 = vpack.c.b16 %v9286, %v9284
        %v9447 = vpack.c.b16 %v9289, %v9287
        %v9448 = vpack.c.b16 %v9290, %v9288
        %v9449 = vpack.c.b16 %v9293, %v9291
        %v9450 = vpack.c.b16 %v9294, %v9292
        %v9451 = vpack.c.b16 %v9297, %v9295
        %v9452 = vpack.c.b16 %v9298, %v9296
        %v9453 = vpack.c.b16 %v9301, %v9299
        %v9454 = vpack.c.b16 %v9302, %v9300
        %v9455 = vpack.c.b16 %v9305, %v9303
        %v9456 = vpack.c.b16 %v9306, %v9304
        %v9457 = vpack.c.b16 %v9309, %v9307
        %v9458 = vpack.c.b16 %v9310, %v9308
        %v9459 = vpack.c.b16 %v9313, %v9311
        %v9460 = vpack.c.b16 %v9314, %v9312
        %v9461 = vpack.c.b16 %v9317, %v9315
        %v9462 = vpack.c.b16 %v9318, %v9316
        %v9463 = vpack.c.b16 %v9321, %v9319
        %v9464 = vpack.c.b16 %v9322, %v9320
        %v9465 = vpack.c.b16 %v9325, %v9323
        %v9466 = vpack.c.b16 %v9326, %v9324
        %v9467 = vpack.c.b16 %v9329, %v9327
        %v9468 = vpack.c.b16 %v9330, %v9328
        %v9469 = vpack.c.b16 %v9333, %v9331
        %v9470 = vpack.c.b16 %v9334, %v9332
        %v9471 = vpack.c.b16 %v9337, %v9335
        %v9472 = vpack.c.b16 %v9338, %v9336
        %v9473 = vpack.c.b16 %v9341, %v9339
        %v9474 = vpack.c.b16 %v9342, %v9340
        %v9475 = vpack.c.b16 %v9345, %v9343
        %v9476 = vpack.c.b16 %v9346, %v9344
        %v9477 = vpack.c.b16 %v9349, %v9347
        %v9478 = vpack.c.b16 %v9350, %v9348
        %9607 = vmatprep.subr.bf16.mxu0 %v9366
        %9608 = vmatpush1.bf16.msra.mxu0 %v9365
        %9609 = vmatprep.subr.bf16.mxu0 %v9364
        %9610 = vmatpush1.bf16.msra.mxu0 %v9363
        %9611 = vmatprep.subr.bf16.mxu0 %v9362
        %9612 = vmatpush1.bf16.msra.mxu0 %v9361
        %9613 = vmatprep.subr.bf16.mxu0 %v9360
        %9614 = vmatpush1.bf16.msra.mxu0 %v9359
        %9615 = vmatprep.subr.bf16.mxu0 %v9358
        %9616 = vmatpush1.bf16.msra.mxu0 %v9357
        %9617 = vmatprep.subr.bf16.mxu0 %v9356
        %9618 = vmatpush1.bf16.msra.mxu0 %v9355
        %9619 = vmatprep.subr.bf16.mxu0 %v9354
        %9620 = vmatpush1.bf16.msra.mxu0 %v9353
        %9621 = vmatprep.subr.bf16.mxu0 %v9352
        %9622 = vmatpush1.bf16.msra.mxu0 %v9351
        %9623 = vmatprep.subr.bf16.mxu0 %v9382
        %9624 = vmatpush2.bf16.msra.mxu0 %v9381
        %9625 = vmatprep.subr.bf16.mxu0 %v9380
        %9626 = vmatpush2.bf16.msra.mxu0 %v9379
        %9627 = vmatprep.subr.bf16.mxu0 %v9378
        %9628 = vmatpush2.bf16.msra.mxu0 %v9377
        %9629 = vmatprep.subr.bf16.mxu0 %v9376
        %9630 = vmatpush2.bf16.msra.mxu0 %v9375
        %9631 = vmatprep.subr.bf16.mxu0 %v9374
        %9632 = vmatpush2.bf16.msra.mxu0 %v9373
        %9633 = vmatprep.subr.bf16.mxu0 %v9372
        %9634 = vmatpush2.bf16.msra.mxu0 %v9371
        %9635 = vmatprep.subr.bf16.mxu0 %v9370
        %9636 = vmatpush2.bf16.msra.mxu0 %v9369
        %9637 = vmatprep.subr.bf16.mxu0 %v9368
        %9638 = vmatpush2.bf16.msra.mxu0 %v9367
        %9639 = vmatprep.mubr.bf16.mxu0 %v8764
        %9640 = vmatmul.mubr.bf16.gmra.mxu0 %v8763
        %v9641 = vpop.f32.mrf.mxu0
        %v9642 = vadd.f32 %v8960, %v9641
        %v9643 = vpop.f32.mrf.mxu0
        %v9644 = vadd.f32 %v8964, %v9643
        %v9645 = vpop.f32.mrf.mxu0
        %v9646 = vadd.f32 %v8960, %v9645
        %v9647 = vpop.f32.mrf.mxu0
        %v9648 = vadd.f32 %v8964, %v9647
        %9649 = vmatprep.mubr.bf16.mxu0 %v8772
        %9650 = vmatmul.mubr.bf16.gmra.mxu0 %v8771
        %v9651 = vpop.f32.mrf.mxu0
        %v9652 = vadd.f32 %v8960, %v9651
        %v9653 = vpop.f32.mrf.mxu0
        %v9654 = vadd.f32 %v8964, %v9653
        %v9655 = vpop.f32.mrf.mxu0
        %v9656 = vadd.f32 %v8960, %v9655
        %v9657 = vpop.f32.mrf.mxu0
        %v9658 = vadd.f32 %v8964, %v9657
        %9659 = vmatprep.mubr.bf16.mxu0 %v8780
        %9660 = vmatmul.mubr.bf16.gmra.mxu0 %v8779
        %v9661 = vpop.f32.mrf.mxu0
        %v9662 = vadd.f32 %v8960, %v9661
        %v9663 = vpop.f32.mrf.mxu0
        %v9664 = vadd.f32 %v8964, %v9663
        %v9665 = vpop.f32.mrf.mxu0
        %v9666 = vadd.f32 %v8960, %v9665
        %v9667 = vpop.f32.mrf.mxu0
        %v9668 = vadd.f32 %v8964, %v9667
        %9669 = vmatprep.mubr.bf16.mxu0 %v8788
        %9670 = vmatmul.mubr.bf16.gmra.mxu0 %v8787
        %v9671 = vpop.f32.mrf.mxu0
        %v9672 = vadd.f32 %v8960, %v9671
        %v9673 = vpop.f32.mrf.mxu0
        %v9674 = vadd.f32 %v8964, %v9673
        %v9675 = vpop.f32.mrf.mxu0
        %v9676 = vadd.f32 %v8960, %v9675
        %v9677 = vpop.f32.mrf.mxu0
        %v9678 = vadd.f32 %v8964, %v9677
        %9679 = vmatprep.mubr.bf16.mxu0 %v8796
        %9680 = vmatmul.mubr.bf16.gmra.mxu0 %v8795
        %v9681 = vpop.f32.mrf.mxu0
        %v9682 = vadd.f32 %v8960, %v9681
        %v9683 = vpop.f32.mrf.mxu0
        %v9684 = vadd.f32 %v8964, %v9683
        %v9685 = vpop.f32.mrf.mxu0
        %v9686 = vadd.f32 %v8960, %v9685
        %v9687 = vpop.f32.mrf.mxu0
        %v9688 = vadd.f32 %v8964, %v9687
        %9689 = vmatprep.mubr.bf16.mxu0 %v8804
        %9690 = vmatmul.mubr.bf16.gmra.mxu0 %v8803
        %v9691 = vpop.f32.mrf.mxu0
        %v9692 = vadd.f32 %v8960, %v9691
        %v9693 = vpop.f32.mrf.mxu0
        %v9694 = vadd.f32 %v8964, %v9693
        %v9695 = vpop.f32.mrf.mxu0
        %v9696 = vadd.f32 %v8960, %v9695
        %v9697 = vpop.f32.mrf.mxu0
        %v9698 = vadd.f32 %v8964, %v9697
        %9699 = vmatprep.mubr.bf16.mxu0 %v8812
        %9700 = vmatmul.mubr.bf16.gmra.mxu0 %v8811
        %v9701 = vpop.f32.mrf.mxu0
        %v9702 = vadd.f32 %v8960, %v9701
        %v9703 = vpop.f32.mrf.mxu0
        %v9704 = vadd.f32 %v8964, %v9703
        %v9705 = vpop.f32.mrf.mxu0
        %v9706 = vadd.f32 %v8960, %v9705
        %v9707 = vpop.f32.mrf.mxu0
        %v9708 = vadd.f32 %v8964, %v9707
        %9709 = vmatprep.mubr.bf16.mxu0 %v8820
        %9710 = vmatmul.mubr.bf16.gmra.mxu0 %v8819
        %v9711 = vpop.f32.mrf.mxu0
        %v9712 = vadd.f32 %v8960, %v9711
        %v9713 = vpop.f32.mrf.mxu0
        %v9714 = vadd.f32 %v8964, %v9713
        %v9715 = vpop.f32.mrf.mxu0
        %v9716 = vadd.f32 %v8960, %v9715
        %v9717 = vpop.f32.mrf.mxu0
        %v9718 = vadd.f32 %v8964, %v9717
        %9719 = vdwg.mxu0
        %9720 = vmatprep.subr.bf16.mxu0 %v9398
        %9721 = vmatpush1.bf16.msra.mxu0 %v9397
        %9722 = vmatprep.subr.bf16.mxu0 %v9396
        %9723 = vmatpush1.bf16.msra.mxu0 %v9395
        %9724 = vmatprep.subr.bf16.mxu0 %v9394
        %9725 = vmatpush1.bf16.msra.mxu0 %v9393
        %9726 = vmatprep.subr.bf16.mxu0 %v9392
        %9727 = vmatpush1.bf16.msra.mxu0 %v9391
        %9728 = vmatprep.subr.bf16.mxu0 %v9390
        %9729 = vmatpush1.bf16.msra.mxu0 %v9389
        %9730 = vmatprep.subr.bf16.mxu0 %v9388
        %9731 = vmatpush1.bf16.msra.mxu0 %v9387
        %9732 = vmatprep.subr.bf16.mxu0 %v9386
        %9733 = vmatpush1.bf16.msra.mxu0 %v9385
        %9734 = vmatprep.subr.bf16.mxu0 %v9384
        %9735 = vmatpush1.bf16.msra.mxu0 %v9383
        %9736 = vmatprep.subr.bf16.mxu0 %v9414
        %9737 = vmatpush2.bf16.msra.mxu0 %v9413
        %9738 = vmatprep.subr.bf16.mxu0 %v9412
        %9739 = vmatpush2.bf16.msra.mxu0 %v9411
        %9740 = vmatprep.subr.bf16.mxu0 %v9410
        %9741 = vmatpush2.bf16.msra.mxu0 %v9409
        %9742 = vmatprep.subr.bf16.mxu0 %v9408
        %9743 = vmatpush2.bf16.msra.mxu0 %v9407
        %9744 = vmatprep.subr.bf16.mxu0 %v9406
        %9745 = vmatpush2.bf16.msra.mxu0 %v9405
        %9746 = vmatprep.subr.bf16.mxu0 %v9404
        %9747 = vmatpush2.bf16.msra.mxu0 %v9403
        %9748 = vmatprep.subr.bf16.mxu0 %v9402
        %9749 = vmatpush2.bf16.msra.mxu0 %v9401
        %9750 = vmatprep.subr.bf16.mxu0 %v9400
        %9751 = vmatpush2.bf16.msra.mxu0 %v9399
        %9752 = vmatprep.mubr.bf16.mxu0 %v8766
        %9753 = vmatmul.mubr.bf16.gmra.mxu0 %v8765
        %v9754 = vpop.f32.mrf.mxu0
        %v9755 = vadd.f32 %v9642, %v9754
        %v9756 = vpop.f32.mrf.mxu0
        %v9757 = vadd.f32 %v9644, %v9756
        %v9758 = vpop.f32.mrf.mxu0
        %v9759 = vadd.f32 %v9646, %v9758
        %v9760 = vpop.f32.mrf.mxu0
        %v9761 = vadd.f32 %v9648, %v9760
        %9762 = vmatprep.mubr.bf16.mxu0 %v8774
        %9763 = vmatmul.mubr.bf16.gmra.mxu0 %v8773
        %v9764 = vpop.f32.mrf.mxu0
        %v9765 = vadd.f32 %v9652, %v9764
        %v9766 = vpop.f32.mrf.mxu0
        %v9767 = vadd.f32 %v9654, %v9766
        %v9768 = vpop.f32.mrf.mxu0
        %v9769 = vadd.f32 %v9656, %v9768
        %v9770 = vpop.f32.mrf.mxu0
        %v9771 = vadd.f32 %v9658, %v9770
        %9772 = vmatprep.mubr.bf16.mxu0 %v8782
        %9773 = vmatmul.mubr.bf16.gmra.mxu0 %v8781
        %v9774 = vpop.f32.mrf.mxu0
        %v9775 = vadd.f32 %v9662, %v9774
        %v9776 = vpop.f32.mrf.mxu0
        %v9777 = vadd.f32 %v9664, %v9776
        %v9778 = vpop.f32.mrf.mxu0
        %v9779 = vadd.f32 %v9666, %v9778
        %v9780 = vpop.f32.mrf.mxu0
        %v9781 = vadd.f32 %v9668, %v9780
        %9782 = vmatprep.mubr.bf16.mxu0 %v8790
        %9783 = vmatmul.mubr.bf16.gmra.mxu0 %v8789
        %v9784 = vpop.f32.mrf.mxu0
        %v9785 = vadd.f32 %v9672, %v9784
        %v9786 = vpop.f32.mrf.mxu0
        %v9787 = vadd.f32 %v9674, %v9786
        %v9788 = vpop.f32.mrf.mxu0
        %v9789 = vadd.f32 %v9676, %v9788
        %v9790 = vpop.f32.mrf.mxu0
        %v9791 = vadd.f32 %v9678, %v9790
        %9792 = vmatprep.mubr.bf16.mxu0 %v8798
        %9793 = vmatmul.mubr.bf16.gmra.mxu0 %v8797
        %v9794 = vpop.f32.mrf.mxu0
        %v9795 = vadd.f32 %v9682, %v9794
        %v9796 = vpop.f32.mrf.mxu0
        %v9797 = vadd.f32 %v9684, %v9796
        %v9798 = vpop.f32.mrf.mxu0
        %v9799 = vadd.f32 %v9686, %v9798
        %v9800 = vpop.f32.mrf.mxu0
        %v9801 = vadd.f32 %v9688, %v9800
        %9802 = vmatprep.mubr.bf16.mxu0 %v8806
        %9803 = vmatmul.mubr.bf16.gmra.mxu0 %v8805
        %v9804 = vpop.f32.mrf.mxu0
        %v9805 = vadd.f32 %v9692, %v9804
        %v9806 = vpop.f32.mrf.mxu0
        %v9807 = vadd.f32 %v9694, %v9806
        %v9808 = vpop.f32.mrf.mxu0
        %v9809 = vadd.f32 %v9696, %v9808
        %v9810 = vpop.f32.mrf.mxu0
        %v9811 = vadd.f32 %v9698, %v9810
        %9812 = vmatprep.mubr.bf16.mxu0 %v8814
        %9813 = vmatmul.mubr.bf16.gmra.mxu0 %v8813
        %v9814 = vpop.f32.mrf.mxu0
        %v9815 = vadd.f32 %v9702, %v9814
        %v9816 = vpop.f32.mrf.mxu0
        %v9817 = vadd.f32 %v9704, %v9816
        %v9818 = vpop.f32.mrf.mxu0
        %v9819 = vadd.f32 %v9706, %v9818
        %v9820 = vpop.f32.mrf.mxu0
        %v9821 = vadd.f32 %v9708, %v9820
        %9822 = vmatprep.mubr.bf16.mxu0 %v8822
        %9823 = vmatmul.mubr.bf16.gmra.mxu0 %v8821
        %v9824 = vpop.f32.mrf.mxu0
        %v9825 = vadd.f32 %v9712, %v9824
        %v9826 = vpop.f32.mrf.mxu0
        %v9827 = vadd.f32 %v9714, %v9826
        %v9828 = vpop.f32.mrf.mxu0
        %v9829 = vadd.f32 %v9716, %v9828
        %v9830 = vpop.f32.mrf.mxu0
        %v9831 = vadd.f32 %v9718, %v9830
        %9832 = vdwg.mxu0
        %9833 = vmatprep.subr.bf16.mxu0 %v9430
        %9834 = vmatpush1.bf16.msra.mxu0 %v9429
        %9835 = vmatprep.subr.bf16.mxu0 %v9428
        %9836 = vmatpush1.bf16.msra.mxu0 %v9427
        %9837 = vmatprep.subr.bf16.mxu0 %v9426
        %9838 = vmatpush1.bf16.msra.mxu0 %v9425
        %9839 = vmatprep.subr.bf16.mxu0 %v9424
        %9840 = vmatpush1.bf16.msra.mxu0 %v9423
        %9841 = vmatprep.subr.bf16.mxu0 %v9422
        %9842 = vmatpush1.bf16.msra.mxu0 %v9421
        %9843 = vmatprep.subr.bf16.mxu0 %v9420
        %9844 = vmatpush1.bf16.msra.mxu0 %v9419
        %9845 = vmatprep.subr.bf16.mxu0 %v9418
        %9846 = vmatpush1.bf16.msra.mxu0 %v9417
        %9847 = vmatprep.subr.bf16.mxu0 %v9416
        %9848 = vmatpush1.bf16.msra.mxu0 %v9415
        %9849 = vmatprep.subr.bf16.mxu0 %v9446
        %9850 = vmatpush2.bf16.msra.mxu0 %v9445
        %9851 = vmatprep.subr.bf16.mxu0 %v9444
        %9852 = vmatpush2.bf16.msra.mxu0 %v9443
        %9853 = vmatprep.subr.bf16.mxu0 %v9442
        %9854 = vmatpush2.bf16.msra.mxu0 %v9441
        %9855 = vmatprep.subr.bf16.mxu0 %v9440
        %9856 = vmatpush2.bf16.msra.mxu0 %v9439
        %9857 = vmatprep.subr.bf16.mxu0 %v9438
        %9858 = vmatpush2.bf16.msra.mxu0 %v9437
        %9859 = vmatprep.subr.bf16.mxu0 %v9436
        %9860 = vmatpush2.bf16.msra.mxu0 %v9435
        %9861 = vmatprep.subr.bf16.mxu0 %v9434
        %9862 = vmatpush2.bf16.msra.mxu0 %v9433
        %9863 = vmatprep.subr.bf16.mxu0 %v9432
        %9864 = vmatpush2.bf16.msra.mxu0 %v9431
        %9865 = vmatprep.mubr.bf16.mxu0 %v8768
        %9866 = vmatmul.mubr.bf16.gmra.mxu0 %v8767
        %v9867 = vpop.f32.mrf.mxu0
        %v9868 = vadd.f32 %v9755, %v9867
        %v9869 = vpop.f32.mrf.mxu0
        %v9870 = vadd.f32 %v9757, %v9869
        %v9871 = vpop.f32.mrf.mxu0
        %v9872 = vadd.f32 %v9759, %v9871
        %v9873 = vpop.f32.mrf.mxu0
        %v9874 = vadd.f32 %v9761, %v9873
        %9875 = vmatprep.mubr.bf16.mxu0 %v8776
        %9876 = vmatmul.mubr.bf16.gmra.mxu0 %v8775
        %v9877 = vpop.f32.mrf.mxu0
        %v9878 = vadd.f32 %v9765, %v9877
        %v9879 = vpop.f32.mrf.mxu0
        %v9880 = vadd.f32 %v9767, %v9879
        %v9881 = vpop.f32.mrf.mxu0
        %v9882 = vadd.f32 %v9769, %v9881
        %v9883 = vpop.f32.mrf.mxu0
        %v9884 = vadd.f32 %v9771, %v9883
        %9885 = vmatprep.mubr.bf16.mxu0 %v8784
        %9886 = vmatmul.mubr.bf16.gmra.mxu0 %v8783
        %v9887 = vpop.f32.mrf.mxu0
        %v9888 = vadd.f32 %v9775, %v9887
        %v9889 = vpop.f32.mrf.mxu0
        %v9890 = vadd.f32 %v9777, %v9889
        %v9891 = vpop.f32.mrf.mxu0
        %v9892 = vadd.f32 %v9779, %v9891
        %v9893 = vpop.f32.mrf.mxu0
        %v9894 = vadd.f32 %v9781, %v9893
        %9895 = vmatprep.mubr.bf16.mxu0 %v8792
        %9896 = vmatmul.mubr.bf16.gmra.mxu0 %v8791
        %v9897 = vpop.f32.mrf.mxu0
        %v9898 = vadd.f32 %v9785, %v9897
        %v9899 = vpop.f32.mrf.mxu0
        %v9900 = vadd.f32 %v9787, %v9899
        %v9901 = vpop.f32.mrf.mxu0
        %v9902 = vadd.f32 %v9789, %v9901
        %v9903 = vpop.f32.mrf.mxu0
        %v9904 = vadd.f32 %v9791, %v9903
        %9905 = vmatprep.mubr.bf16.mxu0 %v8800
        %9906 = vmatmul.mubr.bf16.gmra.mxu0 %v8799
        %v9907 = vpop.f32.mrf.mxu0
        %v9908 = vadd.f32 %v9795, %v9907
        %v9909 = vpop.f32.mrf.mxu0
        %v9910 = vadd.f32 %v9797, %v9909
        %v9911 = vpop.f32.mrf.mxu0
        %v9912 = vadd.f32 %v9799, %v9911
        %v9913 = vpop.f32.mrf.mxu0
        %v9914 = vadd.f32 %v9801, %v9913
        %9915 = vmatprep.mubr.bf16.mxu0 %v8808
        %9916 = vmatmul.mubr.bf16.gmra.mxu0 %v8807
        %v9917 = vpop.f32.mrf.mxu0
        %v9918 = vadd.f32 %v9805, %v9917
        %v9919 = vpop.f32.mrf.mxu0
        %v9920 = vadd.f32 %v9807, %v9919
        %v9921 = vpop.f32.mrf.mxu0
        %v9922 = vadd.f32 %v9809, %v9921
        %v9923 = vpop.f32.mrf.mxu0
        %v9924 = vadd.f32 %v9811, %v9923
        %9925 = vmatprep.mubr.bf16.mxu0 %v8816
        %9926 = vmatmul.mubr.bf16.gmra.mxu0 %v8815
        %v9927 = vpop.f32.mrf.mxu0
        %v9928 = vadd.f32 %v9815, %v9927
        %v9929 = vpop.f32.mrf.mxu0
        %v9930 = vadd.f32 %v9817, %v9929
        %v9931 = vpop.f32.mrf.mxu0
        %v9932 = vadd.f32 %v9819, %v9931
        %v9933 = vpop.f32.mrf.mxu0
        %v9934 = vadd.f32 %v9821, %v9933
        %9935 = vmatprep.mubr.bf16.mxu0 %v8824
        %9936 = vmatmul.mubr.bf16.gmra.mxu0 %v8823
        %v9937 = vpop.f32.mrf.mxu0
        %v9938 = vadd.f32 %v9825, %v9937
        %v9939 = vpop.f32.mrf.mxu0
        %v9940 = vadd.f32 %v9827, %v9939
        %v9941 = vpop.f32.mrf.mxu0
        %v9942 = vadd.f32 %v9829, %v9941
        %v9943 = vpop.f32.mrf.mxu0
        %v9944 = vadd.f32 %v9831, %v9943
        %9945 = vdwg.mxu0
        %9946 = vmatprep.subr.bf16.mxu0 %v9462
        %9947 = vmatpush1.bf16.msra.mxu0 %v9461
        %9948 = vmatprep.subr.bf16.mxu0 %v9460
        %9949 = vmatpush1.bf16.msra.mxu0 %v9459
        %9950 = vmatprep.subr.bf16.mxu0 %v9458
        %9951 = vmatpush1.bf16.msra.mxu0 %v9457
        %9952 = vmatprep.subr.bf16.mxu0 %v9456
        %9953 = vmatpush1.bf16.msra.mxu0 %v9455
        %9954 = vmatprep.subr.bf16.mxu0 %v9454
        %9955 = vmatpush1.bf16.msra.mxu0 %v9453
        %9956 = vmatprep.subr.bf16.mxu0 %v9452
        %9957 = vmatpush1.bf16.msra.mxu0 %v9451
        %9958 = vmatprep.subr.bf16.mxu0 %v9450
        %9959 = vmatpush1.bf16.msra.mxu0 %v9449
        %9960 = vmatprep.subr.bf16.mxu0 %v9448
        %9961 = vmatpush1.bf16.msra.mxu0 %v9447
        %9962 = vmatprep.subr.bf16.mxu0 %v9478
        %9963 = vmatpush2.bf16.msra.mxu0 %v9477
        %9964 = vmatprep.subr.bf16.mxu0 %v9476
        %9965 = vmatpush2.bf16.msra.mxu0 %v9475
        %9966 = vmatprep.subr.bf16.mxu0 %v9474
        %9967 = vmatpush2.bf16.msra.mxu0 %v9473
        %9968 = vmatprep.subr.bf16.mxu0 %v9472
        %9969 = vmatpush2.bf16.msra.mxu0 %v9471
        %9970 = vmatprep.subr.bf16.mxu0 %v9470
        %9971 = vmatpush2.bf16.msra.mxu0 %v9469
        %9972 = vmatprep.subr.bf16.mxu0 %v9468
        %9973 = vmatpush2.bf16.msra.mxu0 %v9467
        %9974 = vmatprep.subr.bf16.mxu0 %v9466
        %9975 = vmatpush2.bf16.msra.mxu0 %v9465
        %9976 = vmatprep.subr.bf16.mxu0 %v9464
        %9977 = vmatpush2.bf16.msra.mxu0 %v9463
        %9978 = vmatprep.mubr.bf16.mxu0 %v8770
        %9979 = vmatmul.mubr.bf16.gmra.mxu0 %v8769
        %v9980 = vpop.f32.mrf.mxu0
        %v9981 = vadd.f32 %v9868, %v9980
        %v9982 = vpop.f32.mrf.mxu0
        %v9983 = vadd.f32 %v9870, %v9982
        %v9984 = vpop.f32.mrf.mxu0
        %v9985 = vadd.f32 %v9872, %v9984
        %v9986 = vpop.f32.mrf.mxu0
        %v9987 = vadd.f32 %v9874, %v9986
        %9988 = vmatprep.mubr.bf16.mxu0 %v8778
        %9989 = vmatmul.mubr.bf16.gmra.mxu0 %v8777
        %v9990 = vpop.f32.mrf.mxu0
        %v9991 = vadd.f32 %v9878, %v9990
        %v9992 = vpop.f32.mrf.mxu0
        %v9993 = vadd.f32 %v9880, %v9992
        %v9994 = vpop.f32.mrf.mxu0
        %v9995 = vadd.f32 %v9882, %v9994
        %v9996 = vpop.f32.mrf.mxu0
        %v9997 = vadd.f32 %v9884, %v9996
        %9998 = vmatprep.mubr.bf16.mxu0 %v8786
        %9999 = vmatmul.mubr.bf16.gmra.mxu0 %v8785
        %v10000 = vpop.f32.mrf.mxu0
        %v10001 = vadd.f32 %v9888, %v10000
        %v10002 = vpop.f32.mrf.mxu0
        %v10003 = vadd.f32 %v9890, %v10002
        %v10004 = vpop.f32.mrf.mxu0
        %v10005 = vadd.f32 %v9892, %v10004
        %v10006 = vpop.f32.mrf.mxu0
        %v10007 = vadd.f32 %v9894, %v10006
        %10008 = vmatprep.mubr.bf16.mxu0 %v8794
        %10009 = vmatmul.mubr.bf16.gmra.mxu0 %v8793
        %v10010 = vpop.f32.mrf.mxu0
        %v10011 = vadd.f32 %v9898, %v10010
        %v10012 = vpop.f32.mrf.mxu0
        %v10013 = vadd.f32 %v9900, %v10012
        %v10014 = vpop.f32.mrf.mxu0
        %v10015 = vadd.f32 %v9902, %v10014
        %v10016 = vpop.f32.mrf.mxu0
        %v10017 = vadd.f32 %v9904, %v10016
        %10018 = vmatprep.mubr.bf16.mxu0 %v8802
        %10019 = vmatmul.mubr.bf16.gmra.mxu0 %v8801
        %v10020 = vpop.f32.mrf.mxu0
        %v10021 = vadd.f32 %v9908, %v10020
        %v10022 = vpop.f32.mrf.mxu0
        %v10023 = vadd.f32 %v9910, %v10022
        %v10024 = vpop.f32.mrf.mxu0
        %v10025 = vadd.f32 %v9912, %v10024
        %v10026 = vpop.f32.mrf.mxu0
        %v10027 = vadd.f32 %v9914, %v10026
        %10028 = vmatprep.mubr.bf16.mxu0 %v8810
        %10029 = vmatmul.mubr.bf16.gmra.mxu0 %v8809
        %v10030 = vpop.f32.mrf.mxu0
        %v10031 = vadd.f32 %v9918, %v10030
        %v10032 = vpop.f32.mrf.mxu0
        %v10033 = vadd.f32 %v9920, %v10032
        %v10034 = vpop.f32.mrf.mxu0
        %v10035 = vadd.f32 %v9922, %v10034
        %v10036 = vpop.f32.mrf.mxu0
        %v10037 = vadd.f32 %v9924, %v10036
        %10038 = vmatprep.mubr.bf16.mxu0 %v8818
        %10039 = vmatmul.mubr.bf16.gmra.mxu0 %v8817
        %v10040 = vpop.f32.mrf.mxu0
        %v10041 = vadd.f32 %v9928, %v10040
        %v10042 = vpop.f32.mrf.mxu0
        %v10043 = vadd.f32 %v9930, %v10042
        %v10044 = vpop.f32.mrf.mxu0
        %v10045 = vadd.f32 %v9932, %v10044
        %v10046 = vpop.f32.mrf.mxu0
        %v10047 = vadd.f32 %v9934, %v10046
        %10048 = vmatprep.mubr.bf16.mxu0 %v8826
        %10049 = vmatmul.mubr.bf16.gmra.mxu0 %v8825
        %v10050 = vpop.f32.mrf.mxu0
        %v10051 = vadd.f32 %v9938, %v10050
        %v10052 = vpop.f32.mrf.mxu0
        %v10053 = vadd.f32 %v9940, %v10052
        %v10054 = vpop.f32.mrf.mxu0
        %v10055 = vadd.f32 %v9942, %v10054
        %v10056 = vpop.f32.mrf.mxu0
        %v10057 = vadd.f32 %v9944, %v10056
        %10058 = vdwg.mxu0
        %v10059 = vadd.f32 %v5957, %v9981
        %v10060 = vadd.f32 %v5958, %v9983
        %v10061 = vadd.f32 %v5959, %v9985
        %v10062 = vadd.f32 %v5960, %v9987
        %v10063 = vadd.f32 %v5961, %v9991
        %v10064 = vadd.f32 %v5962, %v9993
        %v10065 = vadd.f32 %v5963, %v9995
        %v10066 = vadd.f32 %v5964, %v9997
        %v10067 = vadd.f32 %v5965, %v10001
        %v10068 = vadd.f32 %v5966, %v10003
        %v10069 = vadd.f32 %v5967, %v10005
        %v10070 = vadd.f32 %v5968, %v10007
        %v10071 = vadd.f32 %v5969, %v10011
        %v10072 = vadd.f32 %v5970, %v10013
        %v10073 = vadd.f32 %v5971, %v10015
        %v10074 = vadd.f32 %v5972, %v10017
        %v10075 = vadd.f32 %v5973, %v10021
        %v10076 = vadd.f32 %v5974, %v10023
        %v10077 = vadd.f32 %v5975, %v10025
        %v10078 = vadd.f32 %v5976, %v10027
        %v10079 = vadd.f32 %v5977, %v10031
        %v10080 = vadd.f32 %v5978, %v10033
        %v10081 = vadd.f32 %v5979, %v10035
        %v10082 = vadd.f32 %v5980, %v10037
        %v10083 = vadd.f32 %v5981, %v10041
        %v10084 = vadd.f32 %v5982, %v10043
        %v10085 = vadd.f32 %v5983, %v10045
        %v10086 = vadd.f32 %v5984, %v10047
        %v10087 = vadd.f32 %v5985, %v10051
        %v10088 = vadd.f32 %v5986, %v10053
        %v10089 = vadd.f32 %v5987, %v10055
        %v10090 = vadd.f32 %v5988, %v10057
        %10091 = vst [vmem:[%s697] sm:$0xff] %v10059
        %10092 = vst [vmem:[%s697 + $0x8] sm:$0xff] %v10060
        %10093 = vst [vmem:[%s697 + $0x10] sm:$0xff] %v10061
        %10094 = vst [vmem:[%s697 + $0x18] sm:$0xff] %v10062
        %10095 = vst [vmem:[%s697 + $0x20] sm:$0xff] %v10063
        %10096 = vst [vmem:[%s697 + $0x28] sm:$0xff] %v10064
        %10097 = vst [vmem:[%s697 + $0x30] sm:$0xff] %v10065
        %10098 = vst [vmem:[%s697 + $0x38] sm:$0xff] %v10066
        %10099 = vst [vmem:[%s697 + $0x40] sm:$0xff] %v10067
        %10100 = vst [vmem:[%s697 + $0x48] sm:$0xff] %v10068
        %10101 = vst [vmem:[%s697 + $0x50] sm:$0xff] %v10069
        %10102 = vst [vmem:[%s697 + $0x58] sm:$0xff] %v10070
        %10103 = vst [vmem:[%s697 + $0x60] sm:$0xff] %v10071
        %10104 = vst [vmem:[%s697 + $0x68] sm:$0xff] %v10072
        %10105 = vst [vmem:[%s697 + $0x70] sm:$0xff] %v10073
        %10106 = vst [vmem:[%s697 + $0x78] sm:$0xff] %v10074
        %10107 = vst [vmem:[%s697 + $0x80] sm:$0xff] %v10075
        %10108 = vst [vmem:[%s697 + $0x88] sm:$0xff] %v10076
        %10109 = vst [vmem:[%s697 + $0x90] sm:$0xff] %v10077
        %10110 = vst [vmem:[%s697 + $0x98] sm:$0xff] %v10078
        %10111 = vst [vmem:[%s697 + $0xa0] sm:$0xff] %v10079
        %10112 = vst [vmem:[%s697 + $0xa8] sm:$0xff] %v10080
        %10113 = vst [vmem:[%s697 + $0xb0] sm:$0xff] %v10081
        %10114 = vst [vmem:[%s697 + $0xb8] sm:$0xff] %v10082
        %10115 = vst [vmem:[%s697 + $0xc0] sm:$0xff] %v10083
        %10116 = vst [vmem:[%s697 + $0xc8] sm:$0xff] %v10084
        %10117 = vst [vmem:[%s697 + $0xd0] sm:$0xff] %v10085
        %10118 = vst [vmem:[%s697 + $0xd8] sm:$0xff] %v10086
        %10119 = vst [vmem:[%s697 + $0xe0] sm:$0xff] %v10087
        %10120 = vst [vmem:[%s697 + $0xe8] sm:$0xff] %v10088
        %10121 = vst [vmem:[%s697 + $0xf0] sm:$0xff] %v10089
        %10122 = vst [vmem:[%s697 + $0xf8] sm:$0xff] %v10090
        %s10123 = sand.u32 %s424, 1
        %s10124 = scalar_lea.sflag [#allocation6], %s10123
        %s10125 = sand.u32 %s424, 1
        %s10126 = smul.addr %s10125, 256
        %s10127 = scalar_lea.vmem [#allocation19], %s10126
        // Predicated region
        $region132: #{tpu_custom_call.1} parent=87 // pred_check
          %p10128 = pneg %p434
        $region133: #{tpu_custom_call.1} parent=87 // pred_check_branch
          %10130 = sbr.rel (%p10128) target = $region135
        $region134: #{tpu_custom_call.1} parent=87 // pred_region
          %s10131 = smul.u32 16, %s43
          %s10133 = ssub.s32 4096, 4096
          %10134 = vsyncadd %s10124, %s10133
          %s10135 = smul.addr %s10131, 2
          %s10136 = smul.addr %s42, 64
          %s10137 = sadd.s32 %s10135, %s10136
          %s10138 = smul.addr %s10137, 128
          %s10139 = scalar_lea.hbm %s17, %s10138
          %s10140 = sshll.u32 %s10127, 4
          %s10141 = int_to_ptr.vmem [resolvable:$true] %s10140
          %10146 = dma.vmem_to_hbm [thread:$0]  %s10141, 4096, %s10139, %s10124, 256, 256, 16
        $region135: #{tpu_custom_call.1} parent=87 // pred_fallthru
          _
      $region88: #{tpu_custom_call.1} parent=5 // pred_fallthru
        _
      %p10147 = scmp.le.s32.totalorder 2, %s33
      // Predicated region
      $region136: #{tpu_custom_call.1} parent=5 // pred_check
        %p10148 = pneg %p10147
      $region137: #{tpu_custom_call.1} parent=5 // pred_check_branch
        %10150 = sbr.rel (%p10148) target = $region139
      $region138: #{tpu_custom_call.1} parent=5 // pred_region
        %s10151 = ssub.s32 %s33, 2
        // Predicated region
        $region140: #{tpu_custom_call.1} parent=138 // pred_check
          %p10152 = pneg %p440
        $region141: #{tpu_custom_call.1} parent=138 // pred_check_branch
          %10154 = sbr.rel (%p10152) target = $region143
        $region142: #{tpu_custom_call.1} parent=138 // pred_region
          %s10155 = sand.u32 %s425, 1
          %s10156 = scalar_lea.sflag [#allocation6], %s10155
          %s10157 = sand.u32 %s425, 1
          %s10158 = smul.addr %s10157, 256
          %s10159 = scalar_lea.vmem [#allocation19], %s10158
          %10160 = dma.done %s10156, 4096
        $region143: #{tpu_custom_call.1} parent=138 // pred_fallthru
          _
      $region139: #{tpu_custom_call.1} parent=5 // pred_fallthru
        _
    $region6: #{tpu_custom_call.1} parent=1 // loop_footer
      %s37 = sadd.s32 1, %s33
    $region7: #{tpu_custom_call.1} parent=1 // loop_footer_branch
      %32 = sbr.rel target = $region3
    $region8: #{tpu_custom_call.1} parent=1 // loop_exit
      _
    %10161 = vsyncpa [#allocation5], 1
    %s10162 = scalar_lea.sflag [#allocation5], 1
    %10163 = vsyncpa %s10162, 1
    %10164 = vsyncpa [#allocation8], 1
    %10165 = vsyncpa [#allocation11], 1
    %10166 = vsyncpa [#allocation14], 1
    %10167 = vsyncpa [#allocation17], 1
    %10168 = vsyncpa [#allocation6], 1
    %s10169 = scalar_lea.sflag [#allocation6], 1
    %10170 = vsyncpa %s10169, 1

</llo_original>
